<compile_context>
chip_gen: v6e
topology: v6e:2x2x1
jax: 0.10.0
libtpu: 0.0.40
codegen_flags: <defaults>
</compile_context>

<pallas_src>
import math
import functools

import jax
import jax.numpy as jnp
from jax import lax
from jax.experimental import pallas as pl
from jax.experimental.pallas import tpu as pltpu

E_CRIT_NEW = 26267.160775850585
INV_E_CRIT = 1.0 / E_CRIT_NEW
G_STD = 0.01
INV_G_STD = 1.0 / G_STD
NU = 1.0 / (G_STD * math.sqrt(2.0 * math.pi))
LOG_NU = math.log(NU)
F_MEAN = 0.0
F_STD = 0.001
R_STD = 0.01
R_INIT = 0.08076263685971334
_BIG = 1e30          # catch-all upper edge for the last resampling bucket
_GRP = 8             # steps per coalesced (8, N) history-store group

# VoC open-circuit-voltage model constants (from the PyTorch module)
_VL = -1.59614486
_V0 = 4.13646328
_GAMMA = 0.63726463
_ALPHA = 1.40174122
_BETA = 2.54478965


def _voc(soc):
    return (_VL
            + (_V0 - _VL) * jnp.exp(_GAMMA * (soc - 1.0))
            + _ALPHA * _VL * (soc - 1.0)
            + (1.0 - _ALPHA) * _VL
            * (math.exp(-_BETA) - jnp.exp(-_BETA * jnp.sqrt(soc))))


def _pf_kernel(n, t_real, tb,
               cur_ref, vmeas_ref, u_ref, ecrit_ref,       # scalar prefetch (SMEM)
               soc0_ref, r0_ref, tril2_ref,                 # resident VMEM inputs
               rnoise_ref, fnoise_ref,                      # (TB, N) VMEM blocks
               volt_out, soc_out, loss_out,                 # VMEM outputs
               carry_sc, loss_sc):                          # VMEM scratch
    c = pl.program_id(0)
    inv_n = 1.0 / float(n)
    log_n = math.log(float(n))

    @pl.when(c == 0)
    def _():
        carry_sc[...] = jnp.zeros_like(carry_sc)
        carry_sc[0:1, :] = soc0_ref[...]
        carry_sc[1:2, :] = r0_ref[...]
        loss_sc[...] = jnp.zeros_like(loss_sc)

    # ---- loop-invariant values, hoisted out of the per-step body -----------
    e_crit = ecrit_ref[0]                         # the single trainable parameter
    dyn_scale = INV_E_CRIT * e_crit               # scalar, hoisted
    # Resampling slot-position base i/N, lane-dense row (one vreg).
    pos_base = (lax.broadcasted_iota(jnp.int32, (1, n), 1).astype(jnp.float32)
                * inv_n)
    # Catch-all bump for the last source bucket (column, sublane axis).
    bump_col = jnp.where(
        lax.broadcasted_iota(jnp.int32, (n, 1), 0) == n - 1,
        _BIG, 0.0).astype(jnp.float32)
    # Sublane-index column used to stack rows into (8, N) register tiles.
    row_id = lax.broadcasted_iota(jnp.int32, (_GRP, 1), 0)

    def step(t, soc, r, rn_row, fn_row, loss_acc):
        i_prev = cur_ref[jnp.maximum(t - 1, 0)]   # current used for the dynamics
        i_now = cur_ref[t]                        # current used for the measurement
        v_meas = vmeas_ref[t]
        u_t = u_ref[t]

        # --- particle propagation -------------------------------------------
        r = r + rn_row
        v = _voc(soc) - i_prev * r
        soc = soc - (i_prev * dyn_scale) * v
        soc = soc + fn_row
        soc = jnp.where(soc > 1.0, 1.0, soc)
        soc = jnp.where(soc < 0.0, 1e-10, soc)
        v = _voc(soc) - i_now * r

        # --- weights and running log-likelihood ------------------------------
        err = (v - v_meas) * INV_G_STD
        logw = LOG_NU - 0.5 * err * err                     # (1, N)
        m = jnp.max(logw, axis=1, keepdims=True)            # (1, 1)
        lw = jnp.exp(logw - m)                              # (1, N)
        s = jnp.sum(lw, axis=1, keepdims=True)              # (1, 1)
        step_loss = m + jnp.log(s) - log_n
        loss_acc = loss_acc + jnp.where(t < t_real, step_loss,
                                        jnp.zeros_like(step_loss))

        # --- systematic resampling -------------------------------------------
        # TODO(synk): resample() is not defined in the PyTorch source; implemented
        # here as deterministic systematic resampling with uniform output weights.
        # Column-oriented inclusive / exclusive cumulative sums off the MXU:
        # the weight row is padded to a native (8, N) tile, transposed once
        # (native-shaped, cheap), and multiplied by the resident
        # (2N, N) = [k<=j ; k<j] constant with standard contraction dims.
        lw8 = jnp.where(row_id == 0, lw, 0.0)               # (8, N), rows 1..7 = 0
        lw_cols = lw8.T                                     # (N, 8), lane 0 = lw
        cc = jnp.dot(tril2_ref[...], lw_cols,
                     preferred_element_type=jnp.float32)    # (2N, 8)
        cum_col = cc[0:n, 0:1]                              # inclusive cumsum
        prev_col = cc[n:2 * n, 0:1]                         # exclusive cumsum
        hi_col = cum_col + bump_col                         # catch-all last bucket
        # Slot positions, scaled by sum(w) so weights never need normalizing.
        pos = (pos_base + u_t * inv_n) * s                  # (1, N)
        # sel[j, i] == 1  <=>  output slot i draws source particle j
        # (source-major, so the resample matmul below needs no transposes).
        sel = jnp.logical_and(pos >= prev_col,
                              pos < hi_col).astype(jnp.float32)   # (N, N)

        # Fused resample of (soc, R, V): one stacked (8,N) x (N,N) MXU pass.
        state8 = jnp.where(row_id == 0, soc,
                           jnp.where(row_id == 1, r, v))    # rows: soc, R, V, V...
        res = jnp.dot(state8, sel,
                      preferred_element_type=jnp.float32)   # (8, N)
        return res[0:1, :], res[1:2, :], res[2:3, :], loss_acc

    def group(g, carry):
        soc, r, loss_acc = carry
        base = pl.multiple_of(g * _GRP, _GRP)
        volt_tile = jnp.zeros((_GRP, n), jnp.float32)
        soc_tile = jnp.zeros((_GRP, n), jnp.float32)
        for j in range(_GRP):                                # static unroll = 8
            t = c * tb + base + j
            rn_row = rnoise_ref[pl.ds(base + j, 1), :]
            fn_row = fnoise_ref[pl.ds(base + j, 1), :]
            soc, r, v, loss_acc = step(t, soc, r, rn_row, fn_row, loss_acc)
            volt_tile = jnp.where(row_id == j, v, volt_tile)
            soc_tile = jnp.where(row_id == j, soc, soc_tile)
        # Coalesced, aligned full-tile history stores (one per 8 steps).
        volt_out[pl.ds(base, _GRP), :] = volt_tile
        soc_out[pl.ds(base, _GRP), :] = soc_tile
        return soc, r, loss_acc

    # Carried state / loss live in registers for the whole chunk.
    carry0 = (carry_sc[0:1, :], carry_sc[1:2, :], loss_sc[...])
    soc_f, r_f, loss_f = lax.fori_loop(0, tb // _GRP, group, carry0)

    # Chunk exit: persist the carry for the next chunk.
    carry_sc[0:1, :] = soc_f
    carry_sc[1:2, :] = r_f
    loss_sc[...] = loss_f

    @pl.when(c == pl.num_programs(0) - 1)
    def _():
        loss_out[...] = loss_f


def ae_pf_forward(soc_init, current, voltage_measured, *, key, e_crit=1.0,
                  estimation_stop=None, r_init=None, time_block=64):
    """Pallas implementation of AE_PF.forward.

    soc_init: (N, 1); current, voltage_measured: (1, T) (PyTorch conventions).
    Returns (loss (1,), voltage (N, set_size), soc_hist (N, set_size)).
    """
    n = soc_init.shape[0]
    set_size = current.shape[1]
    if estimation_stop is not None and estimation_stop <= set_size:
        set_size = estimation_stop
    T = int(set_size)
    TB = max(_GRP, (int(time_block) // _GRP) * _GRP)   # multiple of the store group
    Tp = ((T + TB - 1) // TB) * TB                     # pad time to a multiple of TB
    n_chunks = Tp // TB

    # Deterministic process noise, pre-scaled (folds R_std*exp(-t/100), f_std).
    kr, kf, ku = jax.random.split(key, 3)
    t_idx = jnp.arange(Tp, dtype=jnp.float32)
    r_scale = R_STD * jnp.exp(-t_idx / 100.0)
    r_noise = jax.random.normal(kr, (Tp, n), dtype=jnp.float32) * r_scale[:, None]
    f_noise = jax.random.normal(kf, (Tp, n), dtype=jnp.float32) * F_STD + F_MEAN
    u = jax.random.uniform(ku, (Tp,), dtype=jnp.float32)

    cur = current[0, :T].astype(jnp.float32)
    vmeas = voltage_measured[0, :T].astype(jnp.float32)
    if Tp > T:   # pad the tail with benign edge values; loss is masked in-kernel
        pad = Tp - T
        cur = jnp.concatenate([cur, jnp.full((pad,), cur[T - 1], jnp.float32)])
        vmeas = jnp.concatenate([vmeas, jnp.full((pad,), vmeas[T - 1], jnp.float32)])

    ecrit = jnp.asarray([e_crit], dtype=jnp.float32)   # nn.Parameter init = 1.0
    soc0 = soc_init.astype(jnp.float32).reshape(1, n)
    r0 = jnp.full((1, n), R_INIT if r_init is None else r_init, dtype=jnp.float32)

    # Resident (2N, N) column-oriented cumulative-sum constant:
    #   row j     : [k <= j]  -> inclusive cumsum of the weights
    #   row N + j : [k <  j]  -> exclusive cumsum (bit-identical partial sums)
    idx = jnp.arange(n)
    tril_incl = (idx[None, :] <= idx[:, None]).astype(jnp.float32)
    tril_strict = (idx[None, :] < idx[:, None]).astype(jnp.float32)
    tril2 = jnp.concatenate([tril_incl, tril_strict], axis=0)

    kernel = functools.partial(_pf_kernel, n, T, TB)
    grid_spec = pltpu.PrefetchScalarGridSpec(
        num_scalar_prefetch=4,
        grid=(n_chunks,),
        in_specs=[
            pl.BlockSpec((1, n), lambda c, *_: (0, 0)),        # soc_init row
            pl.BlockSpec((1, n), lambda c, *_: (0, 0)),        # R_init row
            pl.BlockSpec((2 * n, n), lambda c, *_: (0, 0)),    # triangular const
            pl.BlockSpec((TB, n), lambda c, *_: (c, 0)),       # R noise chunk
            pl.BlockSpec((TB, n), lambda c, *_: (c, 0)),       # f noise chunk
        ],
        out_specs=[
            pl.BlockSpec((TB, n), lambda c, *_: (c, 0)),       # voltage history
            pl.BlockSpec((TB, n), lambda c, *_: (c, 0)),       # soc history
            pl.BlockSpec((1, 1), lambda c, *_: (0, 0)),        # loss (last chunk)
        ],
        scratch_shapes=[
            pltpu.VMEM((8, n), jnp.float32),   # carried state rows [soc; R]
            pltpu.VMEM((1, 1), jnp.float32),   # running loss across chunks
        ],
    )

    volt_tn, soc_tn, loss = pl.pallas_call(
        kernel,
        out_shape=(jax.ShapeDtypeStruct((Tp, n), jnp.float32),
                   jax.ShapeDtypeStruct((Tp, n), jnp.float32),
                   jax.ShapeDtypeStruct((1, 1), jnp.float32)),
        grid_spec=grid_spec,
        compiler_params=pltpu.CompilerParams(
            dimension_semantics=("arbitrary",)),   # time is inherently serial
    )(cur, vmeas, u, ecrit, soc0, r0, tril2, r_noise, f_noise)

    # back to PyTorch layout: (N, T); loss has shape (1,) like the reference.
    return loss[0], volt_tn[:T].T, soc_tn[:T].T


if __name__ == "__main__":
    key = jax.random.PRNGKey(0)
    k_soc, k_cur, k_vm, k_noise = jax.random.split(key, 4)

    n_particles, seq = 128, 100   # small shapes: 128 particles, 100 time steps
    soc_init = 0.9 + 0.1 * jax.random.uniform(k_soc, (n_particles, 1),
                                              dtype=jnp.float32)
    current = 1.0 + 0.1 * jax.random.uniform(k_cur, (1, seq), dtype=jnp.float32)
    voltage_measured = 4.0 + 0.05 * jax.random.normal(k_vm, (1, seq),
                                                      dtype=jnp.float32)

    loss, voltage, soc_hist = ae_pf_forward(soc_init, current, voltage_measured,
                                            key=k_noise, e_crit=1.0)
    jax.block_until_ready((loss, voltage, soc_hist))

    assert loss.shape == (1,)
    assert voltage.shape == (n_particles, seq)
    assert soc_hist.shape == (n_particles, seq)
    assert bool(jnp.all(jnp.isfinite(loss)))
    assert bool(jnp.all(jnp.isfinite(voltage)))
    assert bool(jnp.all((soc_hist > 0.0) & (soc_hist <= 1.0)))
    print("KERNEL_OK")
</pallas_src>

<mosaic_0001>
module attributes {stable_mosaic.version = 11 : i64} {
  func.func @_pf_kernel(%arg0: i32, %arg1: memref<128xf32, #tpu.memory_space<smem>>, %arg2: memref<128xf32, #tpu.memory_space<smem>>, %arg3: memref<128xf32, #tpu.memory_space<smem>>, %arg4: memref<1xf32, #tpu.memory_space<smem>>, %arg5: memref<1x128xf32, #tpu.memory_space<vmem>>, %arg6: memref<1x128xf32, #tpu.memory_space<vmem>>, %arg7: memref<256x128xf32, #tpu.memory_space<vmem>>, %arg8: memref<64x128xf32, #tpu.memory_space<vmem>>, %arg9: memref<64x128xf32, #tpu.memory_space<vmem>>, %arg10: memref<64x128xf32, #tpu.memory_space<vmem>>, %arg11: memref<64x128xf32, #tpu.memory_space<vmem>>, %arg12: memref<1x1xf32, #tpu.memory_space<vmem>>, %arg13: memref<8x128xf32, #tpu.memory_space<vmem>>, %arg14: memref<1x1xf32, #tpu.memory_space<vmem>>) attributes {dimension_semantics = [#tpu.dimension_semantics<arbitrary>], iteration_bounds = array<i64: 2>, scalar_prefetch = 4 : i64, scratch_operands = 2 : i64, tpu.core_type = #tpu.core_type<tc>, window_params = [{pipeline_mode = #tpu.pipeline_mode<synchronous>, transform_indices = @transform_0, window_bounds = array<i64: 1, 128>}, {pipeline_mode = #tpu.pipeline_mode<synchronous>, transform_indices = @transform_1, window_bounds = array<i64: 1, 128>}, {pipeline_mode = #tpu.pipeline_mode<synchronous>, transform_indices = @transform_2, window_bounds = array<i64: 256, 128>}, {transform_indices = @transform_3, window_bounds = array<i64: 64, 128>}, {transform_indices = @transform_4, window_bounds = array<i64: 64, 128>}, {transform_indices = @transform_5, window_bounds = array<i64: 64, 128>}, {transform_indices = @transform_6, window_bounds = array<i64: 64, 128>}, {pipeline_mode = #tpu.pipeline_mode<synchronous>, transform_indices = @transform_7, window_bounds = array<i64: 1, 1>}]} {
    %c0_i32 = arith.constant 0 : i32
    %0 = arith.cmpi eq, %arg0, %c0_i32 : i32
    %1 = arith.extui %0 : i1 to i32
    %c0_i32_0 = arith.constant 0 : i32
    %2 = arith.cmpi ne, %1, %c0_i32_0 : i32
    scf.if %2 {
      %cst_19 = arith.constant 0.000000e+00 : f32
      %27 = vector.broadcast %cst_19 : f32 to vector<8x128xf32>
      %c0_20 = arith.constant 0 : index
      %c0_21 = arith.constant 0 : index
      %28 = vector.load %arg13[%c0_20, %c0_21] : memref<8x128xf32, #tpu.memory_space<vmem>>, vector<8x128xf32>
      tpu.vector_store %arg13[%c0_20, %c0_21], %27 {strides = array<i32>} : memref<8x128xf32, #tpu.memory_space<vmem>>, vector<8x128xf32>,
      %c0_22 = arith.constant 0 : index
      %c0_23 = arith.constant 0 : index
      %29 = vector.load %arg5[%c0_22, %c0_23] : memref<1x128xf32, #tpu.memory_space<vmem>>, vector<1x128xf32>
      %c0_24 = arith.constant 0 : index
      %c0_25 = arith.constant 0 : index
      %30 = vector.load %arg13[%c0_24, %c0_25] : memref<8x128xf32, #tpu.memory_space<vmem>>, vector<1x128xf32>
      tpu.vector_store %arg13[%c0_24, %c0_25], %29 {strides = array<i32>} : memref<8x128xf32, #tpu.memory_space<vmem>>, vector<1x128xf32>,
      %c0_26 = arith.constant 0 : index
      %c0_27 = arith.constant 0 : index
      %31 = vector.load %arg6[%c0_26, %c0_27] : memref<1x128xf32, #tpu.memory_space<vmem>>, vector<1x128xf32>
      %c1_28 = arith.constant 1 : index
      %c0_29 = arith.constant 0 : index
      %32 = vector.load %arg13[%c1_28, %c0_29] : memref<8x128xf32, #tpu.memory_space<vmem>>, vector<1x128xf32>
      tpu.vector_store %arg13[%c1_28, %c0_29], %31 {strides = array<i32>} : memref<8x128xf32, #tpu.memory_space<vmem>>, vector<1x128xf32>,
      %cst_30 = arith.constant 0.000000e+00 : f32
      %33 = vector.broadcast %cst_30 : f32 to vector<1x1xf32>
      %c0_31 = arith.constant 0 : index
      %c0_32 = arith.constant 0 : index
      %34 = vector.load %arg14[%c0_31, %c0_32] : memref<1x1xf32, #tpu.memory_space<vmem>>, vector<1x1xf32>
      tpu.vector_store %arg14[%c0_31, %c0_32], %33 {strides = array<i32>} : memref<1x1xf32, #tpu.memory_space<vmem>>, vector<1x1xf32>,
    } else {
    }
    %c0 = arith.constant 0 : index
    %3 = memref.load %arg4[%c0] : memref<1xf32, #tpu.memory_space<smem>>
    %cst = arith.constant 3.80703495E-5 : f32
    %4 = arith.mulf %cst, %3 : f32
    %5 = tpu.iota {dimensions = array<i32: 1>} : vector<1x128xi32>
    %6 = arith.sitofp %5 : vector<1x128xi32> to vector<1x128xf32>
    %cst_1 = arith.constant 7.812500e-03 : f32
    %7 = vector.broadcast %cst_1 : f32 to vector<1x128xf32>
    %8 = arith.mulf %6, %7 : vector<1x128xf32>
    %9 = tpu.iota {dimensions = array<i32: 0>} : vector<128x1xi32>
    %c127_i32 = arith.constant 127 : i32
    %10 = vector.broadcast %c127_i32 : i32 to vector<128x1xi32>
    %11 = arith.cmpi eq, %9, %10 : vector<128x1xi32>
    %cst_2 = arith.constant 1.000000e+30 : f32
    %cst_3 = arith.constant 0.000000e+00 : f32
    %12 = vector.broadcast %cst_2 : f32 to vector<128x1xf32>
    %13 = vector.broadcast %cst_3 : f32 to vector<128x1xf32>
    %14 = arith.select %11, %12, %13 : vector<128x1xi1>, vector<128x1xf32>
    %15 = tpu.iota {dimensions = array<i32: 0>} : vector<8x1xi32>
    %c0_4 = arith.constant 0 : index
    %c0_5 = arith.constant 0 : index
    %16 = vector.load %arg13[%c0_4, %c0_5] : memref<8x128xf32, #tpu.memory_space<vmem>>, vector<1x128xf32>
    %c1 = arith.constant 1 : index
    %c0_6 = arith.constant 0 : index
    %17 = vector.load %arg13[%c1, %c0_6] : memref<8x128xf32, #tpu.memory_space<vmem>>, vector<1x128xf32>
    %c0_7 = arith.constant 0 : index
    %c0_8 = arith.constant 0 : index
    %18 = vector.load %arg14[%c0_7, %c0_8] : memref<1x1xf32, #tpu.memory_space<vmem>>, vector<1x1xf32>
    %c0_i32_9 = arith.constant 0 : i32
    %c8_i32 = arith.constant 8 : i32
    %19 = arith.addi %c0_i32_9, %c8_i32 : i32
    %c1_i32 = arith.constant 1 : i32
    %20:3 = scf.for %arg15 = %c0_i32_9 to %19 step %c1_i32 iter_args(%arg16 = %16, %arg17 = %17, %arg18 = %18) -> (vector<1x128xf32>, vector<1x128xf32>, vector<1x1xf32>)  : i32 {
      %c8_i32_19 = arith.constant 8 : i32
      %27 = arith.muli %arg15, %c8_i32_19 : i32
      %28 = tpu.assume_multiple %27, 8 : i32
      %cst_20 = arith.constant 0.000000e+00 : f32
      %29 = vector.broadcast %cst_20 : f32 to vector<8x128xf32>
      %cst_21 = arith.constant 0.000000e+00 : f32
      %30 = vector.broadcast %cst_21 : f32 to vector<8x128xf32>
      %c64_i32 = arith.constant 64 : i32
      %31 = arith.muli %arg0, %c64_i32 : i32
      %32 = arith.addi %31, %28 : i32
      %c0_i32_22 = arith.constant 0 : i32
      %33 = arith.addi %32, %c0_i32_22 : i32
      %c0_i32_23 = arith.constant 0 : i32
      %34 = arith.addi %28, %c0_i32_23 : i32
      %35 = arith.index_cast %34 : i32 to index
      %c0_24 = arith.constant 0 : index
      %36 = vector.load %arg8[%35, %c0_24] : memref<64x128xf32, #tpu.memory_space<vmem>>, vector<1x128xf32>
      %c0_i32_25 = arith.constant 0 : i32
      %37 = arith.addi %28, %c0_i32_25 : i32
      %38 = arith.index_cast %37 : i32 to index
      %c0_26 = arith.constant 0 : index
      %39 = vector.load %arg9[%38, %c0_26] : memref<64x128xf32, #tpu.memory_space<vmem>>, vector<1x128xf32>
      %c1_i32_27 = arith.constant 1 : i32
      %40 = arith.subi %33, %c1_i32_27 : i32
      %c0_i32_28 = arith.constant 0 : i32
      %41 = arith.maxsi %40, %c0_i32_28 : i32
      %42 = arith.index_cast %41 : i32 to index
      %43 = memref.load %arg1[%42] : memref<128xf32, #tpu.memory_space<smem>>
      %44 = arith.index_cast %33 : i32 to index
      %45 = memref.load %arg1[%44] : memref<128xf32, #tpu.memory_space<smem>>
      %46 = arith.index_cast %33 : i32 to index
      %47 = memref.load %arg2[%46] : memref<128xf32, #tpu.memory_space<smem>>
      %48 = arith.index_cast %33 : i32 to index
      %49 = memref.load %arg3[%48] : memref<128xf32, #tpu.memory_space<smem>>
      %50 = arith.addf %arg17, %36 : vector<1x128xf32>
      %cst_29 = arith.constant 1.000000e+00 : f32
      %51 = vector.broadcast %cst_29 : f32 to vector<1x128xf32>
      %52 = arith.subf %arg16, %51 : vector<1x128xf32>
      %cst_30 = arith.constant 0.637264609 : f32
      %53 = vector.broadcast %cst_30 : f32 to vector<1x128xf32>
      %54 = arith.mulf %53, %52 : vector<1x128xf32>
      %55 = math.exp %54 : vector<1x128xf32>
      %cst_31 = arith.constant 5.73260832 : f32
      %56 = vector.broadcast %cst_31 : f32 to vector<1x128xf32>
      %57 = arith.mulf %56, %55 : vector<1x128xf32>
      %cst_32 = arith.constant -1.59614491 : f32
      %58 = vector.broadcast %cst_32 : f32 to vector<1x128xf32>
      %59 = arith.addf %58, %57 : vector<1x128xf32>
      %cst_33 = arith.constant 1.000000e+00 : f32
      %60 = vector.broadcast %cst_33 : f32 to vector<1x128xf32>
      %61 = arith.subf %arg16, %60 : vector<1x128xf32>
      %cst_34 = arith.constant -2.23738194 : f32
      %62 = vector.broadcast %cst_34 : f32 to vector<1x128xf32>
      %63 = arith.mulf %62, %61 : vector<1x128xf32>
      %64 = arith.addf %59, %63 : vector<1x128xf32>
      %65 = math.sqrt %arg16 : vector<1x128xf32>
      %cst_35 = arith.constant -2.54478955 : f32
      %66 = vector.broadcast %cst_35 : f32 to vector<1x128xf32>
      %67 = arith.mulf %66, %65 : vector<1x128xf32>
      %68 = math.exp %67 : vector<1x128xf32>
      %cst_36 = arith.constant 0.0784895569 : f32
      %69 = vector.broadcast %cst_36 : f32 to vector<1x128xf32>
      %70 = arith.subf %69, %68 : vector<1x128xf32>
      %cst_37 = arith.constant 0.641237199 : f32
      %71 = vector.broadcast %cst_37 : f32 to vector<1x128xf32>
      %72 = arith.mulf %71, %70 : vector<1x128xf32>
      %73 = arith.addf %64, %72 : vector<1x128xf32>
      %74 = vector.broadcast %43 : f32 to vector<1x128xf32>
      %75 = arith.mulf %74, %50 : vector<1x128xf32>
      %76 = arith.subf %73, %75 : vector<1x128xf32>
      %77 = arith.mulf %43, %4 : f32
      %78 = vector.broadcast %77 : f32 to vector<1x128xf32>
      %79 = arith.mulf %78, %76 : vector<1x128xf32>
      %80 = arith.subf %arg16, %79 : vector<1x128xf32>
      %81 = arith.addf %80, %39 : vector<1x128xf32>
      %cst_38 = arith.constant 1.000000e+00 : f32
      %82 = vector.broadcast %cst_38 : f32 to vector<1x128xf32>
      %83 = arith.cmpf ogt, %81, %82 : vector<1x128xf32>
      %cst_39 = arith.constant 1.000000e+00 : f32
      %84 = vector.broadcast %cst_39 : f32 to vector<1x128xf32>
      %85 = arith.select %83, %84, %81 : vector<1x128xi1>, vector<1x128xf32>
      %cst_40 = arith.constant 0.000000e+00 : f32
      %86 = vector.broadcast %cst_40 : f32 to vector<1x128xf32>
      %87 = arith.cmpf olt, %85, %86 : vector<1x128xf32>
      %cst_41 = arith.constant 1.000000e-10 : f32
      %88 = vector.broadcast %cst_41 : f32 to vector<1x128xf32>
      %89 = arith.select %87, %88, %85 : vector<1x128xi1>, vector<1x128xf32>
      %cst_42 = arith.constant 1.000000e+00 : f32
      %90 = vector.broadcast %cst_42 : f32 to vector<1x128xf32>
      %91 = arith.subf %89, %90 : vector<1x128xf32>
      %cst_43 = arith.constant 0.637264609 : f32
      %92 = vector.broadcast %cst_43 : f32 to vector<1x128xf32>
      %93 = arith.mulf %92, %91 : vector<1x128xf32>
      %94 = math.exp %93 : vector<1x128xf32>
      %cst_44 = arith.constant 5.73260832 : f32
      %95 = vector.broadcast %cst_44 : f32 to vector<1x128xf32>
      %96 = arith.mulf %95, %94 : vector<1x128xf32>
      %cst_45 = arith.constant -1.59614491 : f32
      %97 = vector.broadcast %cst_45 : f32 to vector<1x128xf32>
      %98 = arith.addf %97, %96 : vector<1x128xf32>
      %cst_46 = arith.constant 1.000000e+00 : f32
      %99 = vector.broadcast %cst_46 : f32 to vector<1x128xf32>
      %100 = arith.subf %89, %99 : vector<1x128xf32>
      %cst_47 = arith.constant -2.23738194 : f32
      %101 = vector.broadcast %cst_47 : f32 to vector<1x128xf32>
      %102 = arith.mulf %101, %100 : vector<1x128xf32>
      %103 = arith.addf %98, %102 : vector<1x128xf32>
      %104 = math.sqrt %89 : vector<1x128xf32>
      %cst_48 = arith.constant -2.54478955 : f32
      %105 = vector.broadcast %cst_48 : f32 to vector<1x128xf32>
      %106 = arith.mulf %105, %104 : vector<1x128xf32>
      %107 = math.exp %106 : vector<1x128xf32>
      %cst_49 = arith.constant 0.0784895569 : f32
      %108 = vector.broadcast %cst_49 : f32 to vector<1x128xf32>
      %109 = arith.subf %108, %107 : vector<1x128xf32>
      %cst_50 = arith.constant 0.641237199 : f32
      %110 = vector.broadcast %cst_50 : f32 to vector<1x128xf32>
      %111 = arith.mulf %110, %109 : vector<1x128xf32>
      %112 = arith.addf %103, %111 : vector<1x128xf32>
      %113 = vector.broadcast %45 : f32 to vector<1x128xf32>
      %114 = arith.mulf %113, %50 : vector<1x128xf32>
      %115 = arith.subf %112, %114 : vector<1x128xf32>
      %116 = vector.broadcast %47 : f32 to vector<1x128xf32>
      %117 = arith.subf %115, %116 : vector<1x128xf32>
      %cst_51 = arith.constant 1.000000e+02 : f32
      %118 = vector.broadcast %cst_51 : f32 to vector<1x128xf32>
      %119 = arith.mulf %117, %118 : vector<1x128xf32>
      %cst_52 = arith.constant 5.000000e-01 : f32
      %120 = vector.broadcast %cst_52 : f32 to vector<1x128xf32>
      %121 = arith.mulf %120, %119 : vector<1x128xf32>
      %122 = arith.mulf %121, %119 : vector<1x128xf32>
      %cst_53 = arith.constant 3.68623161 : f32
      %123 = vector.broadcast %cst_53 : f32 to vector<1x128xf32>
      %124 = arith.subf %123, %122 : vector<1x128xf32>
      %cst_54 = arith.constant dense<0xFF800000> : vector<1xf32>
      %125 = vector.multi_reduction <maximumf>, %124, %cst_54 [1] : vector<1x128xf32> to vector<1xf32>
      %126 = vector.shape_cast %125 : vector<1xf32> to vector<1x1xf32>
      %127 = vector.broadcast %126 : vector<1x1xf32> to vector<1x128xf32>
      %128 = arith.subf %124, %127 : vector<1x128xf32>
      %129 = math.exp %128 : vector<1x128xf32>
      %cst_55 = arith.constant dense<0.000000e+00> : vector<1xf32>
      %130 = vector.multi_reduction <add>, %129, %cst_55 [1] : vector<1x128xf32> to vector<1xf32>
      %131 = vector.shape_cast %130 : vector<1xf32> to vector<1x1xf32>
      %132 = math.log %131 : vector<1x1xf32>
      %133 = arith.addf %126, %132 : vector<1x1xf32>
      %cst_56 = arith.constant 4.85203028 : f32
      %134 = vector.broadcast %cst_56 : f32 to vector<1x1xf32>
      %135 = arith.subf %133, %134 : vector<1x1xf32>
      %c100_i32 = arith.constant 100 : i32
      %136 = arith.cmpi slt, %33, %c100_i32 : i32
      %cst_57 = arith.constant 0.000000e+00 : f32
      %137 = vector.broadcast %cst_57 : f32 to vector<1x1xf32>
      %138 = arith.select %136, %135, %137 : vector<1x1xf32>
      %139 = arith.addf %arg18, %138 : vector<1x1xf32>
      %c0_i32_58 = arith.constant 0 : i32
      %140 = vector.broadcast %c0_i32_58 : i32 to vector<8x1xi32>
      %141 = arith.cmpi eq, %15, %140 : vector<8x1xi32>
      %cst_59 = arith.constant 0.000000e+00 : f32
      %142 = vector.shape_cast %141 : vector<8x1xi1> to vector<8x1xi1>
      %143 = vector.broadcast %142 : vector<8x1xi1> to vector<8x128xi1>
      %144 = vector.shape_cast %129 : vector<1x128xf32> to vector<1x128xf32>
      %145 = vector.broadcast %144 : vector<1x128xf32> to vector<8x128xf32>
      %146 = vector.broadcast %cst_59 : f32 to vector<8x128xf32>
      %147 = arith.select %143, %145, %146 : vector<8x128xi1>, vector<8x128xf32>
      %148 = tpu.transpose %147, [1, 0] : vector<8x128xf32> -> vector<128x8xf32>
      %c0_60 = arith.constant 0 : index
      %c0_61 = arith.constant 0 : index
      %149 = vector.load %arg7[%c0_60, %c0_61] : memref<256x128xf32, #tpu.memory_space<vmem>>, vector<256x128xf32>
      %cst_62 = arith.constant dense<0.000000e+00> : vector<256x8xf32>
      %150 = tpu.matmul %149, %148, %cst_62 {dimension_numbers = #tpu.dot_dimension_numbers<[1], [0], [0], [1], [0, 0, 1, 1], [], []>} : vector<256x128xf32>, vector<128x8xf32>, vector<256x8xf32> -> vector<256x8xf32>
      %151 = vector.extract_strided_slice %150 {offsets = [0, 0], sizes = [128, 1], strides = [1, 1]} : vector<256x8xf32> to vector<128x1xf32>
      %152 = vector.extract_strided_slice %150 {offsets = [128, 0], sizes = [128, 1], strides = [1, 1]} : vector<256x8xf32> to vector<128x1xf32>
      %153 = arith.addf %151, %14 : vector<128x1xf32>
      %cst_63 = arith.constant 7.812500e-03 : f32
      %154 = arith.mulf %49, %cst_63 : f32
      %155 = vector.broadcast %154 : f32 to vector<1x128xf32>
      %156 = arith.addf %8, %155 : vector<1x128xf32>
      %157 = vector.broadcast %131 : vector<1x1xf32> to vector<1x128xf32>
      %158 = arith.mulf %156, %157 : vector<1x128xf32>
      %159 = vector.broadcast %158 : vector<1x128xf32> to vector<128x128xf32>
      %160 = vector.broadcast %152 : vector<128x1xf32> to vector<128x128xf32>
      %161 = arith.cmpf oge, %159, %160 : vector<128x128xf32>
      %162 = vector.broadcast %158 : vector<1x128xf32> to vector<128x128xf32>
      %163 = vector.broadcast %153 : vector<128x1xf32> to vector<128x128xf32>
      %164 = arith.cmpf olt, %162, %163 : vector<128x128xf32>
      %165 = arith.andi %161, %164 : vector<128x128xi1>
      %166 = arith.extui %165 : vector<128x128xi1> to vector<128x128xi32>
      %167 = arith.sitofp %166 : vector<128x128xi32> to vector<128x128xf32>
      %c0_i32_64 = arith.constant 0 : i32
      %168 = vector.broadcast %c0_i32_64 : i32 to vector<8x1xi32>
      %169 = arith.cmpi eq, %15, %168 : vector<8x1xi32>
      %c1_i32_65 = arith.constant 1 : i32
      %170 = vector.broadcast %c1_i32_65 : i32 to vector<8x1xi32>
      %171 = arith.cmpi eq, %15, %170 : vector<8x1xi32>
      %172 = vector.shape_cast %171 : vector<8x1xi1> to vector<8x1xi1>
      %173 = vector.broadcast %172 : vector<8x1xi1> to vector<8x128xi1>
      %174 = vector.shape_cast %50 : vector<1x128xf32> to vector<1x128xf32>
      %175 = vector.broadcast %174 : vector<1x128xf32> to vector<8x128xf32>
      %176 = vector.shape_cast %115 : vector<1x128xf32> to vector<1x128xf32>
      %177 = vector.broadcast %176 : vector<1x128xf32> to vector<8x128xf32>
      %178 = arith.select %173, %175, %177 : vector<8x128xi1>, vector<8x128xf32>
      %179 = vector.shape_cast %169 : vector<8x1xi1> to vector<8x1xi1>
      %180 = vector.broadcast %179 : vector<8x1xi1> to vector<8x128xi1>
      %181 = vector.shape_cast %89 : vector<1x128xf32> to vector<1x128xf32>
      %182 = vector.broadcast %181 : vector<1x128xf32> to vector<8x128xf32>
      %183 = arith.select %180, %182, %178 : vector<8x128xi1>, vector<8x128xf32>
      %cst_66 = arith.constant dense<0.000000e+00> : vector<8x128xf32>
      %184 = tpu.matmul %183, %167, %cst_66 {dimension_numbers = #tpu.dot_dimension_numbers<[1], [0], [0], [1], [0, 0, 1, 1], [], []>} : vector<8x128xf32>, vector<128x128xf32>, vector<8x128xf32> -> vector<8x128xf32>
      %185 = vector.extract_strided_slice %184 {offsets = [0, 0], sizes = [1, 128], strides = [1, 1]} : vector<8x128xf32> to vector<1x128xf32>
      %186 = vector.extract_strided_slice %184 {offsets = [1, 0], sizes = [1, 128], strides = [1, 1]} : vector<8x128xf32> to vector<1x128xf32>
      %187 = vector.extract_strided_slice %184 {offsets = [2, 0], sizes = [1, 128], strides = [1, 1]} : vector<8x128xf32> to vector<1x128xf32>
      %c0_i32_67 = arith.constant 0 : i32
      %188 = vector.broadcast %c0_i32_67 : i32 to vector<8x1xi32>
      %189 = arith.cmpi eq, %15, %188 : vector<8x1xi32>
      %190 = vector.shape_cast %189 : vector<8x1xi1> to vector<8x1xi1>
      %191 = vector.broadcast %190 : vector<8x1xi1> to vector<8x128xi1>
      %192 = vector.shape_cast %187 : vector<1x128xf32> to vector<1x128xf32>
      %193 = vector.broadcast %192 : vector<1x128xf32> to vector<8x128xf32>
      %194 = arith.select %191, %193, %29 : vector<8x128xi1>, vector<8x128xf32>
      %c0_i32_68 = arith.constant 0 : i32
      %195 = vector.broadcast %c0_i32_68 : i32 to vector<8x1xi32>
      %196 = arith.cmpi eq, %15, %195 : vector<8x1xi32>
      %197 = vector.shape_cast %196 : vector<8x1xi1> to vector<8x1xi1>
      %198 = vector.broadcast %197 : vector<8x1xi1> to vector<8x128xi1>
      %199 = vector.shape_cast %185 : vector<1x128xf32> to vector<1x128xf32>
      %200 = vector.broadcast %199 : vector<1x128xf32> to vector<8x128xf32>
      %201 = arith.select %198, %200, %30 : vector<8x128xi1>, vector<8x128xf32>
      %c64_i32_69 = arith.constant 64 : i32
      %202 = arith.muli %arg0, %c64_i32_69 : i32
      %203 = arith.addi %202, %28 : i32
      %c1_i32_70 = arith.constant 1 : i32
      %204 = arith.addi %203, %c1_i32_70 : i32
      %c1_i32_71 = arith.constant 1 : i32
      %205 = arith.addi %28, %c1_i32_71 : i32
      %206 = arith.index_cast %205 : i32 to index
      %c0_72 = arith.constant 0 : index
      %207 = vector.load %arg8[%206, %c0_72] : memref<64x128xf32, #tpu.memory_space<vmem>>, vector<1x128xf32>
      %c1_i32_73 = arith.constant 1 : i32
      %208 = arith.addi %28, %c1_i32_73 : i32
      %209 = arith.index_cast %208 : i32 to index
      %c0_74 = arith.constant 0 : index
      %210 = vector.load %arg9[%209, %c0_74] : memref<64x128xf32, #tpu.memory_space<vmem>>, vector<1x128xf32>
      %c1_i32_75 = arith.constant 1 : i32
      %211 = arith.subi %204, %c1_i32_75 : i32
      %c0_i32_76 = arith.constant 0 : i32
      %212 = arith.maxsi %211, %c0_i32_76 : i32
      %213 = arith.index_cast %212 : i32 to index
      %214 = memref.load %arg1[%213] : memref<128xf32, #tpu.memory_space<smem>>
      %215 = arith.index_cast %204 : i32 to index
      %216 = memref.load %arg1[%215] : memref<128xf32, #tpu.memory_space<smem>>
      %217 = arith.index_cast %204 : i32 to index
      %218 = memref.load %arg2[%217] : memref<128xf32, #tpu.memory_space<smem>>
      %219 = arith.index_cast %204 : i32 to index
      %220 = memref.load %arg3[%219] : memref<128xf32, #tpu.memory_space<smem>>
      %221 = arith.addf %186, %207 : vector<1x128xf32>
      %cst_77 = arith.constant 1.000000e+00 : f32
      %222 = vector.broadcast %cst_77 : f32 to vector<1x128xf32>
      %223 = arith.subf %185, %222 : vector<1x128xf32>
      %cst_78 = arith.constant 0.637264609 : f32
      %224 = vector.broadcast %cst_78 : f32 to vector<1x128xf32>
      %225 = arith.mulf %224, %223 : vector<1x128xf32>
      %226 = math.exp %225 : vector<1x128xf32>
      %cst_79 = arith.constant 5.73260832 : f32
      %227 = vector.broadcast %cst_79 : f32 to vector<1x128xf32>
      %228 = arith.mulf %227, %226 : vector<1x128xf32>
      %cst_80 = arith.constant -1.59614491 : f32
      %229 = vector.broadcast %cst_80 : f32 to vector<1x128xf32>
      %230 = arith.addf %229, %228 : vector<1x128xf32>
      %cst_81 = arith.constant 1.000000e+00 : f32
      %231 = vector.broadcast %cst_81 : f32 to vector<1x128xf32>
      %232 = arith.subf %185, %231 : vector<1x128xf32>
      %cst_82 = arith.constant -2.23738194 : f32
      %233 = vector.broadcast %cst_82 : f32 to vector<1x128xf32>
      %234 = arith.mulf %233, %232 : vector<1x128xf32>
      %235 = arith.addf %230, %234 : vector<1x128xf32>
      %236 = math.sqrt %185 : vector<1x128xf32>
      %cst_83 = arith.constant -2.54478955 : f32
      %237 = vector.broadcast %cst_83 : f32 to vector<1x128xf32>
      %238 = arith.mulf %237, %236 : vector<1x128xf32>
      %239 = math.exp %238 : vector<1x128xf32>
      %cst_84 = arith.constant 0.0784895569 : f32
      %240 = vector.broadcast %cst_84 : f32 to vector<1x128xf32>
      %241 = arith.subf %240, %239 : vector<1x128xf32>
      %cst_85 = arith.constant 0.641237199 : f32
      %242 = vector.broadcast %cst_85 : f32 to vector<1x128xf32>
      %243 = arith.mulf %242, %241 : vector<1x128xf32>
      %244 = arith.addf %235, %243 : vector<1x128xf32>
      %245 = vector.broadcast %214 : f32 to vector<1x128xf32>
      %246 = arith.mulf %245, %221 : vector<1x128xf32>
      %247 = arith.subf %244, %246 : vector<1x128xf32>
      %248 = arith.mulf %214, %4 : f32
      %249 = vector.broadcast %248 : f32 to vector<1x128xf32>
      %250 = arith.mulf %249, %247 : vector<1x128xf32>
      %251 = arith.subf %185, %250 : vector<1x128xf32>
      %252 = arith.addf %251, %210 : vector<1x128xf32>
      %cst_86 = arith.constant 1.000000e+00 : f32
      %253 = vector.broadcast %cst_86 : f32 to vector<1x128xf32>
      %254 = arith.cmpf ogt, %252, %253 : vector<1x128xf32>
      %cst_87 = arith.constant 1.000000e+00 : f32
      %255 = vector.broadcast %cst_87 : f32 to vector<1x128xf32>
      %256 = arith.select %254, %255, %252 : vector<1x128xi1>, vector<1x128xf32>
      %cst_88 = arith.constant 0.000000e+00 : f32
      %257 = vector.broadcast %cst_88 : f32 to vector<1x128xf32>
      %258 = arith.cmpf olt, %256, %257 : vector<1x128xf32>
      %cst_89 = arith.constant 1.000000e-10 : f32
      %259 = vector.broadcast %cst_89 : f32 to vector<1x128xf32>
      %260 = arith.select %258, %259, %256 : vector<1x128xi1>, vector<1x128xf32>
      %cst_90 = arith.constant 1.000000e+00 : f32
      %261 = vector.broadcast %cst_90 : f32 to vector<1x128xf32>
      %262 = arith.subf %260, %261 : vector<1x128xf32>
      %cst_91 = arith.constant 0.637264609 : f32
      %263 = vector.broadcast %cst_91 : f32 to vector<1x128xf32>
      %264 = arith.mulf %263, %262 : vector<1x128xf32>
      %265 = math.exp %264 : vector<1x128xf32>
      %cst_92 = arith.constant 5.73260832 : f32
      %266 = vector.broadcast %cst_92 : f32 to vector<1x128xf32>
      %267 = arith.mulf %266, %265 : vector<1x128xf32>
      %cst_93 = arith.constant -1.59614491 : f32
      %268 = vector.broadcast %cst_93 : f32 to vector<1x128xf32>
      %269 = arith.addf %268, %267 : vector<1x128xf32>
      %cst_94 = arith.constant 1.000000e+00 : f32
      %270 = vector.broadcast %cst_94 : f32 to vector<1x128xf32>
      %271 = arith.subf %260, %270 : vector<1x128xf32>
      %cst_95 = arith.constant -2.23738194 : f32
      %272 = vector.broadcast %cst_95 : f32 to vector<1x128xf32>
      %273 = arith.mulf %272, %271 : vector<1x128xf32>
      %274 = arith.addf %269, %273 : vector<1x128xf32>
      %275 = math.sqrt %260 : vector<1x128xf32>
      %cst_96 = arith.constant -2.54478955 : f32
      %276 = vector.broadcast %cst_96 : f32 to vector<1x128xf32>
      %277 = arith.mulf %276, %275 : vector<1x128xf32>
      %278 = math.exp %277 : vector<1x128xf32>
      %cst_97 = arith.constant 0.0784895569 : f32
      %279 = vector.broadcast %cst_97 : f32 to vector<1x128xf32>
      %280 = arith.subf %279, %278 : vector<1x128xf32>
      %cst_98 = arith.constant 0.641237199 : f32
      %281 = vector.broadcast %cst_98 : f32 to vector<1x128xf32>
      %282 = arith.mulf %281, %280 : vector<1x128xf32>
      %283 = arith.addf %274, %282 : vector<1x128xf32>
      %284 = vector.broadcast %216 : f32 to vector<1x128xf32>
      %285 = arith.mulf %284, %221 : vector<1x128xf32>
      %286 = arith.subf %283, %285 : vector<1x128xf32>
      %287 = vector.broadcast %218 : f32 to vector<1x128xf32>
      %288 = arith.subf %286, %287 : vector<1x128xf32>
      %cst_99 = arith.constant 1.000000e+02 : f32
      %289 = vector.broadcast %cst_99 : f32 to vector<1x128xf32>
      %290 = arith.mulf %288, %289 : vector<1x128xf32>
      %cst_100 = arith.constant 5.000000e-01 : f32
      %291 = vector.broadcast %cst_100 : f32 to vector<1x128xf32>
      %292 = arith.mulf %291, %290 : vector<1x128xf32>
      %293 = arith.mulf %292, %290 : vector<1x128xf32>
      %cst_101 = arith.constant 3.68623161 : f32
      %294 = vector.broadcast %cst_101 : f32 to vector<1x128xf32>
      %295 = arith.subf %294, %293 : vector<1x128xf32>
      %cst_102 = arith.constant dense<0xFF800000> : vector<1xf32>
      %296 = vector.multi_reduction <maximumf>, %295, %cst_102 [1] : vector<1x128xf32> to vector<1xf32>
      %297 = vector.shape_cast %296 : vector<1xf32> to vector<1x1xf32>
      %298 = vector.broadcast %297 : vector<1x1xf32> to vector<1x128xf32>
      %299 = arith.subf %295, %298 : vector<1x128xf32>
      %300 = math.exp %299 : vector<1x128xf32>
      %cst_103 = arith.constant dense<0.000000e+00> : vector<1xf32>
      %301 = vector.multi_reduction <add>, %300, %cst_103 [1] : vector<1x128xf32> to vector<1xf32>
      %302 = vector.shape_cast %301 : vector<1xf32> to vector<1x1xf32>
      %303 = math.log %302 : vector<1x1xf32>
      %304 = arith.addf %297, %303 : vector<1x1xf32>
      %cst_104 = arith.constant 4.85203028 : f32
      %305 = vector.broadcast %cst_104 : f32 to vector<1x1xf32>
      %306 = arith.subf %304, %305 : vector<1x1xf32>
      %c100_i32_105 = arith.constant 100 : i32
      %307 = arith.cmpi slt, %204, %c100_i32_105 : i32
      %cst_106 = arith.constant 0.000000e+00 : f32
      %308 = vector.broadcast %cst_106 : f32 to vector<1x1xf32>
      %309 = arith.select %307, %306, %308 : vector<1x1xf32>
      %310 = arith.addf %139, %309 : vector<1x1xf32>
      %c0_i32_107 = arith.constant 0 : i32
      %311 = vector.broadcast %c0_i32_107 : i32 to vector<8x1xi32>
      %312 = arith.cmpi eq, %15, %311 : vector<8x1xi32>
      %cst_108 = arith.constant 0.000000e+00 : f32
      %313 = vector.shape_cast %312 : vector<8x1xi1> to vector<8x1xi1>
      %314 = vector.broadcast %313 : vector<8x1xi1> to vector<8x128xi1>
      %315 = vector.shape_cast %300 : vector<1x128xf32> to vector<1x128xf32>
      %316 = vector.broadcast %315 : vector<1x128xf32> to vector<8x128xf32>
      %317 = vector.broadcast %cst_108 : f32 to vector<8x128xf32>
      %318 = arith.select %314, %316, %317 : vector<8x128xi1>, vector<8x128xf32>
      %319 = tpu.transpose %318, [1, 0] : vector<8x128xf32> -> vector<128x8xf32>
      %c0_109 = arith.constant 0 : index
      %c0_110 = arith.constant 0 : index
      %320 = vector.load %arg7[%c0_109, %c0_110] : memref<256x128xf32, #tpu.memory_space<vmem>>, vector<256x128xf32>
      %cst_111 = arith.constant dense<0.000000e+00> : vector<256x8xf32>
      %321 = tpu.matmul %320, %319, %cst_111 {dimension_numbers = #tpu.dot_dimension_numbers<[1], [0], [0], [1], [0, 0, 1, 1], [], []>} : vector<256x128xf32>, vector<128x8xf32>, vector<256x8xf32> -> vector<256x8xf32>
      %322 = vector.extract_strided_slice %321 {offsets = [0, 0], sizes = [128, 1], strides = [1, 1]} : vector<256x8xf32> to vector<128x1xf32>
      %323 = vector.extract_strided_slice %321 {offsets = [128, 0], sizes = [128, 1], strides = [1, 1]} : vector<256x8xf32> to vector<128x1xf32>
      %324 = arith.addf %322, %14 : vector<128x1xf32>
      %cst_112 = arith.constant 7.812500e-03 : f32
      %325 = arith.mulf %220, %cst_112 : f32
      %326 = vector.broadcast %325 : f32 to vector<1x128xf32>
      %327 = arith.addf %8, %326 : vector<1x128xf32>
      %328 = vector.broadcast %302 : vector<1x1xf32> to vector<1x128xf32>
      %329 = arith.mulf %327, %328 : vector<1x128xf32>
      %330 = vector.broadcast %329 : vector<1x128xf32> to vector<128x128xf32>
      %331 = vector.broadcast %323 : vector<128x1xf32> to vector<128x128xf32>
      %332 = arith.cmpf oge, %330, %331 : vector<128x128xf32>
      %333 = vector.broadcast %329 : vector<1x128xf32> to vector<128x128xf32>
      %334 = vector.broadcast %324 : vector<128x1xf32> to vector<128x128xf32>
      %335 = arith.cmpf olt, %333, %334 : vector<128x128xf32>
      %336 = arith.andi %332, %335 : vector<128x128xi1>
      %337 = arith.extui %336 : vector<128x128xi1> to vector<128x128xi32>
      %338 = arith.sitofp %337 : vector<128x128xi32> to vector<128x128xf32>
      %c0_i32_113 = arith.constant 0 : i32
      %339 = vector.broadcast %c0_i32_113 : i32 to vector<8x1xi32>
      %340 = arith.cmpi eq, %15, %339 : vector<8x1xi32>
      %c1_i32_114 = arith.constant 1 : i32
      %341 = vector.broadcast %c1_i32_114 : i32 to vector<8x1xi32>
      %342 = arith.cmpi eq, %15, %341 : vector<8x1xi32>
      %343 = vector.shape_cast %342 : vector<8x1xi1> to vector<8x1xi1>
      %344 = vector.broadcast %343 : vector<8x1xi1> to vector<8x128xi1>
      %345 = vector.shape_cast %221 : vector<1x128xf32> to vector<1x128xf32>
      %346 = vector.broadcast %345 : vector<1x128xf32> to vector<8x128xf32>
      %347 = vector.shape_cast %286 : vector<1x128xf32> to vector<1x128xf32>
      %348 = vector.broadcast %347 : vector<1x128xf32> to vector<8x128xf32>
      %349 = arith.select %344, %346, %348 : vector<8x128xi1>, vector<8x128xf32>
      %350 = vector.shape_cast %340 : vector<8x1xi1> to vector<8x1xi1>
      %351 = vector.broadcast %350 : vector<8x1xi1> to vector<8x128xi1>
      %352 = vector.shape_cast %260 : vector<1x128xf32> to vector<1x128xf32>
      %353 = vector.broadcast %352 : vector<1x128xf32> to vector<8x128xf32>
      %354 = arith.select %351, %353, %349 : vector<8x128xi1>, vector<8x128xf32>
      %cst_115 = arith.constant dense<0.000000e+00> : vector<8x128xf32>
      %355 = tpu.matmul %354, %338, %cst_115 {dimension_numbers = #tpu.dot_dimension_numbers<[1], [0], [0], [1], [0, 0, 1, 1], [], []>} : vector<8x128xf32>, vector<128x128xf32>, vector<8x128xf32> -> vector<8x128xf32>
      %356 = vector.extract_strided_slice %355 {offsets = [0, 0], sizes = [1, 128], strides = [1, 1]} : vector<8x128xf32> to vector<1x128xf32>
      %357 = vector.extract_strided_slice %355 {offsets = [1, 0], sizes = [1, 128], strides = [1, 1]} : vector<8x128xf32> to vector<1x128xf32>
      %358 = vector.extract_strided_slice %355 {offsets = [2, 0], sizes = [1, 128], strides = [1, 1]} : vector<8x128xf32> to vector<1x128xf32>
      %c1_i32_116 = arith.constant 1 : i32
      %359 = vector.broadcast %c1_i32_116 : i32 to vector<8x1xi32>
      %360 = arith.cmpi eq, %15, %359 : vector<8x1xi32>
      %361 = vector.shape_cast %360 : vector<8x1xi1> to vector<8x1xi1>
      %362 = vector.broadcast %361 : vector<8x1xi1> to vector<8x128xi1>
      %363 = vector.shape_cast %358 : vector<1x128xf32> to vector<1x128xf32>
      %364 = vector.broadcast %363 : vector<1x128xf32> to vector<8x128xf32>
      %365 = arith.select %362, %364, %194 : vector<8x128xi1>, vector<8x128xf32>
      %c1_i32_117 = arith.constant 1 : i32
      %366 = vector.broadcast %c1_i32_117 : i32 to vector<8x1xi32>
      %367 = arith.cmpi eq, %15, %366 : vector<8x1xi32>
      %368 = vector.shape_cast %367 : vector<8x1xi1> to vector<8x1xi1>
      %369 = vector.broadcast %368 : vector<8x1xi1> to vector<8x128xi1>
      %370 = vector.shape_cast %356 : vector<1x128xf32> to vector<1x128xf32>
      %371 = vector.broadcast %370 : vector<1x128xf32> to vector<8x128xf32>
      %372 = arith.select %369, %371, %201 : vector<8x128xi1>, vector<8x128xf32>
      %c64_i32_118 = arith.constant 64 : i32
      %373 = arith.muli %arg0, %c64_i32_118 : i32
      %374 = arith.addi %373, %28 : i32
      %c2_i32 = arith.constant 2 : i32
      %375 = arith.addi %374, %c2_i32 : i32
      %c2_i32_119 = arith.constant 2 : i32
      %376 = arith.addi %28, %c2_i32_119 : i32
      %377 = arith.index_cast %376 : i32 to index
      %c0_120 = arith.constant 0 : index
      %378 = vector.load %arg8[%377, %c0_120] : memref<64x128xf32, #tpu.memory_space<vmem>>, vector<1x128xf32>
      %c2_i32_121 = arith.constant 2 : i32
      %379 = arith.addi %28, %c2_i32_121 : i32
      %380 = arith.index_cast %379 : i32 to index
      %c0_122 = arith.constant 0 : index
      %381 = vector.load %arg9[%380, %c0_122] : memref<64x128xf32, #tpu.memory_space<vmem>>, vector<1x128xf32>
      %c1_i32_123 = arith.constant 1 : i32
      %382 = arith.subi %375, %c1_i32_123 : i32
      %c0_i32_124 = arith.constant 0 : i32
      %383 = arith.maxsi %382, %c0_i32_124 : i32
      %384 = arith.index_cast %383 : i32 to index
      %385 = memref.load %arg1[%384] : memref<128xf32, #tpu.memory_space<smem>>
      %386 = arith.index_cast %375 : i32 to index
      %387 = memref.load %arg1[%386] : memref<128xf32, #tpu.memory_space<smem>>
      %388 = arith.index_cast %375 : i32 to index
      %389 = memref.load %arg2[%388] : memref<128xf32, #tpu.memory_space<smem>>
      %390 = arith.index_cast %375 : i32 to index
      %391 = memref.load %arg3[%390] : memref<128xf32, #tpu.memory_space<smem>>
      %392 = arith.addf %357, %378 : vector<1x128xf32>
      %cst_125 = arith.constant 1.000000e+00 : f32
      %393 = vector.broadcast %cst_125 : f32 to vector<1x128xf32>
      %394 = arith.subf %356, %393 : vector<1x128xf32>
      %cst_126 = arith.constant 0.637264609 : f32
      %395 = vector.broadcast %cst_126 : f32 to vector<1x128xf32>
      %396 = arith.mulf %395, %394 : vector<1x128xf32>
      %397 = math.exp %396 : vector<1x128xf32>
      %cst_127 = arith.constant 5.73260832 : f32
      %398 = vector.broadcast %cst_127 : f32 to vector<1x128xf32>
      %399 = arith.mulf %398, %397 : vector<1x128xf32>
      %cst_128 = arith.constant -1.59614491 : f32
      %400 = vector.broadcast %cst_128 : f32 to vector<1x128xf32>
      %401 = arith.addf %400, %399 : vector<1x128xf32>
      %cst_129 = arith.constant 1.000000e+00 : f32
      %402 = vector.broadcast %cst_129 : f32 to vector<1x128xf32>
      %403 = arith.subf %356, %402 : vector<1x128xf32>
      %cst_130 = arith.constant -2.23738194 : f32
      %404 = vector.broadcast %cst_130 : f32 to vector<1x128xf32>
      %405 = arith.mulf %404, %403 : vector<1x128xf32>
      %406 = arith.addf %401, %405 : vector<1x128xf32>
      %407 = math.sqrt %356 : vector<1x128xf32>
      %cst_131 = arith.constant -2.54478955 : f32
      %408 = vector.broadcast %cst_131 : f32 to vector<1x128xf32>
      %409 = arith.mulf %408, %407 : vector<1x128xf32>
      %410 = math.exp %409 : vector<1x128xf32>
      %cst_132 = arith.constant 0.0784895569 : f32
      %411 = vector.broadcast %cst_132 : f32 to vector<1x128xf32>
      %412 = arith.subf %411, %410 : vector<1x128xf32>
      %cst_133 = arith.constant 0.641237199 : f32
      %413 = vector.broadcast %cst_133 : f32 to vector<1x128xf32>
      %414 = arith.mulf %413, %412 : vector<1x128xf32>
      %415 = arith.addf %406, %414 : vector<1x128xf32>
      %416 = vector.broadcast %385 : f32 to vector<1x128xf32>
      %417 = arith.mulf %416, %392 : vector<1x128xf32>
      %418 = arith.subf %415, %417 : vector<1x128xf32>
      %419 = arith.mulf %385, %4 : f32
      %420 = vector.broadcast %419 : f32 to vector<1x128xf32>
      %421 = arith.mulf %420, %418 : vector<1x128xf32>
      %422 = arith.subf %356, %421 : vector<1x128xf32>
      %423 = arith.addf %422, %381 : vector<1x128xf32>
      %cst_134 = arith.constant 1.000000e+00 : f32
      %424 = vector.broadcast %cst_134 : f32 to vector<1x128xf32>
      %425 = arith.cmpf ogt, %423, %424 : vector<1x128xf32>
      %cst_135 = arith.constant 1.000000e+00 : f32
      %426 = vector.broadcast %cst_135 : f32 to vector<1x128xf32>
      %427 = arith.select %425, %426, %423 : vector<1x128xi1>, vector<1x128xf32>
      %cst_136 = arith.constant 0.000000e+00 : f32
      %428 = vector.broadcast %cst_136 : f32 to vector<1x128xf32>
      %429 = arith.cmpf olt, %427, %428 : vector<1x128xf32>
      %cst_137 = arith.constant 1.000000e-10 : f32
      %430 = vector.broadcast %cst_137 : f32 to vector<1x128xf32>
      %431 = arith.select %429, %430, %427 : vector<1x128xi1>, vector<1x128xf32>
      %cst_138 = arith.constant 1.000000e+00 : f32
      %432 = vector.broadcast %cst_138 : f32 to vector<1x128xf32>
      %433 = arith.subf %431, %432 : vector<1x128xf32>
      %cst_139 = arith.constant 0.637264609 : f32
      %434 = vector.broadcast %cst_139 : f32 to vector<1x128xf32>
      %435 = arith.mulf %434, %433 : vector<1x128xf32>
      %436 = math.exp %435 : vector<1x128xf32>
      %cst_140 = arith.constant 5.73260832 : f32
      %437 = vector.broadcast %cst_140 : f32 to vector<1x128xf32>
      %438 = arith.mulf %437, %436 : vector<1x128xf32>
      %cst_141 = arith.constant -1.59614491 : f32
      %439 = vector.broadcast %cst_141 : f32 to vector<1x128xf32>
      %440 = arith.addf %439, %438 : vector<1x128xf32>
      %cst_142 = arith.constant 1.000000e+00 : f32
      %441 = vector.broadcast %cst_142 : f32 to vector<1x128xf32>
      %442 = arith.subf %431, %441 : vector<1x128xf32>
      %cst_143 = arith.constant -2.23738194 : f32
      %443 = vector.broadcast %cst_143 : f32 to vector<1x128xf32>
      %444 = arith.mulf %443, %442 : vector<1x128xf32>
      %445 = arith.addf %440, %444 : vector<1x128xf32>
      %446 = math.sqrt %431 : vector<1x128xf32>
      %cst_144 = arith.constant -2.54478955 : f32
      %447 = vector.broadcast %cst_144 : f32 to vector<1x128xf32>
      %448 = arith.mulf %447, %446 : vector<1x128xf32>
      %449 = math.exp %448 : vector<1x128xf32>
      %cst_145 = arith.constant 0.0784895569 : f32
      %450 = vector.broadcast %cst_145 : f32 to vector<1x128xf32>
      %451 = arith.subf %450, %449 : vector<1x128xf32>
      %cst_146 = arith.constant 0.641237199 : f32
      %452 = vector.broadcast %cst_146 : f32 to vector<1x128xf32>
      %453 = arith.mulf %452, %451 : vector<1x128xf32>
      %454 = arith.addf %445, %453 : vector<1x128xf32>
      %455 = vector.broadcast %387 : f32 to vector<1x128xf32>
      %456 = arith.mulf %455, %392 : vector<1x128xf32>
      %457 = arith.subf %454, %456 : vector<1x128xf32>
      %458 = vector.broadcast %389 : f32 to vector<1x128xf32>
      %459 = arith.subf %457, %458 : vector<1x128xf32>
      %cst_147 = arith.constant 1.000000e+02 : f32
      %460 = vector.broadcast %cst_147 : f32 to vector<1x128xf32>
      %461 = arith.mulf %459, %460 : vector<1x128xf32>
      %cst_148 = arith.constant 5.000000e-01 : f32
      %462 = vector.broadcast %cst_148 : f32 to vector<1x128xf32>
      %463 = arith.mulf %462, %461 : vector<1x128xf32>
      %464 = arith.mulf %463, %461 : vector<1x128xf32>
      %cst_149 = arith.constant 3.68623161 : f32
      %465 = vector.broadcast %cst_149 : f32 to vector<1x128xf32>
      %466 = arith.subf %465, %464 : vector<1x128xf32>
      %cst_150 = arith.constant dense<0xFF800000> : vector<1xf32>
      %467 = vector.multi_reduction <maximumf>, %466, %cst_150 [1] : vector<1x128xf32> to vector<1xf32>
      %468 = vector.shape_cast %467 : vector<1xf32> to vector<1x1xf32>
      %469 = vector.broadcast %468 : vector<1x1xf32> to vector<1x128xf32>
      %470 = arith.subf %466, %469 : vector<1x128xf32>
      %471 = math.exp %470 : vector<1x128xf32>
      %cst_151 = arith.constant dense<0.000000e+00> : vector<1xf32>
      %472 = vector.multi_reduction <add>, %471, %cst_151 [1] : vector<1x128xf32> to vector<1xf32>
      %473 = vector.shape_cast %472 : vector<1xf32> to vector<1x1xf32>
      %474 = math.log %473 : vector<1x1xf32>
      %475 = arith.addf %468, %474 : vector<1x1xf32>
      %cst_152 = arith.constant 4.85203028 : f32
      %476 = vector.broadcast %cst_152 : f32 to vector<1x1xf32>
      %477 = arith.subf %475, %476 : vector<1x1xf32>
      %c100_i32_153 = arith.constant 100 : i32
      %478 = arith.cmpi slt, %375, %c100_i32_153 : i32
      %cst_154 = arith.constant 0.000000e+00 : f32
      %479 = vector.broadcast %cst_154 : f32 to vector<1x1xf32>
      %480 = arith.select %478, %477, %479 : vector<1x1xf32>
      %481 = arith.addf %310, %480 : vector<1x1xf32>
      %c0_i32_155 = arith.constant 0 : i32
      %482 = vector.broadcast %c0_i32_155 : i32 to vector<8x1xi32>
      %483 = arith.cmpi eq, %15, %482 : vector<8x1xi32>
      %cst_156 = arith.constant 0.000000e+00 : f32
      %484 = vector.shape_cast %483 : vector<8x1xi1> to vector<8x1xi1>
      %485 = vector.broadcast %484 : vector<8x1xi1> to vector<8x128xi1>
      %486 = vector.shape_cast %471 : vector<1x128xf32> to vector<1x128xf32>
      %487 = vector.broadcast %486 : vector<1x128xf32> to vector<8x128xf32>
      %488 = vector.broadcast %cst_156 : f32 to vector<8x128xf32>
      %489 = arith.select %485, %487, %488 : vector<8x128xi1>, vector<8x128xf32>
      %490 = tpu.transpose %489, [1, 0] : vector<8x128xf32> -> vector<128x8xf32>
      %c0_157 = arith.constant 0 : index
      %c0_158 = arith.constant 0 : index
      %491 = vector.load %arg7[%c0_157, %c0_158] : memref<256x128xf32, #tpu.memory_space<vmem>>, vector<256x128xf32>
      %cst_159 = arith.constant dense<0.000000e+00> : vector<256x8xf32>
      %492 = tpu.matmul %491, %490, %cst_159 {dimension_numbers = #tpu.dot_dimension_numbers<[1], [0], [0], [1], [0, 0, 1, 1], [], []>} : vector<256x128xf32>, vector<128x8xf32>, vector<256x8xf32> -> vector<256x8xf32>
      %493 = vector.extract_strided_slice %492 {offsets = [0, 0], sizes = [128, 1], strides = [1, 1]} : vector<256x8xf32> to vector<128x1xf32>
      %494 = vector.extract_strided_slice %492 {offsets = [128, 0], sizes = [128, 1], strides = [1, 1]} : vector<256x8xf32> to vector<128x1xf32>
      %495 = arith.addf %493, %14 : vector<128x1xf32>
      %cst_160 = arith.constant 7.812500e-03 : f32
      %496 = arith.mulf %391, %cst_160 : f32
      %497 = vector.broadcast %496 : f32 to vector<1x128xf32>
      %498 = arith.addf %8, %497 : vector<1x128xf32>
      %499 = vector.broadcast %473 : vector<1x1xf32> to vector<1x128xf32>
      %500 = arith.mulf %498, %499 : vector<1x128xf32>
      %501 = vector.broadcast %500 : vector<1x128xf32> to vector<128x128xf32>
      %502 = vector.broadcast %494 : vector<128x1xf32> to vector<128x128xf32>
      %503 = arith.cmpf oge, %501, %502 : vector<128x128xf32>
      %504 = vector.broadcast %500 : vector<1x128xf32> to vector<128x128xf32>
      %505 = vector.broadcast %495 : vector<128x1xf32> to vector<128x128xf32>
      %506 = arith.cmpf olt, %504, %505 : vector<128x128xf32>
      %507 = arith.andi %503, %506 : vector<128x128xi1>
      %508 = arith.extui %507 : vector<128x128xi1> to vector<128x128xi32>
      %509 = arith.sitofp %508 : vector<128x128xi32> to vector<128x128xf32>
      %c0_i32_161 = arith.constant 0 : i32
      %510 = vector.broadcast %c0_i32_161 : i32 to vector<8x1xi32>
      %511 = arith.cmpi eq, %15, %510 : vector<8x1xi32>
      %c1_i32_162 = arith.constant 1 : i32
      %512 = vector.broadcast %c1_i32_162 : i32 to vector<8x1xi32>
      %513 = arith.cmpi eq, %15, %512 : vector<8x1xi32>
      %514 = vector.shape_cast %513 : vector<8x1xi1> to vector<8x1xi1>
      %515 = vector.broadcast %514 : vector<8x1xi1> to vector<8x128xi1>
      %516 = vector.shape_cast %392 : vector<1x128xf32> to vector<1x128xf32>
      %517 = vector.broadcast %516 : vector<1x128xf32> to vector<8x128xf32>
      %518 = vector.shape_cast %457 : vector<1x128xf32> to vector<1x128xf32>
      %519 = vector.broadcast %518 : vector<1x128xf32> to vector<8x128xf32>
      %520 = arith.select %515, %517, %519 : vector<8x128xi1>, vector<8x128xf32>
      %521 = vector.shape_cast %511 : vector<8x1xi1> to vector<8x1xi1>
      %522 = vector.broadcast %521 : vector<8x1xi1> to vector<8x128xi1>
      %523 = vector.shape_cast %431 : vector<1x128xf32> to vector<1x128xf32>
      %524 = vector.broadcast %523 : vector<1x128xf32> to vector<8x128xf32>
      %525 = arith.select %522, %524, %520 : vector<8x128xi1>, vector<8x128xf32>
      %cst_163 = arith.constant dense<0.000000e+00> : vector<8x128xf32>
      %526 = tpu.matmul %525, %509, %cst_163 {dimension_numbers = #tpu.dot_dimension_numbers<[1], [0], [0], [1], [0, 0, 1, 1], [], []>} : vector<8x128xf32>, vector<128x128xf32>, vector<8x128xf32> -> vector<8x128xf32>
      %527 = vector.extract_strided_slice %526 {offsets = [0, 0], sizes = [1, 128], strides = [1, 1]} : vector<8x128xf32> to vector<1x128xf32>
      %528 = vector.extract_strided_slice %526 {offsets = [1, 0], sizes = [1, 128], strides = [1, 1]} : vector<8x128xf32> to vector<1x128xf32>
      %529 = vector.extract_strided_slice %526 {offsets = [2, 0], sizes = [1, 128], strides = [1, 1]} : vector<8x128xf32> to vector<1x128xf32>
      %c2_i32_164 = arith.constant 2 : i32
      %530 = vector.broadcast %c2_i32_164 : i32 to vector<8x1xi32>
      %531 = arith.cmpi eq, %15, %530 : vector<8x1xi32>
      %532 = vector.shape_cast %531 : vector<8x1xi1> to vector<8x1xi1>
      %533 = vector.broadcast %532 : vector<8x1xi1> to vector<8x128xi1>
      %534 = vector.shape_cast %529 : vector<1x128xf32> to vector<1x128xf32>
      %535 = vector.broadcast %534 : vector<1x128xf32> to vector<8x128xf32>
      %536 = arith.select %533, %535, %365 : vector<8x128xi1>, vector<8x128xf32>
      %c2_i32_165 = arith.constant 2 : i32
      %537 = vector.broadcast %c2_i32_165 : i32 to vector<8x1xi32>
      %538 = arith.cmpi eq, %15, %537 : vector<8x1xi32>
      %539 = vector.shape_cast %538 : vector<8x1xi1> to vector<8x1xi1>
      %540 = vector.broadcast %539 : vector<8x1xi1> to vector<8x128xi1>
      %541 = vector.shape_cast %527 : vector<1x128xf32> to vector<1x128xf32>
      %542 = vector.broadcast %541 : vector<1x128xf32> to vector<8x128xf32>
      %543 = arith.select %540, %542, %372 : vector<8x128xi1>, vector<8x128xf32>
      %c64_i32_166 = arith.constant 64 : i32
      %544 = arith.muli %arg0, %c64_i32_166 : i32
      %545 = arith.addi %544, %28 : i32
      %c3_i32 = arith.constant 3 : i32
      %546 = arith.addi %545, %c3_i32 : i32
      %c3_i32_167 = arith.constant 3 : i32
      %547 = arith.addi %28, %c3_i32_167 : i32
      %548 = arith.index_cast %547 : i32 to index
      %c0_168 = arith.constant 0 : index
      %549 = vector.load %arg8[%548, %c0_168] : memref<64x128xf32, #tpu.memory_space<vmem>>, vector<1x128xf32>
      %c3_i32_169 = arith.constant 3 : i32
      %550 = arith.addi %28, %c3_i32_169 : i32
      %551 = arith.index_cast %550 : i32 to index
      %c0_170 = arith.constant 0 : index
      %552 = vector.load %arg9[%551, %c0_170] : memref<64x128xf32, #tpu.memory_space<vmem>>, vector<1x128xf32>
      %c1_i32_171 = arith.constant 1 : i32
      %553 = arith.subi %546, %c1_i32_171 : i32
      %c0_i32_172 = arith.constant 0 : i32
      %554 = arith.maxsi %553, %c0_i32_172 : i32
      %555 = arith.index_cast %554 : i32 to index
      %556 = memref.load %arg1[%555] : memref<128xf32, #tpu.memory_space<smem>>
      %557 = arith.index_cast %546 : i32 to index
      %558 = memref.load %arg1[%557] : memref<128xf32, #tpu.memory_space<smem>>
      %559 = arith.index_cast %546 : i32 to index
      %560 = memref.load %arg2[%559] : memref<128xf32, #tpu.memory_space<smem>>
      %561 = arith.index_cast %546 : i32 to index
      %562 = memref.load %arg3[%561] : memref<128xf32, #tpu.memory_space<smem>>
      %563 = arith.addf %528, %549 : vector<1x128xf32>
      %cst_173 = arith.constant 1.000000e+00 : f32
      %564 = vector.broadcast %cst_173 : f32 to vector<1x128xf32>
      %565 = arith.subf %527, %564 : vector<1x128xf32>
      %cst_174 = arith.constant 0.637264609 : f32
      %566 = vector.broadcast %cst_174 : f32 to vector<1x128xf32>
      %567 = arith.mulf %566, %565 : vector<1x128xf32>
      %568 = math.exp %567 : vector<1x128xf32>
      %cst_175 = arith.constant 5.73260832 : f32
      %569 = vector.broadcast %cst_175 : f32 to vector<1x128xf32>
      %570 = arith.mulf %569, %568 : vector<1x128xf32>
      %cst_176 = arith.constant -1.59614491 : f32
      %571 = vector.broadcast %cst_176 : f32 to vector<1x128xf32>
      %572 = arith.addf %571, %570 : vector<1x128xf32>
      %cst_177 = arith.constant 1.000000e+00 : f32
      %573 = vector.broadcast %cst_177 : f32 to vector<1x128xf32>
      %574 = arith.subf %527, %573 : vector<1x128xf32>
      %cst_178 = arith.constant -2.23738194 : f32
      %575 = vector.broadcast %cst_178 : f32 to vector<1x128xf32>
      %576 = arith.mulf %575, %574 : vector<1x128xf32>
      %577 = arith.addf %572, %576 : vector<1x128xf32>
      %578 = math.sqrt %527 : vector<1x128xf32>
      %cst_179 = arith.constant -2.54478955 : f32
      %579 = vector.broadcast %cst_179 : f32 to vector<1x128xf32>
      %580 = arith.mulf %579, %578 : vector<1x128xf32>
      %581 = math.exp %580 : vector<1x128xf32>
      %cst_180 = arith.constant 0.0784895569 : f32
      %582 = vector.broadcast %cst_180 : f32 to vector<1x128xf32>
      %583 = arith.subf %582, %581 : vector<1x128xf32>
      %cst_181 = arith.constant 0.641237199 : f32
      %584 = vector.broadcast %cst_181 : f32 to vector<1x128xf32>
      %585 = arith.mulf %584, %583 : vector<1x128xf32>
      %586 = arith.addf %577, %585 : vector<1x128xf32>
      %587 = vector.broadcast %556 : f32 to vector<1x128xf32>
      %588 = arith.mulf %587, %563 : vector<1x128xf32>
      %589 = arith.subf %586, %588 : vector<1x128xf32>
      %590 = arith.mulf %556, %4 : f32
      %591 = vector.broadcast %590 : f32 to vector<1x128xf32>
      %592 = arith.mulf %591, %589 : vector<1x128xf32>
      %593 = arith.subf %527, %592 : vector<1x128xf32>
      %594 = arith.addf %593, %552 : vector<1x128xf32>
      %cst_182 = arith.constant 1.000000e+00 : f32
      %595 = vector.broadcast %cst_182 : f32 to vector<1x128xf32>
      %596 = arith.cmpf ogt, %594, %595 : vector<1x128xf32>
      %cst_183 = arith.constant 1.000000e+00 : f32
      %597 = vector.broadcast %cst_183 : f32 to vector<1x128xf32>
      %598 = arith.select %596, %597, %594 : vector<1x128xi1>, vector<1x128xf32>
      %cst_184 = arith.constant 0.000000e+00 : f32
      %599 = vector.broadcast %cst_184 : f32 to vector<1x128xf32>
      %600 = arith.cmpf olt, %598, %599 : vector<1x128xf32>
      %cst_185 = arith.constant 1.000000e-10 : f32
      %601 = vector.broadcast %cst_185 : f32 to vector<1x128xf32>
      %602 = arith.select %600, %601, %598 : vector<1x128xi1>, vector<1x128xf32>
      %cst_186 = arith.constant 1.000000e+00 : f32
      %603 = vector.broadcast %cst_186 : f32 to vector<1x128xf32>
      %604 = arith.subf %602, %603 : vector<1x128xf32>
      %cst_187 = arith.constant 0.637264609 : f32
      %605 = vector.broadcast %cst_187 : f32 to vector<1x128xf32>
      %606 = arith.mulf %605, %604 : vector<1x128xf32>
      %607 = math.exp %606 : vector<1x128xf32>
      %cst_188 = arith.constant 5.73260832 : f32
      %608 = vector.broadcast %cst_188 : f32 to vector<1x128xf32>
      %609 = arith.mulf %608, %607 : vector<1x128xf32>
      %cst_189 = arith.constant -1.59614491 : f32
      %610 = vector.broadcast %cst_189 : f32 to vector<1x128xf32>
      %611 = arith.addf %610, %609 : vector<1x128xf32>
      %cst_190 = arith.constant 1.000000e+00 : f32
      %612 = vector.broadcast %cst_190 : f32 to vector<1x128xf32>
      %613 = arith.subf %602, %612 : vector<1x128xf32>
      %cst_191 = arith.constant -2.23738194 : f32
      %614 = vector.broadcast %cst_191 : f32 to vector<1x128xf32>
      %615 = arith.mulf %614, %613 : vector<1x128xf32>
      %616 = arith.addf %611, %615 : vector<1x128xf32>
      %617 = math.sqrt %602 : vector<1x128xf32>
      %cst_192 = arith.constant -2.54478955 : f32
      %618 = vector.broadcast %cst_192 : f32 to vector<1x128xf32>
      %619 = arith.mulf %618, %617 : vector<1x128xf32>
      %620 = math.exp %619 : vector<1x128xf32>
      %cst_193 = arith.constant 0.0784895569 : f32
      %621 = vector.broadcast %cst_193 : f32 to vector<1x128xf32>
      %622 = arith.subf %621, %620 : vector<1x128xf32>
      %cst_194 = arith.constant 0.641237199 : f32
      %623 = vector.broadcast %cst_194 : f32 to vector<1x128xf32>
      %624 = arith.mulf %623, %622 : vector<1x128xf32>
      %625 = arith.addf %616, %624 : vector<1x128xf32>
      %626 = vector.broadcast %558 : f32 to vector<1x128xf32>
      %627 = arith.mulf %626, %563 : vector<1x128xf32>
      %628 = arith.subf %625, %627 : vector<1x128xf32>
      %629 = vector.broadcast %560 : f32 to vector<1x128xf32>
      %630 = arith.subf %628, %629 : vector<1x128xf32>
      %cst_195 = arith.constant 1.000000e+02 : f32
      %631 = vector.broadcast %cst_195 : f32 to vector<1x128xf32>
      %632 = arith.mulf %630, %631 : vector<1x128xf32>
      %cst_196 = arith.constant 5.000000e-01 : f32
      %633 = vector.broadcast %cst_196 : f32 to vector<1x128xf32>
      %634 = arith.mulf %633, %632 : vector<1x128xf32>
      %635 = arith.mulf %634, %632 : vector<1x128xf32>
      %cst_197 = arith.constant 3.68623161 : f32
      %636 = vector.broadcast %cst_197 : f32 to vector<1x128xf32>
      %637 = arith.subf %636, %635 : vector<1x128xf32>
      %cst_198 = arith.constant dense<0xFF800000> : vector<1xf32>
      %638 = vector.multi_reduction <maximumf>, %637, %cst_198 [1] : vector<1x128xf32> to vector<1xf32>
      %639 = vector.shape_cast %638 : vector<1xf32> to vector<1x1xf32>
      %640 = vector.broadcast %639 : vector<1x1xf32> to vector<1x128xf32>
      %641 = arith.subf %637, %640 : vector<1x128xf32>
      %642 = math.exp %641 : vector<1x128xf32>
      %cst_199 = arith.constant dense<0.000000e+00> : vector<1xf32>
      %643 = vector.multi_reduction <add>, %642, %cst_199 [1] : vector<1x128xf32> to vector<1xf32>
      %644 = vector.shape_cast %643 : vector<1xf32> to vector<1x1xf32>
      %645 = math.log %644 : vector<1x1xf32>
      %646 = arith.addf %639, %645 : vector<1x1xf32>
      %cst_200 = arith.constant 4.85203028 : f32
      %647 = vector.broadcast %cst_200 : f32 to vector<1x1xf32>
      %648 = arith.subf %646, %647 : vector<1x1xf32>
      %c100_i32_201 = arith.constant 100 : i32
      %649 = arith.cmpi slt, %546, %c100_i32_201 : i32
      %cst_202 = arith.constant 0.000000e+00 : f32
      %650 = vector.broadcast %cst_202 : f32 to vector<1x1xf32>
      %651 = arith.select %649, %648, %650 : vector<1x1xf32>
      %652 = arith.addf %481, %651 : vector<1x1xf32>
      %c0_i32_203 = arith.constant 0 : i32
      %653 = vector.broadcast %c0_i32_203 : i32 to vector<8x1xi32>
      %654 = arith.cmpi eq, %15, %653 : vector<8x1xi32>
      %cst_204 = arith.constant 0.000000e+00 : f32
      %655 = vector.shape_cast %654 : vector<8x1xi1> to vector<8x1xi1>
      %656 = vector.broadcast %655 : vector<8x1xi1> to vector<8x128xi1>
      %657 = vector.shape_cast %642 : vector<1x128xf32> to vector<1x128xf32>
      %658 = vector.broadcast %657 : vector<1x128xf32> to vector<8x128xf32>
      %659 = vector.broadcast %cst_204 : f32 to vector<8x128xf32>
      %660 = arith.select %656, %658, %659 : vector<8x128xi1>, vector<8x128xf32>
      %661 = tpu.transpose %660, [1, 0] : vector<8x128xf32> -> vector<128x8xf32>
      %c0_205 = arith.constant 0 : index
      %c0_206 = arith.constant 0 : index
      %662 = vector.load %arg7[%c0_205, %c0_206] : memref<256x128xf32, #tpu.memory_space<vmem>>, vector<256x128xf32>
      %cst_207 = arith.constant dense<0.000000e+00> : vector<256x8xf32>
      %663 = tpu.matmul %662, %661, %cst_207 {dimension_numbers = #tpu.dot_dimension_numbers<[1], [0], [0], [1], [0, 0, 1, 1], [], []>} : vector<256x128xf32>, vector<128x8xf32>, vector<256x8xf32> -> vector<256x8xf32>
      %664 = vector.extract_strided_slice %663 {offsets = [0, 0], sizes = [128, 1], strides = [1, 1]} : vector<256x8xf32> to vector<128x1xf32>
      %665 = vector.extract_strided_slice %663 {offsets = [128, 0], sizes = [128, 1], strides = [1, 1]} : vector<256x8xf32> to vector<128x1xf32>
      %666 = arith.addf %664, %14 : vector<128x1xf32>
      %cst_208 = arith.constant 7.812500e-03 : f32
      %667 = arith.mulf %562, %cst_208 : f32
      %668 = vector.broadcast %667 : f32 to vector<1x128xf32>
      %669 = arith.addf %8, %668 : vector<1x128xf32>
      %670 = vector.broadcast %644 : vector<1x1xf32> to vector<1x128xf32>
      %671 = arith.mulf %669, %670 : vector<1x128xf32>
      %672 = vector.broadcast %671 : vector<1x128xf32> to vector<128x128xf32>
      %673 = vector.broadcast %665 : vector<128x1xf32> to vector<128x128xf32>
      %674 = arith.cmpf oge, %672, %673 : vector<128x128xf32>
      %675 = vector.broadcast %671 : vector<1x128xf32> to vector<128x128xf32>
      %676 = vector.broadcast %666 : vector<128x1xf32> to vector<128x128xf32>
      %677 = arith.cmpf olt, %675, %676 : vector<128x128xf32>
      %678 = arith.andi %674, %677 : vector<128x128xi1>
      %679 = arith.extui %678 : vector<128x128xi1> to vector<128x128xi32>
      %680 = arith.sitofp %679 : vector<128x128xi32> to vector<128x128xf32>
      %c0_i32_209 = arith.constant 0 : i32
      %681 = vector.broadcast %c0_i32_209 : i32 to vector<8x1xi32>
      %682 = arith.cmpi eq, %15, %681 : vector<8x1xi32>
      %c1_i32_210 = arith.constant 1 : i32
      %683 = vector.broadcast %c1_i32_210 : i32 to vector<8x1xi32>
      %684 = arith.cmpi eq, %15, %683 : vector<8x1xi32>
      %685 = vector.shape_cast %684 : vector<8x1xi1> to vector<8x1xi1>
      %686 = vector.broadcast %685 : vector<8x1xi1> to vector<8x128xi1>
      %687 = vector.shape_cast %563 : vector<1x128xf32> to vector<1x128xf32>
      %688 = vector.broadcast %687 : vector<1x128xf32> to vector<8x128xf32>
      %689 = vector.shape_cast %628 : vector<1x128xf32> to vector<1x128xf32>
      %690 = vector.broadcast %689 : vector<1x128xf32> to vector<8x128xf32>
      %691 = arith.select %686, %688, %690 : vector<8x128xi1>, vector<8x128xf32>
      %692 = vector.shape_cast %682 : vector<8x1xi1> to vector<8x1xi1>
      %693 = vector.broadcast %692 : vector<8x1xi1> to vector<8x128xi1>
      %694 = vector.shape_cast %602 : vector<1x128xf32> to vector<1x128xf32>
      %695 = vector.broadcast %694 : vector<1x128xf32> to vector<8x128xf32>
      %696 = arith.select %693, %695, %691 : vector<8x128xi1>, vector<8x128xf32>
      %cst_211 = arith.constant dense<0.000000e+00> : vector<8x128xf32>
      %697 = tpu.matmul %696, %680, %cst_211 {dimension_numbers = #tpu.dot_dimension_numbers<[1], [0], [0], [1], [0, 0, 1, 1], [], []>} : vector<8x128xf32>, vector<128x128xf32>, vector<8x128xf32> -> vector<8x128xf32>
      %698 = vector.extract_strided_slice %697 {offsets = [0, 0], sizes = [1, 128], strides = [1, 1]} : vector<8x128xf32> to vector<1x128xf32>
      %699 = vector.extract_strided_slice %697 {offsets = [1, 0], sizes = [1, 128], strides = [1, 1]} : vector<8x128xf32> to vector<1x128xf32>
      %700 = vector.extract_strided_slice %697 {offsets = [2, 0], sizes = [1, 128], strides = [1, 1]} : vector<8x128xf32> to vector<1x128xf32>
      %c3_i32_212 = arith.constant 3 : i32
      %701 = vector.broadcast %c3_i32_212 : i32 to vector<8x1xi32>
      %702 = arith.cmpi eq, %15, %701 : vector<8x1xi32>
      %703 = vector.shape_cast %702 : vector<8x1xi1> to vector<8x1xi1>
      %704 = vector.broadcast %703 : vector<8x1xi1> to vector<8x128xi1>
      %705 = vector.shape_cast %700 : vector<1x128xf32> to vector<1x128xf32>
      %706 = vector.broadcast %705 : vector<1x128xf32> to vector<8x128xf32>
      %707 = arith.select %704, %706, %536 : vector<8x128xi1>, vector<8x128xf32>
      %c3_i32_213 = arith.constant 3 : i32
      %708 = vector.broadcast %c3_i32_213 : i32 to vector<8x1xi32>
      %709 = arith.cmpi eq, %15, %708 : vector<8x1xi32>
      %710 = vector.shape_cast %709 : vector<8x1xi1> to vector<8x1xi1>
      %711 = vector.broadcast %710 : vector<8x1xi1> to vector<8x128xi1>
      %712 = vector.shape_cast %698 : vector<1x128xf32> to vector<1x128xf32>
      %713 = vector.broadcast %712 : vector<1x128xf32> to vector<8x128xf32>
      %714 = arith.select %711, %713, %543 : vector<8x128xi1>, vector<8x128xf32>
      %c64_i32_214 = arith.constant 64 : i32
      %715 = arith.muli %arg0, %c64_i32_214 : i32
      %716 = arith.addi %715, %28 : i32
      %c4_i32 = arith.constant 4 : i32
      %717 = arith.addi %716, %c4_i32 : i32
      %c4_i32_215 = arith.constant 4 : i32
      %718 = arith.addi %28, %c4_i32_215 : i32
      %719 = arith.index_cast %718 : i32 to index
      %c0_216 = arith.constant 0 : index
      %720 = vector.load %arg8[%719, %c0_216] : memref<64x128xf32, #tpu.memory_space<vmem>>, vector<1x128xf32>
      %c4_i32_217 = arith.constant 4 : i32
      %721 = arith.addi %28, %c4_i32_217 : i32
      %722 = arith.index_cast %721 : i32 to index
      %c0_218 = arith.constant 0 : index
      %723 = vector.load %arg9[%722, %c0_218] : memref<64x128xf32, #tpu.memory_space<vmem>>, vector<1x128xf32>
      %c1_i32_219 = arith.constant 1 : i32
      %724 = arith.subi %717, %c1_i32_219 : i32
      %c0_i32_220 = arith.constant 0 : i32
      %725 = arith.maxsi %724, %c0_i32_220 : i32
      %726 = arith.index_cast %725 : i32 to index
      %727 = memref.load %arg1[%726] : memref<128xf32, #tpu.memory_space<smem>>
      %728 = arith.index_cast %717 : i32 to index
      %729 = memref.load %arg1[%728] : memref<128xf32, #tpu.memory_space<smem>>
      %730 = arith.index_cast %717 : i32 to index
      %731 = memref.load %arg2[%730] : memref<128xf32, #tpu.memory_space<smem>>
      %732 = arith.index_cast %717 : i32 to index
      %733 = memref.load %arg3[%732] : memref<128xf32, #tpu.memory_space<smem>>
      %734 = arith.addf %699, %720 : vector<1x128xf32>
      %cst_221 = arith.constant 1.000000e+00 : f32
      %735 = vector.broadcast %cst_221 : f32 to vector<1x128xf32>
      %736 = arith.subf %698, %735 : vector<1x128xf32>
      %cst_222 = arith.constant 0.637264609 : f32
      %737 = vector.broadcast %cst_222 : f32 to vector<1x128xf32>
      %738 = arith.mulf %737, %736 : vector<1x128xf32>
      %739 = math.exp %738 : vector<1x128xf32>
      %cst_223 = arith.constant 5.73260832 : f32
      %740 = vector.broadcast %cst_223 : f32 to vector<1x128xf32>
      %741 = arith.mulf %740, %739 : vector<1x128xf32>
      %cst_224 = arith.constant -1.59614491 : f32
      %742 = vector.broadcast %cst_224 : f32 to vector<1x128xf32>
      %743 = arith.addf %742, %741 : vector<1x128xf32>
      %cst_225 = arith.constant 1.000000e+00 : f32
      %744 = vector.broadcast %cst_225 : f32 to vector<1x128xf32>
      %745 = arith.subf %698, %744 : vector<1x128xf32>
      %cst_226 = arith.constant -2.23738194 : f32
      %746 = vector.broadcast %cst_226 : f32 to vector<1x128xf32>
      %747 = arith.mulf %746, %745 : vector<1x128xf32>
      %748 = arith.addf %743, %747 : vector<1x128xf32>
      %749 = math.sqrt %698 : vector<1x128xf32>
      %cst_227 = arith.constant -2.54478955 : f32
      %750 = vector.broadcast %cst_227 : f32 to vector<1x128xf32>
      %751 = arith.mulf %750, %749 : vector<1x128xf32>
      %752 = math.exp %751 : vector<1x128xf32>
      %cst_228 = arith.constant 0.0784895569 : f32
      %753 = vector.broadcast %cst_228 : f32 to vector<1x128xf32>
      %754 = arith.subf %753, %752 : vector<1x128xf32>
      %cst_229 = arith.constant 0.641237199 : f32
      %755 = vector.broadcast %cst_229 : f32 to vector<1x128xf32>
      %756 = arith.mulf %755, %754 : vector<1x128xf32>
      %757 = arith.addf %748, %756 : vector<1x128xf32>
      %758 = vector.broadcast %727 : f32 to vector<1x128xf32>
      %759 = arith.mulf %758, %734 : vector<1x128xf32>
      %760 = arith.subf %757, %759 : vector<1x128xf32>
      %761 = arith.mulf %727, %4 : f32
      %762 = vector.broadcast %761 : f32 to vector<1x128xf32>
      %763 = arith.mulf %762, %760 : vector<1x128xf32>
      %764 = arith.subf %698, %763 : vector<1x128xf32>
      %765 = arith.addf %764, %723 : vector<1x128xf32>
      %cst_230 = arith.constant 1.000000e+00 : f32
      %766 = vector.broadcast %cst_230 : f32 to vector<1x128xf32>
      %767 = arith.cmpf ogt, %765, %766 : vector<1x128xf32>
      %cst_231 = arith.constant 1.000000e+00 : f32
      %768 = vector.broadcast %cst_231 : f32 to vector<1x128xf32>
      %769 = arith.select %767, %768, %765 : vector<1x128xi1>, vector<1x128xf32>
      %cst_232 = arith.constant 0.000000e+00 : f32
      %770 = vector.broadcast %cst_232 : f32 to vector<1x128xf32>
      %771 = arith.cmpf olt, %769, %770 : vector<1x128xf32>
      %cst_233 = arith.constant 1.000000e-10 : f32
      %772 = vector.broadcast %cst_233 : f32 to vector<1x128xf32>
      %773 = arith.select %771, %772, %769 : vector<1x128xi1>, vector<1x128xf32>
      %cst_234 = arith.constant 1.000000e+00 : f32
      %774 = vector.broadcast %cst_234 : f32 to vector<1x128xf32>
      %775 = arith.subf %773, %774 : vector<1x128xf32>
      %cst_235 = arith.constant 0.637264609 : f32
      %776 = vector.broadcast %cst_235 : f32 to vector<1x128xf32>
      %777 = arith.mulf %776, %775 : vector<1x128xf32>
      %778 = math.exp %777 : vector<1x128xf32>
      %cst_236 = arith.constant 5.73260832 : f32
      %779 = vector.broadcast %cst_236 : f32 to vector<1x128xf32>
      %780 = arith.mulf %779, %778 : vector<1x128xf32>
      %cst_237 = arith.constant -1.59614491 : f32
      %781 = vector.broadcast %cst_237 : f32 to vector<1x128xf32>
      %782 = arith.addf %781, %780 : vector<1x128xf32>
      %cst_238 = arith.constant 1.000000e+00 : f32
      %783 = vector.broadcast %cst_238 : f32 to vector<1x128xf32>
      %784 = arith.subf %773, %783 : vector<1x128xf32>
      %cst_239 = arith.constant -2.23738194 : f32
      %785 = vector.broadcast %cst_239 : f32 to vector<1x128xf32>
      %786 = arith.mulf %785, %784 : vector<1x128xf32>
      %787 = arith.addf %782, %786 : vector<1x128xf32>
      %788 = math.sqrt %773 : vector<1x128xf32>
      %cst_240 = arith.constant -2.54478955 : f32
      %789 = vector.broadcast %cst_240 : f32 to vector<1x128xf32>
      %790 = arith.mulf %789, %788 : vector<1x128xf32>
      %791 = math.exp %790 : vector<1x128xf32>
      %cst_241 = arith.constant 0.0784895569 : f32
      %792 = vector.broadcast %cst_241 : f32 to vector<1x128xf32>
      %793 = arith.subf %792, %791 : vector<1x128xf32>
      %cst_242 = arith.constant 0.641237199 : f32
      %794 = vector.broadcast %cst_242 : f32 to vector<1x128xf32>
      %795 = arith.mulf %794, %793 : vector<1x128xf32>
      %796 = arith.addf %787, %795 : vector<1x128xf32>
      %797 = vector.broadcast %729 : f32 to vector<1x128xf32>
      %798 = arith.mulf %797, %734 : vector<1x128xf32>
      %799 = arith.subf %796, %798 : vector<1x128xf32>
      %800 = vector.broadcast %731 : f32 to vector<1x128xf32>
      %801 = arith.subf %799, %800 : vector<1x128xf32>
      %cst_243 = arith.constant 1.000000e+02 : f32
      %802 = vector.broadcast %cst_243 : f32 to vector<1x128xf32>
      %803 = arith.mulf %801, %802 : vector<1x128xf32>
      %cst_244 = arith.constant 5.000000e-01 : f32
      %804 = vector.broadcast %cst_244 : f32 to vector<1x128xf32>
      %805 = arith.mulf %804, %803 : vector<1x128xf32>
      %806 = arith.mulf %805, %803 : vector<1x128xf32>
      %cst_245 = arith.constant 3.68623161 : f32
      %807 = vector.broadcast %cst_245 : f32 to vector<1x128xf32>
      %808 = arith.subf %807, %806 : vector<1x128xf32>
      %cst_246 = arith.constant dense<0xFF800000> : vector<1xf32>
      %809 = vector.multi_reduction <maximumf>, %808, %cst_246 [1] : vector<1x128xf32> to vector<1xf32>
      %810 = vector.shape_cast %809 : vector<1xf32> to vector<1x1xf32>
      %811 = vector.broadcast %810 : vector<1x1xf32> to vector<1x128xf32>
      %812 = arith.subf %808, %811 : vector<1x128xf32>
      %813 = math.exp %812 : vector<1x128xf32>
      %cst_247 = arith.constant dense<0.000000e+00> : vector<1xf32>
      %814 = vector.multi_reduction <add>, %813, %cst_247 [1] : vector<1x128xf32> to vector<1xf32>
      %815 = vector.shape_cast %814 : vector<1xf32> to vector<1x1xf32>
      %816 = math.log %815 : vector<1x1xf32>
      %817 = arith.addf %810, %816 : vector<1x1xf32>
      %cst_248 = arith.constant 4.85203028 : f32
      %818 = vector.broadcast %cst_248 : f32 to vector<1x1xf32>
      %819 = arith.subf %817, %818 : vector<1x1xf32>
      %c100_i32_249 = arith.constant 100 : i32
      %820 = arith.cmpi slt, %717, %c100_i32_249 : i32
      %cst_250 = arith.constant 0.000000e+00 : f32
      %821 = vector.broadcast %cst_250 : f32 to vector<1x1xf32>
      %822 = arith.select %820, %819, %821 : vector<1x1xf32>
      %823 = arith.addf %652, %822 : vector<1x1xf32>
      %c0_i32_251 = arith.constant 0 : i32
      %824 = vector.broadcast %c0_i32_251 : i32 to vector<8x1xi32>
      %825 = arith.cmpi eq, %15, %824 : vector<8x1xi32>
      %cst_252 = arith.constant 0.000000e+00 : f32
      %826 = vector.shape_cast %825 : vector<8x1xi1> to vector<8x1xi1>
      %827 = vector.broadcast %826 : vector<8x1xi1> to vector<8x128xi1>
      %828 = vector.shape_cast %813 : vector<1x128xf32> to vector<1x128xf32>
      %829 = vector.broadcast %828 : vector<1x128xf32> to vector<8x128xf32>
      %830 = vector.broadcast %cst_252 : f32 to vector<8x128xf32>
      %831 = arith.select %827, %829, %830 : vector<8x128xi1>, vector<8x128xf32>
      %832 = tpu.transpose %831, [1, 0] : vector<8x128xf32> -> vector<128x8xf32>
      %c0_253 = arith.constant 0 : index
      %c0_254 = arith.constant 0 : index
      %833 = vector.load %arg7[%c0_253, %c0_254] : memref<256x128xf32, #tpu.memory_space<vmem>>, vector<256x128xf32>
      %cst_255 = arith.constant dense<0.000000e+00> : vector<256x8xf32>
      %834 = tpu.matmul %833, %832, %cst_255 {dimension_numbers = #tpu.dot_dimension_numbers<[1], [0], [0], [1], [0, 0, 1, 1], [], []>} : vector<256x128xf32>, vector<128x8xf32>, vector<256x8xf32> -> vector<256x8xf32>
      %835 = vector.extract_strided_slice %834 {offsets = [0, 0], sizes = [128, 1], strides = [1, 1]} : vector<256x8xf32> to vector<128x1xf32>
      %836 = vector.extract_strided_slice %834 {offsets = [128, 0], sizes = [128, 1], strides = [1, 1]} : vector<256x8xf32> to vector<128x1xf32>
      %837 = arith.addf %835, %14 : vector<128x1xf32>
      %cst_256 = arith.constant 7.812500e-03 : f32
      %838 = arith.mulf %733, %cst_256 : f32
      %839 = vector.broadcast %838 : f32 to vector<1x128xf32>
      %840 = arith.addf %8, %839 : vector<1x128xf32>
      %841 = vector.broadcast %815 : vector<1x1xf32> to vector<1x128xf32>
      %842 = arith.mulf %840, %841 : vector<1x128xf32>
      %843 = vector.broadcast %842 : vector<1x128xf32> to vector<128x128xf32>
      %844 = vector.broadcast %836 : vector<128x1xf32> to vector<128x128xf32>
      %845 = arith.cmpf oge, %843, %844 : vector<128x128xf32>
      %846 = vector.broadcast %842 : vector<1x128xf32> to vector<128x128xf32>
      %847 = vector.broadcast %837 : vector<128x1xf32> to vector<128x128xf32>
      %848 = arith.cmpf olt, %846, %847 : vector<128x128xf32>
      %849 = arith.andi %845, %848 : vector<128x128xi1>
      %850 = arith.extui %849 : vector<128x128xi1> to vector<128x128xi32>
      %851 = arith.sitofp %850 : vector<128x128xi32> to vector<128x128xf32>
      %c0_i32_257 = arith.constant 0 : i32
      %852 = vector.broadcast %c0_i32_257 : i32 to vector<8x1xi32>
      %853 = arith.cmpi eq, %15, %852 : vector<8x1xi32>
      %c1_i32_258 = arith.constant 1 : i32
      %854 = vector.broadcast %c1_i32_258 : i32 to vector<8x1xi32>
      %855 = arith.cmpi eq, %15, %854 : vector<8x1xi32>
      %856 = vector.shape_cast %855 : vector<8x1xi1> to vector<8x1xi1>
      %857 = vector.broadcast %856 : vector<8x1xi1> to vector<8x128xi1>
      %858 = vector.shape_cast %734 : vector<1x128xf32> to vector<1x128xf32>
      %859 = vector.broadcast %858 : vector<1x128xf32> to vector<8x128xf32>
      %860 = vector.shape_cast %799 : vector<1x128xf32> to vector<1x128xf32>
      %861 = vector.broadcast %860 : vector<1x128xf32> to vector<8x128xf32>
      %862 = arith.select %857, %859, %861 : vector<8x128xi1>, vector<8x128xf32>
      %863 = vector.shape_cast %853 : vector<8x1xi1> to vector<8x1xi1>
      %864 = vector.broadcast %863 : vector<8x1xi1> to vector<8x128xi1>
      %865 = vector.shape_cast %773 : vector<1x128xf32> to vector<1x128xf32>
      %866 = vector.broadcast %865 : vector<1x128xf32> to vector<8x128xf32>
      %867 = arith.select %864, %866, %862 : vector<8x128xi1>, vector<8x128xf32>
      %cst_259 = arith.constant dense<0.000000e+00> : vector<8x128xf32>
      %868 = tpu.matmul %867, %851, %cst_259 {dimension_numbers = #tpu.dot_dimension_numbers<[1], [0], [0], [1], [0, 0, 1, 1], [], []>} : vector<8x128xf32>, vector<128x128xf32>, vector<8x128xf32> -> vector<8x128xf32>
      %869 = vector.extract_strided_slice %868 {offsets = [0, 0], sizes = [1, 128], strides = [1, 1]} : vector<8x128xf32> to vector<1x128xf32>
      %870 = vector.extract_strided_slice %868 {offsets = [1, 0], sizes = [1, 128], strides = [1, 1]} : vector<8x128xf32> to vector<1x128xf32>
      %871 = vector.extract_strided_slice %868 {offsets = [2, 0], sizes = [1, 128], strides = [1, 1]} : vector<8x128xf32> to vector<1x128xf32>
      %c4_i32_260 = arith.constant 4 : i32
      %872 = vector.broadcast %c4_i32_260 : i32 to vector<8x1xi32>
      %873 = arith.cmpi eq, %15, %872 : vector<8x1xi32>
      %874 = vector.shape_cast %873 : vector<8x1xi1> to vector<8x1xi1>
      %875 = vector.broadcast %874 : vector<8x1xi1> to vector<8x128xi1>
      %876 = vector.shape_cast %871 : vector<1x128xf32> to vector<1x128xf32>
      %877 = vector.broadcast %876 : vector<1x128xf32> to vector<8x128xf32>
      %878 = arith.select %875, %877, %707 : vector<8x128xi1>, vector<8x128xf32>
      %c4_i32_261 = arith.constant 4 : i32
      %879 = vector.broadcast %c4_i32_261 : i32 to vector<8x1xi32>
      %880 = arith.cmpi eq, %15, %879 : vector<8x1xi32>
      %881 = vector.shape_cast %880 : vector<8x1xi1> to vector<8x1xi1>
      %882 = vector.broadcast %881 : vector<8x1xi1> to vector<8x128xi1>
      %883 = vector.shape_cast %869 : vector<1x128xf32> to vector<1x128xf32>
      %884 = vector.broadcast %883 : vector<1x128xf32> to vector<8x128xf32>
      %885 = arith.select %882, %884, %714 : vector<8x128xi1>, vector<8x128xf32>
      %c64_i32_262 = arith.constant 64 : i32
      %886 = arith.muli %arg0, %c64_i32_262 : i32
      %887 = arith.addi %886, %28 : i32
      %c5_i32 = arith.constant 5 : i32
      %888 = arith.addi %887, %c5_i32 : i32
      %c5_i32_263 = arith.constant 5 : i32
      %889 = arith.addi %28, %c5_i32_263 : i32
      %890 = arith.index_cast %889 : i32 to index
      %c0_264 = arith.constant 0 : index
      %891 = vector.load %arg8[%890, %c0_264] : memref<64x128xf32, #tpu.memory_space<vmem>>, vector<1x128xf32>
      %c5_i32_265 = arith.constant 5 : i32
      %892 = arith.addi %28, %c5_i32_265 : i32
      %893 = arith.index_cast %892 : i32 to index
      %c0_266 = arith.constant 0 : index
      %894 = vector.load %arg9[%893, %c0_266] : memref<64x128xf32, #tpu.memory_space<vmem>>, vector<1x128xf32>
      %c1_i32_267 = arith.constant 1 : i32
      %895 = arith.subi %888, %c1_i32_267 : i32
      %c0_i32_268 = arith.constant 0 : i32
      %896 = arith.maxsi %895, %c0_i32_268 : i32
      %897 = arith.index_cast %896 : i32 to index
      %898 = memref.load %arg1[%897] : memref<128xf32, #tpu.memory_space<smem>>
      %899 = arith.index_cast %888 : i32 to index
      %900 = memref.load %arg1[%899] : memref<128xf32, #tpu.memory_space<smem>>
      %901 = arith.index_cast %888 : i32 to index
      %902 = memref.load %arg2[%901] : memref<128xf32, #tpu.memory_space<smem>>
      %903 = arith.index_cast %888 : i32 to index
      %904 = memref.load %arg3[%903] : memref<128xf32, #tpu.memory_space<smem>>
      %905 = arith.addf %870, %891 : vector<1x128xf32>
      %cst_269 = arith.constant 1.000000e+00 : f32
      %906 = vector.broadcast %cst_269 : f32 to vector<1x128xf32>
      %907 = arith.subf %869, %906 : vector<1x128xf32>
      %cst_270 = arith.constant 0.637264609 : f32
      %908 = vector.broadcast %cst_270 : f32 to vector<1x128xf32>
      %909 = arith.mulf %908, %907 : vector<1x128xf32>
      %910 = math.exp %909 : vector<1x128xf32>
      %cst_271 = arith.constant 5.73260832 : f32
      %911 = vector.broadcast %cst_271 : f32 to vector<1x128xf32>
      %912 = arith.mulf %911, %910 : vector<1x128xf32>
      %cst_272 = arith.constant -1.59614491 : f32
      %913 = vector.broadcast %cst_272 : f32 to vector<1x128xf32>
      %914 = arith.addf %913, %912 : vector<1x128xf32>
      %cst_273 = arith.constant 1.000000e+00 : f32
      %915 = vector.broadcast %cst_273 : f32 to vector<1x128xf32>
      %916 = arith.subf %869, %915 : vector<1x128xf32>
      %cst_274 = arith.constant -2.23738194 : f32
      %917 = vector.broadcast %cst_274 : f32 to vector<1x128xf32>
      %918 = arith.mulf %917, %916 : vector<1x128xf32>
      %919 = arith.addf %914, %918 : vector<1x128xf32>
      %920 = math.sqrt %869 : vector<1x128xf32>
      %cst_275 = arith.constant -2.54478955 : f32
      %921 = vector.broadcast %cst_275 : f32 to vector<1x128xf32>
      %922 = arith.mulf %921, %920 : vector<1x128xf32>
      %923 = math.exp %922 : vector<1x128xf32>
      %cst_276 = arith.constant 0.0784895569 : f32
      %924 = vector.broadcast %cst_276 : f32 to vector<1x128xf32>
      %925 = arith.subf %924, %923 : vector<1x128xf32>
      %cst_277 = arith.constant 0.641237199 : f32
      %926 = vector.broadcast %cst_277 : f32 to vector<1x128xf32>
      %927 = arith.mulf %926, %925 : vector<1x128xf32>
      %928 = arith.addf %919, %927 : vector<1x128xf32>
      %929 = vector.broadcast %898 : f32 to vector<1x128xf32>
      %930 = arith.mulf %929, %905 : vector<1x128xf32>
      %931 = arith.subf %928, %930 : vector<1x128xf32>
      %932 = arith.mulf %898, %4 : f32
      %933 = vector.broadcast %932 : f32 to vector<1x128xf32>
      %934 = arith.mulf %933, %931 : vector<1x128xf32>
      %935 = arith.subf %869, %934 : vector<1x128xf32>
      %936 = arith.addf %935, %894 : vector<1x128xf32>
      %cst_278 = arith.constant 1.000000e+00 : f32
      %937 = vector.broadcast %cst_278 : f32 to vector<1x128xf32>
      %938 = arith.cmpf ogt, %936, %937 : vector<1x128xf32>
      %cst_279 = arith.constant 1.000000e+00 : f32
      %939 = vector.broadcast %cst_279 : f32 to vector<1x128xf32>
      %940 = arith.select %938, %939, %936 : vector<1x128xi1>, vector<1x128xf32>
      %cst_280 = arith.constant 0.000000e+00 : f32
      %941 = vector.broadcast %cst_280 : f32 to vector<1x128xf32>
      %942 = arith.cmpf olt, %940, %941 : vector<1x128xf32>
      %cst_281 = arith.constant 1.000000e-10 : f32
      %943 = vector.broadcast %cst_281 : f32 to vector<1x128xf32>
      %944 = arith.select %942, %943, %940 : vector<1x128xi1>, vector<1x128xf32>
      %cst_282 = arith.constant 1.000000e+00 : f32
      %945 = vector.broadcast %cst_282 : f32 to vector<1x128xf32>
      %946 = arith.subf %944, %945 : vector<1x128xf32>
      %cst_283 = arith.constant 0.637264609 : f32
      %947 = vector.broadcast %cst_283 : f32 to vector<1x128xf32>
      %948 = arith.mulf %947, %946 : vector<1x128xf32>
      %949 = math.exp %948 : vector<1x128xf32>
      %cst_284 = arith.constant 5.73260832 : f32
      %950 = vector.broadcast %cst_284 : f32 to vector<1x128xf32>
      %951 = arith.mulf %950, %949 : vector<1x128xf32>
      %cst_285 = arith.constant -1.59614491 : f32
      %952 = vector.broadcast %cst_285 : f32 to vector<1x128xf32>
      %953 = arith.addf %952, %951 : vector<1x128xf32>
      %cst_286 = arith.constant 1.000000e+00 : f32
      %954 = vector.broadcast %cst_286 : f32 to vector<1x128xf32>
      %955 = arith.subf %944, %954 : vector<1x128xf32>
      %cst_287 = arith.constant -2.23738194 : f32
      %956 = vector.broadcast %cst_287 : f32 to vector<1x128xf32>
      %957 = arith.mulf %956, %955 : vector<1x128xf32>
      %958 = arith.addf %953, %957 : vector<1x128xf32>
      %959 = math.sqrt %944 : vector<1x128xf32>
      %cst_288 = arith.constant -2.54478955 : f32
      %960 = vector.broadcast %cst_288 : f32 to vector<1x128xf32>
      %961 = arith.mulf %960, %959 : vector<1x128xf32>
      %962 = math.exp %961 : vector<1x128xf32>
      %cst_289 = arith.constant 0.0784895569 : f32
      %963 = vector.broadcast %cst_289 : f32 to vector<1x128xf32>
      %964 = arith.subf %963, %962 : vector<1x128xf32>
      %cst_290 = arith.constant 0.641237199 : f32
      %965 = vector.broadcast %cst_290 : f32 to vector<1x128xf32>
      %966 = arith.mulf %965, %964 : vector<1x128xf32>
      %967 = arith.addf %958, %966 : vector<1x128xf32>
      %968 = vector.broadcast %900 : f32 to vector<1x128xf32>
      %969 = arith.mulf %968, %905 : vector<1x128xf32>
      %970 = arith.subf %967, %969 : vector<1x128xf32>
      %971 = vector.broadcast %902 : f32 to vector<1x128xf32>
      %972 = arith.subf %970, %971 : vector<1x128xf32>
      %cst_291 = arith.constant 1.000000e+02 : f32
      %973 = vector.broadcast %cst_291 : f32 to vector<1x128xf32>
      %974 = arith.mulf %972, %973 : vector<1x128xf32>
      %cst_292 = arith.constant 5.000000e-01 : f32
      %975 = vector.broadcast %cst_292 : f32 to vector<1x128xf32>
      %976 = arith.mulf %975, %974 : vector<1x128xf32>
      %977 = arith.mulf %976, %974 : vector<1x128xf32>
      %cst_293 = arith.constant 3.68623161 : f32
      %978 = vector.broadcast %cst_293 : f32 to vector<1x128xf32>
      %979 = arith.subf %978, %977 : vector<1x128xf32>
      %cst_294 = arith.constant dense<0xFF800000> : vector<1xf32>
      %980 = vector.multi_reduction <maximumf>, %979, %cst_294 [1] : vector<1x128xf32> to vector<1xf32>
      %981 = vector.shape_cast %980 : vector<1xf32> to vector<1x1xf32>
      %982 = vector.broadcast %981 : vector<1x1xf32> to vector<1x128xf32>
      %983 = arith.subf %979, %982 : vector<1x128xf32>
      %984 = math.exp %983 : vector<1x128xf32>
      %cst_295 = arith.constant dense<0.000000e+00> : vector<1xf32>
      %985 = vector.multi_reduction <add>, %984, %cst_295 [1] : vector<1x128xf32> to vector<1xf32>
      %986 = vector.shape_cast %985 : vector<1xf32> to vector<1x1xf32>
      %987 = math.log %986 : vector<1x1xf32>
      %988 = arith.addf %981, %987 : vector<1x1xf32>
      %cst_296 = arith.constant 4.85203028 : f32
      %989 = vector.broadcast %cst_296 : f32 to vector<1x1xf32>
      %990 = arith.subf %988, %989 : vector<1x1xf32>
      %c100_i32_297 = arith.constant 100 : i32
      %991 = arith.cmpi slt, %888, %c100_i32_297 : i32
      %cst_298 = arith.constant 0.000000e+00 : f32
      %992 = vector.broadcast %cst_298 : f32 to vector<1x1xf32>
      %993 = arith.select %991, %990, %992 : vector<1x1xf32>
      %994 = arith.addf %823, %993 : vector<1x1xf32>
      %c0_i32_299 = arith.constant 0 : i32
      %995 = vector.broadcast %c0_i32_299 : i32 to vector<8x1xi32>
      %996 = arith.cmpi eq, %15, %995 : vector<8x1xi32>
      %cst_300 = arith.constant 0.000000e+00 : f32
      %997 = vector.shape_cast %996 : vector<8x1xi1> to vector<8x1xi1>
      %998 = vector.broadcast %997 : vector<8x1xi1> to vector<8x128xi1>
      %999 = vector.shape_cast %984 : vector<1x128xf32> to vector<1x128xf32>
      %1000 = vector.broadcast %999 : vector<1x128xf32> to vector<8x128xf32>
      %1001 = vector.broadcast %cst_300 : f32 to vector<8x128xf32>
      %1002 = arith.select %998, %1000, %1001 : vector<8x128xi1>, vector<8x128xf32>
      %1003 = tpu.transpose %1002, [1, 0] : vector<8x128xf32> -> vector<128x8xf32>
      %c0_301 = arith.constant 0 : index
      %c0_302 = arith.constant 0 : index
      %1004 = vector.load %arg7[%c0_301, %c0_302] : memref<256x128xf32, #tpu.memory_space<vmem>>, vector<256x128xf32>
      %cst_303 = arith.constant dense<0.000000e+00> : vector<256x8xf32>
      %1005 = tpu.matmul %1004, %1003, %cst_303 {dimension_numbers = #tpu.dot_dimension_numbers<[1], [0], [0], [1], [0, 0, 1, 1], [], []>} : vector<256x128xf32>, vector<128x8xf32>, vector<256x8xf32> -> vector<256x8xf32>
      %1006 = vector.extract_strided_slice %1005 {offsets = [0, 0], sizes = [128, 1], strides = [1, 1]} : vector<256x8xf32> to vector<128x1xf32>
      %1007 = vector.extract_strided_slice %1005 {offsets = [128, 0], sizes = [128, 1], strides = [1, 1]} : vector<256x8xf32> to vector<128x1xf32>
      %1008 = arith.addf %1006, %14 : vector<128x1xf32>
      %cst_304 = arith.constant 7.812500e-03 : f32
      %1009 = arith.mulf %904, %cst_304 : f32
      %1010 = vector.broadcast %1009 : f32 to vector<1x128xf32>
      %1011 = arith.addf %8, %1010 : vector<1x128xf32>
      %1012 = vector.broadcast %986 : vector<1x1xf32> to vector<1x128xf32>
      %1013 = arith.mulf %1011, %1012 : vector<1x128xf32>
      %1014 = vector.broadcast %1013 : vector<1x128xf32> to vector<128x128xf32>
      %1015 = vector.broadcast %1007 : vector<128x1xf32> to vector<128x128xf32>
      %1016 = arith.cmpf oge, %1014, %1015 : vector<128x128xf32>
      %1017 = vector.broadcast %1013 : vector<1x128xf32> to vector<128x128xf32>
      %1018 = vector.broadcast %1008 : vector<128x1xf32> to vector<128x128xf32>
      %1019 = arith.cmpf olt, %1017, %1018 : vector<128x128xf32>
      %1020 = arith.andi %1016, %1019 : vector<128x128xi1>
      %1021 = arith.extui %1020 : vector<128x128xi1> to vector<128x128xi32>
      %1022 = arith.sitofp %1021 : vector<128x128xi32> to vector<128x128xf32>
      %c0_i32_305 = arith.constant 0 : i32
      %1023 = vector.broadcast %c0_i32_305 : i32 to vector<8x1xi32>
      %1024 = arith.cmpi eq, %15, %1023 : vector<8x1xi32>
      %c1_i32_306 = arith.constant 1 : i32
      %1025 = vector.broadcast %c1_i32_306 : i32 to vector<8x1xi32>
      %1026 = arith.cmpi eq, %15, %1025 : vector<8x1xi32>
      %1027 = vector.shape_cast %1026 : vector<8x1xi1> to vector<8x1xi1>
      %1028 = vector.broadcast %1027 : vector<8x1xi1> to vector<8x128xi1>
      %1029 = vector.shape_cast %905 : vector<1x128xf32> to vector<1x128xf32>
      %1030 = vector.broadcast %1029 : vector<1x128xf32> to vector<8x128xf32>
      %1031 = vector.shape_cast %970 : vector<1x128xf32> to vector<1x128xf32>
      %1032 = vector.broadcast %1031 : vector<1x128xf32> to vector<8x128xf32>
      %1033 = arith.select %1028, %1030, %1032 : vector<8x128xi1>, vector<8x128xf32>
      %1034 = vector.shape_cast %1024 : vector<8x1xi1> to vector<8x1xi1>
      %1035 = vector.broadcast %1034 : vector<8x1xi1> to vector<8x128xi1>
      %1036 = vector.shape_cast %944 : vector<1x128xf32> to vector<1x128xf32>
      %1037 = vector.broadcast %1036 : vector<1x128xf32> to vector<8x128xf32>
      %1038 = arith.select %1035, %1037, %1033 : vector<8x128xi1>, vector<8x128xf32>
      %cst_307 = arith.constant dense<0.000000e+00> : vector<8x128xf32>
      %1039 = tpu.matmul %1038, %1022, %cst_307 {dimension_numbers = #tpu.dot_dimension_numbers<[1], [0], [0], [1], [0, 0, 1, 1], [], []>} : vector<8x128xf32>, vector<128x128xf32>, vector<8x128xf32> -> vector<8x128xf32>
      %1040 = vector.extract_strided_slice %1039 {offsets = [0, 0], sizes = [1, 128], strides = [1, 1]} : vector<8x128xf32> to vector<1x128xf32>
      %1041 = vector.extract_strided_slice %1039 {offsets = [1, 0], sizes = [1, 128], strides = [1, 1]} : vector<8x128xf32> to vector<1x128xf32>
      %1042 = vector.extract_strided_slice %1039 {offsets = [2, 0], sizes = [1, 128], strides = [1, 1]} : vector<8x128xf32> to vector<1x128xf32>
      %c5_i32_308 = arith.constant 5 : i32
      %1043 = vector.broadcast %c5_i32_308 : i32 to vector<8x1xi32>
      %1044 = arith.cmpi eq, %15, %1043 : vector<8x1xi32>
      %1045 = vector.shape_cast %1044 : vector<8x1xi1> to vector<8x1xi1>
      %1046 = vector.broadcast %1045 : vector<8x1xi1> to vector<8x128xi1>
      %1047 = vector.shape_cast %1042 : vector<1x128xf32> to vector<1x128xf32>
      %1048 = vector.broadcast %1047 : vector<1x128xf32> to vector<8x128xf32>
      %1049 = arith.select %1046, %1048, %878 : vector<8x128xi1>, vector<8x128xf32>
      %c5_i32_309 = arith.constant 5 : i32
      %1050 = vector.broadcast %c5_i32_309 : i32 to vector<8x1xi32>
      %1051 = arith.cmpi eq, %15, %1050 : vector<8x1xi32>
      %1052 = vector.shape_cast %1051 : vector<8x1xi1> to vector<8x1xi1>
      %1053 = vector.broadcast %1052 : vector<8x1xi1> to vector<8x128xi1>
      %1054 = vector.shape_cast %1040 : vector<1x128xf32> to vector<1x128xf32>
      %1055 = vector.broadcast %1054 : vector<1x128xf32> to vector<8x128xf32>
      %1056 = arith.select %1053, %1055, %885 : vector<8x128xi1>, vector<8x128xf32>
      %c64_i32_310 = arith.constant 64 : i32
      %1057 = arith.muli %arg0, %c64_i32_310 : i32
      %1058 = arith.addi %1057, %28 : i32
      %c6_i32 = arith.constant 6 : i32
      %1059 = arith.addi %1058, %c6_i32 : i32
      %c6_i32_311 = arith.constant 6 : i32
      %1060 = arith.addi %28, %c6_i32_311 : i32
      %1061 = arith.index_cast %1060 : i32 to index
      %c0_312 = arith.constant 0 : index
      %1062 = vector.load %arg8[%1061, %c0_312] : memref<64x128xf32, #tpu.memory_space<vmem>>, vector<1x128xf32>
      %c6_i32_313 = arith.constant 6 : i32
      %1063 = arith.addi %28, %c6_i32_313 : i32
      %1064 = arith.index_cast %1063 : i32 to index
      %c0_314 = arith.constant 0 : index
      %1065 = vector.load %arg9[%1064, %c0_314] : memref<64x128xf32, #tpu.memory_space<vmem>>, vector<1x128xf32>
      %c1_i32_315 = arith.constant 1 : i32
      %1066 = arith.subi %1059, %c1_i32_315 : i32
      %c0_i32_316 = arith.constant 0 : i32
      %1067 = arith.maxsi %1066, %c0_i32_316 : i32
      %1068 = arith.index_cast %1067 : i32 to index
      %1069 = memref.load %arg1[%1068] : memref<128xf32, #tpu.memory_space<smem>>
      %1070 = arith.index_cast %1059 : i32 to index
      %1071 = memref.load %arg1[%1070] : memref<128xf32, #tpu.memory_space<smem>>
      %1072 = arith.index_cast %1059 : i32 to index
      %1073 = memref.load %arg2[%1072] : memref<128xf32, #tpu.memory_space<smem>>
      %1074 = arith.index_cast %1059 : i32 to index
      %1075 = memref.load %arg3[%1074] : memref<128xf32, #tpu.memory_space<smem>>
      %1076 = arith.addf %1041, %1062 : vector<1x128xf32>
      %cst_317 = arith.constant 1.000000e+00 : f32
      %1077 = vector.broadcast %cst_317 : f32 to vector<1x128xf32>
      %1078 = arith.subf %1040, %1077 : vector<1x128xf32>
      %cst_318 = arith.constant 0.637264609 : f32
      %1079 = vector.broadcast %cst_318 : f32 to vector<1x128xf32>
      %1080 = arith.mulf %1079, %1078 : vector<1x128xf32>
      %1081 = math.exp %1080 : vector<1x128xf32>
      %cst_319 = arith.constant 5.73260832 : f32
      %1082 = vector.broadcast %cst_319 : f32 to vector<1x128xf32>
      %1083 = arith.mulf %1082, %1081 : vector<1x128xf32>
      %cst_320 = arith.constant -1.59614491 : f32
      %1084 = vector.broadcast %cst_320 : f32 to vector<1x128xf32>
      %1085 = arith.addf %1084, %1083 : vector<1x128xf32>
      %cst_321 = arith.constant 1.000000e+00 : f32
      %1086 = vector.broadcast %cst_321 : f32 to vector<1x128xf32>
      %1087 = arith.subf %1040, %1086 : vector<1x128xf32>
      %cst_322 = arith.constant -2.23738194 : f32
      %1088 = vector.broadcast %cst_322 : f32 to vector<1x128xf32>
      %1089 = arith.mulf %1088, %1087 : vector<1x128xf32>
      %1090 = arith.addf %1085, %1089 : vector<1x128xf32>
      %1091 = math.sqrt %1040 : vector<1x128xf32>
      %cst_323 = arith.constant -2.54478955 : f32
      %1092 = vector.broadcast %cst_323 : f32 to vector<1x128xf32>
      %1093 = arith.mulf %1092, %1091 : vector<1x128xf32>
      %1094 = math.exp %1093 : vector<1x128xf32>
      %cst_324 = arith.constant 0.0784895569 : f32
      %1095 = vector.broadcast %cst_324 : f32 to vector<1x128xf32>
      %1096 = arith.subf %1095, %1094 : vector<1x128xf32>
      %cst_325 = arith.constant 0.641237199 : f32
      %1097 = vector.broadcast %cst_325 : f32 to vector<1x128xf32>
      %1098 = arith.mulf %1097, %1096 : vector<1x128xf32>
      %1099 = arith.addf %1090, %1098 : vector<1x128xf32>
      %1100 = vector.broadcast %1069 : f32 to vector<1x128xf32>
      %1101 = arith.mulf %1100, %1076 : vector<1x128xf32>
      %1102 = arith.subf %1099, %1101 : vector<1x128xf32>
      %1103 = arith.mulf %1069, %4 : f32
      %1104 = vector.broadcast %1103 : f32 to vector<1x128xf32>
      %1105 = arith.mulf %1104, %1102 : vector<1x128xf32>
      %1106 = arith.subf %1040, %1105 : vector<1x128xf32>
      %1107 = arith.addf %1106, %1065 : vector<1x128xf32>
      %cst_326 = arith.constant 1.000000e+00 : f32
      %1108 = vector.broadcast %cst_326 : f32 to vector<1x128xf32>
      %1109 = arith.cmpf ogt, %1107, %1108 : vector<1x128xf32>
      %cst_327 = arith.constant 1.000000e+00 : f32
      %1110 = vector.broadcast %cst_327 : f32 to vector<1x128xf32>
      %1111 = arith.select %1109, %1110, %1107 : vector<1x128xi1>, vector<1x128xf32>
      %cst_328 = arith.constant 0.000000e+00 : f32
      %1112 = vector.broadcast %cst_328 : f32 to vector<1x128xf32>
      %1113 = arith.cmpf olt, %1111, %1112 : vector<1x128xf32>
      %cst_329 = arith.constant 1.000000e-10 : f32
      %1114 = vector.broadcast %cst_329 : f32 to vector<1x128xf32>
      %1115 = arith.select %1113, %1114, %1111 : vector<1x128xi1>, vector<1x128xf32>
      %cst_330 = arith.constant 1.000000e+00 : f32
      %1116 = vector.broadcast %cst_330 : f32 to vector<1x128xf32>
      %1117 = arith.subf %1115, %1116 : vector<1x128xf32>
      %cst_331 = arith.constant 0.637264609 : f32
      %1118 = vector.broadcast %cst_331 : f32 to vector<1x128xf32>
      %1119 = arith.mulf %1118, %1117 : vector<1x128xf32>
      %1120 = math.exp %1119 : vector<1x128xf32>
      %cst_332 = arith.constant 5.73260832 : f32
      %1121 = vector.broadcast %cst_332 : f32 to vector<1x128xf32>
      %1122 = arith.mulf %1121, %1120 : vector<1x128xf32>
      %cst_333 = arith.constant -1.59614491 : f32
      %1123 = vector.broadcast %cst_333 : f32 to vector<1x128xf32>
      %1124 = arith.addf %1123, %1122 : vector<1x128xf32>
      %cst_334 = arith.constant 1.000000e+00 : f32
      %1125 = vector.broadcast %cst_334 : f32 to vector<1x128xf32>
      %1126 = arith.subf %1115, %1125 : vector<1x128xf32>
      %cst_335 = arith.constant -2.23738194 : f32
      %1127 = vector.broadcast %cst_335 : f32 to vector<1x128xf32>
      %1128 = arith.mulf %1127, %1126 : vector<1x128xf32>
      %1129 = arith.addf %1124, %1128 : vector<1x128xf32>
      %1130 = math.sqrt %1115 : vector<1x128xf32>
      %cst_336 = arith.constant -2.54478955 : f32
      %1131 = vector.broadcast %cst_336 : f32 to vector<1x128xf32>
      %1132 = arith.mulf %1131, %1130 : vector<1x128xf32>
      %1133 = math.exp %1132 : vector<1x128xf32>
      %cst_337 = arith.constant 0.0784895569 : f32
      %1134 = vector.broadcast %cst_337 : f32 to vector<1x128xf32>
      %1135 = arith.subf %1134, %1133 : vector<1x128xf32>
      %cst_338 = arith.constant 0.641237199 : f32
      %1136 = vector.broadcast %cst_338 : f32 to vector<1x128xf32>
      %1137 = arith.mulf %1136, %1135 : vector<1x128xf32>
      %1138 = arith.addf %1129, %1137 : vector<1x128xf32>
      %1139 = vector.broadcast %1071 : f32 to vector<1x128xf32>
      %1140 = arith.mulf %1139, %1076 : vector<1x128xf32>
      %1141 = arith.subf %1138, %1140 : vector<1x128xf32>
      %1142 = vector.broadcast %1073 : f32 to vector<1x128xf32>
      %1143 = arith.subf %1141, %1142 : vector<1x128xf32>
      %cst_339 = arith.constant 1.000000e+02 : f32
      %1144 = vector.broadcast %cst_339 : f32 to vector<1x128xf32>
      %1145 = arith.mulf %1143, %1144 : vector<1x128xf32>
      %cst_340 = arith.constant 5.000000e-01 : f32
      %1146 = vector.broadcast %cst_340 : f32 to vector<1x128xf32>
      %1147 = arith.mulf %1146, %1145 : vector<1x128xf32>
      %1148 = arith.mulf %1147, %1145 : vector<1x128xf32>
      %cst_341 = arith.constant 3.68623161 : f32
      %1149 = vector.broadcast %cst_341 : f32 to vector<1x128xf32>
      %1150 = arith.subf %1149, %1148 : vector<1x128xf32>
      %cst_342 = arith.constant dense<0xFF800000> : vector<1xf32>
      %1151 = vector.multi_reduction <maximumf>, %1150, %cst_342 [1] : vector<1x128xf32> to vector<1xf32>
      %1152 = vector.shape_cast %1151 : vector<1xf32> to vector<1x1xf32>
      %1153 = vector.broadcast %1152 : vector<1x1xf32> to vector<1x128xf32>
      %1154 = arith.subf %1150, %1153 : vector<1x128xf32>
      %1155 = math.exp %1154 : vector<1x128xf32>
      %cst_343 = arith.constant dense<0.000000e+00> : vector<1xf32>
      %1156 = vector.multi_reduction <add>, %1155, %cst_343 [1] : vector<1x128xf32> to vector<1xf32>
      %1157 = vector.shape_cast %1156 : vector<1xf32> to vector<1x1xf32>
      %1158 = math.log %1157 : vector<1x1xf32>
      %1159 = arith.addf %1152, %1158 : vector<1x1xf32>
      %cst_344 = arith.constant 4.85203028 : f32
      %1160 = vector.broadcast %cst_344 : f32 to vector<1x1xf32>
      %1161 = arith.subf %1159, %1160 : vector<1x1xf32>
      %c100_i32_345 = arith.constant 100 : i32
      %1162 = arith.cmpi slt, %1059, %c100_i32_345 : i32
      %cst_346 = arith.constant 0.000000e+00 : f32
      %1163 = vector.broadcast %cst_346 : f32 to vector<1x1xf32>
      %1164 = arith.select %1162, %1161, %1163 : vector<1x1xf32>
      %1165 = arith.addf %994, %1164 : vector<1x1xf32>
      %c0_i32_347 = arith.constant 0 : i32
      %1166 = vector.broadcast %c0_i32_347 : i32 to vector<8x1xi32>
      %1167 = arith.cmpi eq, %15, %1166 : vector<8x1xi32>
      %cst_348 = arith.constant 0.000000e+00 : f32
      %1168 = vector.shape_cast %1167 : vector<8x1xi1> to vector<8x1xi1>
      %1169 = vector.broadcast %1168 : vector<8x1xi1> to vector<8x128xi1>
      %1170 = vector.shape_cast %1155 : vector<1x128xf32> to vector<1x128xf32>
      %1171 = vector.broadcast %1170 : vector<1x128xf32> to vector<8x128xf32>
      %1172 = vector.broadcast %cst_348 : f32 to vector<8x128xf32>
      %1173 = arith.select %1169, %1171, %1172 : vector<8x128xi1>, vector<8x128xf32>
      %1174 = tpu.transpose %1173, [1, 0] : vector<8x128xf32> -> vector<128x8xf32>
      %c0_349 = arith.constant 0 : index
      %c0_350 = arith.constant 0 : index
      %1175 = vector.load %arg7[%c0_349, %c0_350] : memref<256x128xf32, #tpu.memory_space<vmem>>, vector<256x128xf32>
      %cst_351 = arith.constant dense<0.000000e+00> : vector<256x8xf32>
      %1176 = tpu.matmul %1175, %1174, %cst_351 {dimension_numbers = #tpu.dot_dimension_numbers<[1], [0], [0], [1], [0, 0, 1, 1], [], []>} : vector<256x128xf32>, vector<128x8xf32>, vector<256x8xf32> -> vector<256x8xf32>
      %1177 = vector.extract_strided_slice %1176 {offsets = [0, 0], sizes = [128, 1], strides = [1, 1]} : vector<256x8xf32> to vector<128x1xf32>
      %1178 = vector.extract_strided_slice %1176 {offsets = [128, 0], sizes = [128, 1], strides = [1, 1]} : vector<256x8xf32> to vector<128x1xf32>
      %1179 = arith.addf %1177, %14 : vector<128x1xf32>
      %cst_352 = arith.constant 7.812500e-03 : f32
      %1180 = arith.mulf %1075, %cst_352 : f32
      %1181 = vector.broadcast %1180 : f32 to vector<1x128xf32>
      %1182 = arith.addf %8, %1181 : vector<1x128xf32>
      %1183 = vector.broadcast %1157 : vector<1x1xf32> to vector<1x128xf32>
      %1184 = arith.mulf %1182, %1183 : vector<1x128xf32>
      %1185 = vector.broadcast %1184 : vector<1x128xf32> to vector<128x128xf32>
      %1186 = vector.broadcast %1178 : vector<128x1xf32> to vector<128x128xf32>
      %1187 = arith.cmpf oge, %1185, %1186 : vector<128x128xf32>
      %1188 = vector.broadcast %1184 : vector<1x128xf32> to vector<128x128xf32>
      %1189 = vector.broadcast %1179 : vector<128x1xf32> to vector<128x128xf32>
      %1190 = arith.cmpf olt, %1188, %1189 : vector<128x128xf32>
      %1191 = arith.andi %1187, %1190 : vector<128x128xi1>
      %1192 = arith.extui %1191 : vector<128x128xi1> to vector<128x128xi32>
      %1193 = arith.sitofp %1192 : vector<128x128xi32> to vector<128x128xf32>
      %c0_i32_353 = arith.constant 0 : i32
      %1194 = vector.broadcast %c0_i32_353 : i32 to vector<8x1xi32>
      %1195 = arith.cmpi eq, %15, %1194 : vector<8x1xi32>
      %c1_i32_354 = arith.constant 1 : i32
      %1196 = vector.broadcast %c1_i32_354 : i32 to vector<8x1xi32>
      %1197 = arith.cmpi eq, %15, %1196 : vector<8x1xi32>
      %1198 = vector.shape_cast %1197 : vector<8x1xi1> to vector<8x1xi1>
      %1199 = vector.broadcast %1198 : vector<8x1xi1> to vector<8x128xi1>
      %1200 = vector.shape_cast %1076 : vector<1x128xf32> to vector<1x128xf32>
      %1201 = vector.broadcast %1200 : vector<1x128xf32> to vector<8x128xf32>
      %1202 = vector.shape_cast %1141 : vector<1x128xf32> to vector<1x128xf32>
      %1203 = vector.broadcast %1202 : vector<1x128xf32> to vector<8x128xf32>
      %1204 = arith.select %1199, %1201, %1203 : vector<8x128xi1>, vector<8x128xf32>
      %1205 = vector.shape_cast %1195 : vector<8x1xi1> to vector<8x1xi1>
      %1206 = vector.broadcast %1205 : vector<8x1xi1> to vector<8x128xi1>
      %1207 = vector.shape_cast %1115 : vector<1x128xf32> to vector<1x128xf32>
      %1208 = vector.broadcast %1207 : vector<1x128xf32> to vector<8x128xf32>
      %1209 = arith.select %1206, %1208, %1204 : vector<8x128xi1>, vector<8x128xf32>
      %cst_355 = arith.constant dense<0.000000e+00> : vector<8x128xf32>
      %1210 = tpu.matmul %1209, %1193, %cst_355 {dimension_numbers = #tpu.dot_dimension_numbers<[1], [0], [0], [1], [0, 0, 1, 1], [], []>} : vector<8x128xf32>, vector<128x128xf32>, vector<8x128xf32> -> vector<8x128xf32>
      %1211 = vector.extract_strided_slice %1210 {offsets = [0, 0], sizes = [1, 128], strides = [1, 1]} : vector<8x128xf32> to vector<1x128xf32>
      %1212 = vector.extract_strided_slice %1210 {offsets = [1, 0], sizes = [1, 128], strides = [1, 1]} : vector<8x128xf32> to vector<1x128xf32>
      %1213 = vector.extract_strided_slice %1210 {offsets = [2, 0], sizes = [1, 128], strides = [1, 1]} : vector<8x128xf32> to vector<1x128xf32>
      %c6_i32_356 = arith.constant 6 : i32
      %1214 = vector.broadcast %c6_i32_356 : i32 to vector<8x1xi32>
      %1215 = arith.cmpi eq, %15, %1214 : vector<8x1xi32>
      %1216 = vector.shape_cast %1215 : vector<8x1xi1> to vector<8x1xi1>
      %1217 = vector.broadcast %1216 : vector<8x1xi1> to vector<8x128xi1>
      %1218 = vector.shape_cast %1213 : vector<1x128xf32> to vector<1x128xf32>
      %1219 = vector.broadcast %1218 : vector<1x128xf32> to vector<8x128xf32>
      %1220 = arith.select %1217, %1219, %1049 : vector<8x128xi1>, vector<8x128xf32>
      %c6_i32_357 = arith.constant 6 : i32
      %1221 = vector.broadcast %c6_i32_357 : i32 to vector<8x1xi32>
      %1222 = arith.cmpi eq, %15, %1221 : vector<8x1xi32>
      %1223 = vector.shape_cast %1222 : vector<8x1xi1> to vector<8x1xi1>
      %1224 = vector.broadcast %1223 : vector<8x1xi1> to vector<8x128xi1>
      %1225 = vector.shape_cast %1211 : vector<1x128xf32> to vector<1x128xf32>
      %1226 = vector.broadcast %1225 : vector<1x128xf32> to vector<8x128xf32>
      %1227 = arith.select %1224, %1226, %1056 : vector<8x128xi1>, vector<8x128xf32>
      %c64_i32_358 = arith.constant 64 : i32
      %1228 = arith.muli %arg0, %c64_i32_358 : i32
      %1229 = arith.addi %1228, %28 : i32
      %c7_i32 = arith.constant 7 : i32
      %1230 = arith.addi %1229, %c7_i32 : i32
      %c7_i32_359 = arith.constant 7 : i32
      %1231 = arith.addi %28, %c7_i32_359 : i32
      %1232 = arith.index_cast %1231 : i32 to index
      %c0_360 = arith.constant 0 : index
      %1233 = vector.load %arg8[%1232, %c0_360] : memref<64x128xf32, #tpu.memory_space<vmem>>, vector<1x128xf32>
      %c7_i32_361 = arith.constant 7 : i32
      %1234 = arith.addi %28, %c7_i32_361 : i32
      %1235 = arith.index_cast %1234 : i32 to index
      %c0_362 = arith.constant 0 : index
      %1236 = vector.load %arg9[%1235, %c0_362] : memref<64x128xf32, #tpu.memory_space<vmem>>, vector<1x128xf32>
      %c1_i32_363 = arith.constant 1 : i32
      %1237 = arith.subi %1230, %c1_i32_363 : i32
      %c0_i32_364 = arith.constant 0 : i32
      %1238 = arith.maxsi %1237, %c0_i32_364 : i32
      %1239 = arith.index_cast %1238 : i32 to index
      %1240 = memref.load %arg1[%1239] : memref<128xf32, #tpu.memory_space<smem>>
      %1241 = arith.index_cast %1230 : i32 to index
      %1242 = memref.load %arg1[%1241] : memref<128xf32, #tpu.memory_space<smem>>
      %1243 = arith.index_cast %1230 : i32 to index
      %1244 = memref.load %arg2[%1243] : memref<128xf32, #tpu.memory_space<smem>>
      %1245 = arith.index_cast %1230 : i32 to index
      %1246 = memref.load %arg3[%1245] : memref<128xf32, #tpu.memory_space<smem>>
      %1247 = arith.addf %1212, %1233 : vector<1x128xf32>
      %cst_365 = arith.constant 1.000000e+00 : f32
      %1248 = vector.broadcast %cst_365 : f32 to vector<1x128xf32>
      %1249 = arith.subf %1211, %1248 : vector<1x128xf32>
      %cst_366 = arith.constant 0.637264609 : f32
      %1250 = vector.broadcast %cst_366 : f32 to vector<1x128xf32>
      %1251 = arith.mulf %1250, %1249 : vector<1x128xf32>
      %1252 = math.exp %1251 : vector<1x128xf32>
      %cst_367 = arith.constant 5.73260832 : f32
      %1253 = vector.broadcast %cst_367 : f32 to vector<1x128xf32>
      %1254 = arith.mulf %1253, %1252 : vector<1x128xf32>
      %cst_368 = arith.constant -1.59614491 : f32
      %1255 = vector.broadcast %cst_368 : f32 to vector<1x128xf32>
      %1256 = arith.addf %1255, %1254 : vector<1x128xf32>
      %cst_369 = arith.constant 1.000000e+00 : f32
      %1257 = vector.broadcast %cst_369 : f32 to vector<1x128xf32>
      %1258 = arith.subf %1211, %1257 : vector<1x128xf32>
      %cst_370 = arith.constant -2.23738194 : f32
      %1259 = vector.broadcast %cst_370 : f32 to vector<1x128xf32>
      %1260 = arith.mulf %1259, %1258 : vector<1x128xf32>
      %1261 = arith.addf %1256, %1260 : vector<1x128xf32>
      %1262 = math.sqrt %1211 : vector<1x128xf32>
      %cst_371 = arith.constant -2.54478955 : f32
      %1263 = vector.broadcast %cst_371 : f32 to vector<1x128xf32>
      %1264 = arith.mulf %1263, %1262 : vector<1x128xf32>
      %1265 = math.exp %1264 : vector<1x128xf32>
      %cst_372 = arith.constant 0.0784895569 : f32
      %1266 = vector.broadcast %cst_372 : f32 to vector<1x128xf32>
      %1267 = arith.subf %1266, %1265 : vector<1x128xf32>
      %cst_373 = arith.constant 0.641237199 : f32
      %1268 = vector.broadcast %cst_373 : f32 to vector<1x128xf32>
      %1269 = arith.mulf %1268, %1267 : vector<1x128xf32>
      %1270 = arith.addf %1261, %1269 : vector<1x128xf32>
      %1271 = vector.broadcast %1240 : f32 to vector<1x128xf32>
      %1272 = arith.mulf %1271, %1247 : vector<1x128xf32>
      %1273 = arith.subf %1270, %1272 : vector<1x128xf32>
      %1274 = arith.mulf %1240, %4 : f32
      %1275 = vector.broadcast %1274 : f32 to vector<1x128xf32>
      %1276 = arith.mulf %1275, %1273 : vector<1x128xf32>
      %1277 = arith.subf %1211, %1276 : vector<1x128xf32>
      %1278 = arith.addf %1277, %1236 : vector<1x128xf32>
      %cst_374 = arith.constant 1.000000e+00 : f32
      %1279 = vector.broadcast %cst_374 : f32 to vector<1x128xf32>
      %1280 = arith.cmpf ogt, %1278, %1279 : vector<1x128xf32>
      %cst_375 = arith.constant 1.000000e+00 : f32
      %1281 = vector.broadcast %cst_375 : f32 to vector<1x128xf32>
      %1282 = arith.select %1280, %1281, %1278 : vector<1x128xi1>, vector<1x128xf32>
      %cst_376 = arith.constant 0.000000e+00 : f32
      %1283 = vector.broadcast %cst_376 : f32 to vector<1x128xf32>
      %1284 = arith.cmpf olt, %1282, %1283 : vector<1x128xf32>
      %cst_377 = arith.constant 1.000000e-10 : f32
      %1285 = vector.broadcast %cst_377 : f32 to vector<1x128xf32>
      %1286 = arith.select %1284, %1285, %1282 : vector<1x128xi1>, vector<1x128xf32>
      %cst_378 = arith.constant 1.000000e+00 : f32
      %1287 = vector.broadcast %cst_378 : f32 to vector<1x128xf32>
      %1288 = arith.subf %1286, %1287 : vector<1x128xf32>
      %cst_379 = arith.constant 0.637264609 : f32
      %1289 = vector.broadcast %cst_379 : f32 to vector<1x128xf32>
      %1290 = arith.mulf %1289, %1288 : vector<1x128xf32>
      %1291 = math.exp %1290 : vector<1x128xf32>
      %cst_380 = arith.constant 5.73260832 : f32
      %1292 = vector.broadcast %cst_380 : f32 to vector<1x128xf32>
      %1293 = arith.mulf %1292, %1291 : vector<1x128xf32>
      %cst_381 = arith.constant -1.59614491 : f32
      %1294 = vector.broadcast %cst_381 : f32 to vector<1x128xf32>
      %1295 = arith.addf %1294, %1293 : vector<1x128xf32>
      %cst_382 = arith.constant 1.000000e+00 : f32
      %1296 = vector.broadcast %cst_382 : f32 to vector<1x128xf32>
      %1297 = arith.subf %1286, %1296 : vector<1x128xf32>
      %cst_383 = arith.constant -2.23738194 : f32
      %1298 = vector.broadcast %cst_383 : f32 to vector<1x128xf32>
      %1299 = arith.mulf %1298, %1297 : vector<1x128xf32>
      %1300 = arith.addf %1295, %1299 : vector<1x128xf32>
      %1301 = math.sqrt %1286 : vector<1x128xf32>
      %cst_384 = arith.constant -2.54478955 : f32
      %1302 = vector.broadcast %cst_384 : f32 to vector<1x128xf32>
      %1303 = arith.mulf %1302, %1301 : vector<1x128xf32>
      %1304 = math.exp %1303 : vector<1x128xf32>
      %cst_385 = arith.constant 0.0784895569 : f32
      %1305 = vector.broadcast %cst_385 : f32 to vector<1x128xf32>
      %1306 = arith.subf %1305, %1304 : vector<1x128xf32>
      %cst_386 = arith.constant 0.641237199 : f32
      %1307 = vector.broadcast %cst_386 : f32 to vector<1x128xf32>
      %1308 = arith.mulf %1307, %1306 : vector<1x128xf32>
      %1309 = arith.addf %1300, %1308 : vector<1x128xf32>
      %1310 = vector.broadcast %1242 : f32 to vector<1x128xf32>
      %1311 = arith.mulf %1310, %1247 : vector<1x128xf32>
      %1312 = arith.subf %1309, %1311 : vector<1x128xf32>
      %1313 = vector.broadcast %1244 : f32 to vector<1x128xf32>
      %1314 = arith.subf %1312, %1313 : vector<1x128xf32>
      %cst_387 = arith.constant 1.000000e+02 : f32
      %1315 = vector.broadcast %cst_387 : f32 to vector<1x128xf32>
      %1316 = arith.mulf %1314, %1315 : vector<1x128xf32>
      %cst_388 = arith.constant 5.000000e-01 : f32
      %1317 = vector.broadcast %cst_388 : f32 to vector<1x128xf32>
      %1318 = arith.mulf %1317, %1316 : vector<1x128xf32>
      %1319 = arith.mulf %1318, %1316 : vector<1x128xf32>
      %cst_389 = arith.constant 3.68623161 : f32
      %1320 = vector.broadcast %cst_389 : f32 to vector<1x128xf32>
      %1321 = arith.subf %1320, %1319 : vector<1x128xf32>
      %cst_390 = arith.constant dense<0xFF800000> : vector<1xf32>
      %1322 = vector.multi_reduction <maximumf>, %1321, %cst_390 [1] : vector<1x128xf32> to vector<1xf32>
      %1323 = vector.shape_cast %1322 : vector<1xf32> to vector<1x1xf32>
      %1324 = vector.broadcast %1323 : vector<1x1xf32> to vector<1x128xf32>
      %1325 = arith.subf %1321, %1324 : vector<1x128xf32>
      %1326 = math.exp %1325 : vector<1x128xf32>
      %cst_391 = arith.constant dense<0.000000e+00> : vector<1xf32>
      %1327 = vector.multi_reduction <add>, %1326, %cst_391 [1] : vector<1x128xf32> to vector<1xf32>
      %1328 = vector.shape_cast %1327 : vector<1xf32> to vector<1x1xf32>
      %1329 = math.log %1328 : vector<1x1xf32>
      %1330 = arith.addf %1323, %1329 : vector<1x1xf32>
      %cst_392 = arith.constant 4.85203028 : f32
      %1331 = vector.broadcast %cst_392 : f32 to vector<1x1xf32>
      %1332 = arith.subf %1330, %1331 : vector<1x1xf32>
      %c100_i32_393 = arith.constant 100 : i32
      %1333 = arith.cmpi slt, %1230, %c100_i32_393 : i32
      %cst_394 = arith.constant 0.000000e+00 : f32
      %1334 = vector.broadcast %cst_394 : f32 to vector<1x1xf32>
      %1335 = arith.select %1333, %1332, %1334 : vector<1x1xf32>
      %1336 = arith.addf %1165, %1335 : vector<1x1xf32>
      %c0_i32_395 = arith.constant 0 : i32
      %1337 = vector.broadcast %c0_i32_395 : i32 to vector<8x1xi32>
      %1338 = arith.cmpi eq, %15, %1337 : vector<8x1xi32>
      %cst_396 = arith.constant 0.000000e+00 : f32
      %1339 = vector.shape_cast %1338 : vector<8x1xi1> to vector<8x1xi1>
      %1340 = vector.broadcast %1339 : vector<8x1xi1> to vector<8x128xi1>
      %1341 = vector.shape_cast %1326 : vector<1x128xf32> to vector<1x128xf32>
      %1342 = vector.broadcast %1341 : vector<1x128xf32> to vector<8x128xf32>
      %1343 = vector.broadcast %cst_396 : f32 to vector<8x128xf32>
      %1344 = arith.select %1340, %1342, %1343 : vector<8x128xi1>, vector<8x128xf32>
      %1345 = tpu.transpose %1344, [1, 0] : vector<8x128xf32> -> vector<128x8xf32>
      %c0_397 = arith.constant 0 : index
      %c0_398 = arith.constant 0 : index
      %1346 = vector.load %arg7[%c0_397, %c0_398] : memref<256x128xf32, #tpu.memory_space<vmem>>, vector<256x128xf32>
      %cst_399 = arith.constant dense<0.000000e+00> : vector<256x8xf32>
      %1347 = tpu.matmul %1346, %1345, %cst_399 {dimension_numbers = #tpu.dot_dimension_numbers<[1], [0], [0], [1], [0, 0, 1, 1], [], []>} : vector<256x128xf32>, vector<128x8xf32>, vector<256x8xf32> -> vector<256x8xf32>
      %1348 = vector.extract_strided_slice %1347 {offsets = [0, 0], sizes = [128, 1], strides = [1, 1]} : vector<256x8xf32> to vector<128x1xf32>
      %1349 = vector.extract_strided_slice %1347 {offsets = [128, 0], sizes = [128, 1], strides = [1, 1]} : vector<256x8xf32> to vector<128x1xf32>
      %1350 = arith.addf %1348, %14 : vector<128x1xf32>
      %cst_400 = arith.constant 7.812500e-03 : f32
      %1351 = arith.mulf %1246, %cst_400 : f32
      %1352 = vector.broadcast %1351 : f32 to vector<1x128xf32>
      %1353 = arith.addf %8, %1352 : vector<1x128xf32>
      %1354 = vector.broadcast %1328 : vector<1x1xf32> to vector<1x128xf32>
      %1355 = arith.mulf %1353, %1354 : vector<1x128xf32>
      %1356 = vector.broadcast %1355 : vector<1x128xf32> to vector<128x128xf32>
      %1357 = vector.broadcast %1349 : vector<128x1xf32> to vector<128x128xf32>
      %1358 = arith.cmpf oge, %1356, %1357 : vector<128x128xf32>
      %1359 = vector.broadcast %1355 : vector<1x128xf32> to vector<128x128xf32>
      %1360 = vector.broadcast %1350 : vector<128x1xf32> to vector<128x128xf32>
      %1361 = arith.cmpf olt, %1359, %1360 : vector<128x128xf32>
      %1362 = arith.andi %1358, %1361 : vector<128x128xi1>
      %1363 = arith.extui %1362 : vector<128x128xi1> to vector<128x128xi32>
      %1364 = arith.sitofp %1363 : vector<128x128xi32> to vector<128x128xf32>
      %c0_i32_401 = arith.constant 0 : i32
      %1365 = vector.broadcast %c0_i32_401 : i32 to vector<8x1xi32>
      %1366 = arith.cmpi eq, %15, %1365 : vector<8x1xi32>
      %c1_i32_402 = arith.constant 1 : i32
      %1367 = vector.broadcast %c1_i32_402 : i32 to vector<8x1xi32>
      %1368 = arith.cmpi eq, %15, %1367 : vector<8x1xi32>
      %1369 = vector.shape_cast %1368 : vector<8x1xi1> to vector<8x1xi1>
      %1370 = vector.broadcast %1369 : vector<8x1xi1> to vector<8x128xi1>
      %1371 = vector.shape_cast %1247 : vector<1x128xf32> to vector<1x128xf32>
      %1372 = vector.broadcast %1371 : vector<1x128xf32> to vector<8x128xf32>
      %1373 = vector.shape_cast %1312 : vector<1x128xf32> to vector<1x128xf32>
      %1374 = vector.broadcast %1373 : vector<1x128xf32> to vector<8x128xf32>
      %1375 = arith.select %1370, %1372, %1374 : vector<8x128xi1>, vector<8x128xf32>
      %1376 = vector.shape_cast %1366 : vector<8x1xi1> to vector<8x1xi1>
      %1377 = vector.broadcast %1376 : vector<8x1xi1> to vector<8x128xi1>
      %1378 = vector.shape_cast %1286 : vector<1x128xf32> to vector<1x128xf32>
      %1379 = vector.broadcast %1378 : vector<1x128xf32> to vector<8x128xf32>
      %1380 = arith.select %1377, %1379, %1375 : vector<8x128xi1>, vector<8x128xf32>
      %cst_403 = arith.constant dense<0.000000e+00> : vector<8x128xf32>
      %1381 = tpu.matmul %1380, %1364, %cst_403 {dimension_numbers = #tpu.dot_dimension_numbers<[1], [0], [0], [1], [0, 0, 1, 1], [], []>} : vector<8x128xf32>, vector<128x128xf32>, vector<8x128xf32> -> vector<8x128xf32>
      %1382 = vector.extract_strided_slice %1381 {offsets = [0, 0], sizes = [1, 128], strides = [1, 1]} : vector<8x128xf32> to vector<1x128xf32>
      %1383 = vector.extract_strided_slice %1381 {offsets = [1, 0], sizes = [1, 128], strides = [1, 1]} : vector<8x128xf32> to vector<1x128xf32>
      %1384 = vector.extract_strided_slice %1381 {offsets = [2, 0], sizes = [1, 128], strides = [1, 1]} : vector<8x128xf32> to vector<1x128xf32>
      %c7_i32_404 = arith.constant 7 : i32
      %1385 = vector.broadcast %c7_i32_404 : i32 to vector<8x1xi32>
      %1386 = arith.cmpi eq, %15, %1385 : vector<8x1xi32>
      %1387 = vector.shape_cast %1386 : vector<8x1xi1> to vector<8x1xi1>
      %1388 = vector.broadcast %1387 : vector<8x1xi1> to vector<8x128xi1>
      %1389 = vector.shape_cast %1384 : vector<1x128xf32> to vector<1x128xf32>
      %1390 = vector.broadcast %1389 : vector<1x128xf32> to vector<8x128xf32>
      %1391 = arith.select %1388, %1390, %1220 : vector<8x128xi1>, vector<8x128xf32>
      %c7_i32_405 = arith.constant 7 : i32
      %1392 = vector.broadcast %c7_i32_405 : i32 to vector<8x1xi32>
      %1393 = arith.cmpi eq, %15, %1392 : vector<8x1xi32>
      %1394 = vector.shape_cast %1393 : vector<8x1xi1> to vector<8x1xi1>
      %1395 = vector.broadcast %1394 : vector<8x1xi1> to vector<8x128xi1>
      %1396 = vector.shape_cast %1382 : vector<1x128xf32> to vector<1x128xf32>
      %1397 = vector.broadcast %1396 : vector<1x128xf32> to vector<8x128xf32>
      %1398 = arith.select %1395, %1397, %1227 : vector<8x128xi1>, vector<8x128xf32>
      %1399 = arith.index_cast %28 : i32 to index
      %c0_406 = arith.constant 0 : index
      %1400 = vector.load %arg10[%1399, %c0_406] : memref<64x128xf32, #tpu.memory_space<vmem>>, vector<8x128xf32>
      tpu.vector_store %arg10[%1399, %c0_406], %1391 {strides = array<i32>} : memref<64x128xf32, #tpu.memory_space<vmem>>, vector<8x128xf32>,
      %1401 = arith.index_cast %28 : i32 to index
      %c0_407 = arith.constant 0 : index
      %1402 = vector.load %arg11[%1401, %c0_407] : memref<64x128xf32, #tpu.memory_space<vmem>>, vector<8x128xf32>
      tpu.vector_store %arg11[%1401, %c0_407], %1398 {strides = array<i32>} : memref<64x128xf32, #tpu.memory_space<vmem>>, vector<8x128xf32>,
      scf.yield %1382, %1383, %1336 : vector<1x128xf32>, vector<1x128xf32>, vector<1x1xf32>
    }
    %c8_i32_10 = arith.constant 8 : i32
    %c0_11 = arith.constant 0 : index
    %c0_12 = arith.constant 0 : index
    %21 = vector.load %arg13[%c0_11, %c0_12] : memref<8x128xf32, #tpu.memory_space<vmem>>, vector<1x128xf32>
    tpu.vector_store %arg13[%c0_11, %c0_12], %20#0 {strides = array<i32>} : memref<8x128xf32, #tpu.memory_space<vmem>>, vector<1x128xf32>,
    %c1_13 = arith.constant 1 : index
    %c0_14 = arith.constant 0 : index
    %22 = vector.load %arg13[%c1_13, %c0_14] : memref<8x128xf32, #tpu.memory_space<vmem>>, vector<1x128xf32>
    tpu.vector_store %arg13[%c1_13, %c0_14], %20#1 {strides = array<i32>} : memref<8x128xf32, #tpu.memory_space<vmem>>, vector<1x128xf32>,
    %c0_15 = arith.constant 0 : index
    %c0_16 = arith.constant 0 : index
    %23 = vector.load %arg14[%c0_15, %c0_16] : memref<1x1xf32, #tpu.memory_space<vmem>>, vector<1x1xf32>
    tpu.vector_store %arg14[%c0_15, %c0_16], %20#2 {strides = array<i32>} : memref<1x1xf32, #tpu.memory_space<vmem>>, vector<1x1xf32>,
    %c1_i32_17 = arith.constant 1 : i32
    %24 = arith.cmpi eq, %arg0, %c1_i32_17 : i32
    %25 = arith.extui %24 : i1 to i32
    %c0_i32_18 = arith.constant 0 : i32
    %26 = arith.cmpi ne, %25, %c0_i32_18 : i32
    scf.if %26 {
      %c0_19 = arith.constant 0 : index
      %c0_20 = arith.constant 0 : index
      %27 = vector.load %arg12[%c0_19, %c0_20] : memref<1x1xf32, #tpu.memory_space<vmem>>, vector<1x1xf32>
      tpu.vector_store %arg12[%c0_19, %c0_20], %20#2 {strides = array<i32>} : memref<1x1xf32, #tpu.memory_space<vmem>>, vector<1x1xf32>,
    } else {
    }
    return
  }
  func.func @transform_0(%arg0: i32, %arg1: memref<128xf32, #tpu.memory_space<smem>>, %arg2: memref<128xf32, #tpu.memory_space<smem>>, %arg3: memref<128xf32, #tpu.memory_space<smem>>, %arg4: memref<1xf32, #tpu.memory_space<smem>>) -> (i32, i32) {
    %c0_i32 = arith.constant 0 : i32
    %c0_i32_0 = arith.constant 0 : i32
    %c0_i32_1 = arith.constant 0 : i32
    return %c0_i32, %c0_i32_0 : i32, i32
  }
  func.func @transform_1(%arg0: i32, %arg1: memref<128xf32, #tpu.memory_space<smem>>, %arg2: memref<128xf32, #tpu.memory_space<smem>>, %arg3: memref<128xf32, #tpu.memory_space<smem>>, %arg4: memref<1xf32, #tpu.memory_space<smem>>) -> (i32, i32) {
    %c0_i32 = arith.constant 0 : i32
    %c0_i32_0 = arith.constant 0 : i32
    %c0_i32_1 = arith.constant 0 : i32
    return %c0_i32, %c0_i32_0 : i32, i32
  }
  func.func @transform_2(%arg0: i32, %arg1: memref<128xf32, #tpu.memory_space<smem>>, %arg2: memref<128xf32, #tpu.memory_space<smem>>, %arg3: memref<128xf32, #tpu.memory_space<smem>>, %arg4: memref<1xf32, #tpu.memory_space<smem>>) -> (i32, i32) {
    %c0_i32 = arith.constant 0 : i32
    %c0_i32_0 = arith.constant 0 : i32
    %c0_i32_1 = arith.constant 0 : i32
    return %c0_i32, %c0_i32_0 : i32, i32
  }
  func.func @transform_3(%arg0: i32, %arg1: memref<128xf32, #tpu.memory_space<smem>>, %arg2: memref<128xf32, #tpu.memory_space<smem>>, %arg3: memref<128xf32, #tpu.memory_space<smem>>, %arg4: memref<1xf32, #tpu.memory_space<smem>>) -> (i32, i32) {
    %c0_i32 = arith.constant 0 : i32
    %c0_i32_0 = arith.constant 0 : i32
    return %arg0, %c0_i32 : i32, i32
  }
  func.func @transform_4(%arg0: i32, %arg1: memref<128xf32, #tpu.memory_space<smem>>, %arg2: memref<128xf32, #tpu.memory_space<smem>>, %arg3: memref<128xf32, #tpu.memory_space<smem>>, %arg4: memref<1xf32, #tpu.memory_space<smem>>) -> (i32, i32) {
    %c0_i32 = arith.constant 0 : i32
    %c0_i32_0 = arith.constant 0 : i32
    return %arg0, %c0_i32 : i32, i32
  }
  func.func @transform_5(%arg0: i32, %arg1: memref<128xf32, #tpu.memory_space<smem>>, %arg2: memref<128xf32, #tpu.memory_space<smem>>, %arg3: memref<128xf32, #tpu.memory_space<smem>>, %arg4: memref<1xf32, #tpu.memory_space<smem>>) -> (i32, i32) {
    %c0_i32 = arith.constant 0 : i32
    %c0_i32_0 = arith.constant 0 : i32
    return %arg0, %c0_i32 : i32, i32
  }
  func.func @transform_6(%arg0: i32, %arg1: memref<128xf32, #tpu.memory_space<smem>>, %arg2: memref<128xf32, #tpu.memory_space<smem>>, %arg3: memref<128xf32, #tpu.memory_space<smem>>, %arg4: memref<1xf32, #tpu.memory_space<smem>>) -> (i32, i32) {
    %c0_i32 = arith.constant 0 : i32
    %c0_i32_0 = arith.constant 0 : i32
    return %arg0, %c0_i32 : i32, i32
  }
  func.func @transform_7(%arg0: i32, %arg1: memref<128xf32, #tpu.memory_space<smem>>, %arg2: memref<128xf32, #tpu.memory_space<smem>>, %arg3: memref<128xf32, #tpu.memory_space<smem>>, %arg4: memref<1xf32, #tpu.memory_space<smem>>) -> (i32, i32) {
    %c0_i32 = arith.constant 0 : i32
    %c0_i32_0 = arith.constant 0 : i32
    %c0_i32_1 = arith.constant 0 : i32
    return %c0_i32, %c0_i32_0 : i32, i32
  }
}

</mosaic_0001>

<llo_original>
// kernel: tpu_custom_call.1
$region0: #{tpu_custom_call.1}
  #allocation0 [shape = 'u32[]', space=smem, size = 0x4, offset = 0x4, fixed_abs, tag = 'smem constant byte address 0x4 - core index']
  #allocation1 [shape = 'u32[144,128]{1,0:T(1,128)}', space=vmem, size = 0x12000, scoped, tag = 'internal scratch']
  #allocation2 [shape = 'f32[8,128]{1,0:T(8,128)}', space=vmem, size = 0x1000, scoped, tag = 'scratch operand']
  #allocation3 [shape = 'f32[1,1]{1,0:T(1,128)}', space=vmem, size = 0x200, scoped, tag = 'scratch operand']
  #allocation4 [shape = 's32[1]{0}', space=sflag, size = 0x4, scoped, tag = 'scoped memory for tpu_custom_call.1']
  #allocation5 [shape = 'u8[512]{0}', space=smem, size = 0x200, scoped, tag = 'prefetched SMEM operand 0']
  #allocation6 [shape = 'u8[512]{0}', space=smem, size = 0x200, scoped, tag = 'prefetched SMEM operand 1']
  #allocation7 [shape = 'u8[512]{0}', space=smem, size = 0x200, scoped, tag = 'prefetched SMEM operand 2']
  #allocation8 [shape = 'f32[1]{0:T(128)S(6)}', space=smem, size = 0x200, scoped, tag = 'prefetched SMEM operand 3']
  %s0 = inlined_call_operand.vmem [shape: f32[128], index: 0, kind: input, shape index: {}]
  %s1 = inlined_call_operand.vmem [shape: f32[128], index: 1, kind: input, shape index: {}]
  %s2 = inlined_call_operand.vmem [shape: f32[128], index: 2, kind: input, shape index: {}]
  %s3 = inlined_call_operand.<no memory space> [shape: f32[1], index: 3, kind: input, shape index: {}]
  %s4 = inlined_call_operand.vmem [shape: f32[1,128], index: 4, kind: input, shape index: {}]
  %s5 = inlined_call_operand.vmem [shape: f32[1,128], index: 5, kind: input, shape index: {}]
  %s6 = inlined_call_operand.hbm [shape: f32[256,128], index: 6, kind: input, shape index: {}]
  %s7 = inlined_call_operand.hbm [shape: f32[128,128], index: 7, kind: input, shape index: {}]
  %s8 = inlined_call_operand.hbm [shape: f32[128,128], index: 8, kind: input, shape index: {}]
  %s9 = inlined_call_operand.hbm [shape: f32[128,128], index: 9, kind: output, shape index: {0}]
  %s10 = inlined_call_operand.hbm [shape: f32[128,128], index: 10, kind: output, shape index: {1}]
  %s11 = inlined_call_operand.hbm [shape: f32[1,1], index: 11, kind: output, shape index: {2}]
  %12 = xla_tuple %s9, %s10, %s11
  %s13 = sld [smem:[#allocation0]]
  $region96: #{tpu_custom_call.1} parent=0
    _
  %s15 = ssub.s32 1, %s13
  %s16 = scalar_select 0, %s15, %s13
  %s17 = sshll.u32 %s0, 4
  %s18 = int_to_ptr.vmem [resolvable:$true] %s17
  %20 = dma.vmem_to_smem %s18, 16, [#allocation5], [#allocation4]
  %s21 = sshll.u32 %s1, 4
  %s22 = int_to_ptr.vmem [resolvable:$true] %s21
  %24 = dma.vmem_to_smem %s22, 16, [#allocation6], [#allocation4]
  %s25 = sshll.u32 %s2, 4
  %s26 = int_to_ptr.vmem [resolvable:$true] %s25
  %28 = dma.vmem_to_smem %s26, 16, [#allocation7], [#allocation4]
  %29 = sst [smem:[#allocation8]] %s3
  %30 = dma.done [#allocation4], 48
  %31 = sfence
  $region1: #{tpu_custom_call.1} parent=0
    #allocation9 [shape = 'u8[131072]{0}', space=vmem, size = 0x20000, scoped, tag = 'input window, operand 6, single buffered']
    #allocation10 [shape = 's32[2]{0}', space=sflag, size = 0x8, scoped, tag = 'scoped memory for tpu_custom_call.1']
    #allocation11 [shape = 's32[2]{0}', space=sflag, size = 0x8, scoped, tag = 'scoped memory for tpu_custom_call.1']
    #allocation12 [shape = 'u8[65536]{0}', space=vmem, size = 0x10000, scoped, tag = 'input window, operand 7']
    #allocation13 [shape = 's32[2]{0}', space=sflag, size = 0x8, scoped, tag = 'scoped memory for tpu_custom_call.1']
    #allocation14 [shape = 'u8[65536]{0}', space=vmem, size = 0x10000, scoped, tag = 'input window, operand 8']
    #allocation15 [shape = 'u8[65536]{0}', space=vmem, size = 0x10000, scoped, tag = 'output window, operand 0']
    #allocation16 [shape = 'u8[65536]{0}', space=vmem, size = 0x10000, scoped, tag = 'output window, operand 1']
    #allocation17 [shape = 's32[2]{0}', space=sflag, size = 0x8, scoped, tag = 'scoped memory for tpu_custom_call.1']
    #allocation18 [shape = 'u8[512]{0}', space=vmem, size = 0x400, scoped, tag = 'output window, operand 2, single buffered']
    %32 = vsyncpa [#allocation10], 0
    %33 = vsyncpa [#allocation13], 0
    %s34 = scalar_lea.sflag [#allocation13], 1
    %35 = vsyncpa %s34, 0
    %36 = vsyncpa [#allocation11], 0
    %s37 = scalar_lea.sflag [#allocation11], 1
    %38 = vsyncpa %s37, 0
    %39 = vsyncpa [#allocation17], 0
    %s40 = scalar_lea.sflag [#allocation17], 1
    %41 = vsyncpa %s40, 0
    loop: start=0, step=1, limit=4
    $region2: #{tpu_custom_call.1} parent=1 // loop_pre_header
      _
    $region3: #{tpu_custom_call.1} parent=1 // loop_header
      %s43 = sphi 0, %s47
      %p44 = scmp.ge.s32.totalorder %s43, 4
      %s51 = sphi 0, %s51
      %s53 = sphi 0, %s51
      %s54 = sphi 0, %s53
      %s68 = sphi 0, %s54
      %s72 = sphi 0, %s72
      %s74 = sphi 0, %s72
      %s75 = sphi 0, %s74
      %s89 = sphi 0, %s75
      %s93 = sphi 0, %s93
      %s95 = sphi 0, %s93
      %s96 = sphi 0, %s95
      %s110 = sphi 0, %s96
      %s116 = sphi 0, %s118
      %s119 = sphi 0, %s116
      %s120 = sphi 0, %s119
      %s136 = sphi 0, %s120
      %s142 = sphi 0, %s144
      %s145 = sphi 0, %s142
      %s146 = sphi 0, %s145
      %s162 = sphi 0, %s146
      %s168 = sphi 0, %s170
      %s171 = sphi 0, %s168
      %s172 = sphi 0, %s171
      %s188 = sphi 0, %s172
      %s194 = sphi 0, %s196
      %s197 = sphi 0, %s194
      %s198 = sphi 0, %s197
      %s214 = sphi 0, %s198
      %s218 = sphi 0, %s218
      %s220 = sphi 0, %s218
      %s221 = sphi 0, %s220
      %s235 = sphi 0, %s221
    $region4: #{tpu_custom_call.1} parent=1 // loop_header_branch
      %46 = sbr.rel (%p44) target = $region8
    $region5: #{tpu_custom_call.1} parent=1 // loop_body
      %s48 = ssub.s32 %s43, 1
      %s49 = ssub.s32 %s43, 2
      %s50 = sadd.s32 %s43, 1
      %s52 = sadd.s32 %s51, 1
      %p55 = scmp.eq.s32.totalorder %s43, 1
      %p56 = scmp.ne.s32.totalorder %s51, %s53
      %p57 = scmp.eq.s32.totalorder %s43, 0
      %p58 = por %p56, %p57
      %p59 = scmp.ne.s32.totalorder %s51, %s53
      %p60 = scmp.eq.s32.totalorder %s48, 1
      %p61 = por %p59, %p60
      %p62 = scmp.ne.s32.totalorder %s53, %s54
      %p63 = scmp.eq.s32.totalorder %s48, 0
      %p64 = por %p62, %p63
      %p65 = scmp.ne.s32.totalorder %s53, %s54
      %p66 = scmp.eq.s32.totalorder %s49, 1
      %p67 = por %p65, %p66
      %p69 = scmp.ne.s32.totalorder %s54, %s68
      %p70 = scmp.eq.s32.totalorder %s49, 0
      %p71 = por %p69, %p70
      %s73 = sadd.s32 %s72, 1
      %p76 = scmp.eq.s32.totalorder %s43, 1
      %p77 = scmp.ne.s32.totalorder %s72, %s74
      %p78 = scmp.eq.s32.totalorder %s43, 0
      %p79 = por %p77, %p78
      %p80 = scmp.ne.s32.totalorder %s72, %s74
      %p81 = scmp.eq.s32.totalorder %s48, 1
      %p82 = por %p80, %p81
      %p83 = scmp.ne.s32.totalorder %s74, %s75
      %p84 = scmp.eq.s32.totalorder %s48, 0
      %p85 = por %p83, %p84
      %p86 = scmp.ne.s32.totalorder %s74, %s75
      %p87 = scmp.eq.s32.totalorder %s49, 1
      %p88 = por %p86, %p87
      %p90 = scmp.ne.s32.totalorder %s75, %s89
      %p91 = scmp.eq.s32.totalorder %s49, 0
      %p92 = por %p90, %p91
      %s94 = sadd.s32 %s93, 1
      %p97 = scmp.eq.s32.totalorder %s43, 1
      %p98 = scmp.ne.s32.totalorder %s93, %s95
      %p99 = scmp.eq.s32.totalorder %s43, 0
      %p100 = por %p98, %p99
      %p101 = scmp.ne.s32.totalorder %s93, %s95
      %p102 = scmp.eq.s32.totalorder %s48, 1
      %p103 = por %p101, %p102
      %p104 = scmp.ne.s32.totalorder %s95, %s96
      %p105 = scmp.eq.s32.totalorder %s48, 0
      %p106 = por %p104, %p105
      %p107 = scmp.ne.s32.totalorder %s95, %s96
      %p108 = scmp.eq.s32.totalorder %s49, 1
      %p109 = por %p107, %p108
      %p111 = scmp.ne.s32.totalorder %s96, %s110
      %p112 = scmp.eq.s32.totalorder %s49, 0
      %p113 = por %p111, %p112
      %s114 = ssub.s32 %s43, %s50
      %p115 = scmp.eq.s32.totalorder %s114, 0
      %s117 = sadd.s32 %s116, 1
      %s118 = scalar_select %p115, %s116, %s117
      %p121 = pneg %p115
      %p122 = scmp.eq.s32.totalorder %s43, 1
      %p123 = por %p121, %p122
      %p124 = scmp.ne.s32.totalorder %s116, %s119
      %p125 = scmp.eq.s32.totalorder %s43, 0
      %p126 = por %p124, %p125
      %p127 = scmp.ne.s32.totalorder %s116, %s119
      %p128 = scmp.eq.s32.totalorder %s48, 1
      %p129 = por %p127, %p128
      %p130 = scmp.ne.s32.totalorder %s119, %s120
      %p131 = scmp.eq.s32.totalorder %s48, 0
      %p132 = por %p130, %p131
      %p133 = scmp.ne.s32.totalorder %s119, %s120
      %p134 = scmp.eq.s32.totalorder %s49, 1
      %p135 = por %p133, %p134
      %p137 = scmp.ne.s32.totalorder %s120, %s136
      %p138 = scmp.eq.s32.totalorder %s49, 0
      %p139 = por %p137, %p138
      %s140 = ssub.s32 %s43, %s50
      %p141 = scmp.eq.s32.totalorder %s140, 0
      %s143 = sadd.s32 %s142, 1
      %s144 = scalar_select %p141, %s142, %s143
      %p147 = pneg %p141
      %p148 = scmp.eq.s32.totalorder %s43, 1
      %p149 = por %p147, %p148
      %p150 = scmp.ne.s32.totalorder %s142, %s145
      %p151 = scmp.eq.s32.totalorder %s43, 0
      %p152 = por %p150, %p151
      %p153 = scmp.ne.s32.totalorder %s142, %s145
      %p154 = scmp.eq.s32.totalorder %s48, 1
      %p155 = por %p153, %p154
      %p156 = scmp.ne.s32.totalorder %s145, %s146
      %p157 = scmp.eq.s32.totalorder %s48, 0
      %p158 = por %p156, %p157
      %p159 = scmp.ne.s32.totalorder %s145, %s146
      %p160 = scmp.eq.s32.totalorder %s49, 1
      %p161 = por %p159, %p160
      %p163 = scmp.ne.s32.totalorder %s146, %s162
      %p164 = scmp.eq.s32.totalorder %s49, 0
      %p165 = por %p163, %p164
      %s166 = ssub.s32 %s43, %s50
      %p167 = scmp.eq.s32.totalorder %s166, 0
      %s169 = sadd.s32 %s168, 1
      %s170 = scalar_select %p167, %s168, %s169
      %p173 = pneg %p167
      %p174 = scmp.eq.s32.totalorder %s43, 1
      %p175 = por %p173, %p174
      %p176 = scmp.ne.s32.totalorder %s168, %s171
      %p177 = scmp.eq.s32.totalorder %s43, 0
      %p178 = por %p176, %p177
      %p179 = scmp.ne.s32.totalorder %s168, %s171
      %p180 = scmp.eq.s32.totalorder %s48, 1
      %p181 = por %p179, %p180
      %p182 = scmp.ne.s32.totalorder %s171, %s172
      %p183 = scmp.eq.s32.totalorder %s48, 0
      %p184 = por %p182, %p183
      %p185 = scmp.ne.s32.totalorder %s171, %s172
      %p186 = scmp.eq.s32.totalorder %s49, 1
      %p187 = por %p185, %p186
      %p189 = scmp.ne.s32.totalorder %s172, %s188
      %p190 = scmp.eq.s32.totalorder %s49, 0
      %p191 = por %p189, %p190
      %s192 = ssub.s32 %s43, %s50
      %p193 = scmp.eq.s32.totalorder %s192, 0
      %s195 = sadd.s32 %s194, 1
      %s196 = scalar_select %p193, %s194, %s195
      %p199 = pneg %p193
      %p200 = scmp.eq.s32.totalorder %s43, 1
      %p201 = por %p199, %p200
      %p202 = scmp.ne.s32.totalorder %s194, %s197
      %p203 = scmp.eq.s32.totalorder %s43, 0
      %p204 = por %p202, %p203
      %p205 = scmp.ne.s32.totalorder %s194, %s197
      %p206 = scmp.eq.s32.totalorder %s48, 1
      %p207 = por %p205, %p206
      %p208 = scmp.ne.s32.totalorder %s197, %s198
      %p209 = scmp.eq.s32.totalorder %s48, 0
      %p210 = por %p208, %p209
      %p211 = scmp.ne.s32.totalorder %s197, %s198
      %p212 = scmp.eq.s32.totalorder %s49, 1
      %p213 = por %p211, %p212
      %p215 = scmp.ne.s32.totalorder %s198, %s214
      %p216 = scmp.eq.s32.totalorder %s49, 0
      %p217 = por %p215, %p216
      %s219 = sadd.s32 %s218, 1
      %p222 = scmp.eq.s32.totalorder %s43, 1
      %p223 = scmp.ne.s32.totalorder %s218, %s220
      %p224 = scmp.eq.s32.totalorder %s43, 0
      %p225 = por %p223, %p224
      %p226 = scmp.ne.s32.totalorder %s218, %s220
      %p227 = scmp.eq.s32.totalorder %s48, 1
      %p228 = por %p226, %p227
      %p229 = scmp.ne.s32.totalorder %s220, %s221
      %p230 = scmp.eq.s32.totalorder %s48, 0
      %p231 = por %p229, %p230
      %p232 = scmp.ne.s32.totalorder %s220, %s221
      %p233 = scmp.eq.s32.totalorder %s49, 1
      %p234 = por %p232, %p233
      %p236 = scmp.ne.s32.totalorder %s221, %s235
      %p237 = scmp.eq.s32.totalorder %s49, 0
      %p238 = por %p236, %p237
      %p239 = scmp.le.s32.totalorder 1, %s43
      %p240 = scmp.lt.s32.totalorder %s43, 3
      %p241 = pnand %p239, %p240
      %p242 = pneg %p241
      // Predicated region
      $region9: #{tpu_custom_call.1} parent=5 // pred_check
        _
      $region10: #{tpu_custom_call.1} parent=5 // pred_check_branch
        %244 = sbr.rel (%p241) target = $region12
      $region11: #{tpu_custom_call.1} parent=5 // pred_region
        %s245 = ssub.s32 %s43, 1
        // Predicated region
        $region13: #{tpu_custom_call.1} parent=11 // pred_check
          %p246 = pneg %p64
        $region14: #{tpu_custom_call.1} parent=11 // pred_check_branch
          %248 = sbr.rel (%p246) target = $region16
        $region15: #{tpu_custom_call.1} parent=11 // pred_region
          _
        $region16: #{tpu_custom_call.1} parent=11 // pred_fallthru
          _
        // Predicated region
        $region17: #{tpu_custom_call.1} parent=11 // pred_check
          %p249 = pneg %p85
        $region18: #{tpu_custom_call.1} parent=11 // pred_check_branch
          %251 = sbr.rel (%p249) target = $region20
        $region19: #{tpu_custom_call.1} parent=11 // pred_region
          _
        $region20: #{tpu_custom_call.1} parent=11 // pred_fallthru
          _
        // Predicated region
        $region21: #{tpu_custom_call.1} parent=11 // pred_check
          %p252 = pneg %p106
        $region22: #{tpu_custom_call.1} parent=11 // pred_check_branch
          %254 = sbr.rel (%p252) target = $region24
        $region23: #{tpu_custom_call.1} parent=11 // pred_region
          %s256 = ssub.s32 4096, 4096
          %257 = vsyncadd [#allocation10], %s256
          %s258 = sshll.u32 [#allocation9], 4
          %s259 = int_to_ptr.vmem [resolvable:$true] %s258
          %264 = dma.hbm_to_vmem [thread:$0]  %s6, 4096, %s259, [#allocation10], 128, 128, 8
        $region24: #{tpu_custom_call.1} parent=11 // pred_fallthru
          _
      $region12: #{tpu_custom_call.1} parent=5 // pred_fallthru
        _
      %p265 = scmp.lt.s32.totalorder %s43, 2
      // Predicated region
      $region25: #{tpu_custom_call.1} parent=5 // pred_check
        %p266 = pneg %p265
      $region26: #{tpu_custom_call.1} parent=5 // pred_check_branch
        %268 = sbr.rel (%p266) target = $region28
      $region27: #{tpu_custom_call.1} parent=5 // pred_region
        // Predicated region
        $region29: #{tpu_custom_call.1} parent=27 // pred_check
          %p269 = pneg %p126
        $region30: #{tpu_custom_call.1} parent=27 // pred_check_branch
          %271 = sbr.rel (%p269) target = $region32
        $region31: #{tpu_custom_call.1} parent=27 // pred_region
          %s272 = sand.u32 %s43, 1
          %s273 = scalar_lea.sflag [#allocation13], %s272
          %s274 = sand.u32 %s116, 1
          %s275 = smul.addr %s274, 64
          %s276 = scalar_lea.vmem [#allocation12], %s275
          %s277 = smul.u32 8, %s43
          %s279 = ssub.s32 1024, 1024
          %280 = vsyncadd %s273, %s279
          %s281 = smul.addr %s277, 128
          %s282 = scalar_lea.hbm %s7, %s281
          %s283 = sshll.u32 %s276, 4
          %s284 = int_to_ptr.vmem [resolvable:$true] %s283
          %289 = dma.hbm_to_vmem [thread:$0]  %s282, 1024, %s284, %s273, 128, 128, 8
        $region32: #{tpu_custom_call.1} parent=27 // pred_fallthru
          _
        // Predicated region
        $region33: #{tpu_custom_call.1} parent=27 // pred_check
          %p290 = pneg %p152
        $region34: #{tpu_custom_call.1} parent=27 // pred_check_branch
          %292 = sbr.rel (%p290) target = $region36
        $region35: #{tpu_custom_call.1} parent=27 // pred_region
          %s293 = sand.u32 %s43, 1
          %s294 = scalar_lea.sflag [#allocation13], %s293
          %s295 = sand.u32 %s142, 1
          %s296 = smul.addr %s295, 64
          %s297 = scalar_lea.vmem [#allocation14], %s296
          %s298 = smul.u32 8, %s43
          %s300 = ssub.s32 1024, 1024
          %301 = vsyncadd %s294, %s300
          %s302 = smul.addr %s298, 128
          %s303 = scalar_lea.hbm %s8, %s302
          %s304 = sshll.u32 %s297, 4
          %s305 = int_to_ptr.vmem [resolvable:$true] %s304
          %310 = dma.hbm_to_vmem [thread:$0]  %s303, 1024, %s305, %s294, 128, 128, 8
        $region36: #{tpu_custom_call.1} parent=27 // pred_fallthru
          _
      $region28: #{tpu_custom_call.1} parent=5 // pred_fallthru
        _
      %p311 = scmp.le.s32.totalorder 1, %s43
      %p312 = scmp.lt.s32.totalorder %s43, 3
      %p313 = pnand %p311, %p312
      %p314 = pneg %p313
      // Predicated region
      $region37: #{tpu_custom_call.1} parent=5 // pred_check
        _
      $region38: #{tpu_custom_call.1} parent=5 // pred_check_branch
        %316 = sbr.rel (%p313) target = $region40
      $region39: #{tpu_custom_call.1} parent=5 // pred_region
        %s317 = ssub.s32 %s43, 1
        // Predicated region
        $region41: #{tpu_custom_call.1} parent=39 // pred_check
          %p318 = pneg %p106
        $region42: #{tpu_custom_call.1} parent=39 // pred_check_branch
          %320 = sbr.rel (%p318) target = $region44
        $region43: #{tpu_custom_call.1} parent=39 // pred_region
          %321 = dma.done [#allocation10], 4096
        $region44: #{tpu_custom_call.1} parent=39 // pred_fallthru
          _
        %s322 = sand.u32 %s48, 1
        %s323 = scalar_lea.sflag [#allocation13], %s322
        %s324 = sand.u32 %s119, 1
        %s325 = smul.addr %s324, 64
        %s326 = scalar_lea.vmem [#allocation12], %s325
        // Predicated region
        $region45: #{tpu_custom_call.1} parent=39 // pred_check
          %p327 = pneg %p132
        $region46: #{tpu_custom_call.1} parent=39 // pred_check_branch
          %329 = sbr.rel (%p327) target = $region48
        $region47: #{tpu_custom_call.1} parent=39 // pred_region
          %330 = dma.done %s323, 1024
        $region48: #{tpu_custom_call.1} parent=39 // pred_fallthru
          _
        %s331 = sand.u32 %s48, 1
        %s332 = scalar_lea.sflag [#allocation13], %s331
        %s333 = sand.u32 %s145, 1
        %s334 = smul.addr %s333, 64
        %s335 = scalar_lea.vmem [#allocation14], %s334
        // Predicated region
        $region49: #{tpu_custom_call.1} parent=39 // pred_check
          %p336 = pneg %p158
        $region50: #{tpu_custom_call.1} parent=39 // pred_check_branch
          %338 = sbr.rel (%p336) target = $region52
        $region51: #{tpu_custom_call.1} parent=39 // pred_region
          %339 = dma.done %s332, 1024
        $region52: #{tpu_custom_call.1} parent=39 // pred_fallthru
          _
        %p340 = pneg %p64
        %p341 = pneg %p61
        %p342 = pneg %p85
        %p343 = pneg %p82
        %p344 = pneg %p106
        %p345 = pneg %p103
        %s346 = sand.u32 %s48, 1
        %s347 = scalar_lea.sflag [#allocation13], %s346
        %s348 = sand.u32 %s119, 1
        %s349 = smul.addr %s348, 64
        %s350 = scalar_lea.vmem [#allocation12], %s349
        %p351 = pneg %p132
        %p352 = pneg %p129
        %s353 = sand.u32 %s48, 1
        %s354 = scalar_lea.sflag [#allocation13], %s353
        %s355 = sand.u32 %s145, 1
        %s356 = smul.addr %s355, 64
        %s357 = scalar_lea.vmem [#allocation14], %s356
        %p358 = pneg %p158
        %p359 = pneg %p155
        %p360 = pneg %p184
        %p361 = pneg %p181
        %s362 = sand.u32 %s171, 1
        %s363 = scalar_lea.sflag [#allocation11], %s362
        %s364 = sand.u32 %s171, 1
        %s365 = smul.addr %s364, 64
        %s366 = scalar_lea.vmem [#allocation15], %s365
        %p367 = pneg %p210
        %p368 = pneg %p207
        %s369 = sand.u32 %s48, 1
        %s370 = scalar_lea.sflag [#allocation17], %s369
        %s371 = sand.u32 %s197, 1
        %s372 = smul.addr %s371, 64
        %s373 = scalar_lea.vmem [#allocation16], %s372
        %p374 = pneg %p231
        %p375 = pneg %p228
        %s376 = smul.u32 8, %s48
        %s377 = smul.u32 8, %s48
        %s378 = smul.u32 8, %s48
        %s379 = smul.u32 8, %s48
        %p380 = scmp.eq.s32.totalorder %s48, 0
        // Predicated region
        $region53: #{tpu_custom_call.1} parent=39 // pred_check
          %p381 = pneg %p380
        $region54: #{tpu_custom_call.1} parent=39 // pred_check_branch
          %383 = sbr.rel (%p381) target = $region56
        $region55: #{tpu_custom_call.1} parent=39 // pred_region
          %384 = vst [vmem:[#allocation2] sm:$0xff] 0.0
          %v385 = vld [vmem:[%s4] sm:$0x1]
          %386 = vst [vmem:[#allocation2] sm:$0x1] %v385
          %v387 = vld [vmem:[%s5] sm:$0x1]
          %388 = vst [vmem:[#allocation2 + $0x1] sm:$0x1] %v387
          %vm389 = vcmask 0
          %390 = vst.msk [vmem:[#allocation3] sm:$0x1] %vm389, 0.0
        $region56: #{tpu_custom_call.1} parent=39 // pred_fallthru
          _
        %s391 = sld [smem:[#allocation8]]
        %s392 = smul.f32 %s391, 3.807035e-05
        %v393 = vlaneseq
        %v394 = vand.u32 %v393, 127
        %v395 = vcvt.s32.f32 %v394
        %v396 = vmul.f32 %v395, 0.0078125
        %v397 = vlaneseq
        %v398 = vshrl.u32 %v397, 7
        %v399 = vadd.s32 %v398, 8
        %v400 = vadd.s32 %v398, 16
        %v401 = vadd.s32 %v398, 24
        %v402 = vadd.s32 %v398, 32
        %v403 = vadd.s32 %v398, 40
        %v404 = vadd.s32 %v398, 48
        %v405 = vadd.s32 %v398, 56
        %v406 = vadd.s32 %v398, 64
        %v407 = vadd.s32 %v398, 72
        %v408 = vadd.s32 %v398, 80
        %v409 = vadd.s32 %v398, 88
        %v410 = vadd.s32 %v398, 96
        %v411 = vadd.s32 %v398, 104
        %v412 = vadd.s32 %v398, 112
        %v413 = vadd.s32 %v398, 120
        %vm414 = vcmp.eq.s32.totalorder %v398, 127
        %vm415 = vcmp.eq.s32.totalorder %v399, 127
        %vm416 = vcmp.eq.s32.totalorder %v400, 127
        %vm417 = vcmp.eq.s32.totalorder %v401, 127
        %vm418 = vcmp.eq.s32.totalorder %v402, 127
        %vm419 = vcmp.eq.s32.totalorder %v403, 127
        %vm420 = vcmp.eq.s32.totalorder %v404, 127
        %vm421 = vcmp.eq.s32.totalorder %v405, 127
        %vm422 = vcmp.eq.s32.totalorder %v406, 127
        %vm423 = vcmp.eq.s32.totalorder %v407, 127
        %vm424 = vcmp.eq.s32.totalorder %v408, 127
        %vm425 = vcmp.eq.s32.totalorder %v409, 127
        %vm426 = vcmp.eq.s32.totalorder %v410, 127
        %vm427 = vcmp.eq.s32.totalorder %v411, 127
        %vm428 = vcmp.eq.s32.totalorder %v412, 127
        %vm429 = vcmp.eq.s32.totalorder %v413, 127
        %v430 = vsel %vm414, 1e+30, 0.0
        %v431 = vsel %vm415, 1e+30, 0.0
        %v432 = vsel %vm416, 1e+30, 0.0
        %v433 = vsel %vm417, 1e+30, 0.0
        %v434 = vsel %vm418, 1e+30, 0.0
        %v435 = vsel %vm419, 1e+30, 0.0
        %v436 = vsel %vm420, 1e+30, 0.0
        %v437 = vsel %vm421, 1e+30, 0.0
        %v438 = vsel %vm422, 1e+30, 0.0
        %v439 = vsel %vm423, 1e+30, 0.0
        %v440 = vsel %vm424, 1e+30, 0.0
        %v441 = vsel %vm425, 1e+30, 0.0
        %v442 = vsel %vm426, 1e+30, 0.0
        %v443 = vsel %vm427, 1e+30, 0.0
        %v444 = vsel %vm428, 1e+30, 0.0
        %v445 = vsel %vm429, 1e+30, 0.0
        %v446 = vld [vmem:[#allocation2] sm:$0x1]
        %v447 = vld [vmem:[#allocation2 + $0x1] sm:$0x1]
        %v448 = vld [vmem:[#allocation3] sm:$0x1]
        loop: start=0, step=1, limit=8
        $region57: #{tpu_custom_call.1} parent=39 // loop_pre_header
          _
        $region58: #{tpu_custom_call.1} parent=39 // loop_header
          %s450 = sphi 0, %s454
          %p451 = scmp.ge.s32.totalorder %s450, 8
          %v455 = vphi %v446, %v6028
          %v456 = vphi %v447, %v6049
          %v457 = vphi %v448, %v5452
        $region59: #{tpu_custom_call.1} parent=39 // loop_header_branch
          %453 = sbr.rel (%p451) target = $region63
        $region60: #{tpu_custom_call.1} parent=39 // loop_body
          %s458 = smul.u32 %s450, 8
          %s459 = smul.u32 %s48, 64
          %s460 = sadd.s32 %s459, %s458
          %s461 = scalar_lea.vmem %s326, %s458 [#allocation12]
          %v462 = vld [vmem:[%s461] sm:$0x1]
          %s463 = scalar_lea.vmem %s335, %s458 [#allocation14]
          %v464 = vld [vmem:[%s463] sm:$0x1]
          %s465 = sadd.s32 %s460, 4294967295
          %p466 = scmp.gt.s32.totalorder %s465, 0
          %s467 = scalar_select %p466, %s465, 0
          %s468 = sld [smem:[#allocation5 + %s467]]
          %s469 = sld [smem:[#allocation5 + %s460]]
          %s470 = sld [smem:[#allocation6 + %s460]]
          %s471 = sld [smem:[#allocation7 + %s460]]
          %v472 = vadd.f32 %v456, %v462
          %v473 = vsub.f32 %v455, 1.0
          %v474 = vmul.f32 %v473, 0.6372646
          %v475 = vmul.f32 %v474, 1.442695
          %v476 = vpow.pop %v475
          %v477 = vmul.f32 %v476, 5.7326083
          %v478 = vadd.f32 %v477, -1.5961449
          %v479 = vmul.f32 %v473, -2.237382
          %v480 = vadd.f32 %v478, %v479
          %v481 = vrsqrt.pop %v455
          %v482 = vmul.f32 %v455, %v481
          %vm483 = vcmp.eq.f32.partialorder %v455, inf
          %v484 = vsel %vm483, %v455, %v482
          %vm485 = vcmp.eq.f32.partialorder %v455, 0.0
          %v486 = vand.u32 %v455, 2147483648
          %v487 = vsel %vm485, %v486, %v484
          %v488 = vmul.f32 %v487, -2.5447896
          %v489 = vmul.f32 %v488, 1.442695
          %v490 = vpow.pop %v489
          %v491 = vsub.f32 0.07848956, %v490
          %v492 = vmul.f32 %v491, 0.6412372
          %v493 = vadd.f32 %v480, %v492
          %v494 = vstv %s468
          %v495 = vmul.f32 %v494, %v472
          %v496 = vsub.f32 %v493, %v495
          %s497 = smul.f32 %s468, %s392
          %v498 = vstv %s497
          %v499 = vmul.f32 %v498, %v496
          %v500 = vsub.f32 %v455, %v499
          %v501 = vadd.f32 %v500, %v464
          %vm502 = vcmp.gt.f32.partialorder %v501, 1.0
          %v503 = vsel %vm502, 1.0, %v501
          %vm504 = vcmp.lt.f32.partialorder %v503, 0.0
          %v505 = vsel %vm504, 1e-10, %v503
          %v506 = vsub.f32 %v505, 1.0
          %v507 = vmul.f32 %v506, 0.6372646
          %v508 = vmul.f32 %v507, 1.442695
          %v509 = vpow.pop %v508
          %v510 = vmul.f32 %v509, 5.7326083
          %v511 = vadd.f32 %v510, -1.5961449
          %v512 = vmul.f32 %v506, -2.237382
          %v513 = vadd.f32 %v511, %v512
          %v514 = vrsqrt.pop %v505
          %v515 = vmul.f32 %v505, %v514
          %vm516 = vcmp.eq.f32.partialorder %v505, inf
          %v517 = vsel %vm516, %v505, %v515
          %vm518 = vcmp.eq.f32.partialorder %v505, 0.0
          %v519 = vand.u32 %v505, 2147483648
          %v520 = vsel %vm518, %v519, %v517
          %v521 = vmul.f32 %v520, -2.5447896
          %v522 = vmul.f32 %v521, 1.442695
          %v523 = vpow.pop %v522
          %v524 = vsub.f32 0.07848956, %v523
          %v525 = vmul.f32 %v524, 0.6412372
          %v526 = vadd.f32 %v513, %v525
          %v527 = vstv %s469
          %v528 = vmul.f32 %v527, %v472
          %v529 = vsub.f32 %v526, %v528
          %v530 = vstv %s470
          %v531 = vsub.f32 %v529, %v530
          %v532 = vmul.f32 %v531, 100.0
          %v533 = vmul.f32 %v532, 0.5
          %v534 = vmul.f32 %v533, %v532
          %v535 = vsub.f32 3.6862316, %v534
          %vm536 = vcmask 1040384
          %v537 = vsel %vm536, %v535, -inf
          %538 = vmax.xlane.f32.xlu0 %v537
          %v539 = vpop.xlane.xlu0 %538
          %v540 = vsub.f32 %v535, %v539
          %v541 = vmul.f32 %v540, 1.442695
          %v542 = vpow.pop %v541
          %v543 = vsel %vm536, %v542, 0.0
          %544 = vadd.xlane.f32.xlu0 %v543
          %v545 = vpop.xlane.xlu0 %544
          %v546 = vlog2.pop %v545
          %v547 = vmul.f32 %v546, 0.6931472
          %v548 = vadd.f32 %v539, %v547
          %v549 = vsub.f32 %v548, 4.8520303
          %p550 = scmp.lt.s32.totalorder %s460, 100
          %s551 = scalar_select %p550, 1, 0
          %v552 = vstv %s551
          %vm553 = vcmp.eq.s32.totalorder %v552, 1
          %v554 = vsel %vm553, %v549, 0.0
          %v555 = vadd.f32 %v457, %v554
          %vm556 = vcmp.eq.s32.totalorder %v398, 0
          %v557 = vsel %vm556, 1, 0
          %vm558 = vcmp.eq.s32.totalorder %v557, 1
          %v559 = vlaneseq
          %v560 = vshrl.u32 %v559, 7
          %v561 = vsub.s32 0, %v560
          %v562 = vrot.slane %v542, %v561
          %v563 = vsel %vm558, %v562, 0.0
          %v564 = vld [vmem:[#allocation9] sm:$0xff]
          %v565 = vld [vmem:[#allocation9 + $0x8] sm:$0xff]
          %v566 = vld [vmem:[#allocation9 + $0x10] sm:$0xff]
          %v567 = vld [vmem:[#allocation9 + $0x18] sm:$0xff]
          %v568 = vld [vmem:[#allocation9 + $0x20] sm:$0xff]
          %v569 = vld [vmem:[#allocation9 + $0x28] sm:$0xff]
          %v570 = vld [vmem:[#allocation9 + $0x30] sm:$0xff]
          %v571 = vld [vmem:[#allocation9 + $0x38] sm:$0xff]
          %v572 = vld [vmem:[#allocation9 + $0x40] sm:$0xff]
          %v573 = vld [vmem:[#allocation9 + $0x48] sm:$0xff]
          %v574 = vld [vmem:[#allocation9 + $0x50] sm:$0xff]
          %v575 = vld [vmem:[#allocation9 + $0x58] sm:$0xff]
          %v576 = vld [vmem:[#allocation9 + $0x60] sm:$0xff]
          %v577 = vld [vmem:[#allocation9 + $0x68] sm:$0xff]
          %v578 = vld [vmem:[#allocation9 + $0x70] sm:$0xff]
          %v579 = vld [vmem:[#allocation9 + $0x78] sm:$0xff]
          %v580 = vld [vmem:[#allocation9 + $0x80] sm:$0xff]
          %v581 = vld [vmem:[#allocation9 + $0x88] sm:$0xff]
          %v582 = vld [vmem:[#allocation9 + $0x90] sm:$0xff]
          %v583 = vld [vmem:[#allocation9 + $0x98] sm:$0xff]
          %v584 = vld [vmem:[#allocation9 + $0xa0] sm:$0xff]
          %v585 = vld [vmem:[#allocation9 + $0xa8] sm:$0xff]
          %v586 = vld [vmem:[#allocation9 + $0xb0] sm:$0xff]
          %v587 = vld [vmem:[#allocation9 + $0xb8] sm:$0xff]
          %v588 = vld [vmem:[#allocation9 + $0xc0] sm:$0xff]
          %v589 = vld [vmem:[#allocation9 + $0xc8] sm:$0xff]
          %v590 = vld [vmem:[#allocation9 + $0xd0] sm:$0xff]
          %v591 = vld [vmem:[#allocation9 + $0xd8] sm:$0xff]
          %v592 = vld [vmem:[#allocation9 + $0xe0] sm:$0xff]
          %v593 = vld [vmem:[#allocation9 + $0xe8] sm:$0xff]
          %v594 = vld [vmem:[#allocation9 + $0xf0] sm:$0xff]
          %v595 = vld [vmem:[#allocation9 + $0xf8] sm:$0xff]
          %596 = vmatprep.subr.mxu0 0.0
          %597 = vmatpush1.xpose.msra.mxu0 0.0
          %598 = vmatprep.subr.mxu0 0.0
          %599 = vmatpush1.xpose.msra.mxu0 0.0
          %600 = vmatprep.subr.mxu0 0.0
          %601 = vmatpush1.xpose.msra.mxu0 0.0
          %602 = vmatprep.subr.mxu0 0.0
          %603 = vmatpush1.xpose.msra.mxu0 0.0
          %604 = vmatprep.subr.mxu0 0.0
          %605 = vmatpush1.xpose.msra.mxu0 0.0
          %606 = vmatprep.subr.mxu0 0.0
          %607 = vmatpush1.xpose.msra.mxu0 0.0
          %608 = vmatprep.subr.mxu0 0.0
          %609 = vmatpush1.xpose.msra.mxu0 0.0
          %610 = vmatprep.subr.mxu0 0.0
          %611 = vmatpush1.xpose.msra.mxu0 0.0
          %612 = vmatprep.subr.mxu0 0.0
          %613 = vmatpush1.xpose.msra.mxu0 0.0
          %614 = vmatprep.subr.mxu0 0.0
          %615 = vmatpush1.xpose.msra.mxu0 0.0
          %616 = vmatprep.subr.mxu0 0.0
          %617 = vmatpush1.xpose.msra.mxu0 0.0
          %618 = vmatprep.subr.mxu0 0.0
          %619 = vmatpush1.xpose.msra.mxu0 0.0
          %620 = vmatprep.subr.mxu0 0.0
          %621 = vmatpush1.xpose.msra.mxu0 0.0
          %622 = vmatprep.subr.mxu0 0.0
          %623 = vmatpush1.xpose.msra.mxu0 0.0
          %624 = vmatprep.subr.mxu0 0.0
          %625 = vmatpush1.xpose.msra.mxu0 0.0
          %626 = vmatprep.subr.mxu0 0.0
          %627 = vmatpush1.xpose.msra.mxu0 %v563
          %628 = vmatprep.subr.mxu0 0.0
          %629 = vmatpush2.xpose.msra.mxu0 0.0
          %630 = vmatprep.subr.mxu0 0.0
          %631 = vmatpush2.xpose.msra.mxu0 0.0
          %632 = vmatprep.subr.mxu0 0.0
          %633 = vmatpush2.xpose.msra.mxu0 0.0
          %634 = vmatprep.subr.mxu0 0.0
          %635 = vmatpush2.xpose.msra.mxu0 0.0
          %636 = vmatprep.subr.mxu0 0.0
          %637 = vmatpush2.xpose.msra.mxu0 0.0
          %638 = vmatprep.subr.mxu0 0.0
          %639 = vmatpush2.xpose.msra.mxu0 0.0
          %640 = vmatprep.subr.mxu0 0.0
          %641 = vmatpush2.xpose.msra.mxu0 0.0
          %642 = vmatprep.subr.mxu0 0.0
          %643 = vmatpush2.xpose.msra.mxu0 0.0
          %644 = vmatprep.subr.mxu0 0.0
          %645 = vmatpush2.xpose.msra.mxu0 0.0
          %646 = vmatprep.subr.mxu0 0.0
          %647 = vmatpush2.xpose.msra.mxu0 0.0
          %648 = vmatprep.subr.mxu0 0.0
          %649 = vmatpush2.xpose.msra.mxu0 0.0
          %650 = vmatprep.subr.mxu0 0.0
          %651 = vmatpush2.xpose.msra.mxu0 0.0
          %652 = vmatprep.subr.mxu0 0.0
          %653 = vmatpush2.xpose.msra.mxu0 0.0
          %654 = vmatprep.subr.mxu0 0.0
          %655 = vmatpush2.xpose.msra.mxu0 0.0
          %656 = vmatprep.subr.mxu0 0.0
          %657 = vmatpush2.xpose.msra.mxu0 0.0
          %658 = vmatprep.subr.mxu0 0.0
          %659 = vmatpush2.xpose.msra.mxu0 0.0
          %660 = vmatprep.mubr.f32.mxu0 0.0
          %661 = vmatmul.mubr.f32.gmra.mxu0 %v564
          %v662 = vpop.f32.mrf.mxu0
          %v663 = vadd.f32 0.0, %v662
          %v664 = vpop.f32.mrf.mxu0
          %665 = vmatprep.mubr.f32.mxu0 0.0
          %666 = vmatmul.mubr.f32.gmra.mxu0 %v565
          %v667 = vpop.f32.mrf.mxu0
          %v668 = vadd.f32 0.0, %v667
          %v669 = vpop.f32.mrf.mxu0
          %670 = vmatprep.mubr.f32.mxu0 0.0
          %671 = vmatmul.mubr.f32.gmra.mxu0 %v566
          %v672 = vpop.f32.mrf.mxu0
          %v673 = vadd.f32 0.0, %v672
          %v674 = vpop.f32.mrf.mxu0
          %675 = vmatprep.mubr.f32.mxu0 0.0
          %676 = vmatmul.mubr.f32.gmra.mxu0 %v567
          %v677 = vpop.f32.mrf.mxu0
          %v678 = vadd.f32 0.0, %v677
          %v679 = vpop.f32.mrf.mxu0
          %680 = vmatprep.mubr.f32.mxu0 0.0
          %681 = vmatmul.mubr.f32.gmra.mxu0 %v568
          %v682 = vpop.f32.mrf.mxu0
          %v683 = vadd.f32 0.0, %v682
          %v684 = vpop.f32.mrf.mxu0
          %685 = vmatprep.mubr.f32.mxu0 0.0
          %686 = vmatmul.mubr.f32.gmra.mxu0 %v569
          %v687 = vpop.f32.mrf.mxu0
          %v688 = vadd.f32 0.0, %v687
          %v689 = vpop.f32.mrf.mxu0
          %690 = vmatprep.mubr.f32.mxu0 0.0
          %691 = vmatmul.mubr.f32.gmra.mxu0 %v570
          %v692 = vpop.f32.mrf.mxu0
          %v693 = vadd.f32 0.0, %v692
          %v694 = vpop.f32.mrf.mxu0
          %695 = vmatprep.mubr.f32.mxu0 0.0
          %696 = vmatmul.mubr.f32.gmra.mxu0 %v571
          %v697 = vpop.f32.mrf.mxu0
          %v698 = vadd.f32 0.0, %v697
          %v699 = vpop.f32.mrf.mxu0
          %700 = vmatprep.mubr.f32.mxu0 0.0
          %701 = vmatmul.mubr.f32.gmra.mxu0 %v572
          %v702 = vpop.f32.mrf.mxu0
          %v703 = vadd.f32 0.0, %v702
          %v704 = vpop.f32.mrf.mxu0
          %705 = vmatprep.mubr.f32.mxu0 0.0
          %706 = vmatmul.mubr.f32.gmra.mxu0 %v573
          %v707 = vpop.f32.mrf.mxu0
          %v708 = vadd.f32 0.0, %v707
          %v709 = vpop.f32.mrf.mxu0
          %710 = vmatprep.mubr.f32.mxu0 0.0
          %711 = vmatmul.mubr.f32.gmra.mxu0 %v574
          %v712 = vpop.f32.mrf.mxu0
          %v713 = vadd.f32 0.0, %v712
          %v714 = vpop.f32.mrf.mxu0
          %715 = vmatprep.mubr.f32.mxu0 0.0
          %716 = vmatmul.mubr.f32.gmra.mxu0 %v575
          %v717 = vpop.f32.mrf.mxu0
          %v718 = vadd.f32 0.0, %v717
          %v719 = vpop.f32.mrf.mxu0
          %720 = vmatprep.mubr.f32.mxu0 0.0
          %721 = vmatmul.mubr.f32.gmra.mxu0 %v576
          %v722 = vpop.f32.mrf.mxu0
          %v723 = vadd.f32 0.0, %v722
          %v724 = vpop.f32.mrf.mxu0
          %725 = vmatprep.mubr.f32.mxu0 0.0
          %726 = vmatmul.mubr.f32.gmra.mxu0 %v577
          %v727 = vpop.f32.mrf.mxu0
          %v728 = vadd.f32 0.0, %v727
          %v729 = vpop.f32.mrf.mxu0
          %730 = vmatprep.mubr.f32.mxu0 0.0
          %731 = vmatmul.mubr.f32.gmra.mxu0 %v578
          %v732 = vpop.f32.mrf.mxu0
          %v733 = vadd.f32 0.0, %v732
          %v734 = vpop.f32.mrf.mxu0
          %735 = vmatprep.mubr.f32.mxu0 0.0
          %736 = vmatmul.mubr.f32.gmra.mxu0 %v579
          %v737 = vpop.f32.mrf.mxu0
          %v738 = vadd.f32 0.0, %v737
          %v739 = vpop.f32.mrf.mxu0
          %740 = vmatprep.mubr.f32.mxu0 0.0
          %741 = vmatmul.mubr.f32.gmra.mxu0 %v580
          %v742 = vpop.f32.mrf.mxu0
          %v743 = vadd.f32 0.0, %v742
          %v744 = vpop.f32.mrf.mxu0
          %745 = vmatprep.mubr.f32.mxu0 0.0
          %746 = vmatmul.mubr.f32.gmra.mxu0 %v581
          %v747 = vpop.f32.mrf.mxu0
          %v748 = vadd.f32 0.0, %v747
          %v749 = vpop.f32.mrf.mxu0
          %750 = vmatprep.mubr.f32.mxu0 0.0
          %751 = vmatmul.mubr.f32.gmra.mxu0 %v582
          %v752 = vpop.f32.mrf.mxu0
          %v753 = vadd.f32 0.0, %v752
          %v754 = vpop.f32.mrf.mxu0
          %755 = vmatprep.mubr.f32.mxu0 0.0
          %756 = vmatmul.mubr.f32.gmra.mxu0 %v583
          %v757 = vpop.f32.mrf.mxu0
          %v758 = vadd.f32 0.0, %v757
          %v759 = vpop.f32.mrf.mxu0
          %760 = vmatprep.mubr.f32.mxu0 0.0
          %761 = vmatmul.mubr.f32.gmra.mxu0 %v584
          %v762 = vpop.f32.mrf.mxu0
          %v763 = vadd.f32 0.0, %v762
          %v764 = vpop.f32.mrf.mxu0
          %765 = vmatprep.mubr.f32.mxu0 0.0
          %766 = vmatmul.mubr.f32.gmra.mxu0 %v585
          %v767 = vpop.f32.mrf.mxu0
          %v768 = vadd.f32 0.0, %v767
          %v769 = vpop.f32.mrf.mxu0
          %770 = vmatprep.mubr.f32.mxu0 0.0
          %771 = vmatmul.mubr.f32.gmra.mxu0 %v586
          %v772 = vpop.f32.mrf.mxu0
          %v773 = vadd.f32 0.0, %v772
          %v774 = vpop.f32.mrf.mxu0
          %775 = vmatprep.mubr.f32.mxu0 0.0
          %776 = vmatmul.mubr.f32.gmra.mxu0 %v587
          %v777 = vpop.f32.mrf.mxu0
          %v778 = vadd.f32 0.0, %v777
          %v779 = vpop.f32.mrf.mxu0
          %780 = vmatprep.mubr.f32.mxu0 0.0
          %781 = vmatmul.mubr.f32.gmra.mxu0 %v588
          %v782 = vpop.f32.mrf.mxu0
          %v783 = vadd.f32 0.0, %v782
          %v784 = vpop.f32.mrf.mxu0
          %785 = vmatprep.mubr.f32.mxu0 0.0
          %786 = vmatmul.mubr.f32.gmra.mxu0 %v589
          %v787 = vpop.f32.mrf.mxu0
          %v788 = vadd.f32 0.0, %v787
          %v789 = vpop.f32.mrf.mxu0
          %790 = vmatprep.mubr.f32.mxu0 0.0
          %791 = vmatmul.mubr.f32.gmra.mxu0 %v590
          %v792 = vpop.f32.mrf.mxu0
          %v793 = vadd.f32 0.0, %v792
          %v794 = vpop.f32.mrf.mxu0
          %795 = vmatprep.mubr.f32.mxu0 0.0
          %796 = vmatmul.mubr.f32.gmra.mxu0 %v591
          %v797 = vpop.f32.mrf.mxu0
          %v798 = vadd.f32 0.0, %v797
          %v799 = vpop.f32.mrf.mxu0
          %800 = vmatprep.mubr.f32.mxu0 0.0
          %801 = vmatmul.mubr.f32.gmra.mxu0 %v592
          %v802 = vpop.f32.mrf.mxu0
          %v803 = vadd.f32 0.0, %v802
          %v804 = vpop.f32.mrf.mxu0
          %805 = vmatprep.mubr.f32.mxu0 0.0
          %806 = vmatmul.mubr.f32.gmra.mxu0 %v593
          %v807 = vpop.f32.mrf.mxu0
          %v808 = vadd.f32 0.0, %v807
          %v809 = vpop.f32.mrf.mxu0
          %810 = vmatprep.mubr.f32.mxu0 0.0
          %811 = vmatmul.mubr.f32.gmra.mxu0 %v594
          %v812 = vpop.f32.mrf.mxu0
          %v813 = vadd.f32 0.0, %v812
          %v814 = vpop.f32.mrf.mxu0
          %815 = vmatprep.mubr.f32.mxu0 0.0
          %816 = vmatmul.mubr.f32.gmra.mxu0 %v595
          %v817 = vpop.f32.mrf.mxu0
          %v818 = vadd.f32 0.0, %v817
          %v819 = vpop.f32.mrf.mxu0
          %820 = vdwg.mxu0
          %v821 = vadd.f32 %v663, %v430
          %v822 = vadd.f32 %v668, %v431
          %v823 = vadd.f32 %v673, %v432
          %v824 = vadd.f32 %v678, %v433
          %v825 = vadd.f32 %v683, %v434
          %v826 = vadd.f32 %v688, %v435
          %v827 = vadd.f32 %v693, %v436
          %v828 = vadd.f32 %v698, %v437
          %v829 = vadd.f32 %v703, %v438
          %v830 = vadd.f32 %v708, %v439
          %v831 = vadd.f32 %v713, %v440
          %v832 = vadd.f32 %v718, %v441
          %v833 = vadd.f32 %v723, %v442
          %v834 = vadd.f32 %v728, %v443
          %v835 = vadd.f32 %v733, %v444
          %v836 = vadd.f32 %v738, %v445
          %s837 = smul.f32 %s471, 0.0078125
          %v838 = vstv %s837
          %v839 = vadd.f32 %v396, %v838
          %v840 = vmul.f32 %v839, %v545
          %v841 = vlaneseq
          %v842 = vshrl.u32 %v841, 7
          %v843 = vsub.s32 0, %v842
          %v844 = vrot.slane %v840, %v843
          %846 = vset.pattern.permute.xlu0 0
          %847 = vperm.xlu0 %846, %v743
          %v848 = vpop.permute.xlu0 %847
          %851 = vset.pattern.permute.xlu0 0
          %852 = vperm.xlu0 %851, %v748
          %v853 = vpop.permute.xlu0 %852
          %856 = vset.pattern.permute.xlu0 0
          %857 = vperm.xlu0 %856, %v753
          %v858 = vpop.permute.xlu0 %857
          %861 = vset.pattern.permute.xlu0 0
          %862 = vperm.xlu0 %861, %v758
          %v863 = vpop.permute.xlu0 %862
          %866 = vset.pattern.permute.xlu0 0
          %867 = vperm.xlu0 %866, %v763
          %v868 = vpop.permute.xlu0 %867
          %871 = vset.pattern.permute.xlu0 0
          %872 = vperm.xlu0 %871, %v768
          %v873 = vpop.permute.xlu0 %872
          %876 = vset.pattern.permute.xlu0 0
          %877 = vperm.xlu0 %876, %v773
          %v878 = vpop.permute.xlu0 %877
          %881 = vset.pattern.permute.xlu0 0
          %882 = vperm.xlu0 %881, %v778
          %v883 = vpop.permute.xlu0 %882
          %886 = vset.pattern.permute.xlu0 0
          %887 = vperm.xlu0 %886, %v783
          %v888 = vpop.permute.xlu0 %887
          %891 = vset.pattern.permute.xlu0 0
          %892 = vperm.xlu0 %891, %v788
          %v893 = vpop.permute.xlu0 %892
          %896 = vset.pattern.permute.xlu0 0
          %897 = vperm.xlu0 %896, %v793
          %v898 = vpop.permute.xlu0 %897
          %901 = vset.pattern.permute.xlu0 0
          %902 = vperm.xlu0 %901, %v798
          %v903 = vpop.permute.xlu0 %902
          %906 = vset.pattern.permute.xlu0 0
          %907 = vperm.xlu0 %906, %v803
          %v908 = vpop.permute.xlu0 %907
          %911 = vset.pattern.permute.xlu0 0
          %912 = vperm.xlu0 %911, %v808
          %v913 = vpop.permute.xlu0 %912
          %916 = vset.pattern.permute.xlu0 0
          %917 = vperm.xlu0 %916, %v813
          %v918 = vpop.permute.xlu0 %917
          %921 = vset.pattern.permute.xlu0 0
          %922 = vperm.xlu0 %921, %v818
          %v923 = vpop.permute.xlu0 %922
          %vm925 = vcmp.ge.f32.partialorder %v844, %v848
          %vm926 = vcmp.ge.f32.partialorder %v844, %v853
          %vm927 = vcmp.ge.f32.partialorder %v844, %v858
          %vm928 = vcmp.ge.f32.partialorder %v844, %v863
          %vm929 = vcmp.ge.f32.partialorder %v844, %v868
          %vm930 = vcmp.ge.f32.partialorder %v844, %v873
          %vm931 = vcmp.ge.f32.partialorder %v844, %v878
          %vm932 = vcmp.ge.f32.partialorder %v844, %v883
          %vm933 = vcmp.ge.f32.partialorder %v844, %v888
          %vm934 = vcmp.ge.f32.partialorder %v844, %v893
          %vm935 = vcmp.ge.f32.partialorder %v844, %v898
          %vm936 = vcmp.ge.f32.partialorder %v844, %v903
          %vm937 = vcmp.ge.f32.partialorder %v844, %v908
          %vm938 = vcmp.ge.f32.partialorder %v844, %v913
          %vm939 = vcmp.ge.f32.partialorder %v844, %v918
          %vm940 = vcmp.ge.f32.partialorder %v844, %v923
          %942 = vset.pattern.permute.xlu0 0
          %943 = vperm.xlu0 %942, %v821
          %v944 = vpop.permute.xlu0 %943
          %947 = vset.pattern.permute.xlu0 0
          %948 = vperm.xlu0 %947, %v822
          %v949 = vpop.permute.xlu0 %948
          %952 = vset.pattern.permute.xlu0 0
          %953 = vperm.xlu0 %952, %v823
          %v954 = vpop.permute.xlu0 %953
          %957 = vset.pattern.permute.xlu0 0
          %958 = vperm.xlu0 %957, %v824
          %v959 = vpop.permute.xlu0 %958
          %962 = vset.pattern.permute.xlu0 0
          %963 = vperm.xlu0 %962, %v825
          %v964 = vpop.permute.xlu0 %963
          %967 = vset.pattern.permute.xlu0 0
          %968 = vperm.xlu0 %967, %v826
          %v969 = vpop.permute.xlu0 %968
          %972 = vset.pattern.permute.xlu0 0
          %973 = vperm.xlu0 %972, %v827
          %v974 = vpop.permute.xlu0 %973
          %977 = vset.pattern.permute.xlu0 0
          %978 = vperm.xlu0 %977, %v828
          %v979 = vpop.permute.xlu0 %978
          %982 = vset.pattern.permute.xlu0 0
          %983 = vperm.xlu0 %982, %v829
          %v984 = vpop.permute.xlu0 %983
          %987 = vset.pattern.permute.xlu0 0
          %988 = vperm.xlu0 %987, %v830
          %v989 = vpop.permute.xlu0 %988
          %992 = vset.pattern.permute.xlu0 0
          %993 = vperm.xlu0 %992, %v831
          %v994 = vpop.permute.xlu0 %993
          %997 = vset.pattern.permute.xlu0 0
          %998 = vperm.xlu0 %997, %v832
          %v999 = vpop.permute.xlu0 %998
          %1002 = vset.pattern.permute.xlu0 0
          %1003 = vperm.xlu0 %1002, %v833
          %v1004 = vpop.permute.xlu0 %1003
          %1007 = vset.pattern.permute.xlu0 0
          %1008 = vperm.xlu0 %1007, %v834
          %v1009 = vpop.permute.xlu0 %1008
          %1012 = vset.pattern.permute.xlu0 0
          %1013 = vperm.xlu0 %1012, %v835
          %v1014 = vpop.permute.xlu0 %1013
          %1017 = vset.pattern.permute.xlu0 0
          %1018 = vperm.xlu0 %1017, %v836
          %v1019 = vpop.permute.xlu0 %1018
          %vm1021 = vcmp.lt.f32.partialorder %v844, %v944
          %vm1022 = vcmp.lt.f32.partialorder %v844, %v949
          %vm1023 = vcmp.lt.f32.partialorder %v844, %v954
          %vm1024 = vcmp.lt.f32.partialorder %v844, %v959
          %vm1025 = vcmp.lt.f32.partialorder %v844, %v964
          %vm1026 = vcmp.lt.f32.partialorder %v844, %v969
          %vm1027 = vcmp.lt.f32.partialorder %v844, %v974
          %vm1028 = vcmp.lt.f32.partialorder %v844, %v979
          %vm1029 = vcmp.lt.f32.partialorder %v844, %v984
          %vm1030 = vcmp.lt.f32.partialorder %v844, %v989
          %vm1031 = vcmp.lt.f32.partialorder %v844, %v994
          %vm1032 = vcmp.lt.f32.partialorder %v844, %v999
          %vm1033 = vcmp.lt.f32.partialorder %v844, %v1004
          %vm1034 = vcmp.lt.f32.partialorder %v844, %v1009
          %vm1035 = vcmp.lt.f32.partialorder %v844, %v1014
          %vm1036 = vcmp.lt.f32.partialorder %v844, %v1019
          %vm1037 = vmand %vm925, %vm1021
          %vm1038 = vmand %vm926, %vm1022
          %vm1039 = vmand %vm927, %vm1023
          %vm1040 = vmand %vm928, %vm1024
          %vm1041 = vmand %vm929, %vm1025
          %vm1042 = vmand %vm930, %vm1026
          %vm1043 = vmand %vm931, %vm1027
          %vm1044 = vmand %vm932, %vm1028
          %vm1045 = vmand %vm933, %vm1029
          %vm1046 = vmand %vm934, %vm1030
          %vm1047 = vmand %vm935, %vm1031
          %vm1048 = vmand %vm936, %vm1032
          %vm1049 = vmand %vm937, %vm1033
          %vm1050 = vmand %vm938, %vm1034
          %vm1051 = vmand %vm939, %vm1035
          %vm1052 = vmand %vm940, %vm1036
          %v1053 = vsel %vm1037, 1, 0
          %v1054 = vsel %vm1038, 1, 0
          %v1055 = vsel %vm1039, 1, 0
          %v1056 = vsel %vm1040, 1, 0
          %v1057 = vsel %vm1041, 1, 0
          %v1058 = vsel %vm1042, 1, 0
          %v1059 = vsel %vm1043, 1, 0
          %v1060 = vsel %vm1044, 1, 0
          %v1061 = vsel %vm1045, 1, 0
          %v1062 = vsel %vm1046, 1, 0
          %v1063 = vsel %vm1047, 1, 0
          %v1064 = vsel %vm1048, 1, 0
          %v1065 = vsel %vm1049, 1, 0
          %v1066 = vsel %vm1050, 1, 0
          %v1067 = vsel %vm1051, 1, 0
          %v1068 = vsel %vm1052, 1, 0
          %v1069 = vcvt.s32.f32 %v1053
          %v1070 = vcvt.s32.f32 %v1054
          %v1071 = vcvt.s32.f32 %v1055
          %v1072 = vcvt.s32.f32 %v1056
          %v1073 = vcvt.s32.f32 %v1057
          %v1074 = vcvt.s32.f32 %v1058
          %v1075 = vcvt.s32.f32 %v1059
          %v1076 = vcvt.s32.f32 %v1060
          %v1077 = vcvt.s32.f32 %v1061
          %v1078 = vcvt.s32.f32 %v1062
          %v1079 = vcvt.s32.f32 %v1063
          %v1080 = vcvt.s32.f32 %v1064
          %v1081 = vcvt.s32.f32 %v1065
          %v1082 = vcvt.s32.f32 %v1066
          %v1083 = vcvt.s32.f32 %v1067
          %v1084 = vcvt.s32.f32 %v1068
          %vm1085 = vcmp.eq.s32.totalorder %v398, 1
          %v1086 = vsel %vm1085, 1, 0
          %vm1087 = vcmp.eq.s32.totalorder %v1086, 1
          %v1088 = vlaneseq
          %v1089 = vshrl.u32 %v1088, 7
          %v1090 = vsub.s32 0, %v1089
          %v1091 = vrot.slane %v472, %v1090
          %v1092 = vlaneseq
          %v1093 = vshrl.u32 %v1092, 7
          %v1094 = vsub.s32 0, %v1093
          %v1095 = vrot.slane %v529, %v1094
          %v1096 = vsel %vm1087, %v1091, %v1095
          %v1097 = vlaneseq
          %v1098 = vshrl.u32 %v1097, 7
          %v1099 = vsub.s32 0, %v1098
          %v1100 = vrot.slane %v505, %v1099
          %v1101 = vsel %vm558, %v1100, %v1096
          %1102 = vmatprep.subr.mxu0 0.0
          %1103 = vmatpush1.msra.mxu0 %v1084
          %1104 = vmatprep.subr.mxu0 0.0
          %1105 = vmatpush1.msra.mxu0 %v1083
          %1106 = vmatprep.subr.mxu0 0.0
          %1107 = vmatpush1.msra.mxu0 %v1082
          %1108 = vmatprep.subr.mxu0 0.0
          %1109 = vmatpush1.msra.mxu0 %v1081
          %1110 = vmatprep.subr.mxu0 0.0
          %1111 = vmatpush1.msra.mxu0 %v1080
          %1112 = vmatprep.subr.mxu0 0.0
          %1113 = vmatpush1.msra.mxu0 %v1079
          %1114 = vmatprep.subr.mxu0 0.0
          %1115 = vmatpush1.msra.mxu0 %v1078
          %1116 = vmatprep.subr.mxu0 0.0
          %1117 = vmatpush1.msra.mxu0 %v1077
          %1118 = vmatprep.subr.mxu0 0.0
          %1119 = vmatpush1.msra.mxu0 %v1076
          %1120 = vmatprep.subr.mxu0 0.0
          %1121 = vmatpush1.msra.mxu0 %v1075
          %1122 = vmatprep.subr.mxu0 0.0
          %1123 = vmatpush1.msra.mxu0 %v1074
          %1124 = vmatprep.subr.mxu0 0.0
          %1125 = vmatpush1.msra.mxu0 %v1073
          %1126 = vmatprep.subr.mxu0 0.0
          %1127 = vmatpush1.msra.mxu0 %v1072
          %1128 = vmatprep.subr.mxu0 0.0
          %1129 = vmatpush1.msra.mxu0 %v1071
          %1130 = vmatprep.subr.mxu0 0.0
          %1131 = vmatpush1.msra.mxu0 %v1070
          %1132 = vmatprep.subr.mxu0 0.0
          %1133 = vmatpush1.msra.mxu0 %v1069
          %1134 = vmatprep.subr.mxu0 0.0
          %1135 = vmatpush2.msra.mxu0 0.0
          %1136 = vmatprep.subr.mxu0 0.0
          %1137 = vmatpush2.msra.mxu0 0.0
          %1138 = vmatprep.subr.mxu0 0.0
          %1139 = vmatpush2.msra.mxu0 0.0
          %1140 = vmatprep.subr.mxu0 0.0
          %1141 = vmatpush2.msra.mxu0 0.0
          %1142 = vmatprep.subr.mxu0 0.0
          %1143 = vmatpush2.msra.mxu0 0.0
          %1144 = vmatprep.subr.mxu0 0.0
          %1145 = vmatpush2.msra.mxu0 0.0
          %1146 = vmatprep.subr.mxu0 0.0
          %1147 = vmatpush2.msra.mxu0 0.0
          %1148 = vmatprep.subr.mxu0 0.0
          %1149 = vmatpush2.msra.mxu0 0.0
          %1150 = vmatprep.subr.mxu0 0.0
          %1151 = vmatpush2.msra.mxu0 0.0
          %1152 = vmatprep.subr.mxu0 0.0
          %1153 = vmatpush2.msra.mxu0 0.0
          %1154 = vmatprep.subr.mxu0 0.0
          %1155 = vmatpush2.msra.mxu0 0.0
          %1156 = vmatprep.subr.mxu0 0.0
          %1157 = vmatpush2.msra.mxu0 0.0
          %1158 = vmatprep.subr.mxu0 0.0
          %1159 = vmatpush2.msra.mxu0 0.0
          %1160 = vmatprep.subr.mxu0 0.0
          %1161 = vmatpush2.msra.mxu0 0.0
          %1162 = vmatprep.subr.mxu0 0.0
          %1163 = vmatpush2.msra.mxu0 0.0
          %1164 = vmatprep.subr.mxu0 0.0
          %1165 = vmatpush2.msra.mxu0 0.0
          %1166 = vmatprep.mubr.f32.mxu0 0.0
          %1167 = vmatmul.mubr.f32.gmra.mxu0 %v1101
          %v1168 = vpop.f32.mrf.mxu0
          %v1169 = vadd.f32 0.0, %v1168
          %v1170 = vpop.f32.mrf.mxu0
          %1171 = vdwg.mxu0
          %v1172 = vlaneseq
          %v1173 = vshrl.u32 %v1172, 7
          %v1174 = vsub.s32 2, %v1173
          %v1175 = vrot.slane %v1169, %v1174
          %v1176 = vsel %vm558, %v1175, 0.0
          %v1177 = vlaneseq
          %v1178 = vshrl.u32 %v1177, 7
          %v1179 = vsub.s32 0, %v1178
          %v1180 = vrot.slane %v1169, %v1179
          %v1181 = vsel %vm558, %v1180, 0.0
          %s1182 = sadd.s32 %s460, 1
          %s1183 = sadd.s32 %s458, 1
          %s1184 = scalar_lea.vmem %s326, %s1183 [#allocation12]
          %v1185 = vld [vmem:[%s1184] sm:$0x1]
          %s1186 = scalar_lea.vmem %s335, %s1183 [#allocation14]
          %v1187 = vld [vmem:[%s1186] sm:$0x1]
          %p1188 = scmp.gt.s32.totalorder %s460, 0
          %s1189 = scalar_select %p1188, %s460, 0
          %s1190 = sld [smem:[#allocation5 + %s1189]]
          %s1191 = sld [smem:[#allocation5 + %s1182]]
          %s1192 = sld [smem:[#allocation6 + %s1182]]
          %s1193 = sld [smem:[#allocation7 + %s1182]]
          %v1195 = vrot.slane %v1185, 7
          %v1197 = vadd.f32 %v1169, %v1195
          %v1198 = vsub.f32 %v1169, 1.0
          %v1199 = vmul.f32 %v1198, 0.6372646
          %v1200 = vmul.f32 %v1199, 1.442695
          %v1201 = vpow.pop %v1200
          %v1202 = vmul.f32 %v1201, 5.7326083
          %v1203 = vadd.f32 %v1202, -1.5961449
          %v1204 = vmul.f32 %v1198, -2.237382
          %v1205 = vadd.f32 %v1203, %v1204
          %v1206 = vrsqrt.pop %v1169
          %v1207 = vmul.f32 %v1169, %v1206
          %vm1208 = vcmp.eq.f32.partialorder %v1169, inf
          %v1209 = vsel %vm1208, %v1169, %v1207
          %vm1210 = vcmp.eq.f32.partialorder %v1169, 0.0
          %v1211 = vand.u32 %v1169, 2147483648
          %v1212 = vsel %vm1210, %v1211, %v1209
          %v1213 = vmul.f32 %v1212, -2.5447896
          %v1214 = vmul.f32 %v1213, 1.442695
          %v1215 = vpow.pop %v1214
          %v1216 = vsub.f32 0.07848956, %v1215
          %v1217 = vmul.f32 %v1216, 0.6412372
          %v1218 = vadd.f32 %v1205, %v1217
          %v1219 = vstv %s1190
          %v1220 = vmul.f32 %v1219, %v1197
          %v1222 = vrot.slane %v1220, 1
          %v1224 = vsub.f32 %v1218, %v1222
          %s1225 = smul.f32 %s1190, %s392
          %v1226 = vstv %s1225
          %v1227 = vmul.f32 %v1226, %v1224
          %v1228 = vsub.f32 %v1169, %v1227
          %v1229 = vadd.f32 %v1228, %v1187
          %vm1230 = vcmp.gt.f32.partialorder %v1229, 1.0
          %v1231 = vsel %vm1230, 1.0, %v1229
          %vm1232 = vcmp.lt.f32.partialorder %v1231, 0.0
          %v1233 = vsel %vm1232, 1e-10, %v1231
          %v1234 = vsub.f32 %v1233, 1.0
          %v1235 = vmul.f32 %v1234, 0.6372646
          %v1236 = vmul.f32 %v1235, 1.442695
          %v1237 = vpow.pop %v1236
          %v1238 = vmul.f32 %v1237, 5.7326083
          %v1239 = vadd.f32 %v1238, -1.5961449
          %v1240 = vmul.f32 %v1234, -2.237382
          %v1241 = vadd.f32 %v1239, %v1240
          %v1242 = vrsqrt.pop %v1233
          %v1243 = vmul.f32 %v1233, %v1242
          %vm1244 = vcmp.eq.f32.partialorder %v1233, inf
          %v1245 = vsel %vm1244, %v1233, %v1243
          %vm1246 = vcmp.eq.f32.partialorder %v1233, 0.0
          %v1247 = vand.u32 %v1233, 2147483648
          %v1248 = vsel %vm1246, %v1247, %v1245
          %v1249 = vmul.f32 %v1248, -2.5447896
          %v1250 = vmul.f32 %v1249, 1.442695
          %v1251 = vpow.pop %v1250
          %v1252 = vsub.f32 0.07848956, %v1251
          %v1253 = vmul.f32 %v1252, 0.6412372
          %v1254 = vadd.f32 %v1241, %v1253
          %v1255 = vstv %s1191
          %v1256 = vmul.f32 %v1255, %v1197
          %v1258 = vrot.slane %v1256, 1
          %v1260 = vsub.f32 %v1254, %v1258
          %v1261 = vstv %s1192
          %v1262 = vsub.f32 %v1260, %v1261
          %v1263 = vmul.f32 %v1262, 100.0
          %v1264 = vmul.f32 %v1263, 0.5
          %v1265 = vmul.f32 %v1264, %v1263
          %v1266 = vsub.f32 3.6862316, %v1265
          %v1267 = vsel %vm536, %v1266, -inf
          %1268 = vmax.xlane.f32.xlu0 %v1267
          %v1269 = vpop.xlane.xlu0 %1268
          %v1270 = vsub.f32 %v1266, %v1269
          %v1271 = vmul.f32 %v1270, 1.442695
          %v1272 = vpow.pop %v1271
          %v1273 = vsel %vm536, %v1272, 0.0
          %1274 = vadd.xlane.f32.xlu0 %v1273
          %v1275 = vpop.xlane.xlu0 %1274
          %v1276 = vlog2.pop %v1275
          %v1277 = vmul.f32 %v1276, 0.6931472
          %v1278 = vadd.f32 %v1269, %v1277
          %v1279 = vsub.f32 %v1278, 4.8520303
          %p1280 = scmp.lt.s32.totalorder %s1182, 100
          %s1281 = scalar_select %p1280, 1, 0
          %v1282 = vstv %s1281
          %vm1283 = vcmp.eq.s32.totalorder %v1282, 1
          %v1284 = vsel %vm1283, %v1279, 0.0
          %v1285 = vadd.f32 %v555, %v1284
          %v1286 = vlaneseq
          %v1287 = vshrl.u32 %v1286, 7
          %v1288 = vsub.s32 0, %v1287
          %v1289 = vrot.slane %v1272, %v1288
          %v1290 = vsel %vm558, %v1289, 0.0
          %1291 = vmatprep.subr.mxu0 0.0
          %1292 = vmatpush1.xpose.msra.mxu0 0.0
          %1293 = vmatprep.subr.mxu0 0.0
          %1294 = vmatpush1.xpose.msra.mxu0 0.0
          %1295 = vmatprep.subr.mxu0 0.0
          %1296 = vmatpush1.xpose.msra.mxu0 0.0
          %1297 = vmatprep.subr.mxu0 0.0
          %1298 = vmatpush1.xpose.msra.mxu0 0.0
          %1299 = vmatprep.subr.mxu0 0.0
          %1300 = vmatpush1.xpose.msra.mxu0 0.0
          %1301 = vmatprep.subr.mxu0 0.0
          %1302 = vmatpush1.xpose.msra.mxu0 0.0
          %1303 = vmatprep.subr.mxu0 0.0
          %1304 = vmatpush1.xpose.msra.mxu0 0.0
          %1305 = vmatprep.subr.mxu0 0.0
          %1306 = vmatpush1.xpose.msra.mxu0 0.0
          %1307 = vmatprep.subr.mxu0 0.0
          %1308 = vmatpush1.xpose.msra.mxu0 0.0
          %1309 = vmatprep.subr.mxu0 0.0
          %1310 = vmatpush1.xpose.msra.mxu0 0.0
          %1311 = vmatprep.subr.mxu0 0.0
          %1312 = vmatpush1.xpose.msra.mxu0 0.0
          %1313 = vmatprep.subr.mxu0 0.0
          %1314 = vmatpush1.xpose.msra.mxu0 0.0
          %1315 = vmatprep.subr.mxu0 0.0
          %1316 = vmatpush1.xpose.msra.mxu0 0.0
          %1317 = vmatprep.subr.mxu0 0.0
          %1318 = vmatpush1.xpose.msra.mxu0 0.0
          %1319 = vmatprep.subr.mxu0 0.0
          %1320 = vmatpush1.xpose.msra.mxu0 0.0
          %1321 = vmatprep.subr.mxu0 0.0
          %1322 = vmatpush1.xpose.msra.mxu0 %v1290
          %1323 = vmatprep.subr.mxu0 0.0
          %1324 = vmatpush2.xpose.msra.mxu0 0.0
          %1325 = vmatprep.subr.mxu0 0.0
          %1326 = vmatpush2.xpose.msra.mxu0 0.0
          %1327 = vmatprep.subr.mxu0 0.0
          %1328 = vmatpush2.xpose.msra.mxu0 0.0
          %1329 = vmatprep.subr.mxu0 0.0
          %1330 = vmatpush2.xpose.msra.mxu0 0.0
          %1331 = vmatprep.subr.mxu0 0.0
          %1332 = vmatpush2.xpose.msra.mxu0 0.0
          %1333 = vmatprep.subr.mxu0 0.0
          %1334 = vmatpush2.xpose.msra.mxu0 0.0
          %1335 = vmatprep.subr.mxu0 0.0
          %1336 = vmatpush2.xpose.msra.mxu0 0.0
          %1337 = vmatprep.subr.mxu0 0.0
          %1338 = vmatpush2.xpose.msra.mxu0 0.0
          %1339 = vmatprep.subr.mxu0 0.0
          %1340 = vmatpush2.xpose.msra.mxu0 0.0
          %1341 = vmatprep.subr.mxu0 0.0
          %1342 = vmatpush2.xpose.msra.mxu0 0.0
          %1343 = vmatprep.subr.mxu0 0.0
          %1344 = vmatpush2.xpose.msra.mxu0 0.0
          %1345 = vmatprep.subr.mxu0 0.0
          %1346 = vmatpush2.xpose.msra.mxu0 0.0
          %1347 = vmatprep.subr.mxu0 0.0
          %1348 = vmatpush2.xpose.msra.mxu0 0.0
          %1349 = vmatprep.subr.mxu0 0.0
          %1350 = vmatpush2.xpose.msra.mxu0 0.0
          %1351 = vmatprep.subr.mxu0 0.0
          %1352 = vmatpush2.xpose.msra.mxu0 0.0
          %1353 = vmatprep.subr.mxu0 0.0
          %1354 = vmatpush2.xpose.msra.mxu0 0.0
          %1355 = vmatprep.mubr.f32.mxu0 0.0
          %1356 = vmatmul.mubr.f32.gmra.mxu0 %v564
          %v1357 = vpop.f32.mrf.mxu0
          %v1358 = vadd.f32 0.0, %v1357
          %v1359 = vpop.f32.mrf.mxu0
          %1360 = vmatprep.mubr.f32.mxu0 0.0
          %1361 = vmatmul.mubr.f32.gmra.mxu0 %v565
          %v1362 = vpop.f32.mrf.mxu0
          %v1363 = vadd.f32 0.0, %v1362
          %v1364 = vpop.f32.mrf.mxu0
          %1365 = vmatprep.mubr.f32.mxu0 0.0
          %1366 = vmatmul.mubr.f32.gmra.mxu0 %v566
          %v1367 = vpop.f32.mrf.mxu0
          %v1368 = vadd.f32 0.0, %v1367
          %v1369 = vpop.f32.mrf.mxu0
          %1370 = vmatprep.mubr.f32.mxu0 0.0
          %1371 = vmatmul.mubr.f32.gmra.mxu0 %v567
          %v1372 = vpop.f32.mrf.mxu0
          %v1373 = vadd.f32 0.0, %v1372
          %v1374 = vpop.f32.mrf.mxu0
          %1375 = vmatprep.mubr.f32.mxu0 0.0
          %1376 = vmatmul.mubr.f32.gmra.mxu0 %v568
          %v1377 = vpop.f32.mrf.mxu0
          %v1378 = vadd.f32 0.0, %v1377
          %v1379 = vpop.f32.mrf.mxu0
          %1380 = vmatprep.mubr.f32.mxu0 0.0
          %1381 = vmatmul.mubr.f32.gmra.mxu0 %v569
          %v1382 = vpop.f32.mrf.mxu0
          %v1383 = vadd.f32 0.0, %v1382
          %v1384 = vpop.f32.mrf.mxu0
          %1385 = vmatprep.mubr.f32.mxu0 0.0
          %1386 = vmatmul.mubr.f32.gmra.mxu0 %v570
          %v1387 = vpop.f32.mrf.mxu0
          %v1388 = vadd.f32 0.0, %v1387
          %v1389 = vpop.f32.mrf.mxu0
          %1390 = vmatprep.mubr.f32.mxu0 0.0
          %1391 = vmatmul.mubr.f32.gmra.mxu0 %v571
          %v1392 = vpop.f32.mrf.mxu0
          %v1393 = vadd.f32 0.0, %v1392
          %v1394 = vpop.f32.mrf.mxu0
          %1395 = vmatprep.mubr.f32.mxu0 0.0
          %1396 = vmatmul.mubr.f32.gmra.mxu0 %v572
          %v1397 = vpop.f32.mrf.mxu0
          %v1398 = vadd.f32 0.0, %v1397
          %v1399 = vpop.f32.mrf.mxu0
          %1400 = vmatprep.mubr.f32.mxu0 0.0
          %1401 = vmatmul.mubr.f32.gmra.mxu0 %v573
          %v1402 = vpop.f32.mrf.mxu0
          %v1403 = vadd.f32 0.0, %v1402
          %v1404 = vpop.f32.mrf.mxu0
          %1405 = vmatprep.mubr.f32.mxu0 0.0
          %1406 = vmatmul.mubr.f32.gmra.mxu0 %v574
          %v1407 = vpop.f32.mrf.mxu0
          %v1408 = vadd.f32 0.0, %v1407
          %v1409 = vpop.f32.mrf.mxu0
          %1410 = vmatprep.mubr.f32.mxu0 0.0
          %1411 = vmatmul.mubr.f32.gmra.mxu0 %v575
          %v1412 = vpop.f32.mrf.mxu0
          %v1413 = vadd.f32 0.0, %v1412
          %v1414 = vpop.f32.mrf.mxu0
          %1415 = vmatprep.mubr.f32.mxu0 0.0
          %1416 = vmatmul.mubr.f32.gmra.mxu0 %v576
          %v1417 = vpop.f32.mrf.mxu0
          %v1418 = vadd.f32 0.0, %v1417
          %v1419 = vpop.f32.mrf.mxu0
          %1420 = vmatprep.mubr.f32.mxu0 0.0
          %1421 = vmatmul.mubr.f32.gmra.mxu0 %v577
          %v1422 = vpop.f32.mrf.mxu0
          %v1423 = vadd.f32 0.0, %v1422
          %v1424 = vpop.f32.mrf.mxu0
          %1425 = vmatprep.mubr.f32.mxu0 0.0
          %1426 = vmatmul.mubr.f32.gmra.mxu0 %v578
          %v1427 = vpop.f32.mrf.mxu0
          %v1428 = vadd.f32 0.0, %v1427
          %v1429 = vpop.f32.mrf.mxu0
          %1430 = vmatprep.mubr.f32.mxu0 0.0
          %1431 = vmatmul.mubr.f32.gmra.mxu0 %v579
          %v1432 = vpop.f32.mrf.mxu0
          %v1433 = vadd.f32 0.0, %v1432
          %v1434 = vpop.f32.mrf.mxu0
          %1435 = vmatprep.mubr.f32.mxu0 0.0
          %1436 = vmatmul.mubr.f32.gmra.mxu0 %v580
          %v1437 = vpop.f32.mrf.mxu0
          %v1438 = vadd.f32 0.0, %v1437
          %v1439 = vpop.f32.mrf.mxu0
          %1440 = vmatprep.mubr.f32.mxu0 0.0
          %1441 = vmatmul.mubr.f32.gmra.mxu0 %v581
          %v1442 = vpop.f32.mrf.mxu0
          %v1443 = vadd.f32 0.0, %v1442
          %v1444 = vpop.f32.mrf.mxu0
          %1445 = vmatprep.mubr.f32.mxu0 0.0
          %1446 = vmatmul.mubr.f32.gmra.mxu0 %v582
          %v1447 = vpop.f32.mrf.mxu0
          %v1448 = vadd.f32 0.0, %v1447
          %v1449 = vpop.f32.mrf.mxu0
          %1450 = vmatprep.mubr.f32.mxu0 0.0
          %1451 = vmatmul.mubr.f32.gmra.mxu0 %v583
          %v1452 = vpop.f32.mrf.mxu0
          %v1453 = vadd.f32 0.0, %v1452
          %v1454 = vpop.f32.mrf.mxu0
          %1455 = vmatprep.mubr.f32.mxu0 0.0
          %1456 = vmatmul.mubr.f32.gmra.mxu0 %v584
          %v1457 = vpop.f32.mrf.mxu0
          %v1458 = vadd.f32 0.0, %v1457
          %v1459 = vpop.f32.mrf.mxu0
          %1460 = vmatprep.mubr.f32.mxu0 0.0
          %1461 = vmatmul.mubr.f32.gmra.mxu0 %v585
          %v1462 = vpop.f32.mrf.mxu0
          %v1463 = vadd.f32 0.0, %v1462
          %v1464 = vpop.f32.mrf.mxu0
          %1465 = vmatprep.mubr.f32.mxu0 0.0
          %1466 = vmatmul.mubr.f32.gmra.mxu0 %v586
          %v1467 = vpop.f32.mrf.mxu0
          %v1468 = vadd.f32 0.0, %v1467
          %v1469 = vpop.f32.mrf.mxu0
          %1470 = vmatprep.mubr.f32.mxu0 0.0
          %1471 = vmatmul.mubr.f32.gmra.mxu0 %v587
          %v1472 = vpop.f32.mrf.mxu0
          %v1473 = vadd.f32 0.0, %v1472
          %v1474 = vpop.f32.mrf.mxu0
          %1475 = vmatprep.mubr.f32.mxu0 0.0
          %1476 = vmatmul.mubr.f32.gmra.mxu0 %v588
          %v1477 = vpop.f32.mrf.mxu0
          %v1478 = vadd.f32 0.0, %v1477
          %v1479 = vpop.f32.mrf.mxu0
          %1480 = vmatprep.mubr.f32.mxu0 0.0
          %1481 = vmatmul.mubr.f32.gmra.mxu0 %v589
          %v1482 = vpop.f32.mrf.mxu0
          %v1483 = vadd.f32 0.0, %v1482
          %v1484 = vpop.f32.mrf.mxu0
          %1485 = vmatprep.mubr.f32.mxu0 0.0
          %1486 = vmatmul.mubr.f32.gmra.mxu0 %v590
          %v1487 = vpop.f32.mrf.mxu0
          %v1488 = vadd.f32 0.0, %v1487
          %v1489 = vpop.f32.mrf.mxu0
          %1490 = vmatprep.mubr.f32.mxu0 0.0
          %1491 = vmatmul.mubr.f32.gmra.mxu0 %v591
          %v1492 = vpop.f32.mrf.mxu0
          %v1493 = vadd.f32 0.0, %v1492
          %v1494 = vpop.f32.mrf.mxu0
          %1495 = vmatprep.mubr.f32.mxu0 0.0
          %1496 = vmatmul.mubr.f32.gmra.mxu0 %v592
          %v1497 = vpop.f32.mrf.mxu0
          %v1498 = vadd.f32 0.0, %v1497
          %v1499 = vpop.f32.mrf.mxu0
          %1500 = vmatprep.mubr.f32.mxu0 0.0
          %1501 = vmatmul.mubr.f32.gmra.mxu0 %v593
          %v1502 = vpop.f32.mrf.mxu0
          %v1503 = vadd.f32 0.0, %v1502
          %v1504 = vpop.f32.mrf.mxu0
          %1505 = vmatprep.mubr.f32.mxu0 0.0
          %1506 = vmatmul.mubr.f32.gmra.mxu0 %v594
          %v1507 = vpop.f32.mrf.mxu0
          %v1508 = vadd.f32 0.0, %v1507
          %v1509 = vpop.f32.mrf.mxu0
          %1510 = vmatprep.mubr.f32.mxu0 0.0
          %1511 = vmatmul.mubr.f32.gmra.mxu0 %v595
          %v1512 = vpop.f32.mrf.mxu0
          %v1513 = vadd.f32 0.0, %v1512
          %v1514 = vpop.f32.mrf.mxu0
          %1515 = vdwg.mxu0
          %v1516 = vadd.f32 %v1358, %v430
          %v1517 = vadd.f32 %v1363, %v431
          %v1518 = vadd.f32 %v1368, %v432
          %v1519 = vadd.f32 %v1373, %v433
          %v1520 = vadd.f32 %v1378, %v434
          %v1521 = vadd.f32 %v1383, %v435
          %v1522 = vadd.f32 %v1388, %v436
          %v1523 = vadd.f32 %v1393, %v437
          %v1524 = vadd.f32 %v1398, %v438
          %v1525 = vadd.f32 %v1403, %v439
          %v1526 = vadd.f32 %v1408, %v440
          %v1527 = vadd.f32 %v1413, %v441
          %v1528 = vadd.f32 %v1418, %v442
          %v1529 = vadd.f32 %v1423, %v443
          %v1530 = vadd.f32 %v1428, %v444
          %v1531 = vadd.f32 %v1433, %v445
          %s1532 = smul.f32 %s1193, 0.0078125
          %v1533 = vstv %s1532
          %v1534 = vadd.f32 %v396, %v1533
          %v1535 = vmul.f32 %v1534, %v1275
          %v1536 = vlaneseq
          %v1537 = vshrl.u32 %v1536, 7
          %v1538 = vsub.s32 0, %v1537
          %v1539 = vrot.slane %v1535, %v1538
          %1541 = vset.pattern.permute.xlu0 0
          %1542 = vperm.xlu0 %1541, %v1438
          %v1543 = vpop.permute.xlu0 %1542
          %1546 = vset.pattern.permute.xlu0 0
          %1547 = vperm.xlu0 %1546, %v1443
          %v1548 = vpop.permute.xlu0 %1547
          %1551 = vset.pattern.permute.xlu0 0
          %1552 = vperm.xlu0 %1551, %v1448
          %v1553 = vpop.permute.xlu0 %1552
          %1556 = vset.pattern.permute.xlu0 0
          %1557 = vperm.xlu0 %1556, %v1453
          %v1558 = vpop.permute.xlu0 %1557
          %1561 = vset.pattern.permute.xlu0 0
          %1562 = vperm.xlu0 %1561, %v1458
          %v1563 = vpop.permute.xlu0 %1562
          %1566 = vset.pattern.permute.xlu0 0
          %1567 = vperm.xlu0 %1566, %v1463
          %v1568 = vpop.permute.xlu0 %1567
          %1571 = vset.pattern.permute.xlu0 0
          %1572 = vperm.xlu0 %1571, %v1468
          %v1573 = vpop.permute.xlu0 %1572
          %1576 = vset.pattern.permute.xlu0 0
          %1577 = vperm.xlu0 %1576, %v1473
          %v1578 = vpop.permute.xlu0 %1577
          %1581 = vset.pattern.permute.xlu0 0
          %1582 = vperm.xlu0 %1581, %v1478
          %v1583 = vpop.permute.xlu0 %1582
          %1586 = vset.pattern.permute.xlu0 0
          %1587 = vperm.xlu0 %1586, %v1483
          %v1588 = vpop.permute.xlu0 %1587
          %1591 = vset.pattern.permute.xlu0 0
          %1592 = vperm.xlu0 %1591, %v1488
          %v1593 = vpop.permute.xlu0 %1592
          %1596 = vset.pattern.permute.xlu0 0
          %1597 = vperm.xlu0 %1596, %v1493
          %v1598 = vpop.permute.xlu0 %1597
          %1601 = vset.pattern.permute.xlu0 0
          %1602 = vperm.xlu0 %1601, %v1498
          %v1603 = vpop.permute.xlu0 %1602
          %1606 = vset.pattern.permute.xlu0 0
          %1607 = vperm.xlu0 %1606, %v1503
          %v1608 = vpop.permute.xlu0 %1607
          %1611 = vset.pattern.permute.xlu0 0
          %1612 = vperm.xlu0 %1611, %v1508
          %v1613 = vpop.permute.xlu0 %1612
          %1616 = vset.pattern.permute.xlu0 0
          %1617 = vperm.xlu0 %1616, %v1513
          %v1618 = vpop.permute.xlu0 %1617
          %vm1620 = vcmp.ge.f32.partialorder %v1539, %v1543
          %vm1621 = vcmp.ge.f32.partialorder %v1539, %v1548
          %vm1622 = vcmp.ge.f32.partialorder %v1539, %v1553
          %vm1623 = vcmp.ge.f32.partialorder %v1539, %v1558
          %vm1624 = vcmp.ge.f32.partialorder %v1539, %v1563
          %vm1625 = vcmp.ge.f32.partialorder %v1539, %v1568
          %vm1626 = vcmp.ge.f32.partialorder %v1539, %v1573
          %vm1627 = vcmp.ge.f32.partialorder %v1539, %v1578
          %vm1628 = vcmp.ge.f32.partialorder %v1539, %v1583
          %vm1629 = vcmp.ge.f32.partialorder %v1539, %v1588
          %vm1630 = vcmp.ge.f32.partialorder %v1539, %v1593
          %vm1631 = vcmp.ge.f32.partialorder %v1539, %v1598
          %vm1632 = vcmp.ge.f32.partialorder %v1539, %v1603
          %vm1633 = vcmp.ge.f32.partialorder %v1539, %v1608
          %vm1634 = vcmp.ge.f32.partialorder %v1539, %v1613
          %vm1635 = vcmp.ge.f32.partialorder %v1539, %v1618
          %1637 = vset.pattern.permute.xlu0 0
          %1638 = vperm.xlu0 %1637, %v1516
          %v1639 = vpop.permute.xlu0 %1638
          %1642 = vset.pattern.permute.xlu0 0
          %1643 = vperm.xlu0 %1642, %v1517
          %v1644 = vpop.permute.xlu0 %1643
          %1647 = vset.pattern.permute.xlu0 0
          %1648 = vperm.xlu0 %1647, %v1518
          %v1649 = vpop.permute.xlu0 %1648
          %1652 = vset.pattern.permute.xlu0 0
          %1653 = vperm.xlu0 %1652, %v1519
          %v1654 = vpop.permute.xlu0 %1653
          %1657 = vset.pattern.permute.xlu0 0
          %1658 = vperm.xlu0 %1657, %v1520
          %v1659 = vpop.permute.xlu0 %1658
          %1662 = vset.pattern.permute.xlu0 0
          %1663 = vperm.xlu0 %1662, %v1521
          %v1664 = vpop.permute.xlu0 %1663
          %1667 = vset.pattern.permute.xlu0 0
          %1668 = vperm.xlu0 %1667, %v1522
          %v1669 = vpop.permute.xlu0 %1668
          %1672 = vset.pattern.permute.xlu0 0
          %1673 = vperm.xlu0 %1672, %v1523
          %v1674 = vpop.permute.xlu0 %1673
          %1677 = vset.pattern.permute.xlu0 0
          %1678 = vperm.xlu0 %1677, %v1524
          %v1679 = vpop.permute.xlu0 %1678
          %1682 = vset.pattern.permute.xlu0 0
          %1683 = vperm.xlu0 %1682, %v1525
          %v1684 = vpop.permute.xlu0 %1683
          %1687 = vset.pattern.permute.xlu0 0
          %1688 = vperm.xlu0 %1687, %v1526
          %v1689 = vpop.permute.xlu0 %1688
          %1692 = vset.pattern.permute.xlu0 0
          %1693 = vperm.xlu0 %1692, %v1527
          %v1694 = vpop.permute.xlu0 %1693
          %1697 = vset.pattern.permute.xlu0 0
          %1698 = vperm.xlu0 %1697, %v1528
          %v1699 = vpop.permute.xlu0 %1698
          %1702 = vset.pattern.permute.xlu0 0
          %1703 = vperm.xlu0 %1702, %v1529
          %v1704 = vpop.permute.xlu0 %1703
          %1707 = vset.pattern.permute.xlu0 0
          %1708 = vperm.xlu0 %1707, %v1530
          %v1709 = vpop.permute.xlu0 %1708
          %1712 = vset.pattern.permute.xlu0 0
          %1713 = vperm.xlu0 %1712, %v1531
          %v1714 = vpop.permute.xlu0 %1713
          %vm1716 = vcmp.lt.f32.partialorder %v1539, %v1639
          %vm1717 = vcmp.lt.f32.partialorder %v1539, %v1644
          %vm1718 = vcmp.lt.f32.partialorder %v1539, %v1649
          %vm1719 = vcmp.lt.f32.partialorder %v1539, %v1654
          %vm1720 = vcmp.lt.f32.partialorder %v1539, %v1659
          %vm1721 = vcmp.lt.f32.partialorder %v1539, %v1664
          %vm1722 = vcmp.lt.f32.partialorder %v1539, %v1669
          %vm1723 = vcmp.lt.f32.partialorder %v1539, %v1674
          %vm1724 = vcmp.lt.f32.partialorder %v1539, %v1679
          %vm1725 = vcmp.lt.f32.partialorder %v1539, %v1684
          %vm1726 = vcmp.lt.f32.partialorder %v1539, %v1689
          %vm1727 = vcmp.lt.f32.partialorder %v1539, %v1694
          %vm1728 = vcmp.lt.f32.partialorder %v1539, %v1699
          %vm1729 = vcmp.lt.f32.partialorder %v1539, %v1704
          %vm1730 = vcmp.lt.f32.partialorder %v1539, %v1709
          %vm1731 = vcmp.lt.f32.partialorder %v1539, %v1714
          %vm1732 = vmand %vm1620, %vm1716
          %vm1733 = vmand %vm1621, %vm1717
          %vm1734 = vmand %vm1622, %vm1718
          %vm1735 = vmand %vm1623, %vm1719
          %vm1736 = vmand %vm1624, %vm1720
          %vm1737 = vmand %vm1625, %vm1721
          %vm1738 = vmand %vm1626, %vm1722
          %vm1739 = vmand %vm1627, %vm1723
          %vm1740 = vmand %vm1628, %vm1724
          %vm1741 = vmand %vm1629, %vm1725
          %vm1742 = vmand %vm1630, %vm1726
          %vm1743 = vmand %vm1631, %vm1727
          %vm1744 = vmand %vm1632, %vm1728
          %vm1745 = vmand %vm1633, %vm1729
          %vm1746 = vmand %vm1634, %vm1730
          %vm1747 = vmand %vm1635, %vm1731
          %v1748 = vsel %vm1732, 1, 0
          %v1749 = vsel %vm1733, 1, 0
          %v1750 = vsel %vm1734, 1, 0
          %v1751 = vsel %vm1735, 1, 0
          %v1752 = vsel %vm1736, 1, 0
          %v1753 = vsel %vm1737, 1, 0
          %v1754 = vsel %vm1738, 1, 0
          %v1755 = vsel %vm1739, 1, 0
          %v1756 = vsel %vm1740, 1, 0
          %v1757 = vsel %vm1741, 1, 0
          %v1758 = vsel %vm1742, 1, 0
          %v1759 = vsel %vm1743, 1, 0
          %v1760 = vsel %vm1744, 1, 0
          %v1761 = vsel %vm1745, 1, 0
          %v1762 = vsel %vm1746, 1, 0
          %v1763 = vsel %vm1747, 1, 0
          %v1764 = vcvt.s32.f32 %v1748
          %v1765 = vcvt.s32.f32 %v1749
          %v1766 = vcvt.s32.f32 %v1750
          %v1767 = vcvt.s32.f32 %v1751
          %v1768 = vcvt.s32.f32 %v1752
          %v1769 = vcvt.s32.f32 %v1753
          %v1770 = vcvt.s32.f32 %v1754
          %v1771 = vcvt.s32.f32 %v1755
          %v1772 = vcvt.s32.f32 %v1756
          %v1773 = vcvt.s32.f32 %v1757
          %v1774 = vcvt.s32.f32 %v1758
          %v1775 = vcvt.s32.f32 %v1759
          %v1776 = vcvt.s32.f32 %v1760
          %v1777 = vcvt.s32.f32 %v1761
          %v1778 = vcvt.s32.f32 %v1762
          %v1779 = vcvt.s32.f32 %v1763
          %v1780 = vlaneseq
          %v1781 = vshrl.u32 %v1780, 7
          %v1782 = vsub.s32 1, %v1781
          %v1783 = vrot.slane %v1197, %v1782
          %v1784 = vlaneseq
          %v1785 = vshrl.u32 %v1784, 7
          %v1786 = vsub.s32 0, %v1785
          %v1787 = vrot.slane %v1260, %v1786
          %v1788 = vsel %vm1087, %v1783, %v1787
          %v1789 = vlaneseq
          %v1790 = vshrl.u32 %v1789, 7
          %v1791 = vsub.s32 0, %v1790
          %v1792 = vrot.slane %v1233, %v1791
          %v1793 = vsel %vm558, %v1792, %v1788
          %1794 = vmatprep.subr.mxu0 0.0
          %1795 = vmatpush1.msra.mxu0 %v1779
          %1796 = vmatprep.subr.mxu0 0.0
          %1797 = vmatpush1.msra.mxu0 %v1778
          %1798 = vmatprep.subr.mxu0 0.0
          %1799 = vmatpush1.msra.mxu0 %v1777
          %1800 = vmatprep.subr.mxu0 0.0
          %1801 = vmatpush1.msra.mxu0 %v1776
          %1802 = vmatprep.subr.mxu0 0.0
          %1803 = vmatpush1.msra.mxu0 %v1775
          %1804 = vmatprep.subr.mxu0 0.0
          %1805 = vmatpush1.msra.mxu0 %v1774
          %1806 = vmatprep.subr.mxu0 0.0
          %1807 = vmatpush1.msra.mxu0 %v1773
          %1808 = vmatprep.subr.mxu0 0.0
          %1809 = vmatpush1.msra.mxu0 %v1772
          %1810 = vmatprep.subr.mxu0 0.0
          %1811 = vmatpush1.msra.mxu0 %v1771
          %1812 = vmatprep.subr.mxu0 0.0
          %1813 = vmatpush1.msra.mxu0 %v1770
          %1814 = vmatprep.subr.mxu0 0.0
          %1815 = vmatpush1.msra.mxu0 %v1769
          %1816 = vmatprep.subr.mxu0 0.0
          %1817 = vmatpush1.msra.mxu0 %v1768
          %1818 = vmatprep.subr.mxu0 0.0
          %1819 = vmatpush1.msra.mxu0 %v1767
          %1820 = vmatprep.subr.mxu0 0.0
          %1821 = vmatpush1.msra.mxu0 %v1766
          %1822 = vmatprep.subr.mxu0 0.0
          %1823 = vmatpush1.msra.mxu0 %v1765
          %1824 = vmatprep.subr.mxu0 0.0
          %1825 = vmatpush1.msra.mxu0 %v1764
          %1826 = vmatprep.subr.mxu0 0.0
          %1827 = vmatpush2.msra.mxu0 0.0
          %1828 = vmatprep.subr.mxu0 0.0
          %1829 = vmatpush2.msra.mxu0 0.0
          %1830 = vmatprep.subr.mxu0 0.0
          %1831 = vmatpush2.msra.mxu0 0.0
          %1832 = vmatprep.subr.mxu0 0.0
          %1833 = vmatpush2.msra.mxu0 0.0
          %1834 = vmatprep.subr.mxu0 0.0
          %1835 = vmatpush2.msra.mxu0 0.0
          %1836 = vmatprep.subr.mxu0 0.0
          %1837 = vmatpush2.msra.mxu0 0.0
          %1838 = vmatprep.subr.mxu0 0.0
          %1839 = vmatpush2.msra.mxu0 0.0
          %1840 = vmatprep.subr.mxu0 0.0
          %1841 = vmatpush2.msra.mxu0 0.0
          %1842 = vmatprep.subr.mxu0 0.0
          %1843 = vmatpush2.msra.mxu0 0.0
          %1844 = vmatprep.subr.mxu0 0.0
          %1845 = vmatpush2.msra.mxu0 0.0
          %1846 = vmatprep.subr.mxu0 0.0
          %1847 = vmatpush2.msra.mxu0 0.0
          %1848 = vmatprep.subr.mxu0 0.0
          %1849 = vmatpush2.msra.mxu0 0.0
          %1850 = vmatprep.subr.mxu0 0.0
          %1851 = vmatpush2.msra.mxu0 0.0
          %1852 = vmatprep.subr.mxu0 0.0
          %1853 = vmatpush2.msra.mxu0 0.0
          %1854 = vmatprep.subr.mxu0 0.0
          %1855 = vmatpush2.msra.mxu0 0.0
          %1856 = vmatprep.subr.mxu0 0.0
          %1857 = vmatpush2.msra.mxu0 0.0
          %1858 = vmatprep.mubr.f32.mxu0 0.0
          %1859 = vmatmul.mubr.f32.gmra.mxu0 %v1793
          %v1860 = vpop.f32.mrf.mxu0
          %v1861 = vadd.f32 0.0, %v1860
          %v1862 = vpop.f32.mrf.mxu0
          %1863 = vdwg.mxu0
          %v1864 = vlaneseq
          %v1865 = vshrl.u32 %v1864, 7
          %v1866 = vsub.s32 2, %v1865
          %v1867 = vrot.slane %v1861, %v1866
          %v1868 = vsel %vm1087, %v1867, %v1176
          %v1869 = vlaneseq
          %v1870 = vshrl.u32 %v1869, 7
          %v1871 = vsub.s32 0, %v1870
          %v1872 = vrot.slane %v1861, %v1871
          %v1873 = vsel %vm1087, %v1872, %v1181
          %s1874 = sadd.s32 %s460, 2
          %s1875 = sadd.s32 %s458, 2
          %s1876 = scalar_lea.vmem %s326, %s1875 [#allocation12]
          %v1877 = vld [vmem:[%s1876] sm:$0x1]
          %s1878 = scalar_lea.vmem %s335, %s1875 [#allocation14]
          %v1879 = vld [vmem:[%s1878] sm:$0x1]
          %p1880 = scmp.gt.s32.totalorder %s1182, 0
          %s1881 = scalar_select %p1880, %s1182, 0
          %s1882 = sld [smem:[#allocation5 + %s1881]]
          %s1883 = sld [smem:[#allocation5 + %s1874]]
          %s1884 = sld [smem:[#allocation6 + %s1874]]
          %s1885 = sld [smem:[#allocation7 + %s1874]]
          %v1887 = vrot.slane %v1877, 7
          %v1889 = vadd.f32 %v1861, %v1887
          %v1890 = vsub.f32 %v1861, 1.0
          %v1891 = vmul.f32 %v1890, 0.6372646
          %v1892 = vmul.f32 %v1891, 1.442695
          %v1893 = vpow.pop %v1892
          %v1894 = vmul.f32 %v1893, 5.7326083
          %v1895 = vadd.f32 %v1894, -1.5961449
          %v1896 = vmul.f32 %v1890, -2.237382
          %v1897 = vadd.f32 %v1895, %v1896
          %v1898 = vrsqrt.pop %v1861
          %v1899 = vmul.f32 %v1861, %v1898
          %vm1900 = vcmp.eq.f32.partialorder %v1861, inf
          %v1901 = vsel %vm1900, %v1861, %v1899
          %vm1902 = vcmp.eq.f32.partialorder %v1861, 0.0
          %v1903 = vand.u32 %v1861, 2147483648
          %v1904 = vsel %vm1902, %v1903, %v1901
          %v1905 = vmul.f32 %v1904, -2.5447896
          %v1906 = vmul.f32 %v1905, 1.442695
          %v1907 = vpow.pop %v1906
          %v1908 = vsub.f32 0.07848956, %v1907
          %v1909 = vmul.f32 %v1908, 0.6412372
          %v1910 = vadd.f32 %v1897, %v1909
          %v1911 = vstv %s1882
          %v1912 = vmul.f32 %v1911, %v1889
          %v1914 = vrot.slane %v1912, 1
          %v1916 = vsub.f32 %v1910, %v1914
          %s1917 = smul.f32 %s1882, %s392
          %v1918 = vstv %s1917
          %v1919 = vmul.f32 %v1918, %v1916
          %v1920 = vsub.f32 %v1861, %v1919
          %v1921 = vadd.f32 %v1920, %v1879
          %vm1922 = vcmp.gt.f32.partialorder %v1921, 1.0
          %v1923 = vsel %vm1922, 1.0, %v1921
          %vm1924 = vcmp.lt.f32.partialorder %v1923, 0.0
          %v1925 = vsel %vm1924, 1e-10, %v1923
          %v1926 = vsub.f32 %v1925, 1.0
          %v1927 = vmul.f32 %v1926, 0.6372646
          %v1928 = vmul.f32 %v1927, 1.442695
          %v1929 = vpow.pop %v1928
          %v1930 = vmul.f32 %v1929, 5.7326083
          %v1931 = vadd.f32 %v1930, -1.5961449
          %v1932 = vmul.f32 %v1926, -2.237382
          %v1933 = vadd.f32 %v1931, %v1932
          %v1934 = vrsqrt.pop %v1925
          %v1935 = vmul.f32 %v1925, %v1934
          %vm1936 = vcmp.eq.f32.partialorder %v1925, inf
          %v1937 = vsel %vm1936, %v1925, %v1935
          %vm1938 = vcmp.eq.f32.partialorder %v1925, 0.0
          %v1939 = vand.u32 %v1925, 2147483648
          %v1940 = vsel %vm1938, %v1939, %v1937
          %v1941 = vmul.f32 %v1940, -2.5447896
          %v1942 = vmul.f32 %v1941, 1.442695
          %v1943 = vpow.pop %v1942
          %v1944 = vsub.f32 0.07848956, %v1943
          %v1945 = vmul.f32 %v1944, 0.6412372
          %v1946 = vadd.f32 %v1933, %v1945
          %v1947 = vstv %s1883
          %v1948 = vmul.f32 %v1947, %v1889
          %v1950 = vrot.slane %v1948, 1
          %v1952 = vsub.f32 %v1946, %v1950
          %v1953 = vstv %s1884
          %v1954 = vsub.f32 %v1952, %v1953
          %v1955 = vmul.f32 %v1954, 100.0
          %v1956 = vmul.f32 %v1955, 0.5
          %v1957 = vmul.f32 %v1956, %v1955
          %v1958 = vsub.f32 3.6862316, %v1957
          %v1959 = vsel %vm536, %v1958, -inf
          %1960 = vmax.xlane.f32.xlu0 %v1959
          %v1961 = vpop.xlane.xlu0 %1960
          %v1962 = vsub.f32 %v1958, %v1961
          %v1963 = vmul.f32 %v1962, 1.442695
          %v1964 = vpow.pop %v1963
          %v1965 = vsel %vm536, %v1964, 0.0
          %1966 = vadd.xlane.f32.xlu0 %v1965
          %v1967 = vpop.xlane.xlu0 %1966
          %v1968 = vlog2.pop %v1967
          %v1969 = vmul.f32 %v1968, 0.6931472
          %v1970 = vadd.f32 %v1961, %v1969
          %v1971 = vsub.f32 %v1970, 4.8520303
          %p1972 = scmp.lt.s32.totalorder %s1874, 100
          %s1973 = scalar_select %p1972, 1, 0
          %v1974 = vstv %s1973
          %vm1975 = vcmp.eq.s32.totalorder %v1974, 1
          %v1976 = vsel %vm1975, %v1971, 0.0
          %v1977 = vadd.f32 %v1285, %v1976
          %v1978 = vlaneseq
          %v1979 = vshrl.u32 %v1978, 7
          %v1980 = vsub.s32 0, %v1979
          %v1981 = vrot.slane %v1964, %v1980
          %v1982 = vsel %vm558, %v1981, 0.0
          %1983 = vmatprep.subr.mxu0 0.0
          %1984 = vmatpush1.xpose.msra.mxu0 0.0
          %1985 = vmatprep.subr.mxu0 0.0
          %1986 = vmatpush1.xpose.msra.mxu0 0.0
          %1987 = vmatprep.subr.mxu0 0.0
          %1988 = vmatpush1.xpose.msra.mxu0 0.0
          %1989 = vmatprep.subr.mxu0 0.0
          %1990 = vmatpush1.xpose.msra.mxu0 0.0
          %1991 = vmatprep.subr.mxu0 0.0
          %1992 = vmatpush1.xpose.msra.mxu0 0.0
          %1993 = vmatprep.subr.mxu0 0.0
          %1994 = vmatpush1.xpose.msra.mxu0 0.0
          %1995 = vmatprep.subr.mxu0 0.0
          %1996 = vmatpush1.xpose.msra.mxu0 0.0
          %1997 = vmatprep.subr.mxu0 0.0
          %1998 = vmatpush1.xpose.msra.mxu0 0.0
          %1999 = vmatprep.subr.mxu0 0.0
          %2000 = vmatpush1.xpose.msra.mxu0 0.0
          %2001 = vmatprep.subr.mxu0 0.0
          %2002 = vmatpush1.xpose.msra.mxu0 0.0
          %2003 = vmatprep.subr.mxu0 0.0
          %2004 = vmatpush1.xpose.msra.mxu0 0.0
          %2005 = vmatprep.subr.mxu0 0.0
          %2006 = vmatpush1.xpose.msra.mxu0 0.0
          %2007 = vmatprep.subr.mxu0 0.0
          %2008 = vmatpush1.xpose.msra.mxu0 0.0
          %2009 = vmatprep.subr.mxu0 0.0
          %2010 = vmatpush1.xpose.msra.mxu0 0.0
          %2011 = vmatprep.subr.mxu0 0.0
          %2012 = vmatpush1.xpose.msra.mxu0 0.0
          %2013 = vmatprep.subr.mxu0 0.0
          %2014 = vmatpush1.xpose.msra.mxu0 %v1982
          %2015 = vmatprep.subr.mxu0 0.0
          %2016 = vmatpush2.xpose.msra.mxu0 0.0
          %2017 = vmatprep.subr.mxu0 0.0
          %2018 = vmatpush2.xpose.msra.mxu0 0.0
          %2019 = vmatprep.subr.mxu0 0.0
          %2020 = vmatpush2.xpose.msra.mxu0 0.0
          %2021 = vmatprep.subr.mxu0 0.0
          %2022 = vmatpush2.xpose.msra.mxu0 0.0
          %2023 = vmatprep.subr.mxu0 0.0
          %2024 = vmatpush2.xpose.msra.mxu0 0.0
          %2025 = vmatprep.subr.mxu0 0.0
          %2026 = vmatpush2.xpose.msra.mxu0 0.0
          %2027 = vmatprep.subr.mxu0 0.0
          %2028 = vmatpush2.xpose.msra.mxu0 0.0
          %2029 = vmatprep.subr.mxu0 0.0
          %2030 = vmatpush2.xpose.msra.mxu0 0.0
          %2031 = vmatprep.subr.mxu0 0.0
          %2032 = vmatpush2.xpose.msra.mxu0 0.0
          %2033 = vmatprep.subr.mxu0 0.0
          %2034 = vmatpush2.xpose.msra.mxu0 0.0
          %2035 = vmatprep.subr.mxu0 0.0
          %2036 = vmatpush2.xpose.msra.mxu0 0.0
          %2037 = vmatprep.subr.mxu0 0.0
          %2038 = vmatpush2.xpose.msra.mxu0 0.0
          %2039 = vmatprep.subr.mxu0 0.0
          %2040 = vmatpush2.xpose.msra.mxu0 0.0
          %2041 = vmatprep.subr.mxu0 0.0
          %2042 = vmatpush2.xpose.msra.mxu0 0.0
          %2043 = vmatprep.subr.mxu0 0.0
          %2044 = vmatpush2.xpose.msra.mxu0 0.0
          %2045 = vmatprep.subr.mxu0 0.0
          %2046 = vmatpush2.xpose.msra.mxu0 0.0
          %2047 = vmatprep.mubr.f32.mxu0 0.0
          %2048 = vmatmul.mubr.f32.gmra.mxu0 %v564
          %v2049 = vpop.f32.mrf.mxu0
          %v2050 = vadd.f32 0.0, %v2049
          %v2051 = vpop.f32.mrf.mxu0
          %2052 = vmatprep.mubr.f32.mxu0 0.0
          %2053 = vmatmul.mubr.f32.gmra.mxu0 %v565
          %v2054 = vpop.f32.mrf.mxu0
          %v2055 = vadd.f32 0.0, %v2054
          %v2056 = vpop.f32.mrf.mxu0
          %2057 = vmatprep.mubr.f32.mxu0 0.0
          %2058 = vmatmul.mubr.f32.gmra.mxu0 %v566
          %v2059 = vpop.f32.mrf.mxu0
          %v2060 = vadd.f32 0.0, %v2059
          %v2061 = vpop.f32.mrf.mxu0
          %2062 = vmatprep.mubr.f32.mxu0 0.0
          %2063 = vmatmul.mubr.f32.gmra.mxu0 %v567
          %v2064 = vpop.f32.mrf.mxu0
          %v2065 = vadd.f32 0.0, %v2064
          %v2066 = vpop.f32.mrf.mxu0
          %2067 = vmatprep.mubr.f32.mxu0 0.0
          %2068 = vmatmul.mubr.f32.gmra.mxu0 %v568
          %v2069 = vpop.f32.mrf.mxu0
          %v2070 = vadd.f32 0.0, %v2069
          %v2071 = vpop.f32.mrf.mxu0
          %2072 = vmatprep.mubr.f32.mxu0 0.0
          %2073 = vmatmul.mubr.f32.gmra.mxu0 %v569
          %v2074 = vpop.f32.mrf.mxu0
          %v2075 = vadd.f32 0.0, %v2074
          %v2076 = vpop.f32.mrf.mxu0
          %2077 = vmatprep.mubr.f32.mxu0 0.0
          %2078 = vmatmul.mubr.f32.gmra.mxu0 %v570
          %v2079 = vpop.f32.mrf.mxu0
          %v2080 = vadd.f32 0.0, %v2079
          %v2081 = vpop.f32.mrf.mxu0
          %2082 = vmatprep.mubr.f32.mxu0 0.0
          %2083 = vmatmul.mubr.f32.gmra.mxu0 %v571
          %v2084 = vpop.f32.mrf.mxu0
          %v2085 = vadd.f32 0.0, %v2084
          %v2086 = vpop.f32.mrf.mxu0
          %2087 = vmatprep.mubr.f32.mxu0 0.0
          %2088 = vmatmul.mubr.f32.gmra.mxu0 %v572
          %v2089 = vpop.f32.mrf.mxu0
          %v2090 = vadd.f32 0.0, %v2089
          %v2091 = vpop.f32.mrf.mxu0
          %2092 = vmatprep.mubr.f32.mxu0 0.0
          %2093 = vmatmul.mubr.f32.gmra.mxu0 %v573
          %v2094 = vpop.f32.mrf.mxu0
          %v2095 = vadd.f32 0.0, %v2094
          %v2096 = vpop.f32.mrf.mxu0
          %2097 = vmatprep.mubr.f32.mxu0 0.0
          %2098 = vmatmul.mubr.f32.gmra.mxu0 %v574
          %v2099 = vpop.f32.mrf.mxu0
          %v2100 = vadd.f32 0.0, %v2099
          %v2101 = vpop.f32.mrf.mxu0
          %2102 = vmatprep.mubr.f32.mxu0 0.0
          %2103 = vmatmul.mubr.f32.gmra.mxu0 %v575
          %v2104 = vpop.f32.mrf.mxu0
          %v2105 = vadd.f32 0.0, %v2104
          %v2106 = vpop.f32.mrf.mxu0
          %2107 = vmatprep.mubr.f32.mxu0 0.0
          %2108 = vmatmul.mubr.f32.gmra.mxu0 %v576
          %v2109 = vpop.f32.mrf.mxu0
          %v2110 = vadd.f32 0.0, %v2109
          %v2111 = vpop.f32.mrf.mxu0
          %2112 = vmatprep.mubr.f32.mxu0 0.0
          %2113 = vmatmul.mubr.f32.gmra.mxu0 %v577
          %v2114 = vpop.f32.mrf.mxu0
          %v2115 = vadd.f32 0.0, %v2114
          %v2116 = vpop.f32.mrf.mxu0
          %2117 = vmatprep.mubr.f32.mxu0 0.0
          %2118 = vmatmul.mubr.f32.gmra.mxu0 %v578
          %v2119 = vpop.f32.mrf.mxu0
          %v2120 = vadd.f32 0.0, %v2119
          %v2121 = vpop.f32.mrf.mxu0
          %2122 = vmatprep.mubr.f32.mxu0 0.0
          %2123 = vmatmul.mubr.f32.gmra.mxu0 %v579
          %v2124 = vpop.f32.mrf.mxu0
          %v2125 = vadd.f32 0.0, %v2124
          %v2126 = vpop.f32.mrf.mxu0
          %2127 = vmatprep.mubr.f32.mxu0 0.0
          %2128 = vmatmul.mubr.f32.gmra.mxu0 %v580
          %v2129 = vpop.f32.mrf.mxu0
          %v2130 = vadd.f32 0.0, %v2129
          %v2131 = vpop.f32.mrf.mxu0
          %2132 = vmatprep.mubr.f32.mxu0 0.0
          %2133 = vmatmul.mubr.f32.gmra.mxu0 %v581
          %v2134 = vpop.f32.mrf.mxu0
          %v2135 = vadd.f32 0.0, %v2134
          %v2136 = vpop.f32.mrf.mxu0
          %2137 = vmatprep.mubr.f32.mxu0 0.0
          %2138 = vmatmul.mubr.f32.gmra.mxu0 %v582
          %v2139 = vpop.f32.mrf.mxu0
          %v2140 = vadd.f32 0.0, %v2139
          %v2141 = vpop.f32.mrf.mxu0
          %2142 = vmatprep.mubr.f32.mxu0 0.0
          %2143 = vmatmul.mubr.f32.gmra.mxu0 %v583
          %v2144 = vpop.f32.mrf.mxu0
          %v2145 = vadd.f32 0.0, %v2144
          %v2146 = vpop.f32.mrf.mxu0
          %2147 = vmatprep.mubr.f32.mxu0 0.0
          %2148 = vmatmul.mubr.f32.gmra.mxu0 %v584
          %v2149 = vpop.f32.mrf.mxu0
          %v2150 = vadd.f32 0.0, %v2149
          %v2151 = vpop.f32.mrf.mxu0
          %2152 = vmatprep.mubr.f32.mxu0 0.0
          %2153 = vmatmul.mubr.f32.gmra.mxu0 %v585
          %v2154 = vpop.f32.mrf.mxu0
          %v2155 = vadd.f32 0.0, %v2154
          %v2156 = vpop.f32.mrf.mxu0
          %2157 = vmatprep.mubr.f32.mxu0 0.0
          %2158 = vmatmul.mubr.f32.gmra.mxu0 %v586
          %v2159 = vpop.f32.mrf.mxu0
          %v2160 = vadd.f32 0.0, %v2159
          %v2161 = vpop.f32.mrf.mxu0
          %2162 = vmatprep.mubr.f32.mxu0 0.0
          %2163 = vmatmul.mubr.f32.gmra.mxu0 %v587
          %v2164 = vpop.f32.mrf.mxu0
          %v2165 = vadd.f32 0.0, %v2164
          %v2166 = vpop.f32.mrf.mxu0
          %2167 = vmatprep.mubr.f32.mxu0 0.0
          %2168 = vmatmul.mubr.f32.gmra.mxu0 %v588
          %v2169 = vpop.f32.mrf.mxu0
          %v2170 = vadd.f32 0.0, %v2169
          %v2171 = vpop.f32.mrf.mxu0
          %2172 = vmatprep.mubr.f32.mxu0 0.0
          %2173 = vmatmul.mubr.f32.gmra.mxu0 %v589
          %v2174 = vpop.f32.mrf.mxu0
          %v2175 = vadd.f32 0.0, %v2174
          %v2176 = vpop.f32.mrf.mxu0
          %2177 = vmatprep.mubr.f32.mxu0 0.0
          %2178 = vmatmul.mubr.f32.gmra.mxu0 %v590
          %v2179 = vpop.f32.mrf.mxu0
          %v2180 = vadd.f32 0.0, %v2179
          %v2181 = vpop.f32.mrf.mxu0
          %2182 = vmatprep.mubr.f32.mxu0 0.0
          %2183 = vmatmul.mubr.f32.gmra.mxu0 %v591
          %v2184 = vpop.f32.mrf.mxu0
          %v2185 = vadd.f32 0.0, %v2184
          %v2186 = vpop.f32.mrf.mxu0
          %2187 = vmatprep.mubr.f32.mxu0 0.0
          %2188 = vmatmul.mubr.f32.gmra.mxu0 %v592
          %v2189 = vpop.f32.mrf.mxu0
          %v2190 = vadd.f32 0.0, %v2189
          %v2191 = vpop.f32.mrf.mxu0
          %2192 = vmatprep.mubr.f32.mxu0 0.0
          %2193 = vmatmul.mubr.f32.gmra.mxu0 %v593
          %v2194 = vpop.f32.mrf.mxu0
          %v2195 = vadd.f32 0.0, %v2194
          %v2196 = vpop.f32.mrf.mxu0
          %2197 = vmatprep.mubr.f32.mxu0 0.0
          %2198 = vmatmul.mubr.f32.gmra.mxu0 %v594
          %v2199 = vpop.f32.mrf.mxu0
          %v2200 = vadd.f32 0.0, %v2199
          %v2201 = vpop.f32.mrf.mxu0
          %2202 = vmatprep.mubr.f32.mxu0 0.0
          %2203 = vmatmul.mubr.f32.gmra.mxu0 %v595
          %v2204 = vpop.f32.mrf.mxu0
          %v2205 = vadd.f32 0.0, %v2204
          %v2206 = vpop.f32.mrf.mxu0
          %2207 = vdwg.mxu0
          %v2208 = vadd.f32 %v2050, %v430
          %v2209 = vadd.f32 %v2055, %v431
          %v2210 = vadd.f32 %v2060, %v432
          %v2211 = vadd.f32 %v2065, %v433
          %v2212 = vadd.f32 %v2070, %v434
          %v2213 = vadd.f32 %v2075, %v435
          %v2214 = vadd.f32 %v2080, %v436
          %v2215 = vadd.f32 %v2085, %v437
          %v2216 = vadd.f32 %v2090, %v438
          %v2217 = vadd.f32 %v2095, %v439
          %v2218 = vadd.f32 %v2100, %v440
          %v2219 = vadd.f32 %v2105, %v441
          %v2220 = vadd.f32 %v2110, %v442
          %v2221 = vadd.f32 %v2115, %v443
          %v2222 = vadd.f32 %v2120, %v444
          %v2223 = vadd.f32 %v2125, %v445
          %s2224 = smul.f32 %s1885, 0.0078125
          %v2225 = vstv %s2224
          %v2226 = vadd.f32 %v396, %v2225
          %v2227 = vmul.f32 %v2226, %v1967
          %v2228 = vlaneseq
          %v2229 = vshrl.u32 %v2228, 7
          %v2230 = vsub.s32 0, %v2229
          %v2231 = vrot.slane %v2227, %v2230
          %2233 = vset.pattern.permute.xlu0 0
          %2234 = vperm.xlu0 %2233, %v2130
          %v2235 = vpop.permute.xlu0 %2234
          %2238 = vset.pattern.permute.xlu0 0
          %2239 = vperm.xlu0 %2238, %v2135
          %v2240 = vpop.permute.xlu0 %2239
          %2243 = vset.pattern.permute.xlu0 0
          %2244 = vperm.xlu0 %2243, %v2140
          %v2245 = vpop.permute.xlu0 %2244
          %2248 = vset.pattern.permute.xlu0 0
          %2249 = vperm.xlu0 %2248, %v2145
          %v2250 = vpop.permute.xlu0 %2249
          %2253 = vset.pattern.permute.xlu0 0
          %2254 = vperm.xlu0 %2253, %v2150
          %v2255 = vpop.permute.xlu0 %2254
          %2258 = vset.pattern.permute.xlu0 0
          %2259 = vperm.xlu0 %2258, %v2155
          %v2260 = vpop.permute.xlu0 %2259
          %2263 = vset.pattern.permute.xlu0 0
          %2264 = vperm.xlu0 %2263, %v2160
          %v2265 = vpop.permute.xlu0 %2264
          %2268 = vset.pattern.permute.xlu0 0
          %2269 = vperm.xlu0 %2268, %v2165
          %v2270 = vpop.permute.xlu0 %2269
          %2273 = vset.pattern.permute.xlu0 0
          %2274 = vperm.xlu0 %2273, %v2170
          %v2275 = vpop.permute.xlu0 %2274
          %2278 = vset.pattern.permute.xlu0 0
          %2279 = vperm.xlu0 %2278, %v2175
          %v2280 = vpop.permute.xlu0 %2279
          %2283 = vset.pattern.permute.xlu0 0
          %2284 = vperm.xlu0 %2283, %v2180
          %v2285 = vpop.permute.xlu0 %2284
          %2288 = vset.pattern.permute.xlu0 0
          %2289 = vperm.xlu0 %2288, %v2185
          %v2290 = vpop.permute.xlu0 %2289
          %2293 = vset.pattern.permute.xlu0 0
          %2294 = vperm.xlu0 %2293, %v2190
          %v2295 = vpop.permute.xlu0 %2294
          %2298 = vset.pattern.permute.xlu0 0
          %2299 = vperm.xlu0 %2298, %v2195
          %v2300 = vpop.permute.xlu0 %2299
          %2303 = vset.pattern.permute.xlu0 0
          %2304 = vperm.xlu0 %2303, %v2200
          %v2305 = vpop.permute.xlu0 %2304
          %2308 = vset.pattern.permute.xlu0 0
          %2309 = vperm.xlu0 %2308, %v2205
          %v2310 = vpop.permute.xlu0 %2309
          %vm2312 = vcmp.ge.f32.partialorder %v2231, %v2235
          %vm2313 = vcmp.ge.f32.partialorder %v2231, %v2240
          %vm2314 = vcmp.ge.f32.partialorder %v2231, %v2245
          %vm2315 = vcmp.ge.f32.partialorder %v2231, %v2250
          %vm2316 = vcmp.ge.f32.partialorder %v2231, %v2255
          %vm2317 = vcmp.ge.f32.partialorder %v2231, %v2260
          %vm2318 = vcmp.ge.f32.partialorder %v2231, %v2265
          %vm2319 = vcmp.ge.f32.partialorder %v2231, %v2270
          %vm2320 = vcmp.ge.f32.partialorder %v2231, %v2275
          %vm2321 = vcmp.ge.f32.partialorder %v2231, %v2280
          %vm2322 = vcmp.ge.f32.partialorder %v2231, %v2285
          %vm2323 = vcmp.ge.f32.partialorder %v2231, %v2290
          %vm2324 = vcmp.ge.f32.partialorder %v2231, %v2295
          %vm2325 = vcmp.ge.f32.partialorder %v2231, %v2300
          %vm2326 = vcmp.ge.f32.partialorder %v2231, %v2305
          %vm2327 = vcmp.ge.f32.partialorder %v2231, %v2310
          %2329 = vset.pattern.permute.xlu0 0
          %2330 = vperm.xlu0 %2329, %v2208
          %v2331 = vpop.permute.xlu0 %2330
          %2334 = vset.pattern.permute.xlu0 0
          %2335 = vperm.xlu0 %2334, %v2209
          %v2336 = vpop.permute.xlu0 %2335
          %2339 = vset.pattern.permute.xlu0 0
          %2340 = vperm.xlu0 %2339, %v2210
          %v2341 = vpop.permute.xlu0 %2340
          %2344 = vset.pattern.permute.xlu0 0
          %2345 = vperm.xlu0 %2344, %v2211
          %v2346 = vpop.permute.xlu0 %2345
          %2349 = vset.pattern.permute.xlu0 0
          %2350 = vperm.xlu0 %2349, %v2212
          %v2351 = vpop.permute.xlu0 %2350
          %2354 = vset.pattern.permute.xlu0 0
          %2355 = vperm.xlu0 %2354, %v2213
          %v2356 = vpop.permute.xlu0 %2355
          %2359 = vset.pattern.permute.xlu0 0
          %2360 = vperm.xlu0 %2359, %v2214
          %v2361 = vpop.permute.xlu0 %2360
          %2364 = vset.pattern.permute.xlu0 0
          %2365 = vperm.xlu0 %2364, %v2215
          %v2366 = vpop.permute.xlu0 %2365
          %2369 = vset.pattern.permute.xlu0 0
          %2370 = vperm.xlu0 %2369, %v2216
          %v2371 = vpop.permute.xlu0 %2370
          %2374 = vset.pattern.permute.xlu0 0
          %2375 = vperm.xlu0 %2374, %v2217
          %v2376 = vpop.permute.xlu0 %2375
          %2379 = vset.pattern.permute.xlu0 0
          %2380 = vperm.xlu0 %2379, %v2218
          %v2381 = vpop.permute.xlu0 %2380
          %2384 = vset.pattern.permute.xlu0 0
          %2385 = vperm.xlu0 %2384, %v2219
          %v2386 = vpop.permute.xlu0 %2385
          %2389 = vset.pattern.permute.xlu0 0
          %2390 = vperm.xlu0 %2389, %v2220
          %v2391 = vpop.permute.xlu0 %2390
          %2394 = vset.pattern.permute.xlu0 0
          %2395 = vperm.xlu0 %2394, %v2221
          %v2396 = vpop.permute.xlu0 %2395
          %2399 = vset.pattern.permute.xlu0 0
          %2400 = vperm.xlu0 %2399, %v2222
          %v2401 = vpop.permute.xlu0 %2400
          %2404 = vset.pattern.permute.xlu0 0
          %2405 = vperm.xlu0 %2404, %v2223
          %v2406 = vpop.permute.xlu0 %2405
          %vm2408 = vcmp.lt.f32.partialorder %v2231, %v2331
          %vm2409 = vcmp.lt.f32.partialorder %v2231, %v2336
          %vm2410 = vcmp.lt.f32.partialorder %v2231, %v2341
          %vm2411 = vcmp.lt.f32.partialorder %v2231, %v2346
          %vm2412 = vcmp.lt.f32.partialorder %v2231, %v2351
          %vm2413 = vcmp.lt.f32.partialorder %v2231, %v2356
          %vm2414 = vcmp.lt.f32.partialorder %v2231, %v2361
          %vm2415 = vcmp.lt.f32.partialorder %v2231, %v2366
          %vm2416 = vcmp.lt.f32.partialorder %v2231, %v2371
          %vm2417 = vcmp.lt.f32.partialorder %v2231, %v2376
          %vm2418 = vcmp.lt.f32.partialorder %v2231, %v2381
          %vm2419 = vcmp.lt.f32.partialorder %v2231, %v2386
          %vm2420 = vcmp.lt.f32.partialorder %v2231, %v2391
          %vm2421 = vcmp.lt.f32.partialorder %v2231, %v2396
          %vm2422 = vcmp.lt.f32.partialorder %v2231, %v2401
          %vm2423 = vcmp.lt.f32.partialorder %v2231, %v2406
          %vm2424 = vmand %vm2312, %vm2408
          %vm2425 = vmand %vm2313, %vm2409
          %vm2426 = vmand %vm2314, %vm2410
          %vm2427 = vmand %vm2315, %vm2411
          %vm2428 = vmand %vm2316, %vm2412
          %vm2429 = vmand %vm2317, %vm2413
          %vm2430 = vmand %vm2318, %vm2414
          %vm2431 = vmand %vm2319, %vm2415
          %vm2432 = vmand %vm2320, %vm2416
          %vm2433 = vmand %vm2321, %vm2417
          %vm2434 = vmand %vm2322, %vm2418
          %vm2435 = vmand %vm2323, %vm2419
          %vm2436 = vmand %vm2324, %vm2420
          %vm2437 = vmand %vm2325, %vm2421
          %vm2438 = vmand %vm2326, %vm2422
          %vm2439 = vmand %vm2327, %vm2423
          %v2440 = vsel %vm2424, 1, 0
          %v2441 = vsel %vm2425, 1, 0
          %v2442 = vsel %vm2426, 1, 0
          %v2443 = vsel %vm2427, 1, 0
          %v2444 = vsel %vm2428, 1, 0
          %v2445 = vsel %vm2429, 1, 0
          %v2446 = vsel %vm2430, 1, 0
          %v2447 = vsel %vm2431, 1, 0
          %v2448 = vsel %vm2432, 1, 0
          %v2449 = vsel %vm2433, 1, 0
          %v2450 = vsel %vm2434, 1, 0
          %v2451 = vsel %vm2435, 1, 0
          %v2452 = vsel %vm2436, 1, 0
          %v2453 = vsel %vm2437, 1, 0
          %v2454 = vsel %vm2438, 1, 0
          %v2455 = vsel %vm2439, 1, 0
          %v2456 = vcvt.s32.f32 %v2440
          %v2457 = vcvt.s32.f32 %v2441
          %v2458 = vcvt.s32.f32 %v2442
          %v2459 = vcvt.s32.f32 %v2443
          %v2460 = vcvt.s32.f32 %v2444
          %v2461 = vcvt.s32.f32 %v2445
          %v2462 = vcvt.s32.f32 %v2446
          %v2463 = vcvt.s32.f32 %v2447
          %v2464 = vcvt.s32.f32 %v2448
          %v2465 = vcvt.s32.f32 %v2449
          %v2466 = vcvt.s32.f32 %v2450
          %v2467 = vcvt.s32.f32 %v2451
          %v2468 = vcvt.s32.f32 %v2452
          %v2469 = vcvt.s32.f32 %v2453
          %v2470 = vcvt.s32.f32 %v2454
          %v2471 = vcvt.s32.f32 %v2455
          %v2472 = vlaneseq
          %v2473 = vshrl.u32 %v2472, 7
          %v2474 = vsub.s32 1, %v2473
          %v2475 = vrot.slane %v1889, %v2474
          %v2476 = vlaneseq
          %v2477 = vshrl.u32 %v2476, 7
          %v2478 = vsub.s32 0, %v2477
          %v2479 = vrot.slane %v1952, %v2478
          %v2480 = vsel %vm1087, %v2475, %v2479
          %v2481 = vlaneseq
          %v2482 = vshrl.u32 %v2481, 7
          %v2483 = vsub.s32 0, %v2482
          %v2484 = vrot.slane %v1925, %v2483
          %v2485 = vsel %vm558, %v2484, %v2480
          %2486 = vmatprep.subr.mxu0 0.0
          %2487 = vmatpush1.msra.mxu0 %v2471
          %2488 = vmatprep.subr.mxu0 0.0
          %2489 = vmatpush1.msra.mxu0 %v2470
          %2490 = vmatprep.subr.mxu0 0.0
          %2491 = vmatpush1.msra.mxu0 %v2469
          %2492 = vmatprep.subr.mxu0 0.0
          %2493 = vmatpush1.msra.mxu0 %v2468
          %2494 = vmatprep.subr.mxu0 0.0
          %2495 = vmatpush1.msra.mxu0 %v2467
          %2496 = vmatprep.subr.mxu0 0.0
          %2497 = vmatpush1.msra.mxu0 %v2466
          %2498 = vmatprep.subr.mxu0 0.0
          %2499 = vmatpush1.msra.mxu0 %v2465
          %2500 = vmatprep.subr.mxu0 0.0
          %2501 = vmatpush1.msra.mxu0 %v2464
          %2502 = vmatprep.subr.mxu0 0.0
          %2503 = vmatpush1.msra.mxu0 %v2463
          %2504 = vmatprep.subr.mxu0 0.0
          %2505 = vmatpush1.msra.mxu0 %v2462
          %2506 = vmatprep.subr.mxu0 0.0
          %2507 = vmatpush1.msra.mxu0 %v2461
          %2508 = vmatprep.subr.mxu0 0.0
          %2509 = vmatpush1.msra.mxu0 %v2460
          %2510 = vmatprep.subr.mxu0 0.0
          %2511 = vmatpush1.msra.mxu0 %v2459
          %2512 = vmatprep.subr.mxu0 0.0
          %2513 = vmatpush1.msra.mxu0 %v2458
          %2514 = vmatprep.subr.mxu0 0.0
          %2515 = vmatpush1.msra.mxu0 %v2457
          %2516 = vmatprep.subr.mxu0 0.0
          %2517 = vmatpush1.msra.mxu0 %v2456
          %2518 = vmatprep.subr.mxu0 0.0
          %2519 = vmatpush2.msra.mxu0 0.0
          %2520 = vmatprep.subr.mxu0 0.0
          %2521 = vmatpush2.msra.mxu0 0.0
          %2522 = vmatprep.subr.mxu0 0.0
          %2523 = vmatpush2.msra.mxu0 0.0
          %2524 = vmatprep.subr.mxu0 0.0
          %2525 = vmatpush2.msra.mxu0 0.0
          %2526 = vmatprep.subr.mxu0 0.0
          %2527 = vmatpush2.msra.mxu0 0.0
          %2528 = vmatprep.subr.mxu0 0.0
          %2529 = vmatpush2.msra.mxu0 0.0
          %2530 = vmatprep.subr.mxu0 0.0
          %2531 = vmatpush2.msra.mxu0 0.0
          %2532 = vmatprep.subr.mxu0 0.0
          %2533 = vmatpush2.msra.mxu0 0.0
          %2534 = vmatprep.subr.mxu0 0.0
          %2535 = vmatpush2.msra.mxu0 0.0
          %2536 = vmatprep.subr.mxu0 0.0
          %2537 = vmatpush2.msra.mxu0 0.0
          %2538 = vmatprep.subr.mxu0 0.0
          %2539 = vmatpush2.msra.mxu0 0.0
          %2540 = vmatprep.subr.mxu0 0.0
          %2541 = vmatpush2.msra.mxu0 0.0
          %2542 = vmatprep.subr.mxu0 0.0
          %2543 = vmatpush2.msra.mxu0 0.0
          %2544 = vmatprep.subr.mxu0 0.0
          %2545 = vmatpush2.msra.mxu0 0.0
          %2546 = vmatprep.subr.mxu0 0.0
          %2547 = vmatpush2.msra.mxu0 0.0
          %2548 = vmatprep.subr.mxu0 0.0
          %2549 = vmatpush2.msra.mxu0 0.0
          %2550 = vmatprep.mubr.f32.mxu0 0.0
          %2551 = vmatmul.mubr.f32.gmra.mxu0 %v2485
          %v2552 = vpop.f32.mrf.mxu0
          %v2553 = vadd.f32 0.0, %v2552
          %v2554 = vpop.f32.mrf.mxu0
          %2555 = vdwg.mxu0
          %vm2556 = vcmp.eq.s32.totalorder %v398, 2
          %v2557 = vsel %vm2556, 1, 0
          %vm2558 = vcmp.eq.s32.totalorder %v2557, 1
          %v2559 = vlaneseq
          %v2560 = vshrl.u32 %v2559, 7
          %v2561 = vsub.s32 2, %v2560
          %v2562 = vrot.slane %v2553, %v2561
          %v2563 = vsel %vm2558, %v2562, %v1868
          %v2564 = vlaneseq
          %v2565 = vshrl.u32 %v2564, 7
          %v2566 = vsub.s32 0, %v2565
          %v2567 = vrot.slane %v2553, %v2566
          %v2568 = vsel %vm2558, %v2567, %v1873
          %s2569 = sadd.s32 %s460, 3
          %s2570 = sadd.s32 %s458, 3
          %s2571 = scalar_lea.vmem %s326, %s2570 [#allocation12]
          %v2572 = vld [vmem:[%s2571] sm:$0x1]
          %s2573 = scalar_lea.vmem %s335, %s2570 [#allocation14]
          %v2574 = vld [vmem:[%s2573] sm:$0x1]
          %p2575 = scmp.gt.s32.totalorder %s1874, 0
          %s2576 = scalar_select %p2575, %s1874, 0
          %s2577 = sld [smem:[#allocation5 + %s2576]]
          %s2578 = sld [smem:[#allocation5 + %s2569]]
          %s2579 = sld [smem:[#allocation6 + %s2569]]
          %s2580 = sld [smem:[#allocation7 + %s2569]]
          %v2582 = vrot.slane %v2572, 7
          %v2584 = vadd.f32 %v2553, %v2582
          %v2585 = vsub.f32 %v2553, 1.0
          %v2586 = vmul.f32 %v2585, 0.6372646
          %v2587 = vmul.f32 %v2586, 1.442695
          %v2588 = vpow.pop %v2587
          %v2589 = vmul.f32 %v2588, 5.7326083
          %v2590 = vadd.f32 %v2589, -1.5961449
          %v2591 = vmul.f32 %v2585, -2.237382
          %v2592 = vadd.f32 %v2590, %v2591
          %v2593 = vrsqrt.pop %v2553
          %v2594 = vmul.f32 %v2553, %v2593
          %vm2595 = vcmp.eq.f32.partialorder %v2553, inf
          %v2596 = vsel %vm2595, %v2553, %v2594
          %vm2597 = vcmp.eq.f32.partialorder %v2553, 0.0
          %v2598 = vand.u32 %v2553, 2147483648
          %v2599 = vsel %vm2597, %v2598, %v2596
          %v2600 = vmul.f32 %v2599, -2.5447896
          %v2601 = vmul.f32 %v2600, 1.442695
          %v2602 = vpow.pop %v2601
          %v2603 = vsub.f32 0.07848956, %v2602
          %v2604 = vmul.f32 %v2603, 0.6412372
          %v2605 = vadd.f32 %v2592, %v2604
          %v2606 = vstv %s2577
          %v2607 = vmul.f32 %v2606, %v2584
          %v2609 = vrot.slane %v2607, 1
          %v2611 = vsub.f32 %v2605, %v2609
          %s2612 = smul.f32 %s2577, %s392
          %v2613 = vstv %s2612
          %v2614 = vmul.f32 %v2613, %v2611
          %v2615 = vsub.f32 %v2553, %v2614
          %v2616 = vadd.f32 %v2615, %v2574
          %vm2617 = vcmp.gt.f32.partialorder %v2616, 1.0
          %v2618 = vsel %vm2617, 1.0, %v2616
          %vm2619 = vcmp.lt.f32.partialorder %v2618, 0.0
          %v2620 = vsel %vm2619, 1e-10, %v2618
          %v2621 = vsub.f32 %v2620, 1.0
          %v2622 = vmul.f32 %v2621, 0.6372646
          %v2623 = vmul.f32 %v2622, 1.442695
          %v2624 = vpow.pop %v2623
          %v2625 = vmul.f32 %v2624, 5.7326083
          %v2626 = vadd.f32 %v2625, -1.5961449
          %v2627 = vmul.f32 %v2621, -2.237382
          %v2628 = vadd.f32 %v2626, %v2627
          %v2629 = vrsqrt.pop %v2620
          %v2630 = vmul.f32 %v2620, %v2629
          %vm2631 = vcmp.eq.f32.partialorder %v2620, inf
          %v2632 = vsel %vm2631, %v2620, %v2630
          %vm2633 = vcmp.eq.f32.partialorder %v2620, 0.0
          %v2634 = vand.u32 %v2620, 2147483648
          %v2635 = vsel %vm2633, %v2634, %v2632
          %v2636 = vmul.f32 %v2635, -2.5447896
          %v2637 = vmul.f32 %v2636, 1.442695
          %v2638 = vpow.pop %v2637
          %v2639 = vsub.f32 0.07848956, %v2638
          %v2640 = vmul.f32 %v2639, 0.6412372
          %v2641 = vadd.f32 %v2628, %v2640
          %v2642 = vstv %s2578
          %v2643 = vmul.f32 %v2642, %v2584
          %v2645 = vrot.slane %v2643, 1
          %v2647 = vsub.f32 %v2641, %v2645
          %v2648 = vstv %s2579
          %v2649 = vsub.f32 %v2647, %v2648
          %v2650 = vmul.f32 %v2649, 100.0
          %v2651 = vmul.f32 %v2650, 0.5
          %v2652 = vmul.f32 %v2651, %v2650
          %v2653 = vsub.f32 3.6862316, %v2652
          %v2654 = vsel %vm536, %v2653, -inf
          %2655 = vmax.xlane.f32.xlu0 %v2654
          %v2656 = vpop.xlane.xlu0 %2655
          %v2657 = vsub.f32 %v2653, %v2656
          %v2658 = vmul.f32 %v2657, 1.442695
          %v2659 = vpow.pop %v2658
          %v2660 = vsel %vm536, %v2659, 0.0
          %2661 = vadd.xlane.f32.xlu0 %v2660
          %v2662 = vpop.xlane.xlu0 %2661
          %v2663 = vlog2.pop %v2662
          %v2664 = vmul.f32 %v2663, 0.6931472
          %v2665 = vadd.f32 %v2656, %v2664
          %v2666 = vsub.f32 %v2665, 4.8520303
          %p2667 = scmp.lt.s32.totalorder %s2569, 100
          %s2668 = scalar_select %p2667, 1, 0
          %v2669 = vstv %s2668
          %vm2670 = vcmp.eq.s32.totalorder %v2669, 1
          %v2671 = vsel %vm2670, %v2666, 0.0
          %v2672 = vadd.f32 %v1977, %v2671
          %v2673 = vlaneseq
          %v2674 = vshrl.u32 %v2673, 7
          %v2675 = vsub.s32 0, %v2674
          %v2676 = vrot.slane %v2659, %v2675
          %v2677 = vsel %vm558, %v2676, 0.0
          %2678 = vmatprep.subr.mxu0 0.0
          %2679 = vmatpush1.xpose.msra.mxu0 0.0
          %2680 = vmatprep.subr.mxu0 0.0
          %2681 = vmatpush1.xpose.msra.mxu0 0.0
          %2682 = vmatprep.subr.mxu0 0.0
          %2683 = vmatpush1.xpose.msra.mxu0 0.0
          %2684 = vmatprep.subr.mxu0 0.0
          %2685 = vmatpush1.xpose.msra.mxu0 0.0
          %2686 = vmatprep.subr.mxu0 0.0
          %2687 = vmatpush1.xpose.msra.mxu0 0.0
          %2688 = vmatprep.subr.mxu0 0.0
          %2689 = vmatpush1.xpose.msra.mxu0 0.0
          %2690 = vmatprep.subr.mxu0 0.0
          %2691 = vmatpush1.xpose.msra.mxu0 0.0
          %2692 = vmatprep.subr.mxu0 0.0
          %2693 = vmatpush1.xpose.msra.mxu0 0.0
          %2694 = vmatprep.subr.mxu0 0.0
          %2695 = vmatpush1.xpose.msra.mxu0 0.0
          %2696 = vmatprep.subr.mxu0 0.0
          %2697 = vmatpush1.xpose.msra.mxu0 0.0
          %2698 = vmatprep.subr.mxu0 0.0
          %2699 = vmatpush1.xpose.msra.mxu0 0.0
          %2700 = vmatprep.subr.mxu0 0.0
          %2701 = vmatpush1.xpose.msra.mxu0 0.0
          %2702 = vmatprep.subr.mxu0 0.0
          %2703 = vmatpush1.xpose.msra.mxu0 0.0
          %2704 = vmatprep.subr.mxu0 0.0
          %2705 = vmatpush1.xpose.msra.mxu0 0.0
          %2706 = vmatprep.subr.mxu0 0.0
          %2707 = vmatpush1.xpose.msra.mxu0 0.0
          %2708 = vmatprep.subr.mxu0 0.0
          %2709 = vmatpush1.xpose.msra.mxu0 %v2677
          %2710 = vmatprep.subr.mxu0 0.0
          %2711 = vmatpush2.xpose.msra.mxu0 0.0
          %2712 = vmatprep.subr.mxu0 0.0
          %2713 = vmatpush2.xpose.msra.mxu0 0.0
          %2714 = vmatprep.subr.mxu0 0.0
          %2715 = vmatpush2.xpose.msra.mxu0 0.0
          %2716 = vmatprep.subr.mxu0 0.0
          %2717 = vmatpush2.xpose.msra.mxu0 0.0
          %2718 = vmatprep.subr.mxu0 0.0
          %2719 = vmatpush2.xpose.msra.mxu0 0.0
          %2720 = vmatprep.subr.mxu0 0.0
          %2721 = vmatpush2.xpose.msra.mxu0 0.0
          %2722 = vmatprep.subr.mxu0 0.0
          %2723 = vmatpush2.xpose.msra.mxu0 0.0
          %2724 = vmatprep.subr.mxu0 0.0
          %2725 = vmatpush2.xpose.msra.mxu0 0.0
          %2726 = vmatprep.subr.mxu0 0.0
          %2727 = vmatpush2.xpose.msra.mxu0 0.0
          %2728 = vmatprep.subr.mxu0 0.0
          %2729 = vmatpush2.xpose.msra.mxu0 0.0
          %2730 = vmatprep.subr.mxu0 0.0
          %2731 = vmatpush2.xpose.msra.mxu0 0.0
          %2732 = vmatprep.subr.mxu0 0.0
          %2733 = vmatpush2.xpose.msra.mxu0 0.0
          %2734 = vmatprep.subr.mxu0 0.0
          %2735 = vmatpush2.xpose.msra.mxu0 0.0
          %2736 = vmatprep.subr.mxu0 0.0
          %2737 = vmatpush2.xpose.msra.mxu0 0.0
          %2738 = vmatprep.subr.mxu0 0.0
          %2739 = vmatpush2.xpose.msra.mxu0 0.0
          %2740 = vmatprep.subr.mxu0 0.0
          %2741 = vmatpush2.xpose.msra.mxu0 0.0
          %2742 = vmatprep.mubr.f32.mxu0 0.0
          %2743 = vmatmul.mubr.f32.gmra.mxu0 %v564
          %v2744 = vpop.f32.mrf.mxu0
          %v2745 = vadd.f32 0.0, %v2744
          %v2746 = vpop.f32.mrf.mxu0
          %2747 = vmatprep.mubr.f32.mxu0 0.0
          %2748 = vmatmul.mubr.f32.gmra.mxu0 %v565
          %v2749 = vpop.f32.mrf.mxu0
          %v2750 = vadd.f32 0.0, %v2749
          %v2751 = vpop.f32.mrf.mxu0
          %2752 = vmatprep.mubr.f32.mxu0 0.0
          %2753 = vmatmul.mubr.f32.gmra.mxu0 %v566
          %v2754 = vpop.f32.mrf.mxu0
          %v2755 = vadd.f32 0.0, %v2754
          %v2756 = vpop.f32.mrf.mxu0
          %2757 = vmatprep.mubr.f32.mxu0 0.0
          %2758 = vmatmul.mubr.f32.gmra.mxu0 %v567
          %v2759 = vpop.f32.mrf.mxu0
          %v2760 = vadd.f32 0.0, %v2759
          %v2761 = vpop.f32.mrf.mxu0
          %2762 = vmatprep.mubr.f32.mxu0 0.0
          %2763 = vmatmul.mubr.f32.gmra.mxu0 %v568
          %v2764 = vpop.f32.mrf.mxu0
          %v2765 = vadd.f32 0.0, %v2764
          %v2766 = vpop.f32.mrf.mxu0
          %2767 = vmatprep.mubr.f32.mxu0 0.0
          %2768 = vmatmul.mubr.f32.gmra.mxu0 %v569
          %v2769 = vpop.f32.mrf.mxu0
          %v2770 = vadd.f32 0.0, %v2769
          %v2771 = vpop.f32.mrf.mxu0
          %2772 = vmatprep.mubr.f32.mxu0 0.0
          %2773 = vmatmul.mubr.f32.gmra.mxu0 %v570
          %v2774 = vpop.f32.mrf.mxu0
          %v2775 = vadd.f32 0.0, %v2774
          %v2776 = vpop.f32.mrf.mxu0
          %2777 = vmatprep.mubr.f32.mxu0 0.0
          %2778 = vmatmul.mubr.f32.gmra.mxu0 %v571
          %v2779 = vpop.f32.mrf.mxu0
          %v2780 = vadd.f32 0.0, %v2779
          %v2781 = vpop.f32.mrf.mxu0
          %2782 = vmatprep.mubr.f32.mxu0 0.0
          %2783 = vmatmul.mubr.f32.gmra.mxu0 %v572
          %v2784 = vpop.f32.mrf.mxu0
          %v2785 = vadd.f32 0.0, %v2784
          %v2786 = vpop.f32.mrf.mxu0
          %2787 = vmatprep.mubr.f32.mxu0 0.0
          %2788 = vmatmul.mubr.f32.gmra.mxu0 %v573
          %v2789 = vpop.f32.mrf.mxu0
          %v2790 = vadd.f32 0.0, %v2789
          %v2791 = vpop.f32.mrf.mxu0
          %2792 = vmatprep.mubr.f32.mxu0 0.0
          %2793 = vmatmul.mubr.f32.gmra.mxu0 %v574
          %v2794 = vpop.f32.mrf.mxu0
          %v2795 = vadd.f32 0.0, %v2794
          %v2796 = vpop.f32.mrf.mxu0
          %2797 = vmatprep.mubr.f32.mxu0 0.0
          %2798 = vmatmul.mubr.f32.gmra.mxu0 %v575
          %v2799 = vpop.f32.mrf.mxu0
          %v2800 = vadd.f32 0.0, %v2799
          %v2801 = vpop.f32.mrf.mxu0
          %2802 = vmatprep.mubr.f32.mxu0 0.0
          %2803 = vmatmul.mubr.f32.gmra.mxu0 %v576
          %v2804 = vpop.f32.mrf.mxu0
          %v2805 = vadd.f32 0.0, %v2804
          %v2806 = vpop.f32.mrf.mxu0
          %2807 = vmatprep.mubr.f32.mxu0 0.0
          %2808 = vmatmul.mubr.f32.gmra.mxu0 %v577
          %v2809 = vpop.f32.mrf.mxu0
          %v2810 = vadd.f32 0.0, %v2809
          %v2811 = vpop.f32.mrf.mxu0
          %2812 = vmatprep.mubr.f32.mxu0 0.0
          %2813 = vmatmul.mubr.f32.gmra.mxu0 %v578
          %v2814 = vpop.f32.mrf.mxu0
          %v2815 = vadd.f32 0.0, %v2814
          %v2816 = vpop.f32.mrf.mxu0
          %2817 = vmatprep.mubr.f32.mxu0 0.0
          %2818 = vmatmul.mubr.f32.gmra.mxu0 %v579
          %v2819 = vpop.f32.mrf.mxu0
          %v2820 = vadd.f32 0.0, %v2819
          %v2821 = vpop.f32.mrf.mxu0
          %2822 = vmatprep.mubr.f32.mxu0 0.0
          %2823 = vmatmul.mubr.f32.gmra.mxu0 %v580
          %v2824 = vpop.f32.mrf.mxu0
          %v2825 = vadd.f32 0.0, %v2824
          %v2826 = vpop.f32.mrf.mxu0
          %2827 = vmatprep.mubr.f32.mxu0 0.0
          %2828 = vmatmul.mubr.f32.gmra.mxu0 %v581
          %v2829 = vpop.f32.mrf.mxu0
          %v2830 = vadd.f32 0.0, %v2829
          %v2831 = vpop.f32.mrf.mxu0
          %2832 = vmatprep.mubr.f32.mxu0 0.0
          %2833 = vmatmul.mubr.f32.gmra.mxu0 %v582
          %v2834 = vpop.f32.mrf.mxu0
          %v2835 = vadd.f32 0.0, %v2834
          %v2836 = vpop.f32.mrf.mxu0
          %2837 = vmatprep.mubr.f32.mxu0 0.0
          %2838 = vmatmul.mubr.f32.gmra.mxu0 %v583
          %v2839 = vpop.f32.mrf.mxu0
          %v2840 = vadd.f32 0.0, %v2839
          %v2841 = vpop.f32.mrf.mxu0
          %2842 = vmatprep.mubr.f32.mxu0 0.0
          %2843 = vmatmul.mubr.f32.gmra.mxu0 %v584
          %v2844 = vpop.f32.mrf.mxu0
          %v2845 = vadd.f32 0.0, %v2844
          %v2846 = vpop.f32.mrf.mxu0
          %2847 = vmatprep.mubr.f32.mxu0 0.0
          %2848 = vmatmul.mubr.f32.gmra.mxu0 %v585
          %v2849 = vpop.f32.mrf.mxu0
          %v2850 = vadd.f32 0.0, %v2849
          %v2851 = vpop.f32.mrf.mxu0
          %2852 = vmatprep.mubr.f32.mxu0 0.0
          %2853 = vmatmul.mubr.f32.gmra.mxu0 %v586
          %v2854 = vpop.f32.mrf.mxu0
          %v2855 = vadd.f32 0.0, %v2854
          %v2856 = vpop.f32.mrf.mxu0
          %2857 = vmatprep.mubr.f32.mxu0 0.0
          %2858 = vmatmul.mubr.f32.gmra.mxu0 %v587
          %v2859 = vpop.f32.mrf.mxu0
          %v2860 = vadd.f32 0.0, %v2859
          %v2861 = vpop.f32.mrf.mxu0
          %2862 = vmatprep.mubr.f32.mxu0 0.0
          %2863 = vmatmul.mubr.f32.gmra.mxu0 %v588
          %v2864 = vpop.f32.mrf.mxu0
          %v2865 = vadd.f32 0.0, %v2864
          %v2866 = vpop.f32.mrf.mxu0
          %2867 = vmatprep.mubr.f32.mxu0 0.0
          %2868 = vmatmul.mubr.f32.gmra.mxu0 %v589
          %v2869 = vpop.f32.mrf.mxu0
          %v2870 = vadd.f32 0.0, %v2869
          %v2871 = vpop.f32.mrf.mxu0
          %2872 = vmatprep.mubr.f32.mxu0 0.0
          %2873 = vmatmul.mubr.f32.gmra.mxu0 %v590
          %v2874 = vpop.f32.mrf.mxu0
          %v2875 = vadd.f32 0.0, %v2874
          %v2876 = vpop.f32.mrf.mxu0
          %2877 = vmatprep.mubr.f32.mxu0 0.0
          %2878 = vmatmul.mubr.f32.gmra.mxu0 %v591
          %v2879 = vpop.f32.mrf.mxu0
          %v2880 = vadd.f32 0.0, %v2879
          %v2881 = vpop.f32.mrf.mxu0
          %2882 = vmatprep.mubr.f32.mxu0 0.0
          %2883 = vmatmul.mubr.f32.gmra.mxu0 %v592
          %v2884 = vpop.f32.mrf.mxu0
          %v2885 = vadd.f32 0.0, %v2884
          %v2886 = vpop.f32.mrf.mxu0
          %2887 = vmatprep.mubr.f32.mxu0 0.0
          %2888 = vmatmul.mubr.f32.gmra.mxu0 %v593
          %v2889 = vpop.f32.mrf.mxu0
          %v2890 = vadd.f32 0.0, %v2889
          %v2891 = vpop.f32.mrf.mxu0
          %2892 = vmatprep.mubr.f32.mxu0 0.0
          %2893 = vmatmul.mubr.f32.gmra.mxu0 %v594
          %v2894 = vpop.f32.mrf.mxu0
          %v2895 = vadd.f32 0.0, %v2894
          %v2896 = vpop.f32.mrf.mxu0
          %2897 = vmatprep.mubr.f32.mxu0 0.0
          %2898 = vmatmul.mubr.f32.gmra.mxu0 %v595
          %v2899 = vpop.f32.mrf.mxu0
          %v2900 = vadd.f32 0.0, %v2899
          %v2901 = vpop.f32.mrf.mxu0
          %2902 = vdwg.mxu0
          %v2903 = vadd.f32 %v2745, %v430
          %v2904 = vadd.f32 %v2750, %v431
          %v2905 = vadd.f32 %v2755, %v432
          %v2906 = vadd.f32 %v2760, %v433
          %v2907 = vadd.f32 %v2765, %v434
          %v2908 = vadd.f32 %v2770, %v435
          %v2909 = vadd.f32 %v2775, %v436
          %v2910 = vadd.f32 %v2780, %v437
          %v2911 = vadd.f32 %v2785, %v438
          %v2912 = vadd.f32 %v2790, %v439
          %v2913 = vadd.f32 %v2795, %v440
          %v2914 = vadd.f32 %v2800, %v441
          %v2915 = vadd.f32 %v2805, %v442
          %v2916 = vadd.f32 %v2810, %v443
          %v2917 = vadd.f32 %v2815, %v444
          %v2918 = vadd.f32 %v2820, %v445
          %s2919 = smul.f32 %s2580, 0.0078125
          %v2920 = vstv %s2919
          %v2921 = vadd.f32 %v396, %v2920
          %v2922 = vmul.f32 %v2921, %v2662
          %v2923 = vlaneseq
          %v2924 = vshrl.u32 %v2923, 7
          %v2925 = vsub.s32 0, %v2924
          %v2926 = vrot.slane %v2922, %v2925
          %2928 = vset.pattern.permute.xlu0 0
          %2929 = vperm.xlu0 %2928, %v2825
          %v2930 = vpop.permute.xlu0 %2929
          %2933 = vset.pattern.permute.xlu0 0
          %2934 = vperm.xlu0 %2933, %v2830
          %v2935 = vpop.permute.xlu0 %2934
          %2938 = vset.pattern.permute.xlu0 0
          %2939 = vperm.xlu0 %2938, %v2835
          %v2940 = vpop.permute.xlu0 %2939
          %2943 = vset.pattern.permute.xlu0 0
          %2944 = vperm.xlu0 %2943, %v2840
          %v2945 = vpop.permute.xlu0 %2944
          %2948 = vset.pattern.permute.xlu0 0
          %2949 = vperm.xlu0 %2948, %v2845
          %v2950 = vpop.permute.xlu0 %2949
          %2953 = vset.pattern.permute.xlu0 0
          %2954 = vperm.xlu0 %2953, %v2850
          %v2955 = vpop.permute.xlu0 %2954
          %2958 = vset.pattern.permute.xlu0 0
          %2959 = vperm.xlu0 %2958, %v2855
          %v2960 = vpop.permute.xlu0 %2959
          %2963 = vset.pattern.permute.xlu0 0
          %2964 = vperm.xlu0 %2963, %v2860
          %v2965 = vpop.permute.xlu0 %2964
          %2968 = vset.pattern.permute.xlu0 0
          %2969 = vperm.xlu0 %2968, %v2865
          %v2970 = vpop.permute.xlu0 %2969
          %2973 = vset.pattern.permute.xlu0 0
          %2974 = vperm.xlu0 %2973, %v2870
          %v2975 = vpop.permute.xlu0 %2974
          %2978 = vset.pattern.permute.xlu0 0
          %2979 = vperm.xlu0 %2978, %v2875
          %v2980 = vpop.permute.xlu0 %2979
          %2983 = vset.pattern.permute.xlu0 0
          %2984 = vperm.xlu0 %2983, %v2880
          %v2985 = vpop.permute.xlu0 %2984
          %2988 = vset.pattern.permute.xlu0 0
          %2989 = vperm.xlu0 %2988, %v2885
          %v2990 = vpop.permute.xlu0 %2989
          %2993 = vset.pattern.permute.xlu0 0
          %2994 = vperm.xlu0 %2993, %v2890
          %v2995 = vpop.permute.xlu0 %2994
          %2998 = vset.pattern.permute.xlu0 0
          %2999 = vperm.xlu0 %2998, %v2895
          %v3000 = vpop.permute.xlu0 %2999
          %3003 = vset.pattern.permute.xlu0 0
          %3004 = vperm.xlu0 %3003, %v2900
          %v3005 = vpop.permute.xlu0 %3004
          %vm3007 = vcmp.ge.f32.partialorder %v2926, %v2930
          %vm3008 = vcmp.ge.f32.partialorder %v2926, %v2935
          %vm3009 = vcmp.ge.f32.partialorder %v2926, %v2940
          %vm3010 = vcmp.ge.f32.partialorder %v2926, %v2945
          %vm3011 = vcmp.ge.f32.partialorder %v2926, %v2950
          %vm3012 = vcmp.ge.f32.partialorder %v2926, %v2955
          %vm3013 = vcmp.ge.f32.partialorder %v2926, %v2960
          %vm3014 = vcmp.ge.f32.partialorder %v2926, %v2965
          %vm3015 = vcmp.ge.f32.partialorder %v2926, %v2970
          %vm3016 = vcmp.ge.f32.partialorder %v2926, %v2975
          %vm3017 = vcmp.ge.f32.partialorder %v2926, %v2980
          %vm3018 = vcmp.ge.f32.partialorder %v2926, %v2985
          %vm3019 = vcmp.ge.f32.partialorder %v2926, %v2990
          %vm3020 = vcmp.ge.f32.partialorder %v2926, %v2995
          %vm3021 = vcmp.ge.f32.partialorder %v2926, %v3000
          %vm3022 = vcmp.ge.f32.partialorder %v2926, %v3005
          %3024 = vset.pattern.permute.xlu0 0
          %3025 = vperm.xlu0 %3024, %v2903
          %v3026 = vpop.permute.xlu0 %3025
          %3029 = vset.pattern.permute.xlu0 0
          %3030 = vperm.xlu0 %3029, %v2904
          %v3031 = vpop.permute.xlu0 %3030
          %3034 = vset.pattern.permute.xlu0 0
          %3035 = vperm.xlu0 %3034, %v2905
          %v3036 = vpop.permute.xlu0 %3035
          %3039 = vset.pattern.permute.xlu0 0
          %3040 = vperm.xlu0 %3039, %v2906
          %v3041 = vpop.permute.xlu0 %3040
          %3044 = vset.pattern.permute.xlu0 0
          %3045 = vperm.xlu0 %3044, %v2907
          %v3046 = vpop.permute.xlu0 %3045
          %3049 = vset.pattern.permute.xlu0 0
          %3050 = vperm.xlu0 %3049, %v2908
          %v3051 = vpop.permute.xlu0 %3050
          %3054 = vset.pattern.permute.xlu0 0
          %3055 = vperm.xlu0 %3054, %v2909
          %v3056 = vpop.permute.xlu0 %3055
          %3059 = vset.pattern.permute.xlu0 0
          %3060 = vperm.xlu0 %3059, %v2910
          %v3061 = vpop.permute.xlu0 %3060
          %3064 = vset.pattern.permute.xlu0 0
          %3065 = vperm.xlu0 %3064, %v2911
          %v3066 = vpop.permute.xlu0 %3065
          %3069 = vset.pattern.permute.xlu0 0
          %3070 = vperm.xlu0 %3069, %v2912
          %v3071 = vpop.permute.xlu0 %3070
          %3074 = vset.pattern.permute.xlu0 0
          %3075 = vperm.xlu0 %3074, %v2913
          %v3076 = vpop.permute.xlu0 %3075
          %3079 = vset.pattern.permute.xlu0 0
          %3080 = vperm.xlu0 %3079, %v2914
          %v3081 = vpop.permute.xlu0 %3080
          %3084 = vset.pattern.permute.xlu0 0
          %3085 = vperm.xlu0 %3084, %v2915
          %v3086 = vpop.permute.xlu0 %3085
          %3089 = vset.pattern.permute.xlu0 0
          %3090 = vperm.xlu0 %3089, %v2916
          %v3091 = vpop.permute.xlu0 %3090
          %3094 = vset.pattern.permute.xlu0 0
          %3095 = vperm.xlu0 %3094, %v2917
          %v3096 = vpop.permute.xlu0 %3095
          %3099 = vset.pattern.permute.xlu0 0
          %3100 = vperm.xlu0 %3099, %v2918
          %v3101 = vpop.permute.xlu0 %3100
          %vm3103 = vcmp.lt.f32.partialorder %v2926, %v3026
          %vm3104 = vcmp.lt.f32.partialorder %v2926, %v3031
          %vm3105 = vcmp.lt.f32.partialorder %v2926, %v3036
          %vm3106 = vcmp.lt.f32.partialorder %v2926, %v3041
          %vm3107 = vcmp.lt.f32.partialorder %v2926, %v3046
          %vm3108 = vcmp.lt.f32.partialorder %v2926, %v3051
          %vm3109 = vcmp.lt.f32.partialorder %v2926, %v3056
          %vm3110 = vcmp.lt.f32.partialorder %v2926, %v3061
          %vm3111 = vcmp.lt.f32.partialorder %v2926, %v3066
          %vm3112 = vcmp.lt.f32.partialorder %v2926, %v3071
          %vm3113 = vcmp.lt.f32.partialorder %v2926, %v3076
          %vm3114 = vcmp.lt.f32.partialorder %v2926, %v3081
          %vm3115 = vcmp.lt.f32.partialorder %v2926, %v3086
          %vm3116 = vcmp.lt.f32.partialorder %v2926, %v3091
          %vm3117 = vcmp.lt.f32.partialorder %v2926, %v3096
          %vm3118 = vcmp.lt.f32.partialorder %v2926, %v3101
          %vm3119 = vmand %vm3007, %vm3103
          %vm3120 = vmand %vm3008, %vm3104
          %vm3121 = vmand %vm3009, %vm3105
          %vm3122 = vmand %vm3010, %vm3106
          %vm3123 = vmand %vm3011, %vm3107
          %vm3124 = vmand %vm3012, %vm3108
          %vm3125 = vmand %vm3013, %vm3109
          %vm3126 = vmand %vm3014, %vm3110
          %vm3127 = vmand %vm3015, %vm3111
          %vm3128 = vmand %vm3016, %vm3112
          %vm3129 = vmand %vm3017, %vm3113
          %vm3130 = vmand %vm3018, %vm3114
          %vm3131 = vmand %vm3019, %vm3115
          %vm3132 = vmand %vm3020, %vm3116
          %vm3133 = vmand %vm3021, %vm3117
          %vm3134 = vmand %vm3022, %vm3118
          %v3135 = vsel %vm3119, 1, 0
          %v3136 = vsel %vm3120, 1, 0
          %v3137 = vsel %vm3121, 1, 0
          %v3138 = vsel %vm3122, 1, 0
          %v3139 = vsel %vm3123, 1, 0
          %v3140 = vsel %vm3124, 1, 0
          %v3141 = vsel %vm3125, 1, 0
          %v3142 = vsel %vm3126, 1, 0
          %v3143 = vsel %vm3127, 1, 0
          %v3144 = vsel %vm3128, 1, 0
          %v3145 = vsel %vm3129, 1, 0
          %v3146 = vsel %vm3130, 1, 0
          %v3147 = vsel %vm3131, 1, 0
          %v3148 = vsel %vm3132, 1, 0
          %v3149 = vsel %vm3133, 1, 0
          %v3150 = vsel %vm3134, 1, 0
          %v3151 = vcvt.s32.f32 %v3135
          %v3152 = vcvt.s32.f32 %v3136
          %v3153 = vcvt.s32.f32 %v3137
          %v3154 = vcvt.s32.f32 %v3138
          %v3155 = vcvt.s32.f32 %v3139
          %v3156 = vcvt.s32.f32 %v3140
          %v3157 = vcvt.s32.f32 %v3141
          %v3158 = vcvt.s32.f32 %v3142
          %v3159 = vcvt.s32.f32 %v3143
          %v3160 = vcvt.s32.f32 %v3144
          %v3161 = vcvt.s32.f32 %v3145
          %v3162 = vcvt.s32.f32 %v3146
          %v3163 = vcvt.s32.f32 %v3147
          %v3164 = vcvt.s32.f32 %v3148
          %v3165 = vcvt.s32.f32 %v3149
          %v3166 = vcvt.s32.f32 %v3150
          %v3167 = vlaneseq
          %v3168 = vshrl.u32 %v3167, 7
          %v3169 = vsub.s32 1, %v3168
          %v3170 = vrot.slane %v2584, %v3169
          %v3171 = vlaneseq
          %v3172 = vshrl.u32 %v3171, 7
          %v3173 = vsub.s32 0, %v3172
          %v3174 = vrot.slane %v2647, %v3173
          %v3175 = vsel %vm1087, %v3170, %v3174
          %v3176 = vlaneseq
          %v3177 = vshrl.u32 %v3176, 7
          %v3178 = vsub.s32 0, %v3177
          %v3179 = vrot.slane %v2620, %v3178
          %v3180 = vsel %vm558, %v3179, %v3175
          %3181 = vmatprep.subr.mxu0 0.0
          %3182 = vmatpush1.msra.mxu0 %v3166
          %3183 = vmatprep.subr.mxu0 0.0
          %3184 = vmatpush1.msra.mxu0 %v3165
          %3185 = vmatprep.subr.mxu0 0.0
          %3186 = vmatpush1.msra.mxu0 %v3164
          %3187 = vmatprep.subr.mxu0 0.0
          %3188 = vmatpush1.msra.mxu0 %v3163
          %3189 = vmatprep.subr.mxu0 0.0
          %3190 = vmatpush1.msra.mxu0 %v3162
          %3191 = vmatprep.subr.mxu0 0.0
          %3192 = vmatpush1.msra.mxu0 %v3161
          %3193 = vmatprep.subr.mxu0 0.0
          %3194 = vmatpush1.msra.mxu0 %v3160
          %3195 = vmatprep.subr.mxu0 0.0
          %3196 = vmatpush1.msra.mxu0 %v3159
          %3197 = vmatprep.subr.mxu0 0.0
          %3198 = vmatpush1.msra.mxu0 %v3158
          %3199 = vmatprep.subr.mxu0 0.0
          %3200 = vmatpush1.msra.mxu0 %v3157
          %3201 = vmatprep.subr.mxu0 0.0
          %3202 = vmatpush1.msra.mxu0 %v3156
          %3203 = vmatprep.subr.mxu0 0.0
          %3204 = vmatpush1.msra.mxu0 %v3155
          %3205 = vmatprep.subr.mxu0 0.0
          %3206 = vmatpush1.msra.mxu0 %v3154
          %3207 = vmatprep.subr.mxu0 0.0
          %3208 = vmatpush1.msra.mxu0 %v3153
          %3209 = vmatprep.subr.mxu0 0.0
          %3210 = vmatpush1.msra.mxu0 %v3152
          %3211 = vmatprep.subr.mxu0 0.0
          %3212 = vmatpush1.msra.mxu0 %v3151
          %3213 = vmatprep.subr.mxu0 0.0
          %3214 = vmatpush2.msra.mxu0 0.0
          %3215 = vmatprep.subr.mxu0 0.0
          %3216 = vmatpush2.msra.mxu0 0.0
          %3217 = vmatprep.subr.mxu0 0.0
          %3218 = vmatpush2.msra.mxu0 0.0
          %3219 = vmatprep.subr.mxu0 0.0
          %3220 = vmatpush2.msra.mxu0 0.0
          %3221 = vmatprep.subr.mxu0 0.0
          %3222 = vmatpush2.msra.mxu0 0.0
          %3223 = vmatprep.subr.mxu0 0.0
          %3224 = vmatpush2.msra.mxu0 0.0
          %3225 = vmatprep.subr.mxu0 0.0
          %3226 = vmatpush2.msra.mxu0 0.0
          %3227 = vmatprep.subr.mxu0 0.0
          %3228 = vmatpush2.msra.mxu0 0.0
          %3229 = vmatprep.subr.mxu0 0.0
          %3230 = vmatpush2.msra.mxu0 0.0
          %3231 = vmatprep.subr.mxu0 0.0
          %3232 = vmatpush2.msra.mxu0 0.0
          %3233 = vmatprep.subr.mxu0 0.0
          %3234 = vmatpush2.msra.mxu0 0.0
          %3235 = vmatprep.subr.mxu0 0.0
          %3236 = vmatpush2.msra.mxu0 0.0
          %3237 = vmatprep.subr.mxu0 0.0
          %3238 = vmatpush2.msra.mxu0 0.0
          %3239 = vmatprep.subr.mxu0 0.0
          %3240 = vmatpush2.msra.mxu0 0.0
          %3241 = vmatprep.subr.mxu0 0.0
          %3242 = vmatpush2.msra.mxu0 0.0
          %3243 = vmatprep.subr.mxu0 0.0
          %3244 = vmatpush2.msra.mxu0 0.0
          %3245 = vmatprep.mubr.f32.mxu0 0.0
          %3246 = vmatmul.mubr.f32.gmra.mxu0 %v3180
          %v3247 = vpop.f32.mrf.mxu0
          %v3248 = vadd.f32 0.0, %v3247
          %v3249 = vpop.f32.mrf.mxu0
          %3250 = vdwg.mxu0
          %vm3251 = vcmp.eq.s32.totalorder %v398, 3
          %v3252 = vsel %vm3251, 1, 0
          %vm3253 = vcmp.eq.s32.totalorder %v3252, 1
          %v3254 = vlaneseq
          %v3255 = vshrl.u32 %v3254, 7
          %v3256 = vsub.s32 2, %v3255
          %v3257 = vrot.slane %v3248, %v3256
          %v3258 = vsel %vm3253, %v3257, %v2563
          %v3259 = vlaneseq
          %v3260 = vshrl.u32 %v3259, 7
          %v3261 = vsub.s32 0, %v3260
          %v3262 = vrot.slane %v3248, %v3261
          %v3263 = vsel %vm3253, %v3262, %v2568
          %s3264 = sadd.s32 %s460, 4
          %s3265 = sadd.s32 %s458, 4
          %s3266 = scalar_lea.vmem %s326, %s3265 [#allocation12]
          %v3267 = vld [vmem:[%s3266] sm:$0x1]
          %s3268 = scalar_lea.vmem %s335, %s3265 [#allocation14]
          %v3269 = vld [vmem:[%s3268] sm:$0x1]
          %p3270 = scmp.gt.s32.totalorder %s2569, 0
          %s3271 = scalar_select %p3270, %s2569, 0
          %s3272 = sld [smem:[#allocation5 + %s3271]]
          %s3273 = sld [smem:[#allocation5 + %s3264]]
          %s3274 = sld [smem:[#allocation6 + %s3264]]
          %s3275 = sld [smem:[#allocation7 + %s3264]]
          %v3277 = vrot.slane %v3267, 7
          %v3279 = vadd.f32 %v3248, %v3277
          %v3280 = vsub.f32 %v3248, 1.0
          %v3281 = vmul.f32 %v3280, 0.6372646
          %v3282 = vmul.f32 %v3281, 1.442695
          %v3283 = vpow.pop %v3282
          %v3284 = vmul.f32 %v3283, 5.7326083
          %v3285 = vadd.f32 %v3284, -1.5961449
          %v3286 = vmul.f32 %v3280, -2.237382
          %v3287 = vadd.f32 %v3285, %v3286
          %v3288 = vrsqrt.pop %v3248
          %v3289 = vmul.f32 %v3248, %v3288
          %vm3290 = vcmp.eq.f32.partialorder %v3248, inf
          %v3291 = vsel %vm3290, %v3248, %v3289
          %vm3292 = vcmp.eq.f32.partialorder %v3248, 0.0
          %v3293 = vand.u32 %v3248, 2147483648
          %v3294 = vsel %vm3292, %v3293, %v3291
          %v3295 = vmul.f32 %v3294, -2.5447896
          %v3296 = vmul.f32 %v3295, 1.442695
          %v3297 = vpow.pop %v3296
          %v3298 = vsub.f32 0.07848956, %v3297
          %v3299 = vmul.f32 %v3298, 0.6412372
          %v3300 = vadd.f32 %v3287, %v3299
          %v3301 = vstv %s3272
          %v3302 = vmul.f32 %v3301, %v3279
          %v3304 = vrot.slane %v3302, 1
          %v3306 = vsub.f32 %v3300, %v3304
          %s3307 = smul.f32 %s3272, %s392
          %v3308 = vstv %s3307
          %v3309 = vmul.f32 %v3308, %v3306
          %v3310 = vsub.f32 %v3248, %v3309
          %v3311 = vadd.f32 %v3310, %v3269
          %vm3312 = vcmp.gt.f32.partialorder %v3311, 1.0
          %v3313 = vsel %vm3312, 1.0, %v3311
          %vm3314 = vcmp.lt.f32.partialorder %v3313, 0.0
          %v3315 = vsel %vm3314, 1e-10, %v3313
          %v3316 = vsub.f32 %v3315, 1.0
          %v3317 = vmul.f32 %v3316, 0.6372646
          %v3318 = vmul.f32 %v3317, 1.442695
          %v3319 = vpow.pop %v3318
          %v3320 = vmul.f32 %v3319, 5.7326083
          %v3321 = vadd.f32 %v3320, -1.5961449
          %v3322 = vmul.f32 %v3316, -2.237382
          %v3323 = vadd.f32 %v3321, %v3322
          %v3324 = vrsqrt.pop %v3315
          %v3325 = vmul.f32 %v3315, %v3324
          %vm3326 = vcmp.eq.f32.partialorder %v3315, inf
          %v3327 = vsel %vm3326, %v3315, %v3325
          %vm3328 = vcmp.eq.f32.partialorder %v3315, 0.0
          %v3329 = vand.u32 %v3315, 2147483648
          %v3330 = vsel %vm3328, %v3329, %v3327
          %v3331 = vmul.f32 %v3330, -2.5447896
          %v3332 = vmul.f32 %v3331, 1.442695
          %v3333 = vpow.pop %v3332
          %v3334 = vsub.f32 0.07848956, %v3333
          %v3335 = vmul.f32 %v3334, 0.6412372
          %v3336 = vadd.f32 %v3323, %v3335
          %v3337 = vstv %s3273
          %v3338 = vmul.f32 %v3337, %v3279
          %v3340 = vrot.slane %v3338, 1
          %v3342 = vsub.f32 %v3336, %v3340
          %v3343 = vstv %s3274
          %v3344 = vsub.f32 %v3342, %v3343
          %v3345 = vmul.f32 %v3344, 100.0
          %v3346 = vmul.f32 %v3345, 0.5
          %v3347 = vmul.f32 %v3346, %v3345
          %v3348 = vsub.f32 3.6862316, %v3347
          %v3349 = vsel %vm536, %v3348, -inf
          %3350 = vmax.xlane.f32.xlu0 %v3349
          %v3351 = vpop.xlane.xlu0 %3350
          %v3352 = vsub.f32 %v3348, %v3351
          %v3353 = vmul.f32 %v3352, 1.442695
          %v3354 = vpow.pop %v3353
          %v3355 = vsel %vm536, %v3354, 0.0
          %3356 = vadd.xlane.f32.xlu0 %v3355
          %v3357 = vpop.xlane.xlu0 %3356
          %v3358 = vlog2.pop %v3357
          %v3359 = vmul.f32 %v3358, 0.6931472
          %v3360 = vadd.f32 %v3351, %v3359
          %v3361 = vsub.f32 %v3360, 4.8520303
          %p3362 = scmp.lt.s32.totalorder %s3264, 100
          %s3363 = scalar_select %p3362, 1, 0
          %v3364 = vstv %s3363
          %vm3365 = vcmp.eq.s32.totalorder %v3364, 1
          %v3366 = vsel %vm3365, %v3361, 0.0
          %v3367 = vadd.f32 %v2672, %v3366
          %v3368 = vlaneseq
          %v3369 = vshrl.u32 %v3368, 7
          %v3370 = vsub.s32 0, %v3369
          %v3371 = vrot.slane %v3354, %v3370
          %v3372 = vsel %vm558, %v3371, 0.0
          %3373 = vmatprep.subr.mxu0 0.0
          %3374 = vmatpush1.xpose.msra.mxu0 0.0
          %3375 = vmatprep.subr.mxu0 0.0
          %3376 = vmatpush1.xpose.msra.mxu0 0.0
          %3377 = vmatprep.subr.mxu0 0.0
          %3378 = vmatpush1.xpose.msra.mxu0 0.0
          %3379 = vmatprep.subr.mxu0 0.0
          %3380 = vmatpush1.xpose.msra.mxu0 0.0
          %3381 = vmatprep.subr.mxu0 0.0
          %3382 = vmatpush1.xpose.msra.mxu0 0.0
          %3383 = vmatprep.subr.mxu0 0.0
          %3384 = vmatpush1.xpose.msra.mxu0 0.0
          %3385 = vmatprep.subr.mxu0 0.0
          %3386 = vmatpush1.xpose.msra.mxu0 0.0
          %3387 = vmatprep.subr.mxu0 0.0
          %3388 = vmatpush1.xpose.msra.mxu0 0.0
          %3389 = vmatprep.subr.mxu0 0.0
          %3390 = vmatpush1.xpose.msra.mxu0 0.0
          %3391 = vmatprep.subr.mxu0 0.0
          %3392 = vmatpush1.xpose.msra.mxu0 0.0
          %3393 = vmatprep.subr.mxu0 0.0
          %3394 = vmatpush1.xpose.msra.mxu0 0.0
          %3395 = vmatprep.subr.mxu0 0.0
          %3396 = vmatpush1.xpose.msra.mxu0 0.0
          %3397 = vmatprep.subr.mxu0 0.0
          %3398 = vmatpush1.xpose.msra.mxu0 0.0
          %3399 = vmatprep.subr.mxu0 0.0
          %3400 = vmatpush1.xpose.msra.mxu0 0.0
          %3401 = vmatprep.subr.mxu0 0.0
          %3402 = vmatpush1.xpose.msra.mxu0 0.0
          %3403 = vmatprep.subr.mxu0 0.0
          %3404 = vmatpush1.xpose.msra.mxu0 %v3372
          %3405 = vmatprep.subr.mxu0 0.0
          %3406 = vmatpush2.xpose.msra.mxu0 0.0
          %3407 = vmatprep.subr.mxu0 0.0
          %3408 = vmatpush2.xpose.msra.mxu0 0.0
          %3409 = vmatprep.subr.mxu0 0.0
          %3410 = vmatpush2.xpose.msra.mxu0 0.0
          %3411 = vmatprep.subr.mxu0 0.0
          %3412 = vmatpush2.xpose.msra.mxu0 0.0
          %3413 = vmatprep.subr.mxu0 0.0
          %3414 = vmatpush2.xpose.msra.mxu0 0.0
          %3415 = vmatprep.subr.mxu0 0.0
          %3416 = vmatpush2.xpose.msra.mxu0 0.0
          %3417 = vmatprep.subr.mxu0 0.0
          %3418 = vmatpush2.xpose.msra.mxu0 0.0
          %3419 = vmatprep.subr.mxu0 0.0
          %3420 = vmatpush2.xpose.msra.mxu0 0.0
          %3421 = vmatprep.subr.mxu0 0.0
          %3422 = vmatpush2.xpose.msra.mxu0 0.0
          %3423 = vmatprep.subr.mxu0 0.0
          %3424 = vmatpush2.xpose.msra.mxu0 0.0
          %3425 = vmatprep.subr.mxu0 0.0
          %3426 = vmatpush2.xpose.msra.mxu0 0.0
          %3427 = vmatprep.subr.mxu0 0.0
          %3428 = vmatpush2.xpose.msra.mxu0 0.0
          %3429 = vmatprep.subr.mxu0 0.0
          %3430 = vmatpush2.xpose.msra.mxu0 0.0
          %3431 = vmatprep.subr.mxu0 0.0
          %3432 = vmatpush2.xpose.msra.mxu0 0.0
          %3433 = vmatprep.subr.mxu0 0.0
          %3434 = vmatpush2.xpose.msra.mxu0 0.0
          %3435 = vmatprep.subr.mxu0 0.0
          %3436 = vmatpush2.xpose.msra.mxu0 0.0
          %3437 = vmatprep.mubr.f32.mxu0 0.0
          %3438 = vmatmul.mubr.f32.gmra.mxu0 %v564
          %v3439 = vpop.f32.mrf.mxu0
          %v3440 = vadd.f32 0.0, %v3439
          %v3441 = vpop.f32.mrf.mxu0
          %3442 = vmatprep.mubr.f32.mxu0 0.0
          %3443 = vmatmul.mubr.f32.gmra.mxu0 %v565
          %v3444 = vpop.f32.mrf.mxu0
          %v3445 = vadd.f32 0.0, %v3444
          %v3446 = vpop.f32.mrf.mxu0
          %3447 = vmatprep.mubr.f32.mxu0 0.0
          %3448 = vmatmul.mubr.f32.gmra.mxu0 %v566
          %v3449 = vpop.f32.mrf.mxu0
          %v3450 = vadd.f32 0.0, %v3449
          %v3451 = vpop.f32.mrf.mxu0
          %3452 = vmatprep.mubr.f32.mxu0 0.0
          %3453 = vmatmul.mubr.f32.gmra.mxu0 %v567
          %v3454 = vpop.f32.mrf.mxu0
          %v3455 = vadd.f32 0.0, %v3454
          %v3456 = vpop.f32.mrf.mxu0
          %3457 = vmatprep.mubr.f32.mxu0 0.0
          %3458 = vmatmul.mubr.f32.gmra.mxu0 %v568
          %v3459 = vpop.f32.mrf.mxu0
          %v3460 = vadd.f32 0.0, %v3459
          %v3461 = vpop.f32.mrf.mxu0
          %3462 = vmatprep.mubr.f32.mxu0 0.0
          %3463 = vmatmul.mubr.f32.gmra.mxu0 %v569
          %v3464 = vpop.f32.mrf.mxu0
          %v3465 = vadd.f32 0.0, %v3464
          %v3466 = vpop.f32.mrf.mxu0
          %3467 = vmatprep.mubr.f32.mxu0 0.0
          %3468 = vmatmul.mubr.f32.gmra.mxu0 %v570
          %v3469 = vpop.f32.mrf.mxu0
          %v3470 = vadd.f32 0.0, %v3469
          %v3471 = vpop.f32.mrf.mxu0
          %3472 = vmatprep.mubr.f32.mxu0 0.0
          %3473 = vmatmul.mubr.f32.gmra.mxu0 %v571
          %v3474 = vpop.f32.mrf.mxu0
          %v3475 = vadd.f32 0.0, %v3474
          %v3476 = vpop.f32.mrf.mxu0
          %3477 = vmatprep.mubr.f32.mxu0 0.0
          %3478 = vmatmul.mubr.f32.gmra.mxu0 %v572
          %v3479 = vpop.f32.mrf.mxu0
          %v3480 = vadd.f32 0.0, %v3479
          %v3481 = vpop.f32.mrf.mxu0
          %3482 = vmatprep.mubr.f32.mxu0 0.0
          %3483 = vmatmul.mubr.f32.gmra.mxu0 %v573
          %v3484 = vpop.f32.mrf.mxu0
          %v3485 = vadd.f32 0.0, %v3484
          %v3486 = vpop.f32.mrf.mxu0
          %3487 = vmatprep.mubr.f32.mxu0 0.0
          %3488 = vmatmul.mubr.f32.gmra.mxu0 %v574
          %v3489 = vpop.f32.mrf.mxu0
          %v3490 = vadd.f32 0.0, %v3489
          %v3491 = vpop.f32.mrf.mxu0
          %3492 = vmatprep.mubr.f32.mxu0 0.0
          %3493 = vmatmul.mubr.f32.gmra.mxu0 %v575
          %v3494 = vpop.f32.mrf.mxu0
          %v3495 = vadd.f32 0.0, %v3494
          %v3496 = vpop.f32.mrf.mxu0
          %3497 = vmatprep.mubr.f32.mxu0 0.0
          %3498 = vmatmul.mubr.f32.gmra.mxu0 %v576
          %v3499 = vpop.f32.mrf.mxu0
          %v3500 = vadd.f32 0.0, %v3499
          %v3501 = vpop.f32.mrf.mxu0
          %3502 = vmatprep.mubr.f32.mxu0 0.0
          %3503 = vmatmul.mubr.f32.gmra.mxu0 %v577
          %v3504 = vpop.f32.mrf.mxu0
          %v3505 = vadd.f32 0.0, %v3504
          %v3506 = vpop.f32.mrf.mxu0
          %3507 = vmatprep.mubr.f32.mxu0 0.0
          %3508 = vmatmul.mubr.f32.gmra.mxu0 %v578
          %v3509 = vpop.f32.mrf.mxu0
          %v3510 = vadd.f32 0.0, %v3509
          %v3511 = vpop.f32.mrf.mxu0
          %3512 = vmatprep.mubr.f32.mxu0 0.0
          %3513 = vmatmul.mubr.f32.gmra.mxu0 %v579
          %v3514 = vpop.f32.mrf.mxu0
          %v3515 = vadd.f32 0.0, %v3514
          %v3516 = vpop.f32.mrf.mxu0
          %3517 = vmatprep.mubr.f32.mxu0 0.0
          %3518 = vmatmul.mubr.f32.gmra.mxu0 %v580
          %v3519 = vpop.f32.mrf.mxu0
          %v3520 = vadd.f32 0.0, %v3519
          %v3521 = vpop.f32.mrf.mxu0
          %3522 = vmatprep.mubr.f32.mxu0 0.0
          %3523 = vmatmul.mubr.f32.gmra.mxu0 %v581
          %v3524 = vpop.f32.mrf.mxu0
          %v3525 = vadd.f32 0.0, %v3524
          %v3526 = vpop.f32.mrf.mxu0
          %3527 = vmatprep.mubr.f32.mxu0 0.0
          %3528 = vmatmul.mubr.f32.gmra.mxu0 %v582
          %v3529 = vpop.f32.mrf.mxu0
          %v3530 = vadd.f32 0.0, %v3529
          %v3531 = vpop.f32.mrf.mxu0
          %3532 = vmatprep.mubr.f32.mxu0 0.0
          %3533 = vmatmul.mubr.f32.gmra.mxu0 %v583
          %v3534 = vpop.f32.mrf.mxu0
          %v3535 = vadd.f32 0.0, %v3534
          %v3536 = vpop.f32.mrf.mxu0
          %3537 = vmatprep.mubr.f32.mxu0 0.0
          %3538 = vmatmul.mubr.f32.gmra.mxu0 %v584
          %v3539 = vpop.f32.mrf.mxu0
          %v3540 = vadd.f32 0.0, %v3539
          %v3541 = vpop.f32.mrf.mxu0
          %3542 = vmatprep.mubr.f32.mxu0 0.0
          %3543 = vmatmul.mubr.f32.gmra.mxu0 %v585
          %v3544 = vpop.f32.mrf.mxu0
          %v3545 = vadd.f32 0.0, %v3544
          %v3546 = vpop.f32.mrf.mxu0
          %3547 = vmatprep.mubr.f32.mxu0 0.0
          %3548 = vmatmul.mubr.f32.gmra.mxu0 %v586
          %v3549 = vpop.f32.mrf.mxu0
          %v3550 = vadd.f32 0.0, %v3549
          %v3551 = vpop.f32.mrf.mxu0
          %3552 = vmatprep.mubr.f32.mxu0 0.0
          %3553 = vmatmul.mubr.f32.gmra.mxu0 %v587
          %v3554 = vpop.f32.mrf.mxu0
          %v3555 = vadd.f32 0.0, %v3554
          %v3556 = vpop.f32.mrf.mxu0
          %3557 = vmatprep.mubr.f32.mxu0 0.0
          %3558 = vmatmul.mubr.f32.gmra.mxu0 %v588
          %v3559 = vpop.f32.mrf.mxu0
          %v3560 = vadd.f32 0.0, %v3559
          %v3561 = vpop.f32.mrf.mxu0
          %3562 = vmatprep.mubr.f32.mxu0 0.0
          %3563 = vmatmul.mubr.f32.gmra.mxu0 %v589
          %v3564 = vpop.f32.mrf.mxu0
          %v3565 = vadd.f32 0.0, %v3564
          %v3566 = vpop.f32.mrf.mxu0
          %3567 = vmatprep.mubr.f32.mxu0 0.0
          %3568 = vmatmul.mubr.f32.gmra.mxu0 %v590
          %v3569 = vpop.f32.mrf.mxu0
          %v3570 = vadd.f32 0.0, %v3569
          %v3571 = vpop.f32.mrf.mxu0
          %3572 = vmatprep.mubr.f32.mxu0 0.0
          %3573 = vmatmul.mubr.f32.gmra.mxu0 %v591
          %v3574 = vpop.f32.mrf.mxu0
          %v3575 = vadd.f32 0.0, %v3574
          %v3576 = vpop.f32.mrf.mxu0
          %3577 = vmatprep.mubr.f32.mxu0 0.0
          %3578 = vmatmul.mubr.f32.gmra.mxu0 %v592
          %v3579 = vpop.f32.mrf.mxu0
          %v3580 = vadd.f32 0.0, %v3579
          %v3581 = vpop.f32.mrf.mxu0
          %3582 = vmatprep.mubr.f32.mxu0 0.0
          %3583 = vmatmul.mubr.f32.gmra.mxu0 %v593
          %v3584 = vpop.f32.mrf.mxu0
          %v3585 = vadd.f32 0.0, %v3584
          %v3586 = vpop.f32.mrf.mxu0
          %3587 = vmatprep.mubr.f32.mxu0 0.0
          %3588 = vmatmul.mubr.f32.gmra.mxu0 %v594
          %v3589 = vpop.f32.mrf.mxu0
          %v3590 = vadd.f32 0.0, %v3589
          %v3591 = vpop.f32.mrf.mxu0
          %3592 = vmatprep.mubr.f32.mxu0 0.0
          %3593 = vmatmul.mubr.f32.gmra.mxu0 %v595
          %v3594 = vpop.f32.mrf.mxu0
          %v3595 = vadd.f32 0.0, %v3594
          %v3596 = vpop.f32.mrf.mxu0
          %3597 = vdwg.mxu0
          %v3598 = vadd.f32 %v3440, %v430
          %v3599 = vadd.f32 %v3445, %v431
          %v3600 = vadd.f32 %v3450, %v432
          %v3601 = vadd.f32 %v3455, %v433
          %v3602 = vadd.f32 %v3460, %v434
          %v3603 = vadd.f32 %v3465, %v435
          %v3604 = vadd.f32 %v3470, %v436
          %v3605 = vadd.f32 %v3475, %v437
          %v3606 = vadd.f32 %v3480, %v438
          %v3607 = vadd.f32 %v3485, %v439
          %v3608 = vadd.f32 %v3490, %v440
          %v3609 = vadd.f32 %v3495, %v441
          %v3610 = vadd.f32 %v3500, %v442
          %v3611 = vadd.f32 %v3505, %v443
          %v3612 = vadd.f32 %v3510, %v444
          %v3613 = vadd.f32 %v3515, %v445
          %s3614 = smul.f32 %s3275, 0.0078125
          %v3615 = vstv %s3614
          %v3616 = vadd.f32 %v396, %v3615
          %v3617 = vmul.f32 %v3616, %v3357
          %v3618 = vlaneseq
          %v3619 = vshrl.u32 %v3618, 7
          %v3620 = vsub.s32 0, %v3619
          %v3621 = vrot.slane %v3617, %v3620
          %3623 = vset.pattern.permute.xlu0 0
          %3624 = vperm.xlu0 %3623, %v3520
          %v3625 = vpop.permute.xlu0 %3624
          %3628 = vset.pattern.permute.xlu0 0
          %3629 = vperm.xlu0 %3628, %v3525
          %v3630 = vpop.permute.xlu0 %3629
          %3633 = vset.pattern.permute.xlu0 0
          %3634 = vperm.xlu0 %3633, %v3530
          %v3635 = vpop.permute.xlu0 %3634
          %3638 = vset.pattern.permute.xlu0 0
          %3639 = vperm.xlu0 %3638, %v3535
          %v3640 = vpop.permute.xlu0 %3639
          %3643 = vset.pattern.permute.xlu0 0
          %3644 = vperm.xlu0 %3643, %v3540
          %v3645 = vpop.permute.xlu0 %3644
          %3648 = vset.pattern.permute.xlu0 0
          %3649 = vperm.xlu0 %3648, %v3545
          %v3650 = vpop.permute.xlu0 %3649
          %3653 = vset.pattern.permute.xlu0 0
          %3654 = vperm.xlu0 %3653, %v3550
          %v3655 = vpop.permute.xlu0 %3654
          %3658 = vset.pattern.permute.xlu0 0
          %3659 = vperm.xlu0 %3658, %v3555
          %v3660 = vpop.permute.xlu0 %3659
          %3663 = vset.pattern.permute.xlu0 0
          %3664 = vperm.xlu0 %3663, %v3560
          %v3665 = vpop.permute.xlu0 %3664
          %3668 = vset.pattern.permute.xlu0 0
          %3669 = vperm.xlu0 %3668, %v3565
          %v3670 = vpop.permute.xlu0 %3669
          %3673 = vset.pattern.permute.xlu0 0
          %3674 = vperm.xlu0 %3673, %v3570
          %v3675 = vpop.permute.xlu0 %3674
          %3678 = vset.pattern.permute.xlu0 0
          %3679 = vperm.xlu0 %3678, %v3575
          %v3680 = vpop.permute.xlu0 %3679
          %3683 = vset.pattern.permute.xlu0 0
          %3684 = vperm.xlu0 %3683, %v3580
          %v3685 = vpop.permute.xlu0 %3684
          %3688 = vset.pattern.permute.xlu0 0
          %3689 = vperm.xlu0 %3688, %v3585
          %v3690 = vpop.permute.xlu0 %3689
          %3693 = vset.pattern.permute.xlu0 0
          %3694 = vperm.xlu0 %3693, %v3590
          %v3695 = vpop.permute.xlu0 %3694
          %3698 = vset.pattern.permute.xlu0 0
          %3699 = vperm.xlu0 %3698, %v3595
          %v3700 = vpop.permute.xlu0 %3699
          %vm3702 = vcmp.ge.f32.partialorder %v3621, %v3625
          %vm3703 = vcmp.ge.f32.partialorder %v3621, %v3630
          %vm3704 = vcmp.ge.f32.partialorder %v3621, %v3635
          %vm3705 = vcmp.ge.f32.partialorder %v3621, %v3640
          %vm3706 = vcmp.ge.f32.partialorder %v3621, %v3645
          %vm3707 = vcmp.ge.f32.partialorder %v3621, %v3650
          %vm3708 = vcmp.ge.f32.partialorder %v3621, %v3655
          %vm3709 = vcmp.ge.f32.partialorder %v3621, %v3660
          %vm3710 = vcmp.ge.f32.partialorder %v3621, %v3665
          %vm3711 = vcmp.ge.f32.partialorder %v3621, %v3670
          %vm3712 = vcmp.ge.f32.partialorder %v3621, %v3675
          %vm3713 = vcmp.ge.f32.partialorder %v3621, %v3680
          %vm3714 = vcmp.ge.f32.partialorder %v3621, %v3685
          %vm3715 = vcmp.ge.f32.partialorder %v3621, %v3690
          %vm3716 = vcmp.ge.f32.partialorder %v3621, %v3695
          %vm3717 = vcmp.ge.f32.partialorder %v3621, %v3700
          %3719 = vset.pattern.permute.xlu0 0
          %3720 = vperm.xlu0 %3719, %v3598
          %v3721 = vpop.permute.xlu0 %3720
          %3724 = vset.pattern.permute.xlu0 0
          %3725 = vperm.xlu0 %3724, %v3599
          %v3726 = vpop.permute.xlu0 %3725
          %3729 = vset.pattern.permute.xlu0 0
          %3730 = vperm.xlu0 %3729, %v3600
          %v3731 = vpop.permute.xlu0 %3730
          %3734 = vset.pattern.permute.xlu0 0
          %3735 = vperm.xlu0 %3734, %v3601
          %v3736 = vpop.permute.xlu0 %3735
          %3739 = vset.pattern.permute.xlu0 0
          %3740 = vperm.xlu0 %3739, %v3602
          %v3741 = vpop.permute.xlu0 %3740
          %3744 = vset.pattern.permute.xlu0 0
          %3745 = vperm.xlu0 %3744, %v3603
          %v3746 = vpop.permute.xlu0 %3745
          %3749 = vset.pattern.permute.xlu0 0
          %3750 = vperm.xlu0 %3749, %v3604
          %v3751 = vpop.permute.xlu0 %3750
          %3754 = vset.pattern.permute.xlu0 0
          %3755 = vperm.xlu0 %3754, %v3605
          %v3756 = vpop.permute.xlu0 %3755
          %3759 = vset.pattern.permute.xlu0 0
          %3760 = vperm.xlu0 %3759, %v3606
          %v3761 = vpop.permute.xlu0 %3760
          %3764 = vset.pattern.permute.xlu0 0
          %3765 = vperm.xlu0 %3764, %v3607
          %v3766 = vpop.permute.xlu0 %3765
          %3769 = vset.pattern.permute.xlu0 0
          %3770 = vperm.xlu0 %3769, %v3608
          %v3771 = vpop.permute.xlu0 %3770
          %3774 = vset.pattern.permute.xlu0 0
          %3775 = vperm.xlu0 %3774, %v3609
          %v3776 = vpop.permute.xlu0 %3775
          %3779 = vset.pattern.permute.xlu0 0
          %3780 = vperm.xlu0 %3779, %v3610
          %v3781 = vpop.permute.xlu0 %3780
          %3784 = vset.pattern.permute.xlu0 0
          %3785 = vperm.xlu0 %3784, %v3611
          %v3786 = vpop.permute.xlu0 %3785
          %3789 = vset.pattern.permute.xlu0 0
          %3790 = vperm.xlu0 %3789, %v3612
          %v3791 = vpop.permute.xlu0 %3790
          %3794 = vset.pattern.permute.xlu0 0
          %3795 = vperm.xlu0 %3794, %v3613
          %v3796 = vpop.permute.xlu0 %3795
          %vm3798 = vcmp.lt.f32.partialorder %v3621, %v3721
          %vm3799 = vcmp.lt.f32.partialorder %v3621, %v3726
          %vm3800 = vcmp.lt.f32.partialorder %v3621, %v3731
          %vm3801 = vcmp.lt.f32.partialorder %v3621, %v3736
          %vm3802 = vcmp.lt.f32.partialorder %v3621, %v3741
          %vm3803 = vcmp.lt.f32.partialorder %v3621, %v3746
          %vm3804 = vcmp.lt.f32.partialorder %v3621, %v3751
          %vm3805 = vcmp.lt.f32.partialorder %v3621, %v3756
          %vm3806 = vcmp.lt.f32.partialorder %v3621, %v3761
          %vm3807 = vcmp.lt.f32.partialorder %v3621, %v3766
          %vm3808 = vcmp.lt.f32.partialorder %v3621, %v3771
          %vm3809 = vcmp.lt.f32.partialorder %v3621, %v3776
          %vm3810 = vcmp.lt.f32.partialorder %v3621, %v3781
          %vm3811 = vcmp.lt.f32.partialorder %v3621, %v3786
          %vm3812 = vcmp.lt.f32.partialorder %v3621, %v3791
          %vm3813 = vcmp.lt.f32.partialorder %v3621, %v3796
          %vm3814 = vmand %vm3702, %vm3798
          %vm3815 = vmand %vm3703, %vm3799
          %vm3816 = vmand %vm3704, %vm3800
          %vm3817 = vmand %vm3705, %vm3801
          %vm3818 = vmand %vm3706, %vm3802
          %vm3819 = vmand %vm3707, %vm3803
          %vm3820 = vmand %vm3708, %vm3804
          %vm3821 = vmand %vm3709, %vm3805
          %vm3822 = vmand %vm3710, %vm3806
          %vm3823 = vmand %vm3711, %vm3807
          %vm3824 = vmand %vm3712, %vm3808
          %vm3825 = vmand %vm3713, %vm3809
          %vm3826 = vmand %vm3714, %vm3810
          %vm3827 = vmand %vm3715, %vm3811
          %vm3828 = vmand %vm3716, %vm3812
          %vm3829 = vmand %vm3717, %vm3813
          %v3830 = vsel %vm3814, 1, 0
          %v3831 = vsel %vm3815, 1, 0
          %v3832 = vsel %vm3816, 1, 0
          %v3833 = vsel %vm3817, 1, 0
          %v3834 = vsel %vm3818, 1, 0
          %v3835 = vsel %vm3819, 1, 0
          %v3836 = vsel %vm3820, 1, 0
          %v3837 = vsel %vm3821, 1, 0
          %v3838 = vsel %vm3822, 1, 0
          %v3839 = vsel %vm3823, 1, 0
          %v3840 = vsel %vm3824, 1, 0
          %v3841 = vsel %vm3825, 1, 0
          %v3842 = vsel %vm3826, 1, 0
          %v3843 = vsel %vm3827, 1, 0
          %v3844 = vsel %vm3828, 1, 0
          %v3845 = vsel %vm3829, 1, 0
          %v3846 = vcvt.s32.f32 %v3830
          %v3847 = vcvt.s32.f32 %v3831
          %v3848 = vcvt.s32.f32 %v3832
          %v3849 = vcvt.s32.f32 %v3833
          %v3850 = vcvt.s32.f32 %v3834
          %v3851 = vcvt.s32.f32 %v3835
          %v3852 = vcvt.s32.f32 %v3836
          %v3853 = vcvt.s32.f32 %v3837
          %v3854 = vcvt.s32.f32 %v3838
          %v3855 = vcvt.s32.f32 %v3839
          %v3856 = vcvt.s32.f32 %v3840
          %v3857 = vcvt.s32.f32 %v3841
          %v3858 = vcvt.s32.f32 %v3842
          %v3859 = vcvt.s32.f32 %v3843
          %v3860 = vcvt.s32.f32 %v3844
          %v3861 = vcvt.s32.f32 %v3845
          %v3862 = vlaneseq
          %v3863 = vshrl.u32 %v3862, 7
          %v3864 = vsub.s32 1, %v3863
          %v3865 = vrot.slane %v3279, %v3864
          %v3866 = vlaneseq
          %v3867 = vshrl.u32 %v3866, 7
          %v3868 = vsub.s32 0, %v3867
          %v3869 = vrot.slane %v3342, %v3868
          %v3870 = vsel %vm1087, %v3865, %v3869
          %v3871 = vlaneseq
          %v3872 = vshrl.u32 %v3871, 7
          %v3873 = vsub.s32 0, %v3872
          %v3874 = vrot.slane %v3315, %v3873
          %v3875 = vsel %vm558, %v3874, %v3870
          %3876 = vmatprep.subr.mxu0 0.0
          %3877 = vmatpush1.msra.mxu0 %v3861
          %3878 = vmatprep.subr.mxu0 0.0
          %3879 = vmatpush1.msra.mxu0 %v3860
          %3880 = vmatprep.subr.mxu0 0.0
          %3881 = vmatpush1.msra.mxu0 %v3859
          %3882 = vmatprep.subr.mxu0 0.0
          %3883 = vmatpush1.msra.mxu0 %v3858
          %3884 = vmatprep.subr.mxu0 0.0
          %3885 = vmatpush1.msra.mxu0 %v3857
          %3886 = vmatprep.subr.mxu0 0.0
          %3887 = vmatpush1.msra.mxu0 %v3856
          %3888 = vmatprep.subr.mxu0 0.0
          %3889 = vmatpush1.msra.mxu0 %v3855
          %3890 = vmatprep.subr.mxu0 0.0
          %3891 = vmatpush1.msra.mxu0 %v3854
          %3892 = vmatprep.subr.mxu0 0.0
          %3893 = vmatpush1.msra.mxu0 %v3853
          %3894 = vmatprep.subr.mxu0 0.0
          %3895 = vmatpush1.msra.mxu0 %v3852
          %3896 = vmatprep.subr.mxu0 0.0
          %3897 = vmatpush1.msra.mxu0 %v3851
          %3898 = vmatprep.subr.mxu0 0.0
          %3899 = vmatpush1.msra.mxu0 %v3850
          %3900 = vmatprep.subr.mxu0 0.0
          %3901 = vmatpush1.msra.mxu0 %v3849
          %3902 = vmatprep.subr.mxu0 0.0
          %3903 = vmatpush1.msra.mxu0 %v3848
          %3904 = vmatprep.subr.mxu0 0.0
          %3905 = vmatpush1.msra.mxu0 %v3847
          %3906 = vmatprep.subr.mxu0 0.0
          %3907 = vmatpush1.msra.mxu0 %v3846
          %3908 = vmatprep.subr.mxu0 0.0
          %3909 = vmatpush2.msra.mxu0 0.0
          %3910 = vmatprep.subr.mxu0 0.0
          %3911 = vmatpush2.msra.mxu0 0.0
          %3912 = vmatprep.subr.mxu0 0.0
          %3913 = vmatpush2.msra.mxu0 0.0
          %3914 = vmatprep.subr.mxu0 0.0
          %3915 = vmatpush2.msra.mxu0 0.0
          %3916 = vmatprep.subr.mxu0 0.0
          %3917 = vmatpush2.msra.mxu0 0.0
          %3918 = vmatprep.subr.mxu0 0.0
          %3919 = vmatpush2.msra.mxu0 0.0
          %3920 = vmatprep.subr.mxu0 0.0
          %3921 = vmatpush2.msra.mxu0 0.0
          %3922 = vmatprep.subr.mxu0 0.0
          %3923 = vmatpush2.msra.mxu0 0.0
          %3924 = vmatprep.subr.mxu0 0.0
          %3925 = vmatpush2.msra.mxu0 0.0
          %3926 = vmatprep.subr.mxu0 0.0
          %3927 = vmatpush2.msra.mxu0 0.0
          %3928 = vmatprep.subr.mxu0 0.0
          %3929 = vmatpush2.msra.mxu0 0.0
          %3930 = vmatprep.subr.mxu0 0.0
          %3931 = vmatpush2.msra.mxu0 0.0
          %3932 = vmatprep.subr.mxu0 0.0
          %3933 = vmatpush2.msra.mxu0 0.0
          %3934 = vmatprep.subr.mxu0 0.0
          %3935 = vmatpush2.msra.mxu0 0.0
          %3936 = vmatprep.subr.mxu0 0.0
          %3937 = vmatpush2.msra.mxu0 0.0
          %3938 = vmatprep.subr.mxu0 0.0
          %3939 = vmatpush2.msra.mxu0 0.0
          %3940 = vmatprep.mubr.f32.mxu0 0.0
          %3941 = vmatmul.mubr.f32.gmra.mxu0 %v3875
          %v3942 = vpop.f32.mrf.mxu0
          %v3943 = vadd.f32 0.0, %v3942
          %v3944 = vpop.f32.mrf.mxu0
          %3945 = vdwg.mxu0
          %vm3946 = vcmp.eq.s32.totalorder %v398, 4
          %v3947 = vsel %vm3946, 1, 0
          %vm3948 = vcmp.eq.s32.totalorder %v3947, 1
          %v3949 = vlaneseq
          %v3950 = vshrl.u32 %v3949, 7
          %v3951 = vsub.s32 2, %v3950
          %v3952 = vrot.slane %v3943, %v3951
          %v3953 = vsel %vm3948, %v3952, %v3258
          %v3954 = vlaneseq
          %v3955 = vshrl.u32 %v3954, 7
          %v3956 = vsub.s32 0, %v3955
          %v3957 = vrot.slane %v3943, %v3956
          %v3958 = vsel %vm3948, %v3957, %v3263
          %s3959 = sadd.s32 %s460, 5
          %s3960 = sadd.s32 %s458, 5
          %s3961 = scalar_lea.vmem %s326, %s3960 [#allocation12]
          %v3962 = vld [vmem:[%s3961] sm:$0x1]
          %s3963 = scalar_lea.vmem %s335, %s3960 [#allocation14]
          %v3964 = vld [vmem:[%s3963] sm:$0x1]
          %p3965 = scmp.gt.s32.totalorder %s3264, 0
          %s3966 = scalar_select %p3965, %s3264, 0
          %s3967 = sld [smem:[#allocation5 + %s3966]]
          %s3968 = sld [smem:[#allocation5 + %s3959]]
          %s3969 = sld [smem:[#allocation6 + %s3959]]
          %s3970 = sld [smem:[#allocation7 + %s3959]]
          %v3972 = vrot.slane %v3962, 7
          %v3974 = vadd.f32 %v3943, %v3972
          %v3975 = vsub.f32 %v3943, 1.0
          %v3976 = vmul.f32 %v3975, 0.6372646
          %v3977 = vmul.f32 %v3976, 1.442695
          %v3978 = vpow.pop %v3977
          %v3979 = vmul.f32 %v3978, 5.7326083
          %v3980 = vadd.f32 %v3979, -1.5961449
          %v3981 = vmul.f32 %v3975, -2.237382
          %v3982 = vadd.f32 %v3980, %v3981
          %v3983 = vrsqrt.pop %v3943
          %v3984 = vmul.f32 %v3943, %v3983
          %vm3985 = vcmp.eq.f32.partialorder %v3943, inf
          %v3986 = vsel %vm3985, %v3943, %v3984
          %vm3987 = vcmp.eq.f32.partialorder %v3943, 0.0
          %v3988 = vand.u32 %v3943, 2147483648
          %v3989 = vsel %vm3987, %v3988, %v3986
          %v3990 = vmul.f32 %v3989, -2.5447896
          %v3991 = vmul.f32 %v3990, 1.442695
          %v3992 = vpow.pop %v3991
          %v3993 = vsub.f32 0.07848956, %v3992
          %v3994 = vmul.f32 %v3993, 0.6412372
          %v3995 = vadd.f32 %v3982, %v3994
          %v3996 = vstv %s3967
          %v3997 = vmul.f32 %v3996, %v3974
          %v3999 = vrot.slane %v3997, 1
          %v4001 = vsub.f32 %v3995, %v3999
          %s4002 = smul.f32 %s3967, %s392
          %v4003 = vstv %s4002
          %v4004 = vmul.f32 %v4003, %v4001
          %v4005 = vsub.f32 %v3943, %v4004
          %v4006 = vadd.f32 %v4005, %v3964
          %vm4007 = vcmp.gt.f32.partialorder %v4006, 1.0
          %v4008 = vsel %vm4007, 1.0, %v4006
          %vm4009 = vcmp.lt.f32.partialorder %v4008, 0.0
          %v4010 = vsel %vm4009, 1e-10, %v4008
          %v4011 = vsub.f32 %v4010, 1.0
          %v4012 = vmul.f32 %v4011, 0.6372646
          %v4013 = vmul.f32 %v4012, 1.442695
          %v4014 = vpow.pop %v4013
          %v4015 = vmul.f32 %v4014, 5.7326083
          %v4016 = vadd.f32 %v4015, -1.5961449
          %v4017 = vmul.f32 %v4011, -2.237382
          %v4018 = vadd.f32 %v4016, %v4017
          %v4019 = vrsqrt.pop %v4010
          %v4020 = vmul.f32 %v4010, %v4019
          %vm4021 = vcmp.eq.f32.partialorder %v4010, inf
          %v4022 = vsel %vm4021, %v4010, %v4020
          %vm4023 = vcmp.eq.f32.partialorder %v4010, 0.0
          %v4024 = vand.u32 %v4010, 2147483648
          %v4025 = vsel %vm4023, %v4024, %v4022
          %v4026 = vmul.f32 %v4025, -2.5447896
          %v4027 = vmul.f32 %v4026, 1.442695
          %v4028 = vpow.pop %v4027
          %v4029 = vsub.f32 0.07848956, %v4028
          %v4030 = vmul.f32 %v4029, 0.6412372
          %v4031 = vadd.f32 %v4018, %v4030
          %v4032 = vstv %s3968
          %v4033 = vmul.f32 %v4032, %v3974
          %v4035 = vrot.slane %v4033, 1
          %v4037 = vsub.f32 %v4031, %v4035
          %v4038 = vstv %s3969
          %v4039 = vsub.f32 %v4037, %v4038
          %v4040 = vmul.f32 %v4039, 100.0
          %v4041 = vmul.f32 %v4040, 0.5
          %v4042 = vmul.f32 %v4041, %v4040
          %v4043 = vsub.f32 3.6862316, %v4042
          %v4044 = vsel %vm536, %v4043, -inf
          %4045 = vmax.xlane.f32.xlu0 %v4044
          %v4046 = vpop.xlane.xlu0 %4045
          %v4047 = vsub.f32 %v4043, %v4046
          %v4048 = vmul.f32 %v4047, 1.442695
          %v4049 = vpow.pop %v4048
          %v4050 = vsel %vm536, %v4049, 0.0
          %4051 = vadd.xlane.f32.xlu0 %v4050
          %v4052 = vpop.xlane.xlu0 %4051
          %v4053 = vlog2.pop %v4052
          %v4054 = vmul.f32 %v4053, 0.6931472
          %v4055 = vadd.f32 %v4046, %v4054
          %v4056 = vsub.f32 %v4055, 4.8520303
          %p4057 = scmp.lt.s32.totalorder %s3959, 100
          %s4058 = scalar_select %p4057, 1, 0
          %v4059 = vstv %s4058
          %vm4060 = vcmp.eq.s32.totalorder %v4059, 1
          %v4061 = vsel %vm4060, %v4056, 0.0
          %v4062 = vadd.f32 %v3367, %v4061
          %v4063 = vlaneseq
          %v4064 = vshrl.u32 %v4063, 7
          %v4065 = vsub.s32 0, %v4064
          %v4066 = vrot.slane %v4049, %v4065
          %v4067 = vsel %vm558, %v4066, 0.0
          %4068 = vmatprep.subr.mxu0 0.0
          %4069 = vmatpush1.xpose.msra.mxu0 0.0
          %4070 = vmatprep.subr.mxu0 0.0
          %4071 = vmatpush1.xpose.msra.mxu0 0.0
          %4072 = vmatprep.subr.mxu0 0.0
          %4073 = vmatpush1.xpose.msra.mxu0 0.0
          %4074 = vmatprep.subr.mxu0 0.0
          %4075 = vmatpush1.xpose.msra.mxu0 0.0
          %4076 = vmatprep.subr.mxu0 0.0
          %4077 = vmatpush1.xpose.msra.mxu0 0.0
          %4078 = vmatprep.subr.mxu0 0.0
          %4079 = vmatpush1.xpose.msra.mxu0 0.0
          %4080 = vmatprep.subr.mxu0 0.0
          %4081 = vmatpush1.xpose.msra.mxu0 0.0
          %4082 = vmatprep.subr.mxu0 0.0
          %4083 = vmatpush1.xpose.msra.mxu0 0.0
          %4084 = vmatprep.subr.mxu0 0.0
          %4085 = vmatpush1.xpose.msra.mxu0 0.0
          %4086 = vmatprep.subr.mxu0 0.0
          %4087 = vmatpush1.xpose.msra.mxu0 0.0
          %4088 = vmatprep.subr.mxu0 0.0
          %4089 = vmatpush1.xpose.msra.mxu0 0.0
          %4090 = vmatprep.subr.mxu0 0.0
          %4091 = vmatpush1.xpose.msra.mxu0 0.0
          %4092 = vmatprep.subr.mxu0 0.0
          %4093 = vmatpush1.xpose.msra.mxu0 0.0
          %4094 = vmatprep.subr.mxu0 0.0
          %4095 = vmatpush1.xpose.msra.mxu0 0.0
          %4096 = vmatprep.subr.mxu0 0.0
          %4097 = vmatpush1.xpose.msra.mxu0 0.0
          %4098 = vmatprep.subr.mxu0 0.0
          %4099 = vmatpush1.xpose.msra.mxu0 %v4067
          %4100 = vmatprep.subr.mxu0 0.0
          %4101 = vmatpush2.xpose.msra.mxu0 0.0
          %4102 = vmatprep.subr.mxu0 0.0
          %4103 = vmatpush2.xpose.msra.mxu0 0.0
          %4104 = vmatprep.subr.mxu0 0.0
          %4105 = vmatpush2.xpose.msra.mxu0 0.0
          %4106 = vmatprep.subr.mxu0 0.0
          %4107 = vmatpush2.xpose.msra.mxu0 0.0
          %4108 = vmatprep.subr.mxu0 0.0
          %4109 = vmatpush2.xpose.msra.mxu0 0.0
          %4110 = vmatprep.subr.mxu0 0.0
          %4111 = vmatpush2.xpose.msra.mxu0 0.0
          %4112 = vmatprep.subr.mxu0 0.0
          %4113 = vmatpush2.xpose.msra.mxu0 0.0
          %4114 = vmatprep.subr.mxu0 0.0
          %4115 = vmatpush2.xpose.msra.mxu0 0.0
          %4116 = vmatprep.subr.mxu0 0.0
          %4117 = vmatpush2.xpose.msra.mxu0 0.0
          %4118 = vmatprep.subr.mxu0 0.0
          %4119 = vmatpush2.xpose.msra.mxu0 0.0
          %4120 = vmatprep.subr.mxu0 0.0
          %4121 = vmatpush2.xpose.msra.mxu0 0.0
          %4122 = vmatprep.subr.mxu0 0.0
          %4123 = vmatpush2.xpose.msra.mxu0 0.0
          %4124 = vmatprep.subr.mxu0 0.0
          %4125 = vmatpush2.xpose.msra.mxu0 0.0
          %4126 = vmatprep.subr.mxu0 0.0
          %4127 = vmatpush2.xpose.msra.mxu0 0.0
          %4128 = vmatprep.subr.mxu0 0.0
          %4129 = vmatpush2.xpose.msra.mxu0 0.0
          %4130 = vmatprep.subr.mxu0 0.0
          %4131 = vmatpush2.xpose.msra.mxu0 0.0
          %4132 = vmatprep.mubr.f32.mxu0 0.0
          %4133 = vmatmul.mubr.f32.gmra.mxu0 %v564
          %v4134 = vpop.f32.mrf.mxu0
          %v4135 = vadd.f32 0.0, %v4134
          %v4136 = vpop.f32.mrf.mxu0
          %4137 = vmatprep.mubr.f32.mxu0 0.0
          %4138 = vmatmul.mubr.f32.gmra.mxu0 %v565
          %v4139 = vpop.f32.mrf.mxu0
          %v4140 = vadd.f32 0.0, %v4139
          %v4141 = vpop.f32.mrf.mxu0
          %4142 = vmatprep.mubr.f32.mxu0 0.0
          %4143 = vmatmul.mubr.f32.gmra.mxu0 %v566
          %v4144 = vpop.f32.mrf.mxu0
          %v4145 = vadd.f32 0.0, %v4144
          %v4146 = vpop.f32.mrf.mxu0
          %4147 = vmatprep.mubr.f32.mxu0 0.0
          %4148 = vmatmul.mubr.f32.gmra.mxu0 %v567
          %v4149 = vpop.f32.mrf.mxu0
          %v4150 = vadd.f32 0.0, %v4149
          %v4151 = vpop.f32.mrf.mxu0
          %4152 = vmatprep.mubr.f32.mxu0 0.0
          %4153 = vmatmul.mubr.f32.gmra.mxu0 %v568
          %v4154 = vpop.f32.mrf.mxu0
          %v4155 = vadd.f32 0.0, %v4154
          %v4156 = vpop.f32.mrf.mxu0
          %4157 = vmatprep.mubr.f32.mxu0 0.0
          %4158 = vmatmul.mubr.f32.gmra.mxu0 %v569
          %v4159 = vpop.f32.mrf.mxu0
          %v4160 = vadd.f32 0.0, %v4159
          %v4161 = vpop.f32.mrf.mxu0
          %4162 = vmatprep.mubr.f32.mxu0 0.0
          %4163 = vmatmul.mubr.f32.gmra.mxu0 %v570
          %v4164 = vpop.f32.mrf.mxu0
          %v4165 = vadd.f32 0.0, %v4164
          %v4166 = vpop.f32.mrf.mxu0
          %4167 = vmatprep.mubr.f32.mxu0 0.0
          %4168 = vmatmul.mubr.f32.gmra.mxu0 %v571
          %v4169 = vpop.f32.mrf.mxu0
          %v4170 = vadd.f32 0.0, %v4169
          %v4171 = vpop.f32.mrf.mxu0
          %4172 = vmatprep.mubr.f32.mxu0 0.0
          %4173 = vmatmul.mubr.f32.gmra.mxu0 %v572
          %v4174 = vpop.f32.mrf.mxu0
          %v4175 = vadd.f32 0.0, %v4174
          %v4176 = vpop.f32.mrf.mxu0
          %4177 = vmatprep.mubr.f32.mxu0 0.0
          %4178 = vmatmul.mubr.f32.gmra.mxu0 %v573
          %v4179 = vpop.f32.mrf.mxu0
          %v4180 = vadd.f32 0.0, %v4179
          %v4181 = vpop.f32.mrf.mxu0
          %4182 = vmatprep.mubr.f32.mxu0 0.0
          %4183 = vmatmul.mubr.f32.gmra.mxu0 %v574
          %v4184 = vpop.f32.mrf.mxu0
          %v4185 = vadd.f32 0.0, %v4184
          %v4186 = vpop.f32.mrf.mxu0
          %4187 = vmatprep.mubr.f32.mxu0 0.0
          %4188 = vmatmul.mubr.f32.gmra.mxu0 %v575
          %v4189 = vpop.f32.mrf.mxu0
          %v4190 = vadd.f32 0.0, %v4189
          %v4191 = vpop.f32.mrf.mxu0
          %4192 = vmatprep.mubr.f32.mxu0 0.0
          %4193 = vmatmul.mubr.f32.gmra.mxu0 %v576
          %v4194 = vpop.f32.mrf.mxu0
          %v4195 = vadd.f32 0.0, %v4194
          %v4196 = vpop.f32.mrf.mxu0
          %4197 = vmatprep.mubr.f32.mxu0 0.0
          %4198 = vmatmul.mubr.f32.gmra.mxu0 %v577
          %v4199 = vpop.f32.mrf.mxu0
          %v4200 = vadd.f32 0.0, %v4199
          %v4201 = vpop.f32.mrf.mxu0
          %4202 = vmatprep.mubr.f32.mxu0 0.0
          %4203 = vmatmul.mubr.f32.gmra.mxu0 %v578
          %v4204 = vpop.f32.mrf.mxu0
          %v4205 = vadd.f32 0.0, %v4204
          %v4206 = vpop.f32.mrf.mxu0
          %4207 = vmatprep.mubr.f32.mxu0 0.0
          %4208 = vmatmul.mubr.f32.gmra.mxu0 %v579
          %v4209 = vpop.f32.mrf.mxu0
          %v4210 = vadd.f32 0.0, %v4209
          %v4211 = vpop.f32.mrf.mxu0
          %4212 = vmatprep.mubr.f32.mxu0 0.0
          %4213 = vmatmul.mubr.f32.gmra.mxu0 %v580
          %v4214 = vpop.f32.mrf.mxu0
          %v4215 = vadd.f32 0.0, %v4214
          %v4216 = vpop.f32.mrf.mxu0
          %4217 = vmatprep.mubr.f32.mxu0 0.0
          %4218 = vmatmul.mubr.f32.gmra.mxu0 %v581
          %v4219 = vpop.f32.mrf.mxu0
          %v4220 = vadd.f32 0.0, %v4219
          %v4221 = vpop.f32.mrf.mxu0
          %4222 = vmatprep.mubr.f32.mxu0 0.0
          %4223 = vmatmul.mubr.f32.gmra.mxu0 %v582
          %v4224 = vpop.f32.mrf.mxu0
          %v4225 = vadd.f32 0.0, %v4224
          %v4226 = vpop.f32.mrf.mxu0
          %4227 = vmatprep.mubr.f32.mxu0 0.0
          %4228 = vmatmul.mubr.f32.gmra.mxu0 %v583
          %v4229 = vpop.f32.mrf.mxu0
          %v4230 = vadd.f32 0.0, %v4229
          %v4231 = vpop.f32.mrf.mxu0
          %4232 = vmatprep.mubr.f32.mxu0 0.0
          %4233 = vmatmul.mubr.f32.gmra.mxu0 %v584
          %v4234 = vpop.f32.mrf.mxu0
          %v4235 = vadd.f32 0.0, %v4234
          %v4236 = vpop.f32.mrf.mxu0
          %4237 = vmatprep.mubr.f32.mxu0 0.0
          %4238 = vmatmul.mubr.f32.gmra.mxu0 %v585
          %v4239 = vpop.f32.mrf.mxu0
          %v4240 = vadd.f32 0.0, %v4239
          %v4241 = vpop.f32.mrf.mxu0
          %4242 = vmatprep.mubr.f32.mxu0 0.0
          %4243 = vmatmul.mubr.f32.gmra.mxu0 %v586
          %v4244 = vpop.f32.mrf.mxu0
          %v4245 = vadd.f32 0.0, %v4244
          %v4246 = vpop.f32.mrf.mxu0
          %4247 = vmatprep.mubr.f32.mxu0 0.0
          %4248 = vmatmul.mubr.f32.gmra.mxu0 %v587
          %v4249 = vpop.f32.mrf.mxu0
          %v4250 = vadd.f32 0.0, %v4249
          %v4251 = vpop.f32.mrf.mxu0
          %4252 = vmatprep.mubr.f32.mxu0 0.0
          %4253 = vmatmul.mubr.f32.gmra.mxu0 %v588
          %v4254 = vpop.f32.mrf.mxu0
          %v4255 = vadd.f32 0.0, %v4254
          %v4256 = vpop.f32.mrf.mxu0
          %4257 = vmatprep.mubr.f32.mxu0 0.0
          %4258 = vmatmul.mubr.f32.gmra.mxu0 %v589
          %v4259 = vpop.f32.mrf.mxu0
          %v4260 = vadd.f32 0.0, %v4259
          %v4261 = vpop.f32.mrf.mxu0
          %4262 = vmatprep.mubr.f32.mxu0 0.0
          %4263 = vmatmul.mubr.f32.gmra.mxu0 %v590
          %v4264 = vpop.f32.mrf.mxu0
          %v4265 = vadd.f32 0.0, %v4264
          %v4266 = vpop.f32.mrf.mxu0
          %4267 = vmatprep.mubr.f32.mxu0 0.0
          %4268 = vmatmul.mubr.f32.gmra.mxu0 %v591
          %v4269 = vpop.f32.mrf.mxu0
          %v4270 = vadd.f32 0.0, %v4269
          %v4271 = vpop.f32.mrf.mxu0
          %4272 = vmatprep.mubr.f32.mxu0 0.0
          %4273 = vmatmul.mubr.f32.gmra.mxu0 %v592
          %v4274 = vpop.f32.mrf.mxu0
          %v4275 = vadd.f32 0.0, %v4274
          %v4276 = vpop.f32.mrf.mxu0
          %4277 = vmatprep.mubr.f32.mxu0 0.0
          %4278 = vmatmul.mubr.f32.gmra.mxu0 %v593
          %v4279 = vpop.f32.mrf.mxu0
          %v4280 = vadd.f32 0.0, %v4279
          %v4281 = vpop.f32.mrf.mxu0
          %4282 = vmatprep.mubr.f32.mxu0 0.0
          %4283 = vmatmul.mubr.f32.gmra.mxu0 %v594
          %v4284 = vpop.f32.mrf.mxu0
          %v4285 = vadd.f32 0.0, %v4284
          %v4286 = vpop.f32.mrf.mxu0
          %4287 = vmatprep.mubr.f32.mxu0 0.0
          %4288 = vmatmul.mubr.f32.gmra.mxu0 %v595
          %v4289 = vpop.f32.mrf.mxu0
          %v4290 = vadd.f32 0.0, %v4289
          %v4291 = vpop.f32.mrf.mxu0
          %4292 = vdwg.mxu0
          %v4293 = vadd.f32 %v4135, %v430
          %v4294 = vadd.f32 %v4140, %v431
          %v4295 = vadd.f32 %v4145, %v432
          %v4296 = vadd.f32 %v4150, %v433
          %v4297 = vadd.f32 %v4155, %v434
          %v4298 = vadd.f32 %v4160, %v435
          %v4299 = vadd.f32 %v4165, %v436
          %v4300 = vadd.f32 %v4170, %v437
          %v4301 = vadd.f32 %v4175, %v438
          %v4302 = vadd.f32 %v4180, %v439
          %v4303 = vadd.f32 %v4185, %v440
          %v4304 = vadd.f32 %v4190, %v441
          %v4305 = vadd.f32 %v4195, %v442
          %v4306 = vadd.f32 %v4200, %v443
          %v4307 = vadd.f32 %v4205, %v444
          %v4308 = vadd.f32 %v4210, %v445
          %s4309 = smul.f32 %s3970, 0.0078125
          %v4310 = vstv %s4309
          %v4311 = vadd.f32 %v396, %v4310
          %v4312 = vmul.f32 %v4311, %v4052
          %v4313 = vlaneseq
          %v4314 = vshrl.u32 %v4313, 7
          %v4315 = vsub.s32 0, %v4314
          %v4316 = vrot.slane %v4312, %v4315
          %4318 = vset.pattern.permute.xlu0 0
          %4319 = vperm.xlu0 %4318, %v4215
          %v4320 = vpop.permute.xlu0 %4319
          %4323 = vset.pattern.permute.xlu0 0
          %4324 = vperm.xlu0 %4323, %v4220
          %v4325 = vpop.permute.xlu0 %4324
          %4328 = vset.pattern.permute.xlu0 0
          %4329 = vperm.xlu0 %4328, %v4225
          %v4330 = vpop.permute.xlu0 %4329
          %4333 = vset.pattern.permute.xlu0 0
          %4334 = vperm.xlu0 %4333, %v4230
          %v4335 = vpop.permute.xlu0 %4334
          %4338 = vset.pattern.permute.xlu0 0
          %4339 = vperm.xlu0 %4338, %v4235
          %v4340 = vpop.permute.xlu0 %4339
          %4343 = vset.pattern.permute.xlu0 0
          %4344 = vperm.xlu0 %4343, %v4240
          %v4345 = vpop.permute.xlu0 %4344
          %4348 = vset.pattern.permute.xlu0 0
          %4349 = vperm.xlu0 %4348, %v4245
          %v4350 = vpop.permute.xlu0 %4349
          %4353 = vset.pattern.permute.xlu0 0
          %4354 = vperm.xlu0 %4353, %v4250
          %v4355 = vpop.permute.xlu0 %4354
          %4358 = vset.pattern.permute.xlu0 0
          %4359 = vperm.xlu0 %4358, %v4255
          %v4360 = vpop.permute.xlu0 %4359
          %4363 = vset.pattern.permute.xlu0 0
          %4364 = vperm.xlu0 %4363, %v4260
          %v4365 = vpop.permute.xlu0 %4364
          %4368 = vset.pattern.permute.xlu0 0
          %4369 = vperm.xlu0 %4368, %v4265
          %v4370 = vpop.permute.xlu0 %4369
          %4373 = vset.pattern.permute.xlu0 0
          %4374 = vperm.xlu0 %4373, %v4270
          %v4375 = vpop.permute.xlu0 %4374
          %4378 = vset.pattern.permute.xlu0 0
          %4379 = vperm.xlu0 %4378, %v4275
          %v4380 = vpop.permute.xlu0 %4379
          %4383 = vset.pattern.permute.xlu0 0
          %4384 = vperm.xlu0 %4383, %v4280
          %v4385 = vpop.permute.xlu0 %4384
          %4388 = vset.pattern.permute.xlu0 0
          %4389 = vperm.xlu0 %4388, %v4285
          %v4390 = vpop.permute.xlu0 %4389
          %4393 = vset.pattern.permute.xlu0 0
          %4394 = vperm.xlu0 %4393, %v4290
          %v4395 = vpop.permute.xlu0 %4394
          %vm4397 = vcmp.ge.f32.partialorder %v4316, %v4320
          %vm4398 = vcmp.ge.f32.partialorder %v4316, %v4325
          %vm4399 = vcmp.ge.f32.partialorder %v4316, %v4330
          %vm4400 = vcmp.ge.f32.partialorder %v4316, %v4335
          %vm4401 = vcmp.ge.f32.partialorder %v4316, %v4340
          %vm4402 = vcmp.ge.f32.partialorder %v4316, %v4345
          %vm4403 = vcmp.ge.f32.partialorder %v4316, %v4350
          %vm4404 = vcmp.ge.f32.partialorder %v4316, %v4355
          %vm4405 = vcmp.ge.f32.partialorder %v4316, %v4360
          %vm4406 = vcmp.ge.f32.partialorder %v4316, %v4365
          %vm4407 = vcmp.ge.f32.partialorder %v4316, %v4370
          %vm4408 = vcmp.ge.f32.partialorder %v4316, %v4375
          %vm4409 = vcmp.ge.f32.partialorder %v4316, %v4380
          %vm4410 = vcmp.ge.f32.partialorder %v4316, %v4385
          %vm4411 = vcmp.ge.f32.partialorder %v4316, %v4390
          %vm4412 = vcmp.ge.f32.partialorder %v4316, %v4395
          %4414 = vset.pattern.permute.xlu0 0
          %4415 = vperm.xlu0 %4414, %v4293
          %v4416 = vpop.permute.xlu0 %4415
          %4419 = vset.pattern.permute.xlu0 0
          %4420 = vperm.xlu0 %4419, %v4294
          %v4421 = vpop.permute.xlu0 %4420
          %4424 = vset.pattern.permute.xlu0 0
          %4425 = vperm.xlu0 %4424, %v4295
          %v4426 = vpop.permute.xlu0 %4425
          %4429 = vset.pattern.permute.xlu0 0
          %4430 = vperm.xlu0 %4429, %v4296
          %v4431 = vpop.permute.xlu0 %4430
          %4434 = vset.pattern.permute.xlu0 0
          %4435 = vperm.xlu0 %4434, %v4297
          %v4436 = vpop.permute.xlu0 %4435
          %4439 = vset.pattern.permute.xlu0 0
          %4440 = vperm.xlu0 %4439, %v4298
          %v4441 = vpop.permute.xlu0 %4440
          %4444 = vset.pattern.permute.xlu0 0
          %4445 = vperm.xlu0 %4444, %v4299
          %v4446 = vpop.permute.xlu0 %4445
          %4449 = vset.pattern.permute.xlu0 0
          %4450 = vperm.xlu0 %4449, %v4300
          %v4451 = vpop.permute.xlu0 %4450
          %4454 = vset.pattern.permute.xlu0 0
          %4455 = vperm.xlu0 %4454, %v4301
          %v4456 = vpop.permute.xlu0 %4455
          %4459 = vset.pattern.permute.xlu0 0
          %4460 = vperm.xlu0 %4459, %v4302
          %v4461 = vpop.permute.xlu0 %4460
          %4464 = vset.pattern.permute.xlu0 0
          %4465 = vperm.xlu0 %4464, %v4303
          %v4466 = vpop.permute.xlu0 %4465
          %4469 = vset.pattern.permute.xlu0 0
          %4470 = vperm.xlu0 %4469, %v4304
          %v4471 = vpop.permute.xlu0 %4470
          %4474 = vset.pattern.permute.xlu0 0
          %4475 = vperm.xlu0 %4474, %v4305
          %v4476 = vpop.permute.xlu0 %4475
          %4479 = vset.pattern.permute.xlu0 0
          %4480 = vperm.xlu0 %4479, %v4306
          %v4481 = vpop.permute.xlu0 %4480
          %4484 = vset.pattern.permute.xlu0 0
          %4485 = vperm.xlu0 %4484, %v4307
          %v4486 = vpop.permute.xlu0 %4485
          %4489 = vset.pattern.permute.xlu0 0
          %4490 = vperm.xlu0 %4489, %v4308
          %v4491 = vpop.permute.xlu0 %4490
          %vm4493 = vcmp.lt.f32.partialorder %v4316, %v4416
          %vm4494 = vcmp.lt.f32.partialorder %v4316, %v4421
          %vm4495 = vcmp.lt.f32.partialorder %v4316, %v4426
          %vm4496 = vcmp.lt.f32.partialorder %v4316, %v4431
          %vm4497 = vcmp.lt.f32.partialorder %v4316, %v4436
          %vm4498 = vcmp.lt.f32.partialorder %v4316, %v4441
          %vm4499 = vcmp.lt.f32.partialorder %v4316, %v4446
          %vm4500 = vcmp.lt.f32.partialorder %v4316, %v4451
          %vm4501 = vcmp.lt.f32.partialorder %v4316, %v4456
          %vm4502 = vcmp.lt.f32.partialorder %v4316, %v4461
          %vm4503 = vcmp.lt.f32.partialorder %v4316, %v4466
          %vm4504 = vcmp.lt.f32.partialorder %v4316, %v4471
          %vm4505 = vcmp.lt.f32.partialorder %v4316, %v4476
          %vm4506 = vcmp.lt.f32.partialorder %v4316, %v4481
          %vm4507 = vcmp.lt.f32.partialorder %v4316, %v4486
          %vm4508 = vcmp.lt.f32.partialorder %v4316, %v4491
          %vm4509 = vmand %vm4397, %vm4493
          %vm4510 = vmand %vm4398, %vm4494
          %vm4511 = vmand %vm4399, %vm4495
          %vm4512 = vmand %vm4400, %vm4496
          %vm4513 = vmand %vm4401, %vm4497
          %vm4514 = vmand %vm4402, %vm4498
          %vm4515 = vmand %vm4403, %vm4499
          %vm4516 = vmand %vm4404, %vm4500
          %vm4517 = vmand %vm4405, %vm4501
          %vm4518 = vmand %vm4406, %vm4502
          %vm4519 = vmand %vm4407, %vm4503
          %vm4520 = vmand %vm4408, %vm4504
          %vm4521 = vmand %vm4409, %vm4505
          %vm4522 = vmand %vm4410, %vm4506
          %vm4523 = vmand %vm4411, %vm4507
          %vm4524 = vmand %vm4412, %vm4508
          %v4525 = vsel %vm4509, 1, 0
          %v4526 = vsel %vm4510, 1, 0
          %v4527 = vsel %vm4511, 1, 0
          %v4528 = vsel %vm4512, 1, 0
          %v4529 = vsel %vm4513, 1, 0
          %v4530 = vsel %vm4514, 1, 0
          %v4531 = vsel %vm4515, 1, 0
          %v4532 = vsel %vm4516, 1, 0
          %v4533 = vsel %vm4517, 1, 0
          %v4534 = vsel %vm4518, 1, 0
          %v4535 = vsel %vm4519, 1, 0
          %v4536 = vsel %vm4520, 1, 0
          %v4537 = vsel %vm4521, 1, 0
          %v4538 = vsel %vm4522, 1, 0
          %v4539 = vsel %vm4523, 1, 0
          %v4540 = vsel %vm4524, 1, 0
          %v4541 = vcvt.s32.f32 %v4525
          %v4542 = vcvt.s32.f32 %v4526
          %v4543 = vcvt.s32.f32 %v4527
          %v4544 = vcvt.s32.f32 %v4528
          %v4545 = vcvt.s32.f32 %v4529
          %v4546 = vcvt.s32.f32 %v4530
          %v4547 = vcvt.s32.f32 %v4531
          %v4548 = vcvt.s32.f32 %v4532
          %v4549 = vcvt.s32.f32 %v4533
          %v4550 = vcvt.s32.f32 %v4534
          %v4551 = vcvt.s32.f32 %v4535
          %v4552 = vcvt.s32.f32 %v4536
          %v4553 = vcvt.s32.f32 %v4537
          %v4554 = vcvt.s32.f32 %v4538
          %v4555 = vcvt.s32.f32 %v4539
          %v4556 = vcvt.s32.f32 %v4540
          %v4557 = vlaneseq
          %v4558 = vshrl.u32 %v4557, 7
          %v4559 = vsub.s32 1, %v4558
          %v4560 = vrot.slane %v3974, %v4559
          %v4561 = vlaneseq
          %v4562 = vshrl.u32 %v4561, 7
          %v4563 = vsub.s32 0, %v4562
          %v4564 = vrot.slane %v4037, %v4563
          %v4565 = vsel %vm1087, %v4560, %v4564
          %v4566 = vlaneseq
          %v4567 = vshrl.u32 %v4566, 7
          %v4568 = vsub.s32 0, %v4567
          %v4569 = vrot.slane %v4010, %v4568
          %v4570 = vsel %vm558, %v4569, %v4565
          %4571 = vmatprep.subr.mxu0 0.0
          %4572 = vmatpush1.msra.mxu0 %v4556
          %4573 = vmatprep.subr.mxu0 0.0
          %4574 = vmatpush1.msra.mxu0 %v4555
          %4575 = vmatprep.subr.mxu0 0.0
          %4576 = vmatpush1.msra.mxu0 %v4554
          %4577 = vmatprep.subr.mxu0 0.0
          %4578 = vmatpush1.msra.mxu0 %v4553
          %4579 = vmatprep.subr.mxu0 0.0
          %4580 = vmatpush1.msra.mxu0 %v4552
          %4581 = vmatprep.subr.mxu0 0.0
          %4582 = vmatpush1.msra.mxu0 %v4551
          %4583 = vmatprep.subr.mxu0 0.0
          %4584 = vmatpush1.msra.mxu0 %v4550
          %4585 = vmatprep.subr.mxu0 0.0
          %4586 = vmatpush1.msra.mxu0 %v4549
          %4587 = vmatprep.subr.mxu0 0.0
          %4588 = vmatpush1.msra.mxu0 %v4548
          %4589 = vmatprep.subr.mxu0 0.0
          %4590 = vmatpush1.msra.mxu0 %v4547
          %4591 = vmatprep.subr.mxu0 0.0
          %4592 = vmatpush1.msra.mxu0 %v4546
          %4593 = vmatprep.subr.mxu0 0.0
          %4594 = vmatpush1.msra.mxu0 %v4545
          %4595 = vmatprep.subr.mxu0 0.0
          %4596 = vmatpush1.msra.mxu0 %v4544
          %4597 = vmatprep.subr.mxu0 0.0
          %4598 = vmatpush1.msra.mxu0 %v4543
          %4599 = vmatprep.subr.mxu0 0.0
          %4600 = vmatpush1.msra.mxu0 %v4542
          %4601 = vmatprep.subr.mxu0 0.0
          %4602 = vmatpush1.msra.mxu0 %v4541
          %4603 = vmatprep.subr.mxu0 0.0
          %4604 = vmatpush2.msra.mxu0 0.0
          %4605 = vmatprep.subr.mxu0 0.0
          %4606 = vmatpush2.msra.mxu0 0.0
          %4607 = vmatprep.subr.mxu0 0.0
          %4608 = vmatpush2.msra.mxu0 0.0
          %4609 = vmatprep.subr.mxu0 0.0
          %4610 = vmatpush2.msra.mxu0 0.0
          %4611 = vmatprep.subr.mxu0 0.0
          %4612 = vmatpush2.msra.mxu0 0.0
          %4613 = vmatprep.subr.mxu0 0.0
          %4614 = vmatpush2.msra.mxu0 0.0
          %4615 = vmatprep.subr.mxu0 0.0
          %4616 = vmatpush2.msra.mxu0 0.0
          %4617 = vmatprep.subr.mxu0 0.0
          %4618 = vmatpush2.msra.mxu0 0.0
          %4619 = vmatprep.subr.mxu0 0.0
          %4620 = vmatpush2.msra.mxu0 0.0
          %4621 = vmatprep.subr.mxu0 0.0
          %4622 = vmatpush2.msra.mxu0 0.0
          %4623 = vmatprep.subr.mxu0 0.0
          %4624 = vmatpush2.msra.mxu0 0.0
          %4625 = vmatprep.subr.mxu0 0.0
          %4626 = vmatpush2.msra.mxu0 0.0
          %4627 = vmatprep.subr.mxu0 0.0
          %4628 = vmatpush2.msra.mxu0 0.0
          %4629 = vmatprep.subr.mxu0 0.0
          %4630 = vmatpush2.msra.mxu0 0.0
          %4631 = vmatprep.subr.mxu0 0.0
          %4632 = vmatpush2.msra.mxu0 0.0
          %4633 = vmatprep.subr.mxu0 0.0
          %4634 = vmatpush2.msra.mxu0 0.0
          %4635 = vmatprep.mubr.f32.mxu0 0.0
          %4636 = vmatmul.mubr.f32.gmra.mxu0 %v4570
          %v4637 = vpop.f32.mrf.mxu0
          %v4638 = vadd.f32 0.0, %v4637
          %v4639 = vpop.f32.mrf.mxu0
          %4640 = vdwg.mxu0
          %vm4641 = vcmp.eq.s32.totalorder %v398, 5
          %v4642 = vsel %vm4641, 1, 0
          %vm4643 = vcmp.eq.s32.totalorder %v4642, 1
          %v4644 = vlaneseq
          %v4645 = vshrl.u32 %v4644, 7
          %v4646 = vsub.s32 2, %v4645
          %v4647 = vrot.slane %v4638, %v4646
          %v4648 = vsel %vm4643, %v4647, %v3953
          %v4649 = vlaneseq
          %v4650 = vshrl.u32 %v4649, 7
          %v4651 = vsub.s32 0, %v4650
          %v4652 = vrot.slane %v4638, %v4651
          %v4653 = vsel %vm4643, %v4652, %v3958
          %s4654 = sadd.s32 %s460, 6
          %s4655 = sadd.s32 %s458, 6
          %s4656 = scalar_lea.vmem %s326, %s4655 [#allocation12]
          %v4657 = vld [vmem:[%s4656] sm:$0x1]
          %s4658 = scalar_lea.vmem %s335, %s4655 [#allocation14]
          %v4659 = vld [vmem:[%s4658] sm:$0x1]
          %p4660 = scmp.gt.s32.totalorder %s3959, 0
          %s4661 = scalar_select %p4660, %s3959, 0
          %s4662 = sld [smem:[#allocation5 + %s4661]]
          %s4663 = sld [smem:[#allocation5 + %s4654]]
          %s4664 = sld [smem:[#allocation6 + %s4654]]
          %s4665 = sld [smem:[#allocation7 + %s4654]]
          %v4667 = vrot.slane %v4657, 7
          %v4669 = vadd.f32 %v4638, %v4667
          %v4670 = vsub.f32 %v4638, 1.0
          %v4671 = vmul.f32 %v4670, 0.6372646
          %v4672 = vmul.f32 %v4671, 1.442695
          %v4673 = vpow.pop %v4672
          %v4674 = vmul.f32 %v4673, 5.7326083
          %v4675 = vadd.f32 %v4674, -1.5961449
          %v4676 = vmul.f32 %v4670, -2.237382
          %v4677 = vadd.f32 %v4675, %v4676
          %v4678 = vrsqrt.pop %v4638
          %v4679 = vmul.f32 %v4638, %v4678
          %vm4680 = vcmp.eq.f32.partialorder %v4638, inf
          %v4681 = vsel %vm4680, %v4638, %v4679
          %vm4682 = vcmp.eq.f32.partialorder %v4638, 0.0
          %v4683 = vand.u32 %v4638, 2147483648
          %v4684 = vsel %vm4682, %v4683, %v4681
          %v4685 = vmul.f32 %v4684, -2.5447896
          %v4686 = vmul.f32 %v4685, 1.442695
          %v4687 = vpow.pop %v4686
          %v4688 = vsub.f32 0.07848956, %v4687
          %v4689 = vmul.f32 %v4688, 0.6412372
          %v4690 = vadd.f32 %v4677, %v4689
          %v4691 = vstv %s4662
          %v4692 = vmul.f32 %v4691, %v4669
          %v4694 = vrot.slane %v4692, 1
          %v4696 = vsub.f32 %v4690, %v4694
          %s4697 = smul.f32 %s4662, %s392
          %v4698 = vstv %s4697
          %v4699 = vmul.f32 %v4698, %v4696
          %v4700 = vsub.f32 %v4638, %v4699
          %v4701 = vadd.f32 %v4700, %v4659
          %vm4702 = vcmp.gt.f32.partialorder %v4701, 1.0
          %v4703 = vsel %vm4702, 1.0, %v4701
          %vm4704 = vcmp.lt.f32.partialorder %v4703, 0.0
          %v4705 = vsel %vm4704, 1e-10, %v4703
          %v4706 = vsub.f32 %v4705, 1.0
          %v4707 = vmul.f32 %v4706, 0.6372646
          %v4708 = vmul.f32 %v4707, 1.442695
          %v4709 = vpow.pop %v4708
          %v4710 = vmul.f32 %v4709, 5.7326083
          %v4711 = vadd.f32 %v4710, -1.5961449
          %v4712 = vmul.f32 %v4706, -2.237382
          %v4713 = vadd.f32 %v4711, %v4712
          %v4714 = vrsqrt.pop %v4705
          %v4715 = vmul.f32 %v4705, %v4714
          %vm4716 = vcmp.eq.f32.partialorder %v4705, inf
          %v4717 = vsel %vm4716, %v4705, %v4715
          %vm4718 = vcmp.eq.f32.partialorder %v4705, 0.0
          %v4719 = vand.u32 %v4705, 2147483648
          %v4720 = vsel %vm4718, %v4719, %v4717
          %v4721 = vmul.f32 %v4720, -2.5447896
          %v4722 = vmul.f32 %v4721, 1.442695
          %v4723 = vpow.pop %v4722
          %v4724 = vsub.f32 0.07848956, %v4723
          %v4725 = vmul.f32 %v4724, 0.6412372
          %v4726 = vadd.f32 %v4713, %v4725
          %v4727 = vstv %s4663
          %v4728 = vmul.f32 %v4727, %v4669
          %v4730 = vrot.slane %v4728, 1
          %v4732 = vsub.f32 %v4726, %v4730
          %v4733 = vstv %s4664
          %v4734 = vsub.f32 %v4732, %v4733
          %v4735 = vmul.f32 %v4734, 100.0
          %v4736 = vmul.f32 %v4735, 0.5
          %v4737 = vmul.f32 %v4736, %v4735
          %v4738 = vsub.f32 3.6862316, %v4737
          %v4739 = vsel %vm536, %v4738, -inf
          %4740 = vmax.xlane.f32.xlu0 %v4739
          %v4741 = vpop.xlane.xlu0 %4740
          %v4742 = vsub.f32 %v4738, %v4741
          %v4743 = vmul.f32 %v4742, 1.442695
          %v4744 = vpow.pop %v4743
          %v4745 = vsel %vm536, %v4744, 0.0
          %4746 = vadd.xlane.f32.xlu0 %v4745
          %v4747 = vpop.xlane.xlu0 %4746
          %v4748 = vlog2.pop %v4747
          %v4749 = vmul.f32 %v4748, 0.6931472
          %v4750 = vadd.f32 %v4741, %v4749
          %v4751 = vsub.f32 %v4750, 4.8520303
          %p4752 = scmp.lt.s32.totalorder %s4654, 100
          %s4753 = scalar_select %p4752, 1, 0
          %v4754 = vstv %s4753
          %vm4755 = vcmp.eq.s32.totalorder %v4754, 1
          %v4756 = vsel %vm4755, %v4751, 0.0
          %v4757 = vadd.f32 %v4062, %v4756
          %v4758 = vlaneseq
          %v4759 = vshrl.u32 %v4758, 7
          %v4760 = vsub.s32 0, %v4759
          %v4761 = vrot.slane %v4744, %v4760
          %v4762 = vsel %vm558, %v4761, 0.0
          %4763 = vmatprep.subr.mxu0 0.0
          %4764 = vmatpush1.xpose.msra.mxu0 0.0
          %4765 = vmatprep.subr.mxu0 0.0
          %4766 = vmatpush1.xpose.msra.mxu0 0.0
          %4767 = vmatprep.subr.mxu0 0.0
          %4768 = vmatpush1.xpose.msra.mxu0 0.0
          %4769 = vmatprep.subr.mxu0 0.0
          %4770 = vmatpush1.xpose.msra.mxu0 0.0
          %4771 = vmatprep.subr.mxu0 0.0
          %4772 = vmatpush1.xpose.msra.mxu0 0.0
          %4773 = vmatprep.subr.mxu0 0.0
          %4774 = vmatpush1.xpose.msra.mxu0 0.0
          %4775 = vmatprep.subr.mxu0 0.0
          %4776 = vmatpush1.xpose.msra.mxu0 0.0
          %4777 = vmatprep.subr.mxu0 0.0
          %4778 = vmatpush1.xpose.msra.mxu0 0.0
          %4779 = vmatprep.subr.mxu0 0.0
          %4780 = vmatpush1.xpose.msra.mxu0 0.0
          %4781 = vmatprep.subr.mxu0 0.0
          %4782 = vmatpush1.xpose.msra.mxu0 0.0
          %4783 = vmatprep.subr.mxu0 0.0
          %4784 = vmatpush1.xpose.msra.mxu0 0.0
          %4785 = vmatprep.subr.mxu0 0.0
          %4786 = vmatpush1.xpose.msra.mxu0 0.0
          %4787 = vmatprep.subr.mxu0 0.0
          %4788 = vmatpush1.xpose.msra.mxu0 0.0
          %4789 = vmatprep.subr.mxu0 0.0
          %4790 = vmatpush1.xpose.msra.mxu0 0.0
          %4791 = vmatprep.subr.mxu0 0.0
          %4792 = vmatpush1.xpose.msra.mxu0 0.0
          %4793 = vmatprep.subr.mxu0 0.0
          %4794 = vmatpush1.xpose.msra.mxu0 %v4762
          %4795 = vmatprep.subr.mxu0 0.0
          %4796 = vmatpush2.xpose.msra.mxu0 0.0
          %4797 = vmatprep.subr.mxu0 0.0
          %4798 = vmatpush2.xpose.msra.mxu0 0.0
          %4799 = vmatprep.subr.mxu0 0.0
          %4800 = vmatpush2.xpose.msra.mxu0 0.0
          %4801 = vmatprep.subr.mxu0 0.0
          %4802 = vmatpush2.xpose.msra.mxu0 0.0
          %4803 = vmatprep.subr.mxu0 0.0
          %4804 = vmatpush2.xpose.msra.mxu0 0.0
          %4805 = vmatprep.subr.mxu0 0.0
          %4806 = vmatpush2.xpose.msra.mxu0 0.0
          %4807 = vmatprep.subr.mxu0 0.0
          %4808 = vmatpush2.xpose.msra.mxu0 0.0
          %4809 = vmatprep.subr.mxu0 0.0
          %4810 = vmatpush2.xpose.msra.mxu0 0.0
          %4811 = vmatprep.subr.mxu0 0.0
          %4812 = vmatpush2.xpose.msra.mxu0 0.0
          %4813 = vmatprep.subr.mxu0 0.0
          %4814 = vmatpush2.xpose.msra.mxu0 0.0
          %4815 = vmatprep.subr.mxu0 0.0
          %4816 = vmatpush2.xpose.msra.mxu0 0.0
          %4817 = vmatprep.subr.mxu0 0.0
          %4818 = vmatpush2.xpose.msra.mxu0 0.0
          %4819 = vmatprep.subr.mxu0 0.0
          %4820 = vmatpush2.xpose.msra.mxu0 0.0
          %4821 = vmatprep.subr.mxu0 0.0
          %4822 = vmatpush2.xpose.msra.mxu0 0.0
          %4823 = vmatprep.subr.mxu0 0.0
          %4824 = vmatpush2.xpose.msra.mxu0 0.0
          %4825 = vmatprep.subr.mxu0 0.0
          %4826 = vmatpush2.xpose.msra.mxu0 0.0
          %4827 = vmatprep.mubr.f32.mxu0 0.0
          %4828 = vmatmul.mubr.f32.gmra.mxu0 %v564
          %v4829 = vpop.f32.mrf.mxu0
          %v4830 = vadd.f32 0.0, %v4829
          %v4831 = vpop.f32.mrf.mxu0
          %4832 = vmatprep.mubr.f32.mxu0 0.0
          %4833 = vmatmul.mubr.f32.gmra.mxu0 %v565
          %v4834 = vpop.f32.mrf.mxu0
          %v4835 = vadd.f32 0.0, %v4834
          %v4836 = vpop.f32.mrf.mxu0
          %4837 = vmatprep.mubr.f32.mxu0 0.0
          %4838 = vmatmul.mubr.f32.gmra.mxu0 %v566
          %v4839 = vpop.f32.mrf.mxu0
          %v4840 = vadd.f32 0.0, %v4839
          %v4841 = vpop.f32.mrf.mxu0
          %4842 = vmatprep.mubr.f32.mxu0 0.0
          %4843 = vmatmul.mubr.f32.gmra.mxu0 %v567
          %v4844 = vpop.f32.mrf.mxu0
          %v4845 = vadd.f32 0.0, %v4844
          %v4846 = vpop.f32.mrf.mxu0
          %4847 = vmatprep.mubr.f32.mxu0 0.0
          %4848 = vmatmul.mubr.f32.gmra.mxu0 %v568
          %v4849 = vpop.f32.mrf.mxu0
          %v4850 = vadd.f32 0.0, %v4849
          %v4851 = vpop.f32.mrf.mxu0
          %4852 = vmatprep.mubr.f32.mxu0 0.0
          %4853 = vmatmul.mubr.f32.gmra.mxu0 %v569
          %v4854 = vpop.f32.mrf.mxu0
          %v4855 = vadd.f32 0.0, %v4854
          %v4856 = vpop.f32.mrf.mxu0
          %4857 = vmatprep.mubr.f32.mxu0 0.0
          %4858 = vmatmul.mubr.f32.gmra.mxu0 %v570
          %v4859 = vpop.f32.mrf.mxu0
          %v4860 = vadd.f32 0.0, %v4859
          %v4861 = vpop.f32.mrf.mxu0
          %4862 = vmatprep.mubr.f32.mxu0 0.0
          %4863 = vmatmul.mubr.f32.gmra.mxu0 %v571
          %v4864 = vpop.f32.mrf.mxu0
          %v4865 = vadd.f32 0.0, %v4864
          %v4866 = vpop.f32.mrf.mxu0
          %4867 = vmatprep.mubr.f32.mxu0 0.0
          %4868 = vmatmul.mubr.f32.gmra.mxu0 %v572
          %v4869 = vpop.f32.mrf.mxu0
          %v4870 = vadd.f32 0.0, %v4869
          %v4871 = vpop.f32.mrf.mxu0
          %4872 = vmatprep.mubr.f32.mxu0 0.0
          %4873 = vmatmul.mubr.f32.gmra.mxu0 %v573
          %v4874 = vpop.f32.mrf.mxu0
          %v4875 = vadd.f32 0.0, %v4874
          %v4876 = vpop.f32.mrf.mxu0
          %4877 = vmatprep.mubr.f32.mxu0 0.0
          %4878 = vmatmul.mubr.f32.gmra.mxu0 %v574
          %v4879 = vpop.f32.mrf.mxu0
          %v4880 = vadd.f32 0.0, %v4879
          %v4881 = vpop.f32.mrf.mxu0
          %4882 = vmatprep.mubr.f32.mxu0 0.0
          %4883 = vmatmul.mubr.f32.gmra.mxu0 %v575
          %v4884 = vpop.f32.mrf.mxu0
          %v4885 = vadd.f32 0.0, %v4884
          %v4886 = vpop.f32.mrf.mxu0
          %4887 = vmatprep.mubr.f32.mxu0 0.0
          %4888 = vmatmul.mubr.f32.gmra.mxu0 %v576
          %v4889 = vpop.f32.mrf.mxu0
          %v4890 = vadd.f32 0.0, %v4889
          %v4891 = vpop.f32.mrf.mxu0
          %4892 = vmatprep.mubr.f32.mxu0 0.0
          %4893 = vmatmul.mubr.f32.gmra.mxu0 %v577
          %v4894 = vpop.f32.mrf.mxu0
          %v4895 = vadd.f32 0.0, %v4894
          %v4896 = vpop.f32.mrf.mxu0
          %4897 = vmatprep.mubr.f32.mxu0 0.0
          %4898 = vmatmul.mubr.f32.gmra.mxu0 %v578
          %v4899 = vpop.f32.mrf.mxu0
          %v4900 = vadd.f32 0.0, %v4899
          %v4901 = vpop.f32.mrf.mxu0
          %4902 = vmatprep.mubr.f32.mxu0 0.0
          %4903 = vmatmul.mubr.f32.gmra.mxu0 %v579
          %v4904 = vpop.f32.mrf.mxu0
          %v4905 = vadd.f32 0.0, %v4904
          %v4906 = vpop.f32.mrf.mxu0
          %4907 = vmatprep.mubr.f32.mxu0 0.0
          %4908 = vmatmul.mubr.f32.gmra.mxu0 %v580
          %v4909 = vpop.f32.mrf.mxu0
          %v4910 = vadd.f32 0.0, %v4909
          %v4911 = vpop.f32.mrf.mxu0
          %4912 = vmatprep.mubr.f32.mxu0 0.0
          %4913 = vmatmul.mubr.f32.gmra.mxu0 %v581
          %v4914 = vpop.f32.mrf.mxu0
          %v4915 = vadd.f32 0.0, %v4914
          %v4916 = vpop.f32.mrf.mxu0
          %4917 = vmatprep.mubr.f32.mxu0 0.0
          %4918 = vmatmul.mubr.f32.gmra.mxu0 %v582
          %v4919 = vpop.f32.mrf.mxu0
          %v4920 = vadd.f32 0.0, %v4919
          %v4921 = vpop.f32.mrf.mxu0
          %4922 = vmatprep.mubr.f32.mxu0 0.0
          %4923 = vmatmul.mubr.f32.gmra.mxu0 %v583
          %v4924 = vpop.f32.mrf.mxu0
          %v4925 = vadd.f32 0.0, %v4924
          %v4926 = vpop.f32.mrf.mxu0
          %4927 = vmatprep.mubr.f32.mxu0 0.0
          %4928 = vmatmul.mubr.f32.gmra.mxu0 %v584
          %v4929 = vpop.f32.mrf.mxu0
          %v4930 = vadd.f32 0.0, %v4929
          %v4931 = vpop.f32.mrf.mxu0
          %4932 = vmatprep.mubr.f32.mxu0 0.0
          %4933 = vmatmul.mubr.f32.gmra.mxu0 %v585
          %v4934 = vpop.f32.mrf.mxu0
          %v4935 = vadd.f32 0.0, %v4934
          %v4936 = vpop.f32.mrf.mxu0
          %4937 = vmatprep.mubr.f32.mxu0 0.0
          %4938 = vmatmul.mubr.f32.gmra.mxu0 %v586
          %v4939 = vpop.f32.mrf.mxu0
          %v4940 = vadd.f32 0.0, %v4939
          %v4941 = vpop.f32.mrf.mxu0
          %4942 = vmatprep.mubr.f32.mxu0 0.0
          %4943 = vmatmul.mubr.f32.gmra.mxu0 %v587
          %v4944 = vpop.f32.mrf.mxu0
          %v4945 = vadd.f32 0.0, %v4944
          %v4946 = vpop.f32.mrf.mxu0
          %4947 = vmatprep.mubr.f32.mxu0 0.0
          %4948 = vmatmul.mubr.f32.gmra.mxu0 %v588
          %v4949 = vpop.f32.mrf.mxu0
          %v4950 = vadd.f32 0.0, %v4949
          %v4951 = vpop.f32.mrf.mxu0
          %4952 = vmatprep.mubr.f32.mxu0 0.0
          %4953 = vmatmul.mubr.f32.gmra.mxu0 %v589
          %v4954 = vpop.f32.mrf.mxu0
          %v4955 = vadd.f32 0.0, %v4954
          %v4956 = vpop.f32.mrf.mxu0
          %4957 = vmatprep.mubr.f32.mxu0 0.0
          %4958 = vmatmul.mubr.f32.gmra.mxu0 %v590
          %v4959 = vpop.f32.mrf.mxu0
          %v4960 = vadd.f32 0.0, %v4959
          %v4961 = vpop.f32.mrf.mxu0
          %4962 = vmatprep.mubr.f32.mxu0 0.0
          %4963 = vmatmul.mubr.f32.gmra.mxu0 %v591
          %v4964 = vpop.f32.mrf.mxu0
          %v4965 = vadd.f32 0.0, %v4964
          %v4966 = vpop.f32.mrf.mxu0
          %4967 = vmatprep.mubr.f32.mxu0 0.0
          %4968 = vmatmul.mubr.f32.gmra.mxu0 %v592
          %v4969 = vpop.f32.mrf.mxu0
          %v4970 = vadd.f32 0.0, %v4969
          %v4971 = vpop.f32.mrf.mxu0
          %4972 = vmatprep.mubr.f32.mxu0 0.0
          %4973 = vmatmul.mubr.f32.gmra.mxu0 %v593
          %v4974 = vpop.f32.mrf.mxu0
          %v4975 = vadd.f32 0.0, %v4974
          %v4976 = vpop.f32.mrf.mxu0
          %4977 = vmatprep.mubr.f32.mxu0 0.0
          %4978 = vmatmul.mubr.f32.gmra.mxu0 %v594
          %v4979 = vpop.f32.mrf.mxu0
          %v4980 = vadd.f32 0.0, %v4979
          %v4981 = vpop.f32.mrf.mxu0
          %4982 = vmatprep.mubr.f32.mxu0 0.0
          %4983 = vmatmul.mubr.f32.gmra.mxu0 %v595
          %v4984 = vpop.f32.mrf.mxu0
          %v4985 = vadd.f32 0.0, %v4984
          %v4986 = vpop.f32.mrf.mxu0
          %4987 = vdwg.mxu0
          %v4988 = vadd.f32 %v4830, %v430
          %v4989 = vadd.f32 %v4835, %v431
          %v4990 = vadd.f32 %v4840, %v432
          %v4991 = vadd.f32 %v4845, %v433
          %v4992 = vadd.f32 %v4850, %v434
          %v4993 = vadd.f32 %v4855, %v435
          %v4994 = vadd.f32 %v4860, %v436
          %v4995 = vadd.f32 %v4865, %v437
          %v4996 = vadd.f32 %v4870, %v438
          %v4997 = vadd.f32 %v4875, %v439
          %v4998 = vadd.f32 %v4880, %v440
          %v4999 = vadd.f32 %v4885, %v441
          %v5000 = vadd.f32 %v4890, %v442
          %v5001 = vadd.f32 %v4895, %v443
          %v5002 = vadd.f32 %v4900, %v444
          %v5003 = vadd.f32 %v4905, %v445
          %s5004 = smul.f32 %s4665, 0.0078125
          %v5005 = vstv %s5004
          %v5006 = vadd.f32 %v396, %v5005
          %v5007 = vmul.f32 %v5006, %v4747
          %v5008 = vlaneseq
          %v5009 = vshrl.u32 %v5008, 7
          %v5010 = vsub.s32 0, %v5009
          %v5011 = vrot.slane %v5007, %v5010
          %5013 = vset.pattern.permute.xlu0 0
          %5014 = vperm.xlu0 %5013, %v4910
          %v5015 = vpop.permute.xlu0 %5014
          %5018 = vset.pattern.permute.xlu0 0
          %5019 = vperm.xlu0 %5018, %v4915
          %v5020 = vpop.permute.xlu0 %5019
          %5023 = vset.pattern.permute.xlu0 0
          %5024 = vperm.xlu0 %5023, %v4920
          %v5025 = vpop.permute.xlu0 %5024
          %5028 = vset.pattern.permute.xlu0 0
          %5029 = vperm.xlu0 %5028, %v4925
          %v5030 = vpop.permute.xlu0 %5029
          %5033 = vset.pattern.permute.xlu0 0
          %5034 = vperm.xlu0 %5033, %v4930
          %v5035 = vpop.permute.xlu0 %5034
          %5038 = vset.pattern.permute.xlu0 0
          %5039 = vperm.xlu0 %5038, %v4935
          %v5040 = vpop.permute.xlu0 %5039
          %5043 = vset.pattern.permute.xlu0 0
          %5044 = vperm.xlu0 %5043, %v4940
          %v5045 = vpop.permute.xlu0 %5044
          %5048 = vset.pattern.permute.xlu0 0
          %5049 = vperm.xlu0 %5048, %v4945
          %v5050 = vpop.permute.xlu0 %5049
          %5053 = vset.pattern.permute.xlu0 0
          %5054 = vperm.xlu0 %5053, %v4950
          %v5055 = vpop.permute.xlu0 %5054
          %5058 = vset.pattern.permute.xlu0 0
          %5059 = vperm.xlu0 %5058, %v4955
          %v5060 = vpop.permute.xlu0 %5059
          %5063 = vset.pattern.permute.xlu0 0
          %5064 = vperm.xlu0 %5063, %v4960
          %v5065 = vpop.permute.xlu0 %5064
          %5068 = vset.pattern.permute.xlu0 0
          %5069 = vperm.xlu0 %5068, %v4965
          %v5070 = vpop.permute.xlu0 %5069
          %5073 = vset.pattern.permute.xlu0 0
          %5074 = vperm.xlu0 %5073, %v4970
          %v5075 = vpop.permute.xlu0 %5074
          %5078 = vset.pattern.permute.xlu0 0
          %5079 = vperm.xlu0 %5078, %v4975
          %v5080 = vpop.permute.xlu0 %5079
          %5083 = vset.pattern.permute.xlu0 0
          %5084 = vperm.xlu0 %5083, %v4980
          %v5085 = vpop.permute.xlu0 %5084
          %5088 = vset.pattern.permute.xlu0 0
          %5089 = vperm.xlu0 %5088, %v4985
          %v5090 = vpop.permute.xlu0 %5089
          %vm5092 = vcmp.ge.f32.partialorder %v5011, %v5015
          %vm5093 = vcmp.ge.f32.partialorder %v5011, %v5020
          %vm5094 = vcmp.ge.f32.partialorder %v5011, %v5025
          %vm5095 = vcmp.ge.f32.partialorder %v5011, %v5030
          %vm5096 = vcmp.ge.f32.partialorder %v5011, %v5035
          %vm5097 = vcmp.ge.f32.partialorder %v5011, %v5040
          %vm5098 = vcmp.ge.f32.partialorder %v5011, %v5045
          %vm5099 = vcmp.ge.f32.partialorder %v5011, %v5050
          %vm5100 = vcmp.ge.f32.partialorder %v5011, %v5055
          %vm5101 = vcmp.ge.f32.partialorder %v5011, %v5060
          %vm5102 = vcmp.ge.f32.partialorder %v5011, %v5065
          %vm5103 = vcmp.ge.f32.partialorder %v5011, %v5070
          %vm5104 = vcmp.ge.f32.partialorder %v5011, %v5075
          %vm5105 = vcmp.ge.f32.partialorder %v5011, %v5080
          %vm5106 = vcmp.ge.f32.partialorder %v5011, %v5085
          %vm5107 = vcmp.ge.f32.partialorder %v5011, %v5090
          %5109 = vset.pattern.permute.xlu0 0
          %5110 = vperm.xlu0 %5109, %v4988
          %v5111 = vpop.permute.xlu0 %5110
          %5114 = vset.pattern.permute.xlu0 0
          %5115 = vperm.xlu0 %5114, %v4989
          %v5116 = vpop.permute.xlu0 %5115
          %5119 = vset.pattern.permute.xlu0 0
          %5120 = vperm.xlu0 %5119, %v4990
          %v5121 = vpop.permute.xlu0 %5120
          %5124 = vset.pattern.permute.xlu0 0
          %5125 = vperm.xlu0 %5124, %v4991
          %v5126 = vpop.permute.xlu0 %5125
          %5129 = vset.pattern.permute.xlu0 0
          %5130 = vperm.xlu0 %5129, %v4992
          %v5131 = vpop.permute.xlu0 %5130
          %5134 = vset.pattern.permute.xlu0 0
          %5135 = vperm.xlu0 %5134, %v4993
          %v5136 = vpop.permute.xlu0 %5135
          %5139 = vset.pattern.permute.xlu0 0
          %5140 = vperm.xlu0 %5139, %v4994
          %v5141 = vpop.permute.xlu0 %5140
          %5144 = vset.pattern.permute.xlu0 0
          %5145 = vperm.xlu0 %5144, %v4995
          %v5146 = vpop.permute.xlu0 %5145
          %5149 = vset.pattern.permute.xlu0 0
          %5150 = vperm.xlu0 %5149, %v4996
          %v5151 = vpop.permute.xlu0 %5150
          %5154 = vset.pattern.permute.xlu0 0
          %5155 = vperm.xlu0 %5154, %v4997
          %v5156 = vpop.permute.xlu0 %5155
          %5159 = vset.pattern.permute.xlu0 0
          %5160 = vperm.xlu0 %5159, %v4998
          %v5161 = vpop.permute.xlu0 %5160
          %5164 = vset.pattern.permute.xlu0 0
          %5165 = vperm.xlu0 %5164, %v4999
          %v5166 = vpop.permute.xlu0 %5165
          %5169 = vset.pattern.permute.xlu0 0
          %5170 = vperm.xlu0 %5169, %v5000
          %v5171 = vpop.permute.xlu0 %5170
          %5174 = vset.pattern.permute.xlu0 0
          %5175 = vperm.xlu0 %5174, %v5001
          %v5176 = vpop.permute.xlu0 %5175
          %5179 = vset.pattern.permute.xlu0 0
          %5180 = vperm.xlu0 %5179, %v5002
          %v5181 = vpop.permute.xlu0 %5180
          %5184 = vset.pattern.permute.xlu0 0
          %5185 = vperm.xlu0 %5184, %v5003
          %v5186 = vpop.permute.xlu0 %5185
          %vm5188 = vcmp.lt.f32.partialorder %v5011, %v5111
          %vm5189 = vcmp.lt.f32.partialorder %v5011, %v5116
          %vm5190 = vcmp.lt.f32.partialorder %v5011, %v5121
          %vm5191 = vcmp.lt.f32.partialorder %v5011, %v5126
          %vm5192 = vcmp.lt.f32.partialorder %v5011, %v5131
          %vm5193 = vcmp.lt.f32.partialorder %v5011, %v5136
          %vm5194 = vcmp.lt.f32.partialorder %v5011, %v5141
          %vm5195 = vcmp.lt.f32.partialorder %v5011, %v5146
          %vm5196 = vcmp.lt.f32.partialorder %v5011, %v5151
          %vm5197 = vcmp.lt.f32.partialorder %v5011, %v5156
          %vm5198 = vcmp.lt.f32.partialorder %v5011, %v5161
          %vm5199 = vcmp.lt.f32.partialorder %v5011, %v5166
          %vm5200 = vcmp.lt.f32.partialorder %v5011, %v5171
          %vm5201 = vcmp.lt.f32.partialorder %v5011, %v5176
          %vm5202 = vcmp.lt.f32.partialorder %v5011, %v5181
          %vm5203 = vcmp.lt.f32.partialorder %v5011, %v5186
          %vm5204 = vmand %vm5092, %vm5188
          %vm5205 = vmand %vm5093, %vm5189
          %vm5206 = vmand %vm5094, %vm5190
          %vm5207 = vmand %vm5095, %vm5191
          %vm5208 = vmand %vm5096, %vm5192
          %vm5209 = vmand %vm5097, %vm5193
          %vm5210 = vmand %vm5098, %vm5194
          %vm5211 = vmand %vm5099, %vm5195
          %vm5212 = vmand %vm5100, %vm5196
          %vm5213 = vmand %vm5101, %vm5197
          %vm5214 = vmand %vm5102, %vm5198
          %vm5215 = vmand %vm5103, %vm5199
          %vm5216 = vmand %vm5104, %vm5200
          %vm5217 = vmand %vm5105, %vm5201
          %vm5218 = vmand %vm5106, %vm5202
          %vm5219 = vmand %vm5107, %vm5203
          %v5220 = vsel %vm5204, 1, 0
          %v5221 = vsel %vm5205, 1, 0
          %v5222 = vsel %vm5206, 1, 0
          %v5223 = vsel %vm5207, 1, 0
          %v5224 = vsel %vm5208, 1, 0
          %v5225 = vsel %vm5209, 1, 0
          %v5226 = vsel %vm5210, 1, 0
          %v5227 = vsel %vm5211, 1, 0
          %v5228 = vsel %vm5212, 1, 0
          %v5229 = vsel %vm5213, 1, 0
          %v5230 = vsel %vm5214, 1, 0
          %v5231 = vsel %vm5215, 1, 0
          %v5232 = vsel %vm5216, 1, 0
          %v5233 = vsel %vm5217, 1, 0
          %v5234 = vsel %vm5218, 1, 0
          %v5235 = vsel %vm5219, 1, 0
          %v5236 = vcvt.s32.f32 %v5220
          %v5237 = vcvt.s32.f32 %v5221
          %v5238 = vcvt.s32.f32 %v5222
          %v5239 = vcvt.s32.f32 %v5223
          %v5240 = vcvt.s32.f32 %v5224
          %v5241 = vcvt.s32.f32 %v5225
          %v5242 = vcvt.s32.f32 %v5226
          %v5243 = vcvt.s32.f32 %v5227
          %v5244 = vcvt.s32.f32 %v5228
          %v5245 = vcvt.s32.f32 %v5229
          %v5246 = vcvt.s32.f32 %v5230
          %v5247 = vcvt.s32.f32 %v5231
          %v5248 = vcvt.s32.f32 %v5232
          %v5249 = vcvt.s32.f32 %v5233
          %v5250 = vcvt.s32.f32 %v5234
          %v5251 = vcvt.s32.f32 %v5235
          %v5252 = vlaneseq
          %v5253 = vshrl.u32 %v5252, 7
          %v5254 = vsub.s32 1, %v5253
          %v5255 = vrot.slane %v4669, %v5254
          %v5256 = vlaneseq
          %v5257 = vshrl.u32 %v5256, 7
          %v5258 = vsub.s32 0, %v5257
          %v5259 = vrot.slane %v4732, %v5258
          %v5260 = vsel %vm1087, %v5255, %v5259
          %v5261 = vlaneseq
          %v5262 = vshrl.u32 %v5261, 7
          %v5263 = vsub.s32 0, %v5262
          %v5264 = vrot.slane %v4705, %v5263
          %v5265 = vsel %vm558, %v5264, %v5260
          %5266 = vmatprep.subr.mxu0 0.0
          %5267 = vmatpush1.msra.mxu0 %v5251
          %5268 = vmatprep.subr.mxu0 0.0
          %5269 = vmatpush1.msra.mxu0 %v5250
          %5270 = vmatprep.subr.mxu0 0.0
          %5271 = vmatpush1.msra.mxu0 %v5249
          %5272 = vmatprep.subr.mxu0 0.0
          %5273 = vmatpush1.msra.mxu0 %v5248
          %5274 = vmatprep.subr.mxu0 0.0
          %5275 = vmatpush1.msra.mxu0 %v5247
          %5276 = vmatprep.subr.mxu0 0.0
          %5277 = vmatpush1.msra.mxu0 %v5246
          %5278 = vmatprep.subr.mxu0 0.0
          %5279 = vmatpush1.msra.mxu0 %v5245
          %5280 = vmatprep.subr.mxu0 0.0
          %5281 = vmatpush1.msra.mxu0 %v5244
          %5282 = vmatprep.subr.mxu0 0.0
          %5283 = vmatpush1.msra.mxu0 %v5243
          %5284 = vmatprep.subr.mxu0 0.0
          %5285 = vmatpush1.msra.mxu0 %v5242
          %5286 = vmatprep.subr.mxu0 0.0
          %5287 = vmatpush1.msra.mxu0 %v5241
          %5288 = vmatprep.subr.mxu0 0.0
          %5289 = vmatpush1.msra.mxu0 %v5240
          %5290 = vmatprep.subr.mxu0 0.0
          %5291 = vmatpush1.msra.mxu0 %v5239
          %5292 = vmatprep.subr.mxu0 0.0
          %5293 = vmatpush1.msra.mxu0 %v5238
          %5294 = vmatprep.subr.mxu0 0.0
          %5295 = vmatpush1.msra.mxu0 %v5237
          %5296 = vmatprep.subr.mxu0 0.0
          %5297 = vmatpush1.msra.mxu0 %v5236
          %5298 = vmatprep.subr.mxu0 0.0
          %5299 = vmatpush2.msra.mxu0 0.0
          %5300 = vmatprep.subr.mxu0 0.0
          %5301 = vmatpush2.msra.mxu0 0.0
          %5302 = vmatprep.subr.mxu0 0.0
          %5303 = vmatpush2.msra.mxu0 0.0
          %5304 = vmatprep.subr.mxu0 0.0
          %5305 = vmatpush2.msra.mxu0 0.0
          %5306 = vmatprep.subr.mxu0 0.0
          %5307 = vmatpush2.msra.mxu0 0.0
          %5308 = vmatprep.subr.mxu0 0.0
          %5309 = vmatpush2.msra.mxu0 0.0
          %5310 = vmatprep.subr.mxu0 0.0
          %5311 = vmatpush2.msra.mxu0 0.0
          %5312 = vmatprep.subr.mxu0 0.0
          %5313 = vmatpush2.msra.mxu0 0.0
          %5314 = vmatprep.subr.mxu0 0.0
          %5315 = vmatpush2.msra.mxu0 0.0
          %5316 = vmatprep.subr.mxu0 0.0
          %5317 = vmatpush2.msra.mxu0 0.0
          %5318 = vmatprep.subr.mxu0 0.0
          %5319 = vmatpush2.msra.mxu0 0.0
          %5320 = vmatprep.subr.mxu0 0.0
          %5321 = vmatpush2.msra.mxu0 0.0
          %5322 = vmatprep.subr.mxu0 0.0
          %5323 = vmatpush2.msra.mxu0 0.0
          %5324 = vmatprep.subr.mxu0 0.0
          %5325 = vmatpush2.msra.mxu0 0.0
          %5326 = vmatprep.subr.mxu0 0.0
          %5327 = vmatpush2.msra.mxu0 0.0
          %5328 = vmatprep.subr.mxu0 0.0
          %5329 = vmatpush2.msra.mxu0 0.0
          %5330 = vmatprep.mubr.f32.mxu0 0.0
          %5331 = vmatmul.mubr.f32.gmra.mxu0 %v5265
          %v5332 = vpop.f32.mrf.mxu0
          %v5333 = vadd.f32 0.0, %v5332
          %v5334 = vpop.f32.mrf.mxu0
          %5335 = vdwg.mxu0
          %vm5336 = vcmp.eq.s32.totalorder %v398, 6
          %v5337 = vsel %vm5336, 1, 0
          %vm5338 = vcmp.eq.s32.totalorder %v5337, 1
          %v5339 = vlaneseq
          %v5340 = vshrl.u32 %v5339, 7
          %v5341 = vsub.s32 2, %v5340
          %v5342 = vrot.slane %v5333, %v5341
          %v5343 = vsel %vm5338, %v5342, %v4648
          %v5344 = vlaneseq
          %v5345 = vshrl.u32 %v5344, 7
          %v5346 = vsub.s32 0, %v5345
          %v5347 = vrot.slane %v5333, %v5346
          %v5348 = vsel %vm5338, %v5347, %v4653
          %s5349 = sadd.s32 %s460, 7
          %s5350 = sadd.s32 %s458, 7
          %s5351 = scalar_lea.vmem %s326, %s5350 [#allocation12]
          %v5352 = vld [vmem:[%s5351] sm:$0x1]
          %s5353 = scalar_lea.vmem %s335, %s5350 [#allocation14]
          %v5354 = vld [vmem:[%s5353] sm:$0x1]
          %p5355 = scmp.gt.s32.totalorder %s4654, 0
          %s5356 = scalar_select %p5355, %s4654, 0
          %s5357 = sld [smem:[#allocation5 + %s5356]]
          %s5358 = sld [smem:[#allocation5 + %s5349]]
          %s5359 = sld [smem:[#allocation6 + %s5349]]
          %s5360 = sld [smem:[#allocation7 + %s5349]]
          %v5362 = vrot.slane %v5352, 7
          %v5364 = vadd.f32 %v5333, %v5362
          %v5365 = vsub.f32 %v5333, 1.0
          %v5366 = vmul.f32 %v5365, 0.6372646
          %v5367 = vmul.f32 %v5366, 1.442695
          %v5368 = vpow.pop %v5367
          %v5369 = vmul.f32 %v5368, 5.7326083
          %v5370 = vadd.f32 %v5369, -1.5961449
          %v5371 = vmul.f32 %v5365, -2.237382
          %v5372 = vadd.f32 %v5370, %v5371
          %v5373 = vrsqrt.pop %v5333
          %v5374 = vmul.f32 %v5333, %v5373
          %vm5375 = vcmp.eq.f32.partialorder %v5333, inf
          %v5376 = vsel %vm5375, %v5333, %v5374
          %vm5377 = vcmp.eq.f32.partialorder %v5333, 0.0
          %v5378 = vand.u32 %v5333, 2147483648
          %v5379 = vsel %vm5377, %v5378, %v5376
          %v5380 = vmul.f32 %v5379, -2.5447896
          %v5381 = vmul.f32 %v5380, 1.442695
          %v5382 = vpow.pop %v5381
          %v5383 = vsub.f32 0.07848956, %v5382
          %v5384 = vmul.f32 %v5383, 0.6412372
          %v5385 = vadd.f32 %v5372, %v5384
          %v5386 = vstv %s5357
          %v5387 = vmul.f32 %v5386, %v5364
          %v5389 = vrot.slane %v5387, 1
          %v5391 = vsub.f32 %v5385, %v5389
          %s5392 = smul.f32 %s5357, %s392
          %v5393 = vstv %s5392
          %v5394 = vmul.f32 %v5393, %v5391
          %v5395 = vsub.f32 %v5333, %v5394
          %v5396 = vadd.f32 %v5395, %v5354
          %vm5397 = vcmp.gt.f32.partialorder %v5396, 1.0
          %v5398 = vsel %vm5397, 1.0, %v5396
          %vm5399 = vcmp.lt.f32.partialorder %v5398, 0.0
          %v5400 = vsel %vm5399, 1e-10, %v5398
          %v5401 = vsub.f32 %v5400, 1.0
          %v5402 = vmul.f32 %v5401, 0.6372646
          %v5403 = vmul.f32 %v5402, 1.442695
          %v5404 = vpow.pop %v5403
          %v5405 = vmul.f32 %v5404, 5.7326083
          %v5406 = vadd.f32 %v5405, -1.5961449
          %v5407 = vmul.f32 %v5401, -2.237382
          %v5408 = vadd.f32 %v5406, %v5407
          %v5409 = vrsqrt.pop %v5400
          %v5410 = vmul.f32 %v5400, %v5409
          %vm5411 = vcmp.eq.f32.partialorder %v5400, inf
          %v5412 = vsel %vm5411, %v5400, %v5410
          %vm5413 = vcmp.eq.f32.partialorder %v5400, 0.0
          %v5414 = vand.u32 %v5400, 2147483648
          %v5415 = vsel %vm5413, %v5414, %v5412
          %v5416 = vmul.f32 %v5415, -2.5447896
          %v5417 = vmul.f32 %v5416, 1.442695
          %v5418 = vpow.pop %v5417
          %v5419 = vsub.f32 0.07848956, %v5418
          %v5420 = vmul.f32 %v5419, 0.6412372
          %v5421 = vadd.f32 %v5408, %v5420
          %v5422 = vstv %s5358
          %v5423 = vmul.f32 %v5422, %v5364
          %v5425 = vrot.slane %v5423, 1
          %v5427 = vsub.f32 %v5421, %v5425
          %v5428 = vstv %s5359
          %v5429 = vsub.f32 %v5427, %v5428
          %v5430 = vmul.f32 %v5429, 100.0
          %v5431 = vmul.f32 %v5430, 0.5
          %v5432 = vmul.f32 %v5431, %v5430
          %v5433 = vsub.f32 3.6862316, %v5432
          %v5434 = vsel %vm536, %v5433, -inf
          %5435 = vmax.xlane.f32.xlu0 %v5434
          %v5436 = vpop.xlane.xlu0 %5435
          %v5437 = vsub.f32 %v5433, %v5436
          %v5438 = vmul.f32 %v5437, 1.442695
          %v5439 = vpow.pop %v5438
          %v5440 = vsel %vm536, %v5439, 0.0
          %5441 = vadd.xlane.f32.xlu0 %v5440
          %v5442 = vpop.xlane.xlu0 %5441
          %v5443 = vlog2.pop %v5442
          %v5444 = vmul.f32 %v5443, 0.6931472
          %v5445 = vadd.f32 %v5436, %v5444
          %v5446 = vsub.f32 %v5445, 4.8520303
          %p5447 = scmp.lt.s32.totalorder %s5349, 100
          %s5448 = scalar_select %p5447, 1, 0
          %v5449 = vstv %s5448
          %vm5450 = vcmp.eq.s32.totalorder %v5449, 1
          %v5451 = vsel %vm5450, %v5446, 0.0
          %v5452 = vadd.f32 %v4757, %v5451
          %v5453 = vlaneseq
          %v5454 = vshrl.u32 %v5453, 7
          %v5455 = vsub.s32 0, %v5454
          %v5456 = vrot.slane %v5439, %v5455
          %v5457 = vsel %vm558, %v5456, 0.0
          %5458 = vmatprep.subr.mxu0 0.0
          %5459 = vmatpush1.xpose.msra.mxu0 0.0
          %5460 = vmatprep.subr.mxu0 0.0
          %5461 = vmatpush1.xpose.msra.mxu0 0.0
          %5462 = vmatprep.subr.mxu0 0.0
          %5463 = vmatpush1.xpose.msra.mxu0 0.0
          %5464 = vmatprep.subr.mxu0 0.0
          %5465 = vmatpush1.xpose.msra.mxu0 0.0
          %5466 = vmatprep.subr.mxu0 0.0
          %5467 = vmatpush1.xpose.msra.mxu0 0.0
          %5468 = vmatprep.subr.mxu0 0.0
          %5469 = vmatpush1.xpose.msra.mxu0 0.0
          %5470 = vmatprep.subr.mxu0 0.0
          %5471 = vmatpush1.xpose.msra.mxu0 0.0
          %5472 = vmatprep.subr.mxu0 0.0
          %5473 = vmatpush1.xpose.msra.mxu0 0.0
          %5474 = vmatprep.subr.mxu0 0.0
          %5475 = vmatpush1.xpose.msra.mxu0 0.0
          %5476 = vmatprep.subr.mxu0 0.0
          %5477 = vmatpush1.xpose.msra.mxu0 0.0
          %5478 = vmatprep.subr.mxu0 0.0
          %5479 = vmatpush1.xpose.msra.mxu0 0.0
          %5480 = vmatprep.subr.mxu0 0.0
          %5481 = vmatpush1.xpose.msra.mxu0 0.0
          %5482 = vmatprep.subr.mxu0 0.0
          %5483 = vmatpush1.xpose.msra.mxu0 0.0
          %5484 = vmatprep.subr.mxu0 0.0
          %5485 = vmatpush1.xpose.msra.mxu0 0.0
          %5486 = vmatprep.subr.mxu0 0.0
          %5487 = vmatpush1.xpose.msra.mxu0 0.0
          %5488 = vmatprep.subr.mxu0 0.0
          %5489 = vmatpush1.xpose.msra.mxu0 %v5457
          %5490 = vmatprep.subr.mxu0 0.0
          %5491 = vmatpush2.xpose.msra.mxu0 0.0
          %5492 = vmatprep.subr.mxu0 0.0
          %5493 = vmatpush2.xpose.msra.mxu0 0.0
          %5494 = vmatprep.subr.mxu0 0.0
          %5495 = vmatpush2.xpose.msra.mxu0 0.0
          %5496 = vmatprep.subr.mxu0 0.0
          %5497 = vmatpush2.xpose.msra.mxu0 0.0
          %5498 = vmatprep.subr.mxu0 0.0
          %5499 = vmatpush2.xpose.msra.mxu0 0.0
          %5500 = vmatprep.subr.mxu0 0.0
          %5501 = vmatpush2.xpose.msra.mxu0 0.0
          %5502 = vmatprep.subr.mxu0 0.0
          %5503 = vmatpush2.xpose.msra.mxu0 0.0
          %5504 = vmatprep.subr.mxu0 0.0
          %5505 = vmatpush2.xpose.msra.mxu0 0.0
          %5506 = vmatprep.subr.mxu0 0.0
          %5507 = vmatpush2.xpose.msra.mxu0 0.0
          %5508 = vmatprep.subr.mxu0 0.0
          %5509 = vmatpush2.xpose.msra.mxu0 0.0
          %5510 = vmatprep.subr.mxu0 0.0
          %5511 = vmatpush2.xpose.msra.mxu0 0.0
          %5512 = vmatprep.subr.mxu0 0.0
          %5513 = vmatpush2.xpose.msra.mxu0 0.0
          %5514 = vmatprep.subr.mxu0 0.0
          %5515 = vmatpush2.xpose.msra.mxu0 0.0
          %5516 = vmatprep.subr.mxu0 0.0
          %5517 = vmatpush2.xpose.msra.mxu0 0.0
          %5518 = vmatprep.subr.mxu0 0.0
          %5519 = vmatpush2.xpose.msra.mxu0 0.0
          %5520 = vmatprep.subr.mxu0 0.0
          %5521 = vmatpush2.xpose.msra.mxu0 0.0
          %5522 = vmatprep.mubr.f32.mxu0 0.0
          %5523 = vmatmul.mubr.f32.gmra.mxu0 %v564
          %v5524 = vpop.f32.mrf.mxu0
          %v5525 = vadd.f32 0.0, %v5524
          %v5526 = vpop.f32.mrf.mxu0
          %5527 = vmatprep.mubr.f32.mxu0 0.0
          %5528 = vmatmul.mubr.f32.gmra.mxu0 %v565
          %v5529 = vpop.f32.mrf.mxu0
          %v5530 = vadd.f32 0.0, %v5529
          %v5531 = vpop.f32.mrf.mxu0
          %5532 = vmatprep.mubr.f32.mxu0 0.0
          %5533 = vmatmul.mubr.f32.gmra.mxu0 %v566
          %v5534 = vpop.f32.mrf.mxu0
          %v5535 = vadd.f32 0.0, %v5534
          %v5536 = vpop.f32.mrf.mxu0
          %5537 = vmatprep.mubr.f32.mxu0 0.0
          %5538 = vmatmul.mubr.f32.gmra.mxu0 %v567
          %v5539 = vpop.f32.mrf.mxu0
          %v5540 = vadd.f32 0.0, %v5539
          %v5541 = vpop.f32.mrf.mxu0
          %5542 = vmatprep.mubr.f32.mxu0 0.0
          %5543 = vmatmul.mubr.f32.gmra.mxu0 %v568
          %v5544 = vpop.f32.mrf.mxu0
          %v5545 = vadd.f32 0.0, %v5544
          %v5546 = vpop.f32.mrf.mxu0
          %5547 = vmatprep.mubr.f32.mxu0 0.0
          %5548 = vmatmul.mubr.f32.gmra.mxu0 %v569
          %v5549 = vpop.f32.mrf.mxu0
          %v5550 = vadd.f32 0.0, %v5549
          %v5551 = vpop.f32.mrf.mxu0
          %5552 = vmatprep.mubr.f32.mxu0 0.0
          %5553 = vmatmul.mubr.f32.gmra.mxu0 %v570
          %v5554 = vpop.f32.mrf.mxu0
          %v5555 = vadd.f32 0.0, %v5554
          %v5556 = vpop.f32.mrf.mxu0
          %5557 = vmatprep.mubr.f32.mxu0 0.0
          %5558 = vmatmul.mubr.f32.gmra.mxu0 %v571
          %v5559 = vpop.f32.mrf.mxu0
          %v5560 = vadd.f32 0.0, %v5559
          %v5561 = vpop.f32.mrf.mxu0
          %5562 = vmatprep.mubr.f32.mxu0 0.0
          %5563 = vmatmul.mubr.f32.gmra.mxu0 %v572
          %v5564 = vpop.f32.mrf.mxu0
          %v5565 = vadd.f32 0.0, %v5564
          %v5566 = vpop.f32.mrf.mxu0
          %5567 = vmatprep.mubr.f32.mxu0 0.0
          %5568 = vmatmul.mubr.f32.gmra.mxu0 %v573
          %v5569 = vpop.f32.mrf.mxu0
          %v5570 = vadd.f32 0.0, %v5569
          %v5571 = vpop.f32.mrf.mxu0
          %5572 = vmatprep.mubr.f32.mxu0 0.0
          %5573 = vmatmul.mubr.f32.gmra.mxu0 %v574
          %v5574 = vpop.f32.mrf.mxu0
          %v5575 = vadd.f32 0.0, %v5574
          %v5576 = vpop.f32.mrf.mxu0
          %5577 = vmatprep.mubr.f32.mxu0 0.0
          %5578 = vmatmul.mubr.f32.gmra.mxu0 %v575
          %v5579 = vpop.f32.mrf.mxu0
          %v5580 = vadd.f32 0.0, %v5579
          %v5581 = vpop.f32.mrf.mxu0
          %5582 = vmatprep.mubr.f32.mxu0 0.0
          %5583 = vmatmul.mubr.f32.gmra.mxu0 %v576
          %v5584 = vpop.f32.mrf.mxu0
          %v5585 = vadd.f32 0.0, %v5584
          %v5586 = vpop.f32.mrf.mxu0
          %5587 = vmatprep.mubr.f32.mxu0 0.0
          %5588 = vmatmul.mubr.f32.gmra.mxu0 %v577
          %v5589 = vpop.f32.mrf.mxu0
          %v5590 = vadd.f32 0.0, %v5589
          %v5591 = vpop.f32.mrf.mxu0
          %5592 = vmatprep.mubr.f32.mxu0 0.0
          %5593 = vmatmul.mubr.f32.gmra.mxu0 %v578
          %v5594 = vpop.f32.mrf.mxu0
          %v5595 = vadd.f32 0.0, %v5594
          %v5596 = vpop.f32.mrf.mxu0
          %5597 = vmatprep.mubr.f32.mxu0 0.0
          %5598 = vmatmul.mubr.f32.gmra.mxu0 %v579
          %v5599 = vpop.f32.mrf.mxu0
          %v5600 = vadd.f32 0.0, %v5599
          %v5601 = vpop.f32.mrf.mxu0
          %5602 = vmatprep.mubr.f32.mxu0 0.0
          %5603 = vmatmul.mubr.f32.gmra.mxu0 %v580
          %v5604 = vpop.f32.mrf.mxu0
          %v5605 = vadd.f32 0.0, %v5604
          %v5606 = vpop.f32.mrf.mxu0
          %5607 = vmatprep.mubr.f32.mxu0 0.0
          %5608 = vmatmul.mubr.f32.gmra.mxu0 %v581
          %v5609 = vpop.f32.mrf.mxu0
          %v5610 = vadd.f32 0.0, %v5609
          %v5611 = vpop.f32.mrf.mxu0
          %5612 = vmatprep.mubr.f32.mxu0 0.0
          %5613 = vmatmul.mubr.f32.gmra.mxu0 %v582
          %v5614 = vpop.f32.mrf.mxu0
          %v5615 = vadd.f32 0.0, %v5614
          %v5616 = vpop.f32.mrf.mxu0
          %5617 = vmatprep.mubr.f32.mxu0 0.0
          %5618 = vmatmul.mubr.f32.gmra.mxu0 %v583
          %v5619 = vpop.f32.mrf.mxu0
          %v5620 = vadd.f32 0.0, %v5619
          %v5621 = vpop.f32.mrf.mxu0
          %5622 = vmatprep.mubr.f32.mxu0 0.0
          %5623 = vmatmul.mubr.f32.gmra.mxu0 %v584
          %v5624 = vpop.f32.mrf.mxu0
          %v5625 = vadd.f32 0.0, %v5624
          %v5626 = vpop.f32.mrf.mxu0
          %5627 = vmatprep.mubr.f32.mxu0 0.0
          %5628 = vmatmul.mubr.f32.gmra.mxu0 %v585
          %v5629 = vpop.f32.mrf.mxu0
          %v5630 = vadd.f32 0.0, %v5629
          %v5631 = vpop.f32.mrf.mxu0
          %5632 = vmatprep.mubr.f32.mxu0 0.0
          %5633 = vmatmul.mubr.f32.gmra.mxu0 %v586
          %v5634 = vpop.f32.mrf.mxu0
          %v5635 = vadd.f32 0.0, %v5634
          %v5636 = vpop.f32.mrf.mxu0
          %5637 = vmatprep.mubr.f32.mxu0 0.0
          %5638 = vmatmul.mubr.f32.gmra.mxu0 %v587
          %v5639 = vpop.f32.mrf.mxu0
          %v5640 = vadd.f32 0.0, %v5639
          %v5641 = vpop.f32.mrf.mxu0
          %5642 = vmatprep.mubr.f32.mxu0 0.0
          %5643 = vmatmul.mubr.f32.gmra.mxu0 %v588
          %v5644 = vpop.f32.mrf.mxu0
          %v5645 = vadd.f32 0.0, %v5644
          %v5646 = vpop.f32.mrf.mxu0
          %5647 = vmatprep.mubr.f32.mxu0 0.0
          %5648 = vmatmul.mubr.f32.gmra.mxu0 %v589
          %v5649 = vpop.f32.mrf.mxu0
          %v5650 = vadd.f32 0.0, %v5649
          %v5651 = vpop.f32.mrf.mxu0
          %5652 = vmatprep.mubr.f32.mxu0 0.0
          %5653 = vmatmul.mubr.f32.gmra.mxu0 %v590
          %v5654 = vpop.f32.mrf.mxu0
          %v5655 = vadd.f32 0.0, %v5654
          %v5656 = vpop.f32.mrf.mxu0
          %5657 = vmatprep.mubr.f32.mxu0 0.0
          %5658 = vmatmul.mubr.f32.gmra.mxu0 %v591
          %v5659 = vpop.f32.mrf.mxu0
          %v5660 = vadd.f32 0.0, %v5659
          %v5661 = vpop.f32.mrf.mxu0
          %5662 = vmatprep.mubr.f32.mxu0 0.0
          %5663 = vmatmul.mubr.f32.gmra.mxu0 %v592
          %v5664 = vpop.f32.mrf.mxu0
          %v5665 = vadd.f32 0.0, %v5664
          %v5666 = vpop.f32.mrf.mxu0
          %5667 = vmatprep.mubr.f32.mxu0 0.0
          %5668 = vmatmul.mubr.f32.gmra.mxu0 %v593
          %v5669 = vpop.f32.mrf.mxu0
          %v5670 = vadd.f32 0.0, %v5669
          %v5671 = vpop.f32.mrf.mxu0
          %5672 = vmatprep.mubr.f32.mxu0 0.0
          %5673 = vmatmul.mubr.f32.gmra.mxu0 %v594
          %v5674 = vpop.f32.mrf.mxu0
          %v5675 = vadd.f32 0.0, %v5674
          %v5676 = vpop.f32.mrf.mxu0
          %5677 = vmatprep.mubr.f32.mxu0 0.0
          %5678 = vmatmul.mubr.f32.gmra.mxu0 %v595
          %v5679 = vpop.f32.mrf.mxu0
          %v5680 = vadd.f32 0.0, %v5679
          %v5681 = vpop.f32.mrf.mxu0
          %5682 = vdwg.mxu0
          %v5683 = vadd.f32 %v5525, %v430
          %v5684 = vadd.f32 %v5530, %v431
          %v5685 = vadd.f32 %v5535, %v432
          %v5686 = vadd.f32 %v5540, %v433
          %v5687 = vadd.f32 %v5545, %v434
          %v5688 = vadd.f32 %v5550, %v435
          %v5689 = vadd.f32 %v5555, %v436
          %v5690 = vadd.f32 %v5560, %v437
          %v5691 = vadd.f32 %v5565, %v438
          %v5692 = vadd.f32 %v5570, %v439
          %v5693 = vadd.f32 %v5575, %v440
          %v5694 = vadd.f32 %v5580, %v441
          %v5695 = vadd.f32 %v5585, %v442
          %v5696 = vadd.f32 %v5590, %v443
          %v5697 = vadd.f32 %v5595, %v444
          %v5698 = vadd.f32 %v5600, %v445
          %s5699 = smul.f32 %s5360, 0.0078125
          %v5700 = vstv %s5699
          %v5701 = vadd.f32 %v396, %v5700
          %v5702 = vmul.f32 %v5701, %v5442
          %v5703 = vlaneseq
          %v5704 = vshrl.u32 %v5703, 7
          %v5705 = vsub.s32 0, %v5704
          %v5706 = vrot.slane %v5702, %v5705
          %5708 = vset.pattern.permute.xlu0 0
          %5709 = vperm.xlu0 %5708, %v5605
          %v5710 = vpop.permute.xlu0 %5709
          %5713 = vset.pattern.permute.xlu0 0
          %5714 = vperm.xlu0 %5713, %v5610
          %v5715 = vpop.permute.xlu0 %5714
          %5718 = vset.pattern.permute.xlu0 0
          %5719 = vperm.xlu0 %5718, %v5615
          %v5720 = vpop.permute.xlu0 %5719
          %5723 = vset.pattern.permute.xlu0 0
          %5724 = vperm.xlu0 %5723, %v5620
          %v5725 = vpop.permute.xlu0 %5724
          %5728 = vset.pattern.permute.xlu0 0
          %5729 = vperm.xlu0 %5728, %v5625
          %v5730 = vpop.permute.xlu0 %5729
          %5733 = vset.pattern.permute.xlu0 0
          %5734 = vperm.xlu0 %5733, %v5630
          %v5735 = vpop.permute.xlu0 %5734
          %5738 = vset.pattern.permute.xlu0 0
          %5739 = vperm.xlu0 %5738, %v5635
          %v5740 = vpop.permute.xlu0 %5739
          %5743 = vset.pattern.permute.xlu0 0
          %5744 = vperm.xlu0 %5743, %v5640
          %v5745 = vpop.permute.xlu0 %5744
          %5748 = vset.pattern.permute.xlu0 0
          %5749 = vperm.xlu0 %5748, %v5645
          %v5750 = vpop.permute.xlu0 %5749
          %5753 = vset.pattern.permute.xlu0 0
          %5754 = vperm.xlu0 %5753, %v5650
          %v5755 = vpop.permute.xlu0 %5754
          %5758 = vset.pattern.permute.xlu0 0
          %5759 = vperm.xlu0 %5758, %v5655
          %v5760 = vpop.permute.xlu0 %5759
          %5763 = vset.pattern.permute.xlu0 0
          %5764 = vperm.xlu0 %5763, %v5660
          %v5765 = vpop.permute.xlu0 %5764
          %5768 = vset.pattern.permute.xlu0 0
          %5769 = vperm.xlu0 %5768, %v5665
          %v5770 = vpop.permute.xlu0 %5769
          %5773 = vset.pattern.permute.xlu0 0
          %5774 = vperm.xlu0 %5773, %v5670
          %v5775 = vpop.permute.xlu0 %5774
          %5778 = vset.pattern.permute.xlu0 0
          %5779 = vperm.xlu0 %5778, %v5675
          %v5780 = vpop.permute.xlu0 %5779
          %5783 = vset.pattern.permute.xlu0 0
          %5784 = vperm.xlu0 %5783, %v5680
          %v5785 = vpop.permute.xlu0 %5784
          %vm5787 = vcmp.ge.f32.partialorder %v5706, %v5710
          %vm5788 = vcmp.ge.f32.partialorder %v5706, %v5715
          %vm5789 = vcmp.ge.f32.partialorder %v5706, %v5720
          %vm5790 = vcmp.ge.f32.partialorder %v5706, %v5725
          %vm5791 = vcmp.ge.f32.partialorder %v5706, %v5730
          %vm5792 = vcmp.ge.f32.partialorder %v5706, %v5735
          %vm5793 = vcmp.ge.f32.partialorder %v5706, %v5740
          %vm5794 = vcmp.ge.f32.partialorder %v5706, %v5745
          %vm5795 = vcmp.ge.f32.partialorder %v5706, %v5750
          %vm5796 = vcmp.ge.f32.partialorder %v5706, %v5755
          %vm5797 = vcmp.ge.f32.partialorder %v5706, %v5760
          %vm5798 = vcmp.ge.f32.partialorder %v5706, %v5765
          %vm5799 = vcmp.ge.f32.partialorder %v5706, %v5770
          %vm5800 = vcmp.ge.f32.partialorder %v5706, %v5775
          %vm5801 = vcmp.ge.f32.partialorder %v5706, %v5780
          %vm5802 = vcmp.ge.f32.partialorder %v5706, %v5785
          %5804 = vset.pattern.permute.xlu0 0
          %5805 = vperm.xlu0 %5804, %v5683
          %v5806 = vpop.permute.xlu0 %5805
          %5809 = vset.pattern.permute.xlu0 0
          %5810 = vperm.xlu0 %5809, %v5684
          %v5811 = vpop.permute.xlu0 %5810
          %5814 = vset.pattern.permute.xlu0 0
          %5815 = vperm.xlu0 %5814, %v5685
          %v5816 = vpop.permute.xlu0 %5815
          %5819 = vset.pattern.permute.xlu0 0
          %5820 = vperm.xlu0 %5819, %v5686
          %v5821 = vpop.permute.xlu0 %5820
          %5824 = vset.pattern.permute.xlu0 0
          %5825 = vperm.xlu0 %5824, %v5687
          %v5826 = vpop.permute.xlu0 %5825
          %5829 = vset.pattern.permute.xlu0 0
          %5830 = vperm.xlu0 %5829, %v5688
          %v5831 = vpop.permute.xlu0 %5830
          %5834 = vset.pattern.permute.xlu0 0
          %5835 = vperm.xlu0 %5834, %v5689
          %v5836 = vpop.permute.xlu0 %5835
          %5839 = vset.pattern.permute.xlu0 0
          %5840 = vperm.xlu0 %5839, %v5690
          %v5841 = vpop.permute.xlu0 %5840
          %5844 = vset.pattern.permute.xlu0 0
          %5845 = vperm.xlu0 %5844, %v5691
          %v5846 = vpop.permute.xlu0 %5845
          %5849 = vset.pattern.permute.xlu0 0
          %5850 = vperm.xlu0 %5849, %v5692
          %v5851 = vpop.permute.xlu0 %5850
          %5854 = vset.pattern.permute.xlu0 0
          %5855 = vperm.xlu0 %5854, %v5693
          %v5856 = vpop.permute.xlu0 %5855
          %5859 = vset.pattern.permute.xlu0 0
          %5860 = vperm.xlu0 %5859, %v5694
          %v5861 = vpop.permute.xlu0 %5860
          %5864 = vset.pattern.permute.xlu0 0
          %5865 = vperm.xlu0 %5864, %v5695
          %v5866 = vpop.permute.xlu0 %5865
          %5869 = vset.pattern.permute.xlu0 0
          %5870 = vperm.xlu0 %5869, %v5696
          %v5871 = vpop.permute.xlu0 %5870
          %5874 = vset.pattern.permute.xlu0 0
          %5875 = vperm.xlu0 %5874, %v5697
          %v5876 = vpop.permute.xlu0 %5875
          %5879 = vset.pattern.permute.xlu0 0
          %5880 = vperm.xlu0 %5879, %v5698
          %v5881 = vpop.permute.xlu0 %5880
          %vm5883 = vcmp.lt.f32.partialorder %v5706, %v5806
          %vm5884 = vcmp.lt.f32.partialorder %v5706, %v5811
          %vm5885 = vcmp.lt.f32.partialorder %v5706, %v5816
          %vm5886 = vcmp.lt.f32.partialorder %v5706, %v5821
          %vm5887 = vcmp.lt.f32.partialorder %v5706, %v5826
          %vm5888 = vcmp.lt.f32.partialorder %v5706, %v5831
          %vm5889 = vcmp.lt.f32.partialorder %v5706, %v5836
          %vm5890 = vcmp.lt.f32.partialorder %v5706, %v5841
          %vm5891 = vcmp.lt.f32.partialorder %v5706, %v5846
          %vm5892 = vcmp.lt.f32.partialorder %v5706, %v5851
          %vm5893 = vcmp.lt.f32.partialorder %v5706, %v5856
          %vm5894 = vcmp.lt.f32.partialorder %v5706, %v5861
          %vm5895 = vcmp.lt.f32.partialorder %v5706, %v5866
          %vm5896 = vcmp.lt.f32.partialorder %v5706, %v5871
          %vm5897 = vcmp.lt.f32.partialorder %v5706, %v5876
          %vm5898 = vcmp.lt.f32.partialorder %v5706, %v5881
          %vm5899 = vmand %vm5787, %vm5883
          %vm5900 = vmand %vm5788, %vm5884
          %vm5901 = vmand %vm5789, %vm5885
          %vm5902 = vmand %vm5790, %vm5886
          %vm5903 = vmand %vm5791, %vm5887
          %vm5904 = vmand %vm5792, %vm5888
          %vm5905 = vmand %vm5793, %vm5889
          %vm5906 = vmand %vm5794, %vm5890
          %vm5907 = vmand %vm5795, %vm5891
          %vm5908 = vmand %vm5796, %vm5892
          %vm5909 = vmand %vm5797, %vm5893
          %vm5910 = vmand %vm5798, %vm5894
          %vm5911 = vmand %vm5799, %vm5895
          %vm5912 = vmand %vm5800, %vm5896
          %vm5913 = vmand %vm5801, %vm5897
          %vm5914 = vmand %vm5802, %vm5898
          %v5915 = vsel %vm5899, 1, 0
          %v5916 = vsel %vm5900, 1, 0
          %v5917 = vsel %vm5901, 1, 0
          %v5918 = vsel %vm5902, 1, 0
          %v5919 = vsel %vm5903, 1, 0
          %v5920 = vsel %vm5904, 1, 0
          %v5921 = vsel %vm5905, 1, 0
          %v5922 = vsel %vm5906, 1, 0
          %v5923 = vsel %vm5907, 1, 0
          %v5924 = vsel %vm5908, 1, 0
          %v5925 = vsel %vm5909, 1, 0
          %v5926 = vsel %vm5910, 1, 0
          %v5927 = vsel %vm5911, 1, 0
          %v5928 = vsel %vm5912, 1, 0
          %v5929 = vsel %vm5913, 1, 0
          %v5930 = vsel %vm5914, 1, 0
          %v5931 = vcvt.s32.f32 %v5915
          %v5932 = vcvt.s32.f32 %v5916
          %v5933 = vcvt.s32.f32 %v5917
          %v5934 = vcvt.s32.f32 %v5918
          %v5935 = vcvt.s32.f32 %v5919
          %v5936 = vcvt.s32.f32 %v5920
          %v5937 = vcvt.s32.f32 %v5921
          %v5938 = vcvt.s32.f32 %v5922
          %v5939 = vcvt.s32.f32 %v5923
          %v5940 = vcvt.s32.f32 %v5924
          %v5941 = vcvt.s32.f32 %v5925
          %v5942 = vcvt.s32.f32 %v5926
          %v5943 = vcvt.s32.f32 %v5927
          %v5944 = vcvt.s32.f32 %v5928
          %v5945 = vcvt.s32.f32 %v5929
          %v5946 = vcvt.s32.f32 %v5930
          %v5947 = vlaneseq
          %v5948 = vshrl.u32 %v5947, 7
          %v5949 = vsub.s32 1, %v5948
          %v5950 = vrot.slane %v5364, %v5949
          %v5951 = vlaneseq
          %v5952 = vshrl.u32 %v5951, 7
          %v5953 = vsub.s32 0, %v5952
          %v5954 = vrot.slane %v5427, %v5953
          %v5955 = vsel %vm1087, %v5950, %v5954
          %v5956 = vlaneseq
          %v5957 = vshrl.u32 %v5956, 7
          %v5958 = vsub.s32 0, %v5957
          %v5959 = vrot.slane %v5400, %v5958
          %v5960 = vsel %vm558, %v5959, %v5955
          %5961 = vmatprep.subr.mxu0 0.0
          %5962 = vmatpush1.msra.mxu0 %v5946
          %5963 = vmatprep.subr.mxu0 0.0
          %5964 = vmatpush1.msra.mxu0 %v5945
          %5965 = vmatprep.subr.mxu0 0.0
          %5966 = vmatpush1.msra.mxu0 %v5944
          %5967 = vmatprep.subr.mxu0 0.0
          %5968 = vmatpush1.msra.mxu0 %v5943
          %5969 = vmatprep.subr.mxu0 0.0
          %5970 = vmatpush1.msra.mxu0 %v5942
          %5971 = vmatprep.subr.mxu0 0.0
          %5972 = vmatpush1.msra.mxu0 %v5941
          %5973 = vmatprep.subr.mxu0 0.0
          %5974 = vmatpush1.msra.mxu0 %v5940
          %5975 = vmatprep.subr.mxu0 0.0
          %5976 = vmatpush1.msra.mxu0 %v5939
          %5977 = vmatprep.subr.mxu0 0.0
          %5978 = vmatpush1.msra.mxu0 %v5938
          %5979 = vmatprep.subr.mxu0 0.0
          %5980 = vmatpush1.msra.mxu0 %v5937
          %5981 = vmatprep.subr.mxu0 0.0
          %5982 = vmatpush1.msra.mxu0 %v5936
          %5983 = vmatprep.subr.mxu0 0.0
          %5984 = vmatpush1.msra.mxu0 %v5935
          %5985 = vmatprep.subr.mxu0 0.0
          %5986 = vmatpush1.msra.mxu0 %v5934
          %5987 = vmatprep.subr.mxu0 0.0
          %5988 = vmatpush1.msra.mxu0 %v5933
          %5989 = vmatprep.subr.mxu0 0.0
          %5990 = vmatpush1.msra.mxu0 %v5932
          %5991 = vmatprep.subr.mxu0 0.0
          %5992 = vmatpush1.msra.mxu0 %v5931
          %5993 = vmatprep.subr.mxu0 0.0
          %5994 = vmatpush2.msra.mxu0 0.0
          %5995 = vmatprep.subr.mxu0 0.0
          %5996 = vmatpush2.msra.mxu0 0.0
          %5997 = vmatprep.subr.mxu0 0.0
          %5998 = vmatpush2.msra.mxu0 0.0
          %5999 = vmatprep.subr.mxu0 0.0
          %6000 = vmatpush2.msra.mxu0 0.0
          %6001 = vmatprep.subr.mxu0 0.0
          %6002 = vmatpush2.msra.mxu0 0.0
          %6003 = vmatprep.subr.mxu0 0.0
          %6004 = vmatpush2.msra.mxu0 0.0
          %6005 = vmatprep.subr.mxu0 0.0
          %6006 = vmatpush2.msra.mxu0 0.0
          %6007 = vmatprep.subr.mxu0 0.0
          %6008 = vmatpush2.msra.mxu0 0.0
          %6009 = vmatprep.subr.mxu0 0.0
          %6010 = vmatpush2.msra.mxu0 0.0
          %6011 = vmatprep.subr.mxu0 0.0
          %6012 = vmatpush2.msra.mxu0 0.0
          %6013 = vmatprep.subr.mxu0 0.0
          %6014 = vmatpush2.msra.mxu0 0.0
          %6015 = vmatprep.subr.mxu0 0.0
          %6016 = vmatpush2.msra.mxu0 0.0
          %6017 = vmatprep.subr.mxu0 0.0
          %6018 = vmatpush2.msra.mxu0 0.0
          %6019 = vmatprep.subr.mxu0 0.0
          %6020 = vmatpush2.msra.mxu0 0.0
          %6021 = vmatprep.subr.mxu0 0.0
          %6022 = vmatpush2.msra.mxu0 0.0
          %6023 = vmatprep.subr.mxu0 0.0
          %6024 = vmatpush2.msra.mxu0 0.0
          %6025 = vmatprep.mubr.f32.mxu0 0.0
          %6026 = vmatmul.mubr.f32.gmra.mxu0 %v5960
          %v6027 = vpop.f32.mrf.mxu0
          %v6028 = vadd.f32 0.0, %v6027
          %v6029 = vpop.f32.mrf.mxu0
          %6030 = vdwg.mxu0
          %vm6031 = vcmp.eq.s32.totalorder %v398, 7
          %v6032 = vsel %vm6031, 1, 0
          %vm6033 = vcmp.eq.s32.totalorder %v6032, 1
          %v6034 = vlaneseq
          %v6035 = vshrl.u32 %v6034, 7
          %v6036 = vsub.s32 2, %v6035
          %v6037 = vrot.slane %v6028, %v6036
          %v6038 = vsel %vm6033, %v6037, %v5343
          %v6039 = vlaneseq
          %v6040 = vshrl.u32 %v6039, 7
          %v6041 = vsub.s32 0, %v6040
          %v6042 = vrot.slane %v6028, %v6041
          %v6043 = vsel %vm6033, %v6042, %v5348
          %s6044 = scalar_lea.vmem %s366, %s458 [#allocation15]
          %6045 = vst [vmem:[%s6044] sm:$0xff] %v6038
          %s6046 = scalar_lea.vmem %s373, %s458 [#allocation16]
          %6047 = vst [vmem:[%s6046] sm:$0xff] %v6043
          %v6049 = vrot.slane %v6028, 1
        $region61: #{tpu_custom_call.1} parent=39 // loop_footer
          %s454 = sadd.s32 1, %s450
        $region62: #{tpu_custom_call.1} parent=39 // loop_footer_branch
          %449 = sbr.rel target = $region58
        $region63: #{tpu_custom_call.1} parent=39 // loop_exit
          _
        %6051 = vst [vmem:[#allocation2] sm:$0x1] %v455
        %6052 = vst [vmem:[#allocation2 + $0x1] sm:$0x1] %v456
        %vm6053 = vcmask 0
        %6054 = vst.msk [vmem:[#allocation3] sm:$0x1] %vm6053, %v457
        %p6055 = scmp.eq.s32.totalorder %s48, 1
        // Predicated region
        $region64: #{tpu_custom_call.1} parent=39 // pred_check
          %p6056 = pneg %p6055
        $region65: #{tpu_custom_call.1} parent=39 // pred_check_branch
          %6058 = sbr.rel (%p6056) target = $region67
        $region66: #{tpu_custom_call.1} parent=39 // pred_region
          %6059 = vst.msk [vmem:[#allocation18] sm:$0x1] %vm6053, %v457
        $region67: #{tpu_custom_call.1} parent=39 // pred_fallthru
          _
        %s6060 = sand.u32 %s171, 1
        %s6061 = scalar_lea.sflag [#allocation11], %s6060
        %s6062 = sand.u32 %s171, 1
        %s6063 = smul.addr %s6062, 64
        %s6064 = scalar_lea.vmem [#allocation15], %s6063
        %s6065 = sand.u32 %s48, 1
        %s6066 = scalar_lea.sflag [#allocation17], %s6065
        %s6067 = sand.u32 %s197, 1
        %s6068 = smul.addr %s6067, 64
        %s6069 = scalar_lea.vmem [#allocation16], %s6068
        // Predicated region
        $region68: #{tpu_custom_call.1} parent=39 // pred_check
          %p6070 = pneg %p181
        $region69: #{tpu_custom_call.1} parent=39 // pred_check_branch
          %6072 = sbr.rel (%p6070) target = $region71
        $region70: #{tpu_custom_call.1} parent=39 // pred_region
          %s6073 = smul.u32 8, %s48
          %s6075 = ssub.s32 1024, 1024
          %6076 = vsyncadd %s6061, %s6075
          %s6077 = smul.addr %s6073, 128
          %s6078 = scalar_lea.hbm %s9, %s6077
          %s6079 = sshll.u32 %s6064, 4
          %s6080 = int_to_ptr.vmem [resolvable:$true] %s6079
          %6085 = dma.vmem_to_hbm [thread:$0]  %s6080, 1024, %s6078, %s6061, 128, 128, 8
        $region71: #{tpu_custom_call.1} parent=39 // pred_fallthru
          _
        // Predicated region
        $region72: #{tpu_custom_call.1} parent=39 // pred_check
          %p6086 = pneg %p207
        $region73: #{tpu_custom_call.1} parent=39 // pred_check_branch
          %6088 = sbr.rel (%p6086) target = $region75
        $region74: #{tpu_custom_call.1} parent=39 // pred_region
          %s6089 = smul.u32 8, %s48
          %s6091 = ssub.s32 1024, 1024
          %6092 = vsyncadd %s6066, %s6091
          %s6093 = smul.addr %s6089, 128
          %s6094 = scalar_lea.hbm %s10, %s6093
          %s6095 = sshll.u32 %s6069, 4
          %s6096 = int_to_ptr.vmem [resolvable:$true] %s6095
          %6101 = dma.vmem_to_hbm [thread:$0]  %s6096, 1024, %s6094, %s6066, 128, 128, 8
        $region75: #{tpu_custom_call.1} parent=39 // pred_fallthru
          _
        // Predicated region
        $region76: #{tpu_custom_call.1} parent=39 // pred_check
          %p6102 = pneg %p228
        $region77: #{tpu_custom_call.1} parent=39 // pred_check_branch
          %6104 = sbr.rel (%p6102) target = $region79
        $region78: #{tpu_custom_call.1} parent=39 // pred_region
          %s6106 = ssub.s32 16, 16
          %6107 = vsyncadd [#allocation17], %s6106
          %s6109 = sshll.u32 [#allocation18], 4
          %s6110 = int_to_ptr.vmem [resolvable:$true] %s6109
          %6112 = dma.vmem_to_hbm [thread:$0]  %s6110, 16, %s11, [#allocation17]
        $region79: #{tpu_custom_call.1} parent=39 // pred_fallthru
          _
        // Predicated region
        $region80: #{tpu_custom_call.1} parent=39 // pred_check
          %p6113 = pneg %p228
        $region81: #{tpu_custom_call.1} parent=39 // pred_check_branch
          %6115 = sbr.rel (%p6113) target = $region83
        $region82: #{tpu_custom_call.1} parent=39 // pred_region
          %6116 = dma.done [#allocation17], 16
        $region83: #{tpu_custom_call.1} parent=39 // pred_fallthru
          _
      $region40: #{tpu_custom_call.1} parent=5 // pred_fallthru
        _
      %p6117 = scmp.le.s32.totalorder 2, %s43
      // Predicated region
      $region84: #{tpu_custom_call.1} parent=5 // pred_check
        %p6118 = pneg %p6117
      $region85: #{tpu_custom_call.1} parent=5 // pred_check_branch
        %6120 = sbr.rel (%p6118) target = $region87
      $region86: #{tpu_custom_call.1} parent=5 // pred_region
        %s6121 = ssub.s32 %s43, 2
        // Predicated region
        $region88: #{tpu_custom_call.1} parent=86 // pred_check
          %p6122 = pneg %p187
        $region89: #{tpu_custom_call.1} parent=86 // pred_check_branch
          %6124 = sbr.rel (%p6122) target = $region91
        $region90: #{tpu_custom_call.1} parent=86 // pred_region
          %s6125 = sand.u32 %s172, 1
          %s6126 = scalar_lea.sflag [#allocation11], %s6125
          %s6127 = sand.u32 %s172, 1
          %s6128 = smul.addr %s6127, 64
          %s6129 = scalar_lea.vmem [#allocation15], %s6128
          %6130 = dma.done %s6126, 1024
        $region91: #{tpu_custom_call.1} parent=86 // pred_fallthru
          _
        // Predicated region
        $region92: #{tpu_custom_call.1} parent=86 // pred_check
          %p6131 = pneg %p213
        $region93: #{tpu_custom_call.1} parent=86 // pred_check_branch
          %6133 = sbr.rel (%p6131) target = $region95
        $region94: #{tpu_custom_call.1} parent=86 // pred_region
          %s6134 = sand.u32 %s49, 1
          %s6135 = scalar_lea.sflag [#allocation17], %s6134
          %s6136 = sand.u32 %s198, 1
          %s6137 = smul.addr %s6136, 64
          %s6138 = scalar_lea.vmem [#allocation16], %s6137
          %6139 = dma.done %s6135, 1024
        $region95: #{tpu_custom_call.1} parent=86 // pred_fallthru
          _
      $region87: #{tpu_custom_call.1} parent=5 // pred_fallthru
        _
    $region6: #{tpu_custom_call.1} parent=1 // loop_footer
      %s47 = sadd.s32 1, %s43
    $region7: #{tpu_custom_call.1} parent=1 // loop_footer_branch
      %42 = sbr.rel target = $region3
    $region8: #{tpu_custom_call.1} parent=1 // loop_exit
      _
    %6140 = vsyncpa [#allocation10], 1
    %s6141 = scalar_lea.sflag [#allocation10], 1
    %6142 = vsyncpa %s6141, 1
    %6143 = vsyncpa [#allocation13], 1
    %s6144 = scalar_lea.sflag [#allocation13], 1
    %6145 = vsyncpa %s6144, 1
    %6146 = vsyncpa [#allocation11], 1
    %s6147 = scalar_lea.sflag [#allocation11], 1
    %6148 = vsyncpa %s6147, 1
    %6149 = vsyncpa [#allocation17], 1
    %s6150 = scalar_lea.sflag [#allocation17], 1
    %6151 = vsyncpa %s6150, 1

</llo_original>
